<compile_context>
chip_gen: v6e
topology: v6e:2x2x1
jax: 0.10.0
libtpu: 0.0.40
codegen_flags: <defaults>
</compile_context>

<pallas_src>
import math

import numpy as np
import jax
import jax.numpy as jnp
from jax.experimental import pallas as pl
from jax.experimental.pallas import tpu as pltpu

HIGHEST = jax.lax.Precision.HIGHEST


# --------------------------------------------------------------------------
# Fused Pallas kernel (all layers + K hops + head in one body)
# --------------------------------------------------------------------------
def _make_fused_kernel(nlayer, K, rws, hidden, N):
    blk = K * rws * N  # rows of the stacked one-hot block per layer

    def kernel(*refs):
        x_ref = refs[0]
        oh_ref = refs[1]                      # [nlayer*K*rws*N, N] bf16 one-hots
        att_ref = refs[2]                     # [nlayer*(K+1)] f32 in SMEM
        lin_refs = refs[3:3 + 4 * nlayer]     # per layer: W, b, [wl|wr], [bl|br]
        Wf_ref = refs[3 + 4 * nlayer]
        bf_ref = refs[4 + 4 * nlayer]
        out_ref = refs[5 + 4 * nlayer]
        ha_ref = refs[6 + 4 * nlayer]         # VMEM scratch (N, hidden+1)

        h = x_ref[...]                        # [N, F] f32
        for l in range(nlayer):
            W_ref, b_ref, wlr_ref, blr_ref = lin_refs[4 * l:4 * l + 4]

            # Linear + fused [attl | attr] projection. These are tiny; HIGHEST
            # keeps them numerically equal to the f32 reference.
            h = jnp.dot(h, W_ref[...], precision=HIGHEST,
                        preferred_element_type=jnp.float32) + b_ref[...]
            alar = jnp.dot(h, wlr_ref[...], precision=HIGHEST,
                           preferred_element_type=jnp.float32) + blr_ref[...]
            al = alar[:, 0:1]                 # [N, 1]
            ar = alar[:, 1:2]                 # [N, 1]

            # ha = [h | ar]: every one-hot row gathers both x[end] and ar[end]
            # in the same MXU pass.
            ha_ref[:, 0:hidden] = h
            ha_ref[:, hidden:hidden + 1] = ar
            ha = ha_ref[...]
            # hi/lo bf16 split: two DEFAULT-precision bf16 MXU passes give the
            # f32 gather exactly (one-hot lhs is exact in bf16) up to ~2^-17.
            ha_hi = ha.astype(jnp.bfloat16)
            ha_lo = (ha - ha_hi.astype(jnp.float32)).astype(jnp.bfloat16)

            # All K hops x rws walks of this layer in ONE stacked gather:
            # [K*rws*N, N] @ [N, hidden+1]  (static, sublane-aligned row slice)
            oh_l = oh_ref[l * blk:(l + 1) * blk, :]
            g = (jnp.dot(oh_l, ha_hi, preferred_element_type=jnp.float32)
                 + jnp.dot(oh_l, ha_lo, preferred_element_type=jnp.float32))

            agg = att_ref[l * (K + 1)] * h    # mask[0] * x[batch]

            for i in range(K):
                xg, arg = [], []
                for r in range(rws):
                    row0 = (i * rws + r) * N          # multiple of 64 -> aligned
                    gi = g[row0:row0 + N, :]
                    xg.append(gi[:, 0:hidden])        # h[ends_r]
                    arg.append(gi[:, hidden:hidden + 1])  # ar[ends_r]

                # LeakyReLU(0.2) logits, one [N,1] column per walk slot.
                logits = []
                for r in range(rws):
                    v = al + arg[r]
                    logits.append(jnp.where(v > 0, v, 0.2 * v))

                # Per-node softmax over the rws walks (per-group max -> safe).
                m = logits[0]
                for r in range(1, rws):
                    m = jnp.maximum(m, logits[r])
                ps = [jnp.exp(t - m) for t in logits]
                denom = ps[0]
                for r in range(1, rws):
                    denom = denom + ps[r]
                inv = 1.0 / denom             # exact; denom >= 1 by construction

                aggx = ps[0] * inv * xg[0]
                for r in range(1, rws):
                    aggx = aggx + ps[r] * inv * xg[r]

                # mean over walks + att[l, i+1] scaling (scalar from SMEM)
                agg = agg + (att_ref[l * (K + 1) + i + 1] * (1.0 / rws)) * aggx

            h = agg

        # Final linear + log_softmax(dim=1).
        z = jnp.dot(h, Wf_ref[...], precision=HIGHEST,
                    preferred_element_type=jnp.float32) + bf_ref[...]
        zs = z - jnp.max(z, axis=1, keepdims=True)
        out_ref[...] = zs - jnp.log(jnp.sum(jnp.exp(zs), axis=1, keepdims=True))

    return kernel


# --------------------------------------------------------------------------
# Wrapper
# --------------------------------------------------------------------------
def gat_rw_full_forward(x, params, onehots, att, *, K, rws):
    N = x.shape[0]
    nlayer = len(params["lins"])
    hidden = params["lins"][0][0].shape[1]
    C = params["final"][0].shape[1]

    flat = [x, onehots, att.reshape(-1)]
    for (W, b, wl, bl, wr, br) in params["lins"]:
        wlr = jnp.concatenate([wl, wr], axis=1)     # [H, 2]
        blr = jnp.concatenate([bl, br], axis=1)     # [1, 2]
        flat += [W, b, wlr, blr]
    flat += [params["final"][0], params["final"][1]]

    vmem = pl.BlockSpec(memory_space=pltpu.MemorySpace.VMEM)
    smem = pl.BlockSpec(memory_space=pltpu.MemorySpace.SMEM)
    in_specs = [vmem, vmem, smem] + [vmem] * (4 * nlayer + 2)

    kernel = _make_fused_kernel(nlayer, K, rws, hidden, N)
    return pl.pallas_call(
        kernel,
        out_shape=jax.ShapeDtypeStruct((N, C), jnp.float32),
        in_specs=in_specs,
        out_specs=pl.BlockSpec(memory_space=pltpu.MemorySpace.VMEM),
        scratch_shapes=[pltpu.VMEM((N, hidden + 1), jnp.float32)],
    )(*flat)


# --------------------------------------------------------------------------
# Pure-JAX reference (real gathers, per-group softmax)
# --------------------------------------------------------------------------
def ref_forward(x, params, ends_per_layer, att, starts, rws):
    def leaky(v):
        return jnp.where(v > 0, v, 0.2 * v)

    h = x
    N = x.shape[0]
    for l, ends_list in enumerate(ends_per_layer):
        W, b, wl, bl, wr, br = params["lins"][l]
        h = jnp.dot(h, W, precision=HIGHEST) + b
        al = jnp.dot(h, wl, precision=HIGHEST) + bl
        ar = jnp.dot(h, wr, precision=HIGHEST) + br
        agg = att[l, 0] * h
        for i, ends in enumerate(ends_list, start=1):
            logit = leaky(al[starts, 0] + ar[ends, 0])
            e = jax.nn.softmax(logit.reshape(N, rws), axis=1).reshape(-1)
            aggx_ = (e[:, None] * h[ends]).reshape(N, rws, -1).mean(axis=1)
            agg = agg + att[l, i] * aggx_
        h = agg
    Wf, bf = params["final"]
    z = jnp.dot(h, Wf, precision=HIGHEST) + bf
    return jax.nn.log_softmax(z, axis=1)


# --------------------------------------------------------------------------
# Main
# --------------------------------------------------------------------------
if __name__ == "__main__":
    N, F_IN, H, C = 64, 16, 32, 4            # nodes, num_features, hidden, classes
    K, NLAYER, RWS, ALPHA = 3, 2, 4, 0.1

    keys = iter(jax.random.split(jax.random.PRNGKey(0), 64))

    def nk():
        return next(keys)

    def linear_params(fan_in, fan_out):
        bound = 1.0 / math.sqrt(fan_in)
        W = jax.random.uniform(nk(), (fan_in, fan_out), jnp.float32, -bound, bound)
        b = jax.random.uniform(nk(), (1, fan_out), jnp.float32, -bound, bound)
        return W, b

    # parameters (Linear weights stored as [in, out]; same math as torch Linear)
    lins = []
    dims = [F_IN] + [H] * NLAYER
    for l in range(NLAYER):
        W, b = linear_params(dims[l], H)
        Wl, bl = linear_params(H, 1)
        Wr, br = linear_params(H, 1)
        lins.append((W, b, Wl, bl, Wr, br))
    Wf, bf = linear_params(H, C)
    params = {"lins": lins, "final": (Wf, bf)}

    # att parameter: alpha*(1-alpha)^k, last entry (1-alpha)^K, tiled per layer
    tmp = (ALPHA * (1.0 - ALPHA) ** np.arange(0, K + 1)).astype(np.float32)
    tmp[-1] = (1.0 - ALPHA) ** K
    att = jnp.asarray(np.tile(tmp, (NLAYER, 1)), dtype=jnp.float32)   # [nlayer, K+1]

    # node features
    x = jax.random.normal(nk(), (N, F_IN), dtype=jnp.float32)

    # synthetic undirected graph with self loops + host-side random walks
    rng = np.random.default_rng(0)
    A = np.zeros((N, N), dtype=bool)
    src = rng.integers(0, N, size=4 * N)
    dst = rng.integers(0, N, size=4 * N)
    A[src, dst] = True
    A[dst, src] = True
    np.fill_diagonal(A, True)                 # add_remaining_self_loops(to_undirected)
    nbrs = [np.nonzero(A[n])[0] for n in range(N)]

    starts = np.repeat(np.arange(N), RWS)     # arange(N*rws) // rws

    def random_walk_ends(start_nodes, length):
        cur = start_nodes.copy()
        for _ in range(length):
            cur = np.array([nbrs[c][rng.integers(len(nbrs[c]))] for c in cur])
        return cur

    ends_per_layer = [[random_walk_ends(starts, i) for i in range(1, K + 1)]
                      for _ in range(NLAYER)]

    # bf16 one-hot [N, N] per (layer, hop, walk-slot), stacked on the row dim
    # into a single [nlayer*K*rws*N, N] gather matrix (one matmul per layer).
    oh_list = []
    for l in range(NLAYER):
        for i in range(K):
            e = ends_per_layer[l][i].reshape(N, RWS)
            for r in range(RWS):
                oh_list.append(jax.nn.one_hot(jnp.asarray(e[:, r], jnp.int32), N,
                                              dtype=jnp.bfloat16))
    onehots = jnp.concatenate(oh_list, axis=0)    # [nlayer*K*rws*N, N]

    # run fused Pallas forward
    out = gat_rw_full_forward(x, params, onehots, att, K=K, rws=RWS)
    out = jax.block_until_ready(out)

    # verify against pure-JAX reference with real gathers
    ends_jnp = [[jnp.asarray(e, jnp.int32) for e in lst] for lst in ends_per_layer]
    ref = ref_forward(x, params, ends_jnp, att,
                      jnp.asarray(starts, jnp.int32), RWS)
    ref = jax.block_until_ready(ref)

    np.testing.assert_allclose(np.asarray(out), np.asarray(ref),
                               rtol=1e-4, atol=1e-4)
    print("KERNEL_OK")
</pallas_src>

<mosaic_0001>
module attributes {stable_mosaic.version = 11 : i64} {
  func.func @kernel(%arg0: memref<64x16xf32, #tpu.memory_space<vmem>>, %arg1: memref<1536x64xbf16, #tpu.memory_space<vmem>>, %arg2: memref<8xf32, #tpu.memory_space<smem>>, %arg3: memref<16x32xf32, #tpu.memory_space<vmem>>, %arg4: memref<1x32xf32, #tpu.memory_space<vmem>>, %arg5: memref<32x2xf32, #tpu.memory_space<vmem>>, %arg6: memref<1x2xf32, #tpu.memory_space<vmem>>, %arg7: memref<32x32xf32, #tpu.memory_space<vmem>>, %arg8: memref<1x32xf32, #tpu.memory_space<vmem>>, %arg9: memref<32x2xf32, #tpu.memory_space<vmem>>, %arg10: memref<1x2xf32, #tpu.memory_space<vmem>>, %arg11: memref<32x4xf32, #tpu.memory_space<vmem>>, %arg12: memref<1x4xf32, #tpu.memory_space<vmem>>, %arg13: memref<64x4xf32, #tpu.memory_space<vmem>>, %arg14: memref<64x33xf32, #tpu.memory_space<vmem>>) attributes {dimension_semantics = [], scalar_prefetch = 0 : i64, scratch_operands = 1 : i64, tpu.core_type = #tpu.core_type<tc>} {
    %c0 = arith.constant 0 : index
    %c0_0 = arith.constant 0 : index
    %0 = vector.load %arg0[%c0, %c0_0] : memref<64x16xf32, #tpu.memory_space<vmem>>, vector<64x16xf32>
    %c0_1 = arith.constant 0 : index
    %c0_2 = arith.constant 0 : index
    %1 = vector.load %arg3[%c0_1, %c0_2] : memref<16x32xf32, #tpu.memory_space<vmem>>, vector<16x32xf32>
    %cst = arith.constant dense<0.000000e+00> : vector<64x32xf32>
    %2 = tpu.matmul %0, %1, %cst {dimension_numbers = #tpu.dot_dimension_numbers<[1], [0], [0], [1], [0, 0, 1, 1], [], []>, precision = #tpu.contract_precision<fp32>} : vector<64x16xf32>, vector<16x32xf32>, vector<64x32xf32> -> vector<64x32xf32>
    %c0_3 = arith.constant 0 : index
    %c0_4 = arith.constant 0 : index
    %3 = vector.load %arg4[%c0_3, %c0_4] : memref<1x32xf32, #tpu.memory_space<vmem>>, vector<1x32xf32>
    %4 = vector.broadcast %3 : vector<1x32xf32> to vector<64x32xf32>
    %5 = arith.addf %2, %4 : vector<64x32xf32>
    %c0_5 = arith.constant 0 : index
    %c0_6 = arith.constant 0 : index
    %6 = vector.load %arg5[%c0_5, %c0_6] : memref<32x2xf32, #tpu.memory_space<vmem>>, vector<32x2xf32>
    %cst_7 = arith.constant dense<0.000000e+00> : vector<64x2xf32>
    %7 = tpu.matmul %5, %6, %cst_7 {dimension_numbers = #tpu.dot_dimension_numbers<[1], [0], [0], [1], [0, 0, 1, 1], [], []>, precision = #tpu.contract_precision<fp32>} : vector<64x32xf32>, vector<32x2xf32>, vector<64x2xf32> -> vector<64x2xf32>
    %c0_8 = arith.constant 0 : index
    %c0_9 = arith.constant 0 : index
    %8 = vector.load %arg6[%c0_8, %c0_9] : memref<1x2xf32, #tpu.memory_space<vmem>>, vector<1x2xf32>
    %9 = vector.broadcast %8 : vector<1x2xf32> to vector<64x2xf32>
    %10 = arith.addf %7, %9 : vector<64x2xf32>
    %11 = vector.extract_strided_slice %10 {offsets = [0, 0], sizes = [64, 1], strides = [1, 1]} : vector<64x2xf32> to vector<64x1xf32>
    %12 = vector.extract_strided_slice %10 {offsets = [0, 1], sizes = [64, 1], strides = [1, 1]} : vector<64x2xf32> to vector<64x1xf32>
    %c0_10 = arith.constant 0 : index
    %c0_11 = arith.constant 0 : index
    %13 = vector.load %arg14[%c0_10, %c0_11] : memref<64x33xf32, #tpu.memory_space<vmem>>, vector<64x32xf32>
    tpu.vector_store %arg14[%c0_10, %c0_11], %5 {strides = array<i32>} : memref<64x33xf32, #tpu.memory_space<vmem>>, vector<64x32xf32>,
    %c0_12 = arith.constant 0 : index
    %c32 = arith.constant 32 : index
    %14 = vector.load %arg14[%c0_12, %c32] : memref<64x33xf32, #tpu.memory_space<vmem>>, vector<64x1xf32>
    tpu.vector_store %arg14[%c0_12, %c32], %12 {strides = array<i32>} : memref<64x33xf32, #tpu.memory_space<vmem>>, vector<64x1xf32>,
    %c0_13 = arith.constant 0 : index
    %c0_14 = arith.constant 0 : index
    %15 = vector.load %arg14[%c0_13, %c0_14] : memref<64x33xf32, #tpu.memory_space<vmem>>, vector<64x33xf32>
    %16 = arith.truncf %15 : vector<64x33xf32> to vector<64x33xbf16>
    %17 = arith.extf %16 : vector<64x33xbf16> to vector<64x33xf32>
    %18 = arith.subf %15, %17 : vector<64x33xf32>
    %19 = arith.truncf %18 : vector<64x33xf32> to vector<64x33xbf16>
    %c0_15 = arith.constant 0 : index
    %c0_16 = arith.constant 0 : index
    %20 = vector.load %arg1[%c0_15, %c0_16] : memref<1536x64xbf16, #tpu.memory_space<vmem>>, vector<768x64xbf16>
    %cst_17 = arith.constant dense<0.000000e+00> : vector<768x33xf32>
    %21 = tpu.matmul %20, %16, %cst_17 {dimension_numbers = #tpu.dot_dimension_numbers<[1], [0], [0], [1], [0, 0, 1, 1], [], []>} : vector<768x64xbf16>, vector<64x33xbf16>, vector<768x33xf32> -> vector<768x33xf32>
    %cst_18 = arith.constant dense<0.000000e+00> : vector<768x33xf32>
    %22 = tpu.matmul %20, %19, %cst_18 {dimension_numbers = #tpu.dot_dimension_numbers<[1], [0], [0], [1], [0, 0, 1, 1], [], []>} : vector<768x64xbf16>, vector<64x33xbf16>, vector<768x33xf32> -> vector<768x33xf32>
    %23 = arith.addf %21, %22 : vector<768x33xf32>
    %c0_19 = arith.constant 0 : index
    %24 = memref.load %arg2[%c0_19] : memref<8xf32, #tpu.memory_space<smem>>
    %25 = vector.broadcast %24 : f32 to vector<64x32xf32>
    %26 = arith.mulf %25, %5 : vector<64x32xf32>
    %27 = vector.extract_strided_slice %23 {offsets = [0, 0], sizes = [64, 33], strides = [1, 1]} : vector<768x33xf32> to vector<64x33xf32>
    %28 = vector.extract_strided_slice %27 {offsets = [0, 0], sizes = [64, 32], strides = [1, 1]} : vector<64x33xf32> to vector<64x32xf32>
    %29 = vector.extract_strided_slice %27 {offsets = [0, 32], sizes = [64, 1], strides = [1, 1]} : vector<64x33xf32> to vector<64x1xf32>
    %30 = vector.extract_strided_slice %23 {offsets = [64, 0], sizes = [64, 33], strides = [1, 1]} : vector<768x33xf32> to vector<64x33xf32>
    %31 = vector.extract_strided_slice %30 {offsets = [0, 0], sizes = [64, 32], strides = [1, 1]} : vector<64x33xf32> to vector<64x32xf32>
    %32 = vector.extract_strided_slice %30 {offsets = [0, 32], sizes = [64, 1], strides = [1, 1]} : vector<64x33xf32> to vector<64x1xf32>
    %33 = vector.extract_strided_slice %23 {offsets = [128, 0], sizes = [64, 33], strides = [1, 1]} : vector<768x33xf32> to vector<64x33xf32>
    %34 = vector.extract_strided_slice %33 {offsets = [0, 0], sizes = [64, 32], strides = [1, 1]} : vector<64x33xf32> to vector<64x32xf32>
    %35 = vector.extract_strided_slice %33 {offsets = [0, 32], sizes = [64, 1], strides = [1, 1]} : vector<64x33xf32> to vector<64x1xf32>
    %36 = vector.extract_strided_slice %23 {offsets = [192, 0], sizes = [64, 33], strides = [1, 1]} : vector<768x33xf32> to vector<64x33xf32>
    %37 = vector.extract_strided_slice %36 {offsets = [0, 0], sizes = [64, 32], strides = [1, 1]} : vector<64x33xf32> to vector<64x32xf32>
    %38 = vector.extract_strided_slice %36 {offsets = [0, 32], sizes = [64, 1], strides = [1, 1]} : vector<64x33xf32> to vector<64x1xf32>
    %39 = arith.addf %11, %29 : vector<64x1xf32>
    %cst_20 = arith.constant 0.000000e+00 : f32
    %40 = vector.broadcast %cst_20 : f32 to vector<64x1xf32>
    %41 = arith.cmpf ogt, %39, %40 : vector<64x1xf32>
    %cst_21 = arith.constant 2.000000e-01 : f32
    %42 = vector.broadcast %cst_21 : f32 to vector<64x1xf32>
    %43 = arith.mulf %42, %39 : vector<64x1xf32>
    %44 = arith.select %41, %39, %43 : vector<64x1xi1>, vector<64x1xf32>
    %45 = arith.addf %11, %32 : vector<64x1xf32>
    %cst_22 = arith.constant 0.000000e+00 : f32
    %46 = vector.broadcast %cst_22 : f32 to vector<64x1xf32>
    %47 = arith.cmpf ogt, %45, %46 : vector<64x1xf32>
    %cst_23 = arith.constant 2.000000e-01 : f32
    %48 = vector.broadcast %cst_23 : f32 to vector<64x1xf32>
    %49 = arith.mulf %48, %45 : vector<64x1xf32>
    %50 = arith.select %47, %45, %49 : vector<64x1xi1>, vector<64x1xf32>
    %51 = arith.addf %11, %35 : vector<64x1xf32>
    %cst_24 = arith.constant 0.000000e+00 : f32
    %52 = vector.broadcast %cst_24 : f32 to vector<64x1xf32>
    %53 = arith.cmpf ogt, %51, %52 : vector<64x1xf32>
    %cst_25 = arith.constant 2.000000e-01 : f32
    %54 = vector.broadcast %cst_25 : f32 to vector<64x1xf32>
    %55 = arith.mulf %54, %51 : vector<64x1xf32>
    %56 = arith.select %53, %51, %55 : vector<64x1xi1>, vector<64x1xf32>
    %57 = arith.addf %11, %38 : vector<64x1xf32>
    %cst_26 = arith.constant 0.000000e+00 : f32
    %58 = vector.broadcast %cst_26 : f32 to vector<64x1xf32>
    %59 = arith.cmpf ogt, %57, %58 : vector<64x1xf32>
    %cst_27 = arith.constant 2.000000e-01 : f32
    %60 = vector.broadcast %cst_27 : f32 to vector<64x1xf32>
    %61 = arith.mulf %60, %57 : vector<64x1xf32>
    %62 = arith.select %59, %57, %61 : vector<64x1xi1>, vector<64x1xf32>
    %63 = arith.maximumf %44, %50 : vector<64x1xf32>
    %64 = arith.maximumf %63, %56 : vector<64x1xf32>
    %65 = arith.maximumf %64, %62 : vector<64x1xf32>
    %66 = arith.subf %44, %65 : vector<64x1xf32>
    %67 = math.exp %66 : vector<64x1xf32>
    %68 = arith.subf %50, %65 : vector<64x1xf32>
    %69 = math.exp %68 : vector<64x1xf32>
    %70 = arith.subf %56, %65 : vector<64x1xf32>
    %71 = math.exp %70 : vector<64x1xf32>
    %72 = arith.subf %62, %65 : vector<64x1xf32>
    %73 = math.exp %72 : vector<64x1xf32>
    %74 = arith.addf %67, %69 : vector<64x1xf32>
    %75 = arith.addf %74, %71 : vector<64x1xf32>
    %76 = arith.addf %75, %73 : vector<64x1xf32>
    %cst_28 = arith.constant 1.000000e+00 : f32
    %77 = vector.broadcast %cst_28 : f32 to vector<64x1xf32>
    %78 = arith.divf %77, %76 : vector<64x1xf32>
    %79 = arith.mulf %67, %78 : vector<64x1xf32>
    %80 = vector.broadcast %79 : vector<64x1xf32> to vector<64x32xf32>
    %81 = arith.mulf %80, %28 : vector<64x32xf32>
    %82 = arith.mulf %69, %78 : vector<64x1xf32>
    %83 = vector.broadcast %82 : vector<64x1xf32> to vector<64x32xf32>
    %84 = arith.mulf %83, %31 : vector<64x32xf32>
    %85 = arith.addf %81, %84 : vector<64x32xf32>
    %86 = arith.mulf %71, %78 : vector<64x1xf32>
    %87 = vector.broadcast %86 : vector<64x1xf32> to vector<64x32xf32>
    %88 = arith.mulf %87, %34 : vector<64x32xf32>
    %89 = arith.addf %85, %88 : vector<64x32xf32>
    %90 = arith.mulf %73, %78 : vector<64x1xf32>
    %91 = vector.broadcast %90 : vector<64x1xf32> to vector<64x32xf32>
    %92 = arith.mulf %91, %37 : vector<64x32xf32>
    %93 = arith.addf %89, %92 : vector<64x32xf32>
    %c1 = arith.constant 1 : index
    %94 = memref.load %arg2[%c1] : memref<8xf32, #tpu.memory_space<smem>>
    %cst_29 = arith.constant 2.500000e-01 : f32
    %95 = arith.mulf %94, %cst_29 : f32
    %96 = vector.broadcast %95 : f32 to vector<64x32xf32>
    %97 = arith.mulf %96, %93 : vector<64x32xf32>
    %98 = arith.addf %26, %97 : vector<64x32xf32>
    %99 = vector.extract_strided_slice %23 {offsets = [256, 0], sizes = [64, 33], strides = [1, 1]} : vector<768x33xf32> to vector<64x33xf32>
    %100 = vector.extract_strided_slice %99 {offsets = [0, 0], sizes = [64, 32], strides = [1, 1]} : vector<64x33xf32> to vector<64x32xf32>
    %101 = vector.extract_strided_slice %99 {offsets = [0, 32], sizes = [64, 1], strides = [1, 1]} : vector<64x33xf32> to vector<64x1xf32>
    %102 = vector.extract_strided_slice %23 {offsets = [320, 0], sizes = [64, 33], strides = [1, 1]} : vector<768x33xf32> to vector<64x33xf32>
    %103 = vector.extract_strided_slice %102 {offsets = [0, 0], sizes = [64, 32], strides = [1, 1]} : vector<64x33xf32> to vector<64x32xf32>
    %104 = vector.extract_strided_slice %102 {offsets = [0, 32], sizes = [64, 1], strides = [1, 1]} : vector<64x33xf32> to vector<64x1xf32>
    %105 = vector.extract_strided_slice %23 {offsets = [384, 0], sizes = [64, 33], strides = [1, 1]} : vector<768x33xf32> to vector<64x33xf32>
    %106 = vector.extract_strided_slice %105 {offsets = [0, 0], sizes = [64, 32], strides = [1, 1]} : vector<64x33xf32> to vector<64x32xf32>
    %107 = vector.extract_strided_slice %105 {offsets = [0, 32], sizes = [64, 1], strides = [1, 1]} : vector<64x33xf32> to vector<64x1xf32>
    %108 = vector.extract_strided_slice %23 {offsets = [448, 0], sizes = [64, 33], strides = [1, 1]} : vector<768x33xf32> to vector<64x33xf32>
    %109 = vector.extract_strided_slice %108 {offsets = [0, 0], sizes = [64, 32], strides = [1, 1]} : vector<64x33xf32> to vector<64x32xf32>
    %110 = vector.extract_strided_slice %108 {offsets = [0, 32], sizes = [64, 1], strides = [1, 1]} : vector<64x33xf32> to vector<64x1xf32>
    %111 = arith.addf %11, %101 : vector<64x1xf32>
    %cst_30 = arith.constant 0.000000e+00 : f32
    %112 = vector.broadcast %cst_30 : f32 to vector<64x1xf32>
    %113 = arith.cmpf ogt, %111, %112 : vector<64x1xf32>
    %cst_31 = arith.constant 2.000000e-01 : f32
    %114 = vector.broadcast %cst_31 : f32 to vector<64x1xf32>
    %115 = arith.mulf %114, %111 : vector<64x1xf32>
    %116 = arith.select %113, %111, %115 : vector<64x1xi1>, vector<64x1xf32>
    %117 = arith.addf %11, %104 : vector<64x1xf32>
    %cst_32 = arith.constant 0.000000e+00 : f32
    %118 = vector.broadcast %cst_32 : f32 to vector<64x1xf32>
    %119 = arith.cmpf ogt, %117, %118 : vector<64x1xf32>
    %cst_33 = arith.constant 2.000000e-01 : f32
    %120 = vector.broadcast %cst_33 : f32 to vector<64x1xf32>
    %121 = arith.mulf %120, %117 : vector<64x1xf32>
    %122 = arith.select %119, %117, %121 : vector<64x1xi1>, vector<64x1xf32>
    %123 = arith.addf %11, %107 : vector<64x1xf32>
    %cst_34 = arith.constant 0.000000e+00 : f32
    %124 = vector.broadcast %cst_34 : f32 to vector<64x1xf32>
    %125 = arith.cmpf ogt, %123, %124 : vector<64x1xf32>
    %cst_35 = arith.constant 2.000000e-01 : f32
    %126 = vector.broadcast %cst_35 : f32 to vector<64x1xf32>
    %127 = arith.mulf %126, %123 : vector<64x1xf32>
    %128 = arith.select %125, %123, %127 : vector<64x1xi1>, vector<64x1xf32>
    %129 = arith.addf %11, %110 : vector<64x1xf32>
    %cst_36 = arith.constant 0.000000e+00 : f32
    %130 = vector.broadcast %cst_36 : f32 to vector<64x1xf32>
    %131 = arith.cmpf ogt, %129, %130 : vector<64x1xf32>
    %cst_37 = arith.constant 2.000000e-01 : f32
    %132 = vector.broadcast %cst_37 : f32 to vector<64x1xf32>
    %133 = arith.mulf %132, %129 : vector<64x1xf32>
    %134 = arith.select %131, %129, %133 : vector<64x1xi1>, vector<64x1xf32>
    %135 = arith.maximumf %116, %122 : vector<64x1xf32>
    %136 = arith.maximumf %135, %128 : vector<64x1xf32>
    %137 = arith.maximumf %136, %134 : vector<64x1xf32>
    %138 = arith.subf %116, %137 : vector<64x1xf32>
    %139 = math.exp %138 : vector<64x1xf32>
    %140 = arith.subf %122, %137 : vector<64x1xf32>
    %141 = math.exp %140 : vector<64x1xf32>
    %142 = arith.subf %128, %137 : vector<64x1xf32>
    %143 = math.exp %142 : vector<64x1xf32>
    %144 = arith.subf %134, %137 : vector<64x1xf32>
    %145 = math.exp %144 : vector<64x1xf32>
    %146 = arith.addf %139, %141 : vector<64x1xf32>
    %147 = arith.addf %146, %143 : vector<64x1xf32>
    %148 = arith.addf %147, %145 : vector<64x1xf32>
    %cst_38 = arith.constant 1.000000e+00 : f32
    %149 = vector.broadcast %cst_38 : f32 to vector<64x1xf32>
    %150 = arith.divf %149, %148 : vector<64x1xf32>
    %151 = arith.mulf %139, %150 : vector<64x1xf32>
    %152 = vector.broadcast %151 : vector<64x1xf32> to vector<64x32xf32>
    %153 = arith.mulf %152, %100 : vector<64x32xf32>
    %154 = arith.mulf %141, %150 : vector<64x1xf32>
    %155 = vector.broadcast %154 : vector<64x1xf32> to vector<64x32xf32>
    %156 = arith.mulf %155, %103 : vector<64x32xf32>
    %157 = arith.addf %153, %156 : vector<64x32xf32>
    %158 = arith.mulf %143, %150 : vector<64x1xf32>
    %159 = vector.broadcast %158 : vector<64x1xf32> to vector<64x32xf32>
    %160 = arith.mulf %159, %106 : vector<64x32xf32>
    %161 = arith.addf %157, %160 : vector<64x32xf32>
    %162 = arith.mulf %145, %150 : vector<64x1xf32>
    %163 = vector.broadcast %162 : vector<64x1xf32> to vector<64x32xf32>
    %164 = arith.mulf %163, %109 : vector<64x32xf32>
    %165 = arith.addf %161, %164 : vector<64x32xf32>
    %c2 = arith.constant 2 : index
    %166 = memref.load %arg2[%c2] : memref<8xf32, #tpu.memory_space<smem>>
    %cst_39 = arith.constant 2.500000e-01 : f32
    %167 = arith.mulf %166, %cst_39 : f32
    %168 = vector.broadcast %167 : f32 to vector<64x32xf32>
    %169 = arith.mulf %168, %165 : vector<64x32xf32>
    %170 = arith.addf %98, %169 : vector<64x32xf32>
    %171 = vector.extract_strided_slice %23 {offsets = [512, 0], sizes = [64, 33], strides = [1, 1]} : vector<768x33xf32> to vector<64x33xf32>
    %172 = vector.extract_strided_slice %171 {offsets = [0, 0], sizes = [64, 32], strides = [1, 1]} : vector<64x33xf32> to vector<64x32xf32>
    %173 = vector.extract_strided_slice %171 {offsets = [0, 32], sizes = [64, 1], strides = [1, 1]} : vector<64x33xf32> to vector<64x1xf32>
    %174 = vector.extract_strided_slice %23 {offsets = [576, 0], sizes = [64, 33], strides = [1, 1]} : vector<768x33xf32> to vector<64x33xf32>
    %175 = vector.extract_strided_slice %174 {offsets = [0, 0], sizes = [64, 32], strides = [1, 1]} : vector<64x33xf32> to vector<64x32xf32>
    %176 = vector.extract_strided_slice %174 {offsets = [0, 32], sizes = [64, 1], strides = [1, 1]} : vector<64x33xf32> to vector<64x1xf32>
    %177 = vector.extract_strided_slice %23 {offsets = [640, 0], sizes = [64, 33], strides = [1, 1]} : vector<768x33xf32> to vector<64x33xf32>
    %178 = vector.extract_strided_slice %177 {offsets = [0, 0], sizes = [64, 32], strides = [1, 1]} : vector<64x33xf32> to vector<64x32xf32>
    %179 = vector.extract_strided_slice %177 {offsets = [0, 32], sizes = [64, 1], strides = [1, 1]} : vector<64x33xf32> to vector<64x1xf32>
    %180 = vector.extract_strided_slice %23 {offsets = [704, 0], sizes = [64, 33], strides = [1, 1]} : vector<768x33xf32> to vector<64x33xf32>
    %181 = vector.extract_strided_slice %180 {offsets = [0, 0], sizes = [64, 32], strides = [1, 1]} : vector<64x33xf32> to vector<64x32xf32>
    %182 = vector.extract_strided_slice %180 {offsets = [0, 32], sizes = [64, 1], strides = [1, 1]} : vector<64x33xf32> to vector<64x1xf32>
    %183 = arith.addf %11, %173 : vector<64x1xf32>
    %cst_40 = arith.constant 0.000000e+00 : f32
    %184 = vector.broadcast %cst_40 : f32 to vector<64x1xf32>
    %185 = arith.cmpf ogt, %183, %184 : vector<64x1xf32>
    %cst_41 = arith.constant 2.000000e-01 : f32
    %186 = vector.broadcast %cst_41 : f32 to vector<64x1xf32>
    %187 = arith.mulf %186, %183 : vector<64x1xf32>
    %188 = arith.select %185, %183, %187 : vector<64x1xi1>, vector<64x1xf32>
    %189 = arith.addf %11, %176 : vector<64x1xf32>
    %cst_42 = arith.constant 0.000000e+00 : f32
    %190 = vector.broadcast %cst_42 : f32 to vector<64x1xf32>
    %191 = arith.cmpf ogt, %189, %190 : vector<64x1xf32>
    %cst_43 = arith.constant 2.000000e-01 : f32
    %192 = vector.broadcast %cst_43 : f32 to vector<64x1xf32>
    %193 = arith.mulf %192, %189 : vector<64x1xf32>
    %194 = arith.select %191, %189, %193 : vector<64x1xi1>, vector<64x1xf32>
    %195 = arith.addf %11, %179 : vector<64x1xf32>
    %cst_44 = arith.constant 0.000000e+00 : f32
    %196 = vector.broadcast %cst_44 : f32 to vector<64x1xf32>
    %197 = arith.cmpf ogt, %195, %196 : vector<64x1xf32>
    %cst_45 = arith.constant 2.000000e-01 : f32
    %198 = vector.broadcast %cst_45 : f32 to vector<64x1xf32>
    %199 = arith.mulf %198, %195 : vector<64x1xf32>
    %200 = arith.select %197, %195, %199 : vector<64x1xi1>, vector<64x1xf32>
    %201 = arith.addf %11, %182 : vector<64x1xf32>
    %cst_46 = arith.constant 0.000000e+00 : f32
    %202 = vector.broadcast %cst_46 : f32 to vector<64x1xf32>
    %203 = arith.cmpf ogt, %201, %202 : vector<64x1xf32>
    %cst_47 = arith.constant 2.000000e-01 : f32
    %204 = vector.broadcast %cst_47 : f32 to vector<64x1xf32>
    %205 = arith.mulf %204, %201 : vector<64x1xf32>
    %206 = arith.select %203, %201, %205 : vector<64x1xi1>, vector<64x1xf32>
    %207 = arith.maximumf %188, %194 : vector<64x1xf32>
    %208 = arith.maximumf %207, %200 : vector<64x1xf32>
    %209 = arith.maximumf %208, %206 : vector<64x1xf32>
    %210 = arith.subf %188, %209 : vector<64x1xf32>
    %211 = math.exp %210 : vector<64x1xf32>
    %212 = arith.subf %194, %209 : vector<64x1xf32>
    %213 = math.exp %212 : vector<64x1xf32>
    %214 = arith.subf %200, %209 : vector<64x1xf32>
    %215 = math.exp %214 : vector<64x1xf32>
    %216 = arith.subf %206, %209 : vector<64x1xf32>
    %217 = math.exp %216 : vector<64x1xf32>
    %218 = arith.addf %211, %213 : vector<64x1xf32>
    %219 = arith.addf %218, %215 : vector<64x1xf32>
    %220 = arith.addf %219, %217 : vector<64x1xf32>
    %cst_48 = arith.constant 1.000000e+00 : f32
    %221 = vector.broadcast %cst_48 : f32 to vector<64x1xf32>
    %222 = arith.divf %221, %220 : vector<64x1xf32>
    %223 = arith.mulf %211, %222 : vector<64x1xf32>
    %224 = vector.broadcast %223 : vector<64x1xf32> to vector<64x32xf32>
    %225 = arith.mulf %224, %172 : vector<64x32xf32>
    %226 = arith.mulf %213, %222 : vector<64x1xf32>
    %227 = vector.broadcast %226 : vector<64x1xf32> to vector<64x32xf32>
    %228 = arith.mulf %227, %175 : vector<64x32xf32>
    %229 = arith.addf %225, %228 : vector<64x32xf32>
    %230 = arith.mulf %215, %222 : vector<64x1xf32>
    %231 = vector.broadcast %230 : vector<64x1xf32> to vector<64x32xf32>
    %232 = arith.mulf %231, %178 : vector<64x32xf32>
    %233 = arith.addf %229, %232 : vector<64x32xf32>
    %234 = arith.mulf %217, %222 : vector<64x1xf32>
    %235 = vector.broadcast %234 : vector<64x1xf32> to vector<64x32xf32>
    %236 = arith.mulf %235, %181 : vector<64x32xf32>
    %237 = arith.addf %233, %236 : vector<64x32xf32>
    %c3 = arith.constant 3 : index
    %238 = memref.load %arg2[%c3] : memref<8xf32, #tpu.memory_space<smem>>
    %cst_49 = arith.constant 2.500000e-01 : f32
    %239 = arith.mulf %238, %cst_49 : f32
    %240 = vector.broadcast %239 : f32 to vector<64x32xf32>
    %241 = arith.mulf %240, %237 : vector<64x32xf32>
    %242 = arith.addf %170, %241 : vector<64x32xf32>
    %c0_50 = arith.constant 0 : index
    %c0_51 = arith.constant 0 : index
    %243 = vector.load %arg7[%c0_50, %c0_51] : memref<32x32xf32, #tpu.memory_space<vmem>>, vector<32x32xf32>
    %cst_52 = arith.constant dense<0.000000e+00> : vector<64x32xf32>
    %244 = tpu.matmul %242, %243, %cst_52 {dimension_numbers = #tpu.dot_dimension_numbers<[1], [0], [0], [1], [0, 0, 1, 1], [], []>, precision = #tpu.contract_precision<fp32>} : vector<64x32xf32>, vector<32x32xf32>, vector<64x32xf32> -> vector<64x32xf32>
    %c0_53 = arith.constant 0 : index
    %c0_54 = arith.constant 0 : index
    %245 = vector.load %arg8[%c0_53, %c0_54] : memref<1x32xf32, #tpu.memory_space<vmem>>, vector<1x32xf32>
    %246 = vector.broadcast %245 : vector<1x32xf32> to vector<64x32xf32>
    %247 = arith.addf %244, %246 : vector<64x32xf32>
    %c0_55 = arith.constant 0 : index
    %c0_56 = arith.constant 0 : index
    %248 = vector.load %arg9[%c0_55, %c0_56] : memref<32x2xf32, #tpu.memory_space<vmem>>, vector<32x2xf32>
    %cst_57 = arith.constant dense<0.000000e+00> : vector<64x2xf32>
    %249 = tpu.matmul %247, %248, %cst_57 {dimension_numbers = #tpu.dot_dimension_numbers<[1], [0], [0], [1], [0, 0, 1, 1], [], []>, precision = #tpu.contract_precision<fp32>} : vector<64x32xf32>, vector<32x2xf32>, vector<64x2xf32> -> vector<64x2xf32>
    %c0_58 = arith.constant 0 : index
    %c0_59 = arith.constant 0 : index
    %250 = vector.load %arg10[%c0_58, %c0_59] : memref<1x2xf32, #tpu.memory_space<vmem>>, vector<1x2xf32>
    %251 = vector.broadcast %250 : vector<1x2xf32> to vector<64x2xf32>
    %252 = arith.addf %249, %251 : vector<64x2xf32>
    %253 = vector.extract_strided_slice %252 {offsets = [0, 0], sizes = [64, 1], strides = [1, 1]} : vector<64x2xf32> to vector<64x1xf32>
    %254 = vector.extract_strided_slice %252 {offsets = [0, 1], sizes = [64, 1], strides = [1, 1]} : vector<64x2xf32> to vector<64x1xf32>
    %c0_60 = arith.constant 0 : index
    %c0_61 = arith.constant 0 : index
    %255 = vector.load %arg14[%c0_60, %c0_61] : memref<64x33xf32, #tpu.memory_space<vmem>>, vector<64x32xf32>
    tpu.vector_store %arg14[%c0_60, %c0_61], %247 {strides = array<i32>} : memref<64x33xf32, #tpu.memory_space<vmem>>, vector<64x32xf32>,
    %c0_62 = arith.constant 0 : index
    %c32_63 = arith.constant 32 : index
    %256 = vector.load %arg14[%c0_62, %c32_63] : memref<64x33xf32, #tpu.memory_space<vmem>>, vector<64x1xf32>
    tpu.vector_store %arg14[%c0_62, %c32_63], %254 {strides = array<i32>} : memref<64x33xf32, #tpu.memory_space<vmem>>, vector<64x1xf32>,
    %c0_64 = arith.constant 0 : index
    %c0_65 = arith.constant 0 : index
    %257 = vector.load %arg14[%c0_64, %c0_65] : memref<64x33xf32, #tpu.memory_space<vmem>>, vector<64x33xf32>
    %258 = arith.truncf %257 : vector<64x33xf32> to vector<64x33xbf16>
    %259 = arith.extf %258 : vector<64x33xbf16> to vector<64x33xf32>
    %260 = arith.subf %257, %259 : vector<64x33xf32>
    %261 = arith.truncf %260 : vector<64x33xf32> to vector<64x33xbf16>
    %c768 = arith.constant 768 : index
    %c0_66 = arith.constant 0 : index
    %262 = vector.load %arg1[%c768, %c0_66] : memref<1536x64xbf16, #tpu.memory_space<vmem>>, vector<768x64xbf16>
    %cst_67 = arith.constant dense<0.000000e+00> : vector<768x33xf32>
    %263 = tpu.matmul %262, %258, %cst_67 {dimension_numbers = #tpu.dot_dimension_numbers<[1], [0], [0], [1], [0, 0, 1, 1], [], []>} : vector<768x64xbf16>, vector<64x33xbf16>, vector<768x33xf32> -> vector<768x33xf32>
    %cst_68 = arith.constant dense<0.000000e+00> : vector<768x33xf32>
    %264 = tpu.matmul %262, %261, %cst_68 {dimension_numbers = #tpu.dot_dimension_numbers<[1], [0], [0], [1], [0, 0, 1, 1], [], []>} : vector<768x64xbf16>, vector<64x33xbf16>, vector<768x33xf32> -> vector<768x33xf32>
    %265 = arith.addf %263, %264 : vector<768x33xf32>
    %c4 = arith.constant 4 : index
    %266 = memref.load %arg2[%c4] : memref<8xf32, #tpu.memory_space<smem>>
    %267 = vector.broadcast %266 : f32 to vector<64x32xf32>
    %268 = arith.mulf %267, %247 : vector<64x32xf32>
    %269 = vector.extract_strided_slice %265 {offsets = [0, 0], sizes = [64, 33], strides = [1, 1]} : vector<768x33xf32> to vector<64x33xf32>
    %270 = vector.extract_strided_slice %269 {offsets = [0, 0], sizes = [64, 32], strides = [1, 1]} : vector<64x33xf32> to vector<64x32xf32>
    %271 = vector.extract_strided_slice %269 {offsets = [0, 32], sizes = [64, 1], strides = [1, 1]} : vector<64x33xf32> to vector<64x1xf32>
    %272 = vector.extract_strided_slice %265 {offsets = [64, 0], sizes = [64, 33], strides = [1, 1]} : vector<768x33xf32> to vector<64x33xf32>
    %273 = vector.extract_strided_slice %272 {offsets = [0, 0], sizes = [64, 32], strides = [1, 1]} : vector<64x33xf32> to vector<64x32xf32>
    %274 = vector.extract_strided_slice %272 {offsets = [0, 32], sizes = [64, 1], strides = [1, 1]} : vector<64x33xf32> to vector<64x1xf32>
    %275 = vector.extract_strided_slice %265 {offsets = [128, 0], sizes = [64, 33], strides = [1, 1]} : vector<768x33xf32> to vector<64x33xf32>
    %276 = vector.extract_strided_slice %275 {offsets = [0, 0], sizes = [64, 32], strides = [1, 1]} : vector<64x33xf32> to vector<64x32xf32>
    %277 = vector.extract_strided_slice %275 {offsets = [0, 32], sizes = [64, 1], strides = [1, 1]} : vector<64x33xf32> to vector<64x1xf32>
    %278 = vector.extract_strided_slice %265 {offsets = [192, 0], sizes = [64, 33], strides = [1, 1]} : vector<768x33xf32> to vector<64x33xf32>
    %279 = vector.extract_strided_slice %278 {offsets = [0, 0], sizes = [64, 32], strides = [1, 1]} : vector<64x33xf32> to vector<64x32xf32>
    %280 = vector.extract_strided_slice %278 {offsets = [0, 32], sizes = [64, 1], strides = [1, 1]} : vector<64x33xf32> to vector<64x1xf32>
    %281 = arith.addf %253, %271 : vector<64x1xf32>
    %cst_69 = arith.constant 0.000000e+00 : f32
    %282 = vector.broadcast %cst_69 : f32 to vector<64x1xf32>
    %283 = arith.cmpf ogt, %281, %282 : vector<64x1xf32>
    %cst_70 = arith.constant 2.000000e-01 : f32
    %284 = vector.broadcast %cst_70 : f32 to vector<64x1xf32>
    %285 = arith.mulf %284, %281 : vector<64x1xf32>
    %286 = arith.select %283, %281, %285 : vector<64x1xi1>, vector<64x1xf32>
    %287 = arith.addf %253, %274 : vector<64x1xf32>
    %cst_71 = arith.constant 0.000000e+00 : f32
    %288 = vector.broadcast %cst_71 : f32 to vector<64x1xf32>
    %289 = arith.cmpf ogt, %287, %288 : vector<64x1xf32>
    %cst_72 = arith.constant 2.000000e-01 : f32
    %290 = vector.broadcast %cst_72 : f32 to vector<64x1xf32>
    %291 = arith.mulf %290, %287 : vector<64x1xf32>
    %292 = arith.select %289, %287, %291 : vector<64x1xi1>, vector<64x1xf32>
    %293 = arith.addf %253, %277 : vector<64x1xf32>
    %cst_73 = arith.constant 0.000000e+00 : f32
    %294 = vector.broadcast %cst_73 : f32 to vector<64x1xf32>
    %295 = arith.cmpf ogt, %293, %294 : vector<64x1xf32>
    %cst_74 = arith.constant 2.000000e-01 : f32
    %296 = vector.broadcast %cst_74 : f32 to vector<64x1xf32>
    %297 = arith.mulf %296, %293 : vector<64x1xf32>
    %298 = arith.select %295, %293, %297 : vector<64x1xi1>, vector<64x1xf32>
    %299 = arith.addf %253, %280 : vector<64x1xf32>
    %cst_75 = arith.constant 0.000000e+00 : f32
    %300 = vector.broadcast %cst_75 : f32 to vector<64x1xf32>
    %301 = arith.cmpf ogt, %299, %300 : vector<64x1xf32>
    %cst_76 = arith.constant 2.000000e-01 : f32
    %302 = vector.broadcast %cst_76 : f32 to vector<64x1xf32>
    %303 = arith.mulf %302, %299 : vector<64x1xf32>
    %304 = arith.select %301, %299, %303 : vector<64x1xi1>, vector<64x1xf32>
    %305 = arith.maximumf %286, %292 : vector<64x1xf32>
    %306 = arith.maximumf %305, %298 : vector<64x1xf32>
    %307 = arith.maximumf %306, %304 : vector<64x1xf32>
    %308 = arith.subf %286, %307 : vector<64x1xf32>
    %309 = math.exp %308 : vector<64x1xf32>
    %310 = arith.subf %292, %307 : vector<64x1xf32>
    %311 = math.exp %310 : vector<64x1xf32>
    %312 = arith.subf %298, %307 : vector<64x1xf32>
    %313 = math.exp %312 : vector<64x1xf32>
    %314 = arith.subf %304, %307 : vector<64x1xf32>
    %315 = math.exp %314 : vector<64x1xf32>
    %316 = arith.addf %309, %311 : vector<64x1xf32>
    %317 = arith.addf %316, %313 : vector<64x1xf32>
    %318 = arith.addf %317, %315 : vector<64x1xf32>
    %cst_77 = arith.constant 1.000000e+00 : f32
    %319 = vector.broadcast %cst_77 : f32 to vector<64x1xf32>
    %320 = arith.divf %319, %318 : vector<64x1xf32>
    %321 = arith.mulf %309, %320 : vector<64x1xf32>
    %322 = vector.broadcast %321 : vector<64x1xf32> to vector<64x32xf32>
    %323 = arith.mulf %322, %270 : vector<64x32xf32>
    %324 = arith.mulf %311, %320 : vector<64x1xf32>
    %325 = vector.broadcast %324 : vector<64x1xf32> to vector<64x32xf32>
    %326 = arith.mulf %325, %273 : vector<64x32xf32>
    %327 = arith.addf %323, %326 : vector<64x32xf32>
    %328 = arith.mulf %313, %320 : vector<64x1xf32>
    %329 = vector.broadcast %328 : vector<64x1xf32> to vector<64x32xf32>
    %330 = arith.mulf %329, %276 : vector<64x32xf32>
    %331 = arith.addf %327, %330 : vector<64x32xf32>
    %332 = arith.mulf %315, %320 : vector<64x1xf32>
    %333 = vector.broadcast %332 : vector<64x1xf32> to vector<64x32xf32>
    %334 = arith.mulf %333, %279 : vector<64x32xf32>
    %335 = arith.addf %331, %334 : vector<64x32xf32>
    %c5 = arith.constant 5 : index
    %336 = memref.load %arg2[%c5] : memref<8xf32, #tpu.memory_space<smem>>
    %cst_78 = arith.constant 2.500000e-01 : f32
    %337 = arith.mulf %336, %cst_78 : f32
    %338 = vector.broadcast %337 : f32 to vector<64x32xf32>
    %339 = arith.mulf %338, %335 : vector<64x32xf32>
    %340 = arith.addf %268, %339 : vector<64x32xf32>
    %341 = vector.extract_strided_slice %265 {offsets = [256, 0], sizes = [64, 33], strides = [1, 1]} : vector<768x33xf32> to vector<64x33xf32>
    %342 = vector.extract_strided_slice %341 {offsets = [0, 0], sizes = [64, 32], strides = [1, 1]} : vector<64x33xf32> to vector<64x32xf32>
    %343 = vector.extract_strided_slice %341 {offsets = [0, 32], sizes = [64, 1], strides = [1, 1]} : vector<64x33xf32> to vector<64x1xf32>
    %344 = vector.extract_strided_slice %265 {offsets = [320, 0], sizes = [64, 33], strides = [1, 1]} : vector<768x33xf32> to vector<64x33xf32>
    %345 = vector.extract_strided_slice %344 {offsets = [0, 0], sizes = [64, 32], strides = [1, 1]} : vector<64x33xf32> to vector<64x32xf32>
    %346 = vector.extract_strided_slice %344 {offsets = [0, 32], sizes = [64, 1], strides = [1, 1]} : vector<64x33xf32> to vector<64x1xf32>
    %347 = vector.extract_strided_slice %265 {offsets = [384, 0], sizes = [64, 33], strides = [1, 1]} : vector<768x33xf32> to vector<64x33xf32>
    %348 = vector.extract_strided_slice %347 {offsets = [0, 0], sizes = [64, 32], strides = [1, 1]} : vector<64x33xf32> to vector<64x32xf32>
    %349 = vector.extract_strided_slice %347 {offsets = [0, 32], sizes = [64, 1], strides = [1, 1]} : vector<64x33xf32> to vector<64x1xf32>
    %350 = vector.extract_strided_slice %265 {offsets = [448, 0], sizes = [64, 33], strides = [1, 1]} : vector<768x33xf32> to vector<64x33xf32>
    %351 = vector.extract_strided_slice %350 {offsets = [0, 0], sizes = [64, 32], strides = [1, 1]} : vector<64x33xf32> to vector<64x32xf32>
    %352 = vector.extract_strided_slice %350 {offsets = [0, 32], sizes = [64, 1], strides = [1, 1]} : vector<64x33xf32> to vector<64x1xf32>
    %353 = arith.addf %253, %343 : vector<64x1xf32>
    %cst_79 = arith.constant 0.000000e+00 : f32
    %354 = vector.broadcast %cst_79 : f32 to vector<64x1xf32>
    %355 = arith.cmpf ogt, %353, %354 : vector<64x1xf32>
    %cst_80 = arith.constant 2.000000e-01 : f32
    %356 = vector.broadcast %cst_80 : f32 to vector<64x1xf32>
    %357 = arith.mulf %356, %353 : vector<64x1xf32>
    %358 = arith.select %355, %353, %357 : vector<64x1xi1>, vector<64x1xf32>
    %359 = arith.addf %253, %346 : vector<64x1xf32>
    %cst_81 = arith.constant 0.000000e+00 : f32
    %360 = vector.broadcast %cst_81 : f32 to vector<64x1xf32>
    %361 = arith.cmpf ogt, %359, %360 : vector<64x1xf32>
    %cst_82 = arith.constant 2.000000e-01 : f32
    %362 = vector.broadcast %cst_82 : f32 to vector<64x1xf32>
    %363 = arith.mulf %362, %359 : vector<64x1xf32>
    %364 = arith.select %361, %359, %363 : vector<64x1xi1>, vector<64x1xf32>
    %365 = arith.addf %253, %349 : vector<64x1xf32>
    %cst_83 = arith.constant 0.000000e+00 : f32
    %366 = vector.broadcast %cst_83 : f32 to vector<64x1xf32>
    %367 = arith.cmpf ogt, %365, %366 : vector<64x1xf32>
    %cst_84 = arith.constant 2.000000e-01 : f32
    %368 = vector.broadcast %cst_84 : f32 to vector<64x1xf32>
    %369 = arith.mulf %368, %365 : vector<64x1xf32>
    %370 = arith.select %367, %365, %369 : vector<64x1xi1>, vector<64x1xf32>
    %371 = arith.addf %253, %352 : vector<64x1xf32>
    %cst_85 = arith.constant 0.000000e+00 : f32
    %372 = vector.broadcast %cst_85 : f32 to vector<64x1xf32>
    %373 = arith.cmpf ogt, %371, %372 : vector<64x1xf32>
    %cst_86 = arith.constant 2.000000e-01 : f32
    %374 = vector.broadcast %cst_86 : f32 to vector<64x1xf32>
    %375 = arith.mulf %374, %371 : vector<64x1xf32>
    %376 = arith.select %373, %371, %375 : vector<64x1xi1>, vector<64x1xf32>
    %377 = arith.maximumf %358, %364 : vector<64x1xf32>
    %378 = arith.maximumf %377, %370 : vector<64x1xf32>
    %379 = arith.maximumf %378, %376 : vector<64x1xf32>
    %380 = arith.subf %358, %379 : vector<64x1xf32>
    %381 = math.exp %380 : vector<64x1xf32>
    %382 = arith.subf %364, %379 : vector<64x1xf32>
    %383 = math.exp %382 : vector<64x1xf32>
    %384 = arith.subf %370, %379 : vector<64x1xf32>
    %385 = math.exp %384 : vector<64x1xf32>
    %386 = arith.subf %376, %379 : vector<64x1xf32>
    %387 = math.exp %386 : vector<64x1xf32>
    %388 = arith.addf %381, %383 : vector<64x1xf32>
    %389 = arith.addf %388, %385 : vector<64x1xf32>
    %390 = arith.addf %389, %387 : vector<64x1xf32>
    %cst_87 = arith.constant 1.000000e+00 : f32
    %391 = vector.broadcast %cst_87 : f32 to vector<64x1xf32>
    %392 = arith.divf %391, %390 : vector<64x1xf32>
    %393 = arith.mulf %381, %392 : vector<64x1xf32>
    %394 = vector.broadcast %393 : vector<64x1xf32> to vector<64x32xf32>
    %395 = arith.mulf %394, %342 : vector<64x32xf32>
    %396 = arith.mulf %383, %392 : vector<64x1xf32>
    %397 = vector.broadcast %396 : vector<64x1xf32> to vector<64x32xf32>
    %398 = arith.mulf %397, %345 : vector<64x32xf32>
    %399 = arith.addf %395, %398 : vector<64x32xf32>
    %400 = arith.mulf %385, %392 : vector<64x1xf32>
    %401 = vector.broadcast %400 : vector<64x1xf32> to vector<64x32xf32>
    %402 = arith.mulf %401, %348 : vector<64x32xf32>
    %403 = arith.addf %399, %402 : vector<64x32xf32>
    %404 = arith.mulf %387, %392 : vector<64x1xf32>
    %405 = vector.broadcast %404 : vector<64x1xf32> to vector<64x32xf32>
    %406 = arith.mulf %405, %351 : vector<64x32xf32>
    %407 = arith.addf %403, %406 : vector<64x32xf32>
    %c6 = arith.constant 6 : index
    %408 = memref.load %arg2[%c6] : memref<8xf32, #tpu.memory_space<smem>>
    %cst_88 = arith.constant 2.500000e-01 : f32
    %409 = arith.mulf %408, %cst_88 : f32
    %410 = vector.broadcast %409 : f32 to vector<64x32xf32>
    %411 = arith.mulf %410, %407 : vector<64x32xf32>
    %412 = arith.addf %340, %411 : vector<64x32xf32>
    %413 = vector.extract_strided_slice %265 {offsets = [512, 0], sizes = [64, 33], strides = [1, 1]} : vector<768x33xf32> to vector<64x33xf32>
    %414 = vector.extract_strided_slice %413 {offsets = [0, 0], sizes = [64, 32], strides = [1, 1]} : vector<64x33xf32> to vector<64x32xf32>
    %415 = vector.extract_strided_slice %413 {offsets = [0, 32], sizes = [64, 1], strides = [1, 1]} : vector<64x33xf32> to vector<64x1xf32>
    %416 = vector.extract_strided_slice %265 {offsets = [576, 0], sizes = [64, 33], strides = [1, 1]} : vector<768x33xf32> to vector<64x33xf32>
    %417 = vector.extract_strided_slice %416 {offsets = [0, 0], sizes = [64, 32], strides = [1, 1]} : vector<64x33xf32> to vector<64x32xf32>
    %418 = vector.extract_strided_slice %416 {offsets = [0, 32], sizes = [64, 1], strides = [1, 1]} : vector<64x33xf32> to vector<64x1xf32>
    %419 = vector.extract_strided_slice %265 {offsets = [640, 0], sizes = [64, 33], strides = [1, 1]} : vector<768x33xf32> to vector<64x33xf32>
    %420 = vector.extract_strided_slice %419 {offsets = [0, 0], sizes = [64, 32], strides = [1, 1]} : vector<64x33xf32> to vector<64x32xf32>
    %421 = vector.extract_strided_slice %419 {offsets = [0, 32], sizes = [64, 1], strides = [1, 1]} : vector<64x33xf32> to vector<64x1xf32>
    %422 = vector.extract_strided_slice %265 {offsets = [704, 0], sizes = [64, 33], strides = [1, 1]} : vector<768x33xf32> to vector<64x33xf32>
    %423 = vector.extract_strided_slice %422 {offsets = [0, 0], sizes = [64, 32], strides = [1, 1]} : vector<64x33xf32> to vector<64x32xf32>
    %424 = vector.extract_strided_slice %422 {offsets = [0, 32], sizes = [64, 1], strides = [1, 1]} : vector<64x33xf32> to vector<64x1xf32>
    %425 = arith.addf %253, %415 : vector<64x1xf32>
    %cst_89 = arith.constant 0.000000e+00 : f32
    %426 = vector.broadcast %cst_89 : f32 to vector<64x1xf32>
    %427 = arith.cmpf ogt, %425, %426 : vector<64x1xf32>
    %cst_90 = arith.constant 2.000000e-01 : f32
    %428 = vector.broadcast %cst_90 : f32 to vector<64x1xf32>
    %429 = arith.mulf %428, %425 : vector<64x1xf32>
    %430 = arith.select %427, %425, %429 : vector<64x1xi1>, vector<64x1xf32>
    %431 = arith.addf %253, %418 : vector<64x1xf32>
    %cst_91 = arith.constant 0.000000e+00 : f32
    %432 = vector.broadcast %cst_91 : f32 to vector<64x1xf32>
    %433 = arith.cmpf ogt, %431, %432 : vector<64x1xf32>
    %cst_92 = arith.constant 2.000000e-01 : f32
    %434 = vector.broadcast %cst_92 : f32 to vector<64x1xf32>
    %435 = arith.mulf %434, %431 : vector<64x1xf32>
    %436 = arith.select %433, %431, %435 : vector<64x1xi1>, vector<64x1xf32>
    %437 = arith.addf %253, %421 : vector<64x1xf32>
    %cst_93 = arith.constant 0.000000e+00 : f32
    %438 = vector.broadcast %cst_93 : f32 to vector<64x1xf32>
    %439 = arith.cmpf ogt, %437, %438 : vector<64x1xf32>
    %cst_94 = arith.constant 2.000000e-01 : f32
    %440 = vector.broadcast %cst_94 : f32 to vector<64x1xf32>
    %441 = arith.mulf %440, %437 : vector<64x1xf32>
    %442 = arith.select %439, %437, %441 : vector<64x1xi1>, vector<64x1xf32>
    %443 = arith.addf %253, %424 : vector<64x1xf32>
    %cst_95 = arith.constant 0.000000e+00 : f32
    %444 = vector.broadcast %cst_95 : f32 to vector<64x1xf32>
    %445 = arith.cmpf ogt, %443, %444 : vector<64x1xf32>
    %cst_96 = arith.constant 2.000000e-01 : f32
    %446 = vector.broadcast %cst_96 : f32 to vector<64x1xf32>
    %447 = arith.mulf %446, %443 : vector<64x1xf32>
    %448 = arith.select %445, %443, %447 : vector<64x1xi1>, vector<64x1xf32>
    %449 = arith.maximumf %430, %436 : vector<64x1xf32>
    %450 = arith.maximumf %449, %442 : vector<64x1xf32>
    %451 = arith.maximumf %450, %448 : vector<64x1xf32>
    %452 = arith.subf %430, %451 : vector<64x1xf32>
    %453 = math.exp %452 : vector<64x1xf32>
    %454 = arith.subf %436, %451 : vector<64x1xf32>
    %455 = math.exp %454 : vector<64x1xf32>
    %456 = arith.subf %442, %451 : vector<64x1xf32>
    %457 = math.exp %456 : vector<64x1xf32>
    %458 = arith.subf %448, %451 : vector<64x1xf32>
    %459 = math.exp %458 : vector<64x1xf32>
    %460 = arith.addf %453, %455 : vector<64x1xf32>
    %461 = arith.addf %460, %457 : vector<64x1xf32>
    %462 = arith.addf %461, %459 : vector<64x1xf32>
    %cst_97 = arith.constant 1.000000e+00 : f32
    %463 = vector.broadcast %cst_97 : f32 to vector<64x1xf32>
    %464 = arith.divf %463, %462 : vector<64x1xf32>
    %465 = arith.mulf %453, %464 : vector<64x1xf32>
    %466 = vector.broadcast %465 : vector<64x1xf32> to vector<64x32xf32>
    %467 = arith.mulf %466, %414 : vector<64x32xf32>
    %468 = arith.mulf %455, %464 : vector<64x1xf32>
    %469 = vector.broadcast %468 : vector<64x1xf32> to vector<64x32xf32>
    %470 = arith.mulf %469, %417 : vector<64x32xf32>
    %471 = arith.addf %467, %470 : vector<64x32xf32>
    %472 = arith.mulf %457, %464 : vector<64x1xf32>
    %473 = vector.broadcast %472 : vector<64x1xf32> to vector<64x32xf32>
    %474 = arith.mulf %473, %420 : vector<64x32xf32>
    %475 = arith.addf %471, %474 : vector<64x32xf32>
    %476 = arith.mulf %459, %464 : vector<64x1xf32>
    %477 = vector.broadcast %476 : vector<64x1xf32> to vector<64x32xf32>
    %478 = arith.mulf %477, %423 : vector<64x32xf32>
    %479 = arith.addf %475, %478 : vector<64x32xf32>
    %c7 = arith.constant 7 : index
    %480 = memref.load %arg2[%c7] : memref<8xf32, #tpu.memory_space<smem>>
    %cst_98 = arith.constant 2.500000e-01 : f32
    %481 = arith.mulf %480, %cst_98 : f32
    %482 = vector.broadcast %481 : f32 to vector<64x32xf32>
    %483 = arith.mulf %482, %479 : vector<64x32xf32>
    %484 = arith.addf %412, %483 : vector<64x32xf32>
    %c0_99 = arith.constant 0 : index
    %c0_100 = arith.constant 0 : index
    %485 = vector.load %arg11[%c0_99, %c0_100] : memref<32x4xf32, #tpu.memory_space<vmem>>, vector<32x4xf32>
    %cst_101 = arith.constant dense<0.000000e+00> : vector<64x4xf32>
    %486 = tpu.matmul %484, %485, %cst_101 {dimension_numbers = #tpu.dot_dimension_numbers<[1], [0], [0], [1], [0, 0, 1, 1], [], []>, precision = #tpu.contract_precision<fp32>} : vector<64x32xf32>, vector<32x4xf32>, vector<64x4xf32> -> vector<64x4xf32>
    %c0_102 = arith.constant 0 : index
    %c0_103 = arith.constant 0 : index
    %487 = vector.load %arg12[%c0_102, %c0_103] : memref<1x4xf32, #tpu.memory_space<vmem>>, vector<1x4xf32>
    %488 = vector.broadcast %487 : vector<1x4xf32> to vector<64x4xf32>
    %489 = arith.addf %486, %488 : vector<64x4xf32>
    %cst_104 = arith.constant dense<0xFF800000> : vector<64xf32>
    %490 = vector.multi_reduction <maximumf>, %489, %cst_104 [1] : vector<64x4xf32> to vector<64xf32>
    %491 = vector.shape_cast %490 : vector<64xf32> to vector<64x1xf32>
    %492 = vector.broadcast %491 : vector<64x1xf32> to vector<64x4xf32>
    %493 = arith.subf %489, %492 : vector<64x4xf32>
    %494 = math.exp %493 : vector<64x4xf32>
    %cst_105 = arith.constant dense<0.000000e+00> : vector<64xf32>
    %495 = vector.multi_reduction <add>, %494, %cst_105 [1] : vector<64x4xf32> to vector<64xf32>
    %496 = vector.shape_cast %495 : vector<64xf32> to vector<64x1xf32>
    %497 = math.log %496 : vector<64x1xf32>
    %498 = vector.broadcast %497 : vector<64x1xf32> to vector<64x4xf32>
    %499 = arith.subf %493, %498 : vector<64x4xf32>
    %c0_106 = arith.constant 0 : index
    %c0_107 = arith.constant 0 : index
    %500 = vector.load %arg13[%c0_106, %c0_107] : memref<64x4xf32, #tpu.memory_space<vmem>>, vector<64x4xf32>
    tpu.vector_store %arg13[%c0_106, %c0_107], %499 {strides = array<i32>} : memref<64x4xf32, #tpu.memory_space<vmem>>, vector<64x4xf32>,
    return
  }
}

</mosaic_0001>

<llo_original>
// kernel: tpu_custom_call.1
$region0: #{tpu_custom_call.1}
  #allocation0 [shape = 'u32[]', space=smem, size = 0x4, offset = 0x4, fixed_abs, tag = 'smem constant byte address 0x4 - core index']
  #allocation1 [shape = 'u32[144,128]{1,0:T(1,128)}', space=vmem, size = 0x12000, scoped, tag = 'internal scratch']
  #allocation2 [shape = 'f32[64,33]{1,0:T(8,128)}', space=vmem, size = 0x8000, scoped, tag = 'scratch operand']
  %s0 = inlined_call_operand.vmem [shape: f32[64,16], index: 0, kind: input, shape index: {}]
  %s1 = inlined_call_operand.vmem [shape: bf16[1536,64], index: 1, kind: input, shape index: {}]
  %s2 = inlined_call_operand.vmem [shape: f32[8], index: 2, kind: input, shape index: {}]
  %s3 = inlined_call_operand.vmem [shape: f32[16,32], index: 3, kind: input, shape index: {}]
  %s4 = inlined_call_operand.vmem [shape: f32[1,32], index: 4, kind: input, shape index: {}]
  %s5 = inlined_call_operand.vmem [shape: f32[32,2], index: 5, kind: input, shape index: {}]
  %s6 = inlined_call_operand.vmem [shape: f32[1,2], index: 6, kind: input, shape index: {}]
  %s7 = inlined_call_operand.vmem [shape: f32[32,32], index: 7, kind: input, shape index: {}]
  %s8 = inlined_call_operand.vmem [shape: f32[1,32], index: 8, kind: input, shape index: {}]
  %s9 = inlined_call_operand.vmem [shape: f32[32,2], index: 9, kind: input, shape index: {}]
  %s10 = inlined_call_operand.vmem [shape: f32[1,2], index: 10, kind: input, shape index: {}]
  %s11 = inlined_call_operand.vmem [shape: f32[32,4], index: 11, kind: input, shape index: {}]
  %s12 = inlined_call_operand.vmem [shape: f32[1,4], index: 12, kind: input, shape index: {}]
  %s13 = inlined_call_operand.vmem [shape: f32[64,4], index: 13, kind: output, shape index: {}]
  %s14 = sld [smem:[#allocation0]]
  $region66: #{tpu_custom_call.1} parent=0
    _
  %s16 = ssub.s32 1, %s14
  %s17 = scalar_select 0, %s16, %s14
  $region1: #{tpu_custom_call.1} parent=0
    #allocation3 [shape = 'u8[512]{0}', space=smem, size = 0x200, scoped, tag = 'input window, operand 2, single buffered']
    #allocation4 [shape = 's32[1]{0}', space=sflag, size = 0x4, scoped, tag = 'scoped memory for tpu_custom_call.1']
    %18 = vsyncpa [#allocation4], 0
    // Predicated region
    $region2: #{tpu_custom_call.1} parent=1 // pred_check
      _
    $region3: #{tpu_custom_call.1} parent=1 // pred_check_branch
      %20 = sbr.rel (0) target = $region5
    $region4: #{tpu_custom_call.1} parent=1 // pred_region
      _
    $region5: #{tpu_custom_call.1} parent=1 // pred_fallthru
      _
    // Predicated region
    $region6: #{tpu_custom_call.1} parent=1 // pred_check
      _
    $region7: #{tpu_custom_call.1} parent=1 // pred_check_branch
      %22 = sbr.rel (0) target = $region9
    $region8: #{tpu_custom_call.1} parent=1 // pred_region
      _
    $region9: #{tpu_custom_call.1} parent=1 // pred_fallthru
      _
    // Predicated region
    $region10: #{tpu_custom_call.1} parent=1 // pred_check
      _
    $region11: #{tpu_custom_call.1} parent=1 // pred_check_branch
      %24 = sbr.rel (0) target = $region13
    $region12: #{tpu_custom_call.1} parent=1 // pred_region
      %s26 = ssub.s32 16, 16
      %27 = vsyncadd [#allocation4], %s26
      %s29 = sshll.u32 %s2, 4
      %s30 = int_to_ptr.vmem [resolvable:$true] %s29
      %32 = dma.vmem_to_smem %s30, 16, [#allocation3], [#allocation4]
    $region13: #{tpu_custom_call.1} parent=1 // pred_fallthru
      _
    // Predicated region
    $region14: #{tpu_custom_call.1} parent=1 // pred_check
      _
    $region15: #{tpu_custom_call.1} parent=1 // pred_check_branch
      %34 = sbr.rel (0) target = $region17
    $region16: #{tpu_custom_call.1} parent=1 // pred_region
      _
    $region17: #{tpu_custom_call.1} parent=1 // pred_fallthru
      _
    // Predicated region
    $region18: #{tpu_custom_call.1} parent=1 // pred_check
      _
    $region19: #{tpu_custom_call.1} parent=1 // pred_check_branch
      %36 = sbr.rel (0) target = $region21
    $region20: #{tpu_custom_call.1} parent=1 // pred_region
      _
    $region21: #{tpu_custom_call.1} parent=1 // pred_fallthru
      _
    // Predicated region
    $region22: #{tpu_custom_call.1} parent=1 // pred_check
      _
    $region23: #{tpu_custom_call.1} parent=1 // pred_check_branch
      %38 = sbr.rel (0) target = $region25
    $region24: #{tpu_custom_call.1} parent=1 // pred_region
      _
    $region25: #{tpu_custom_call.1} parent=1 // pred_fallthru
      _
    // Predicated region
    $region26: #{tpu_custom_call.1} parent=1 // pred_check
      _
    $region27: #{tpu_custom_call.1} parent=1 // pred_check_branch
      %40 = sbr.rel (0) target = $region29
    $region28: #{tpu_custom_call.1} parent=1 // pred_region
      _
    $region29: #{tpu_custom_call.1} parent=1 // pred_fallthru
      _
    // Predicated region
    $region30: #{tpu_custom_call.1} parent=1 // pred_check
      _
    $region31: #{tpu_custom_call.1} parent=1 // pred_check_branch
      %42 = sbr.rel (0) target = $region33
    $region32: #{tpu_custom_call.1} parent=1 // pred_region
      _
    $region33: #{tpu_custom_call.1} parent=1 // pred_fallthru
      _
    // Predicated region
    $region34: #{tpu_custom_call.1} parent=1 // pred_check
      _
    $region35: #{tpu_custom_call.1} parent=1 // pred_check_branch
      %44 = sbr.rel (0) target = $region37
    $region36: #{tpu_custom_call.1} parent=1 // pred_region
      _
    $region37: #{tpu_custom_call.1} parent=1 // pred_fallthru
      _
    // Predicated region
    $region38: #{tpu_custom_call.1} parent=1 // pred_check
      _
    $region39: #{tpu_custom_call.1} parent=1 // pred_check_branch
      %46 = sbr.rel (0) target = $region41
    $region40: #{tpu_custom_call.1} parent=1 // pred_region
      _
    $region41: #{tpu_custom_call.1} parent=1 // pred_fallthru
      _
    // Predicated region
    $region42: #{tpu_custom_call.1} parent=1 // pred_check
      _
    $region43: #{tpu_custom_call.1} parent=1 // pred_check_branch
      %48 = sbr.rel (0) target = $region45
    $region44: #{tpu_custom_call.1} parent=1 // pred_region
      _
    $region45: #{tpu_custom_call.1} parent=1 // pred_fallthru
      _
    // Predicated region
    $region46: #{tpu_custom_call.1} parent=1 // pred_check
      _
    $region47: #{tpu_custom_call.1} parent=1 // pred_check_branch
      %50 = sbr.rel (0) target = $region49
    $region48: #{tpu_custom_call.1} parent=1 // pred_region
      _
    $region49: #{tpu_custom_call.1} parent=1 // pred_fallthru
      _
    // Predicated region
    $region50: #{tpu_custom_call.1} parent=1 // pred_check
      _
    $region51: #{tpu_custom_call.1} parent=1 // pred_check_branch
      %52 = sbr.rel (0) target = $region53
    $region52: #{tpu_custom_call.1} parent=1 // pred_region
      _
    $region53: #{tpu_custom_call.1} parent=1 // pred_fallthru
      _
    // Predicated region
    $region54: #{tpu_custom_call.1} parent=1 // pred_check
      _
    $region55: #{tpu_custom_call.1} parent=1 // pred_check_branch
      %54 = sbr.rel (0) target = $region57
    $region56: #{tpu_custom_call.1} parent=1 // pred_region
      %55 = dma.done [#allocation4], 16
    $region57: #{tpu_custom_call.1} parent=1 // pred_fallthru
      _
    %56 = sfence
    %v58 = vld [vmem:[%s0] sm:$0xff]
    %v59 = vld [vmem:[%s0 + $0x8] sm:$0xff]
    %v60 = vld [vmem:[%s0 + $0x10] sm:$0xff]
    %v61 = vld [vmem:[%s0 + $0x18] sm:$0xff]
    %v62 = vld [vmem:[%s0 + $0x20] sm:$0xff]
    %v63 = vld [vmem:[%s0 + $0x28] sm:$0xff]
    %v64 = vld [vmem:[%s0 + $0x30] sm:$0xff]
    %v65 = vld [vmem:[%s0 + $0x38] sm:$0xff]
    %v66 = vld [vmem:[%s3] sm:$0xff]
    %v67 = vld [vmem:[%s3 + $0x8] sm:$0xff]
    %v68 = vld [vmem:[%s4] sm:$0x1]
    %v70 = vlaneseq
    %v71 = vshrl.u32 %v70, 7
    %v72 = vsub.s32 0, %v71
    %v73 = vrot.slane %v68, %v72
    %vm75 = vcmask 130048
    %v77 = vsel %vm75, %v58, 0
    %v80 = vsel %vm75, %v59, 0
    %v83 = vsel %vm75, %v60, 0
    %v86 = vsel %vm75, %v61, 0
    %v89 = vsel %vm75, %v62, 0
    %v92 = vsel %vm75, %v63, 0
    %v95 = vsel %vm75, %v64, 0
    %v98 = vsel %vm75, %v65, 0
    %100 = vmatprep.subr.mxu0 0.0
    %101 = vmatpush1.msra.mxu0 0.0
    %102 = vmatprep.subr.mxu0 0.0
    %103 = vmatpush1.msra.mxu0 0.0
    %104 = vmatprep.subr.mxu0 0.0
    %105 = vmatpush1.msra.mxu0 0.0
    %106 = vmatprep.subr.mxu0 0.0
    %107 = vmatpush1.msra.mxu0 0.0
    %108 = vmatprep.subr.mxu0 0.0
    %109 = vmatpush1.msra.mxu0 0.0
    %110 = vmatprep.subr.mxu0 0.0
    %111 = vmatpush1.msra.mxu0 0.0
    %112 = vmatprep.subr.mxu0 0.0
    %113 = vmatpush1.msra.mxu0 0.0
    %114 = vmatprep.subr.mxu0 0.0
    %115 = vmatpush1.msra.mxu0 0.0
    %116 = vmatprep.subr.mxu0 0.0
    %117 = vmatpush1.msra.mxu0 0.0
    %118 = vmatprep.subr.mxu0 0.0
    %119 = vmatpush1.msra.mxu0 0.0
    %120 = vmatprep.subr.mxu0 0.0
    %121 = vmatpush1.msra.mxu0 0.0
    %122 = vmatprep.subr.mxu0 0.0
    %123 = vmatpush1.msra.mxu0 0.0
    %124 = vmatprep.subr.mxu0 0.0
    %125 = vmatpush1.msra.mxu0 0.0
    %126 = vmatprep.subr.mxu0 0.0
    %127 = vmatpush1.msra.mxu0 0.0
    %128 = vmatprep.subr.mxu0 0.0
    %v129 = vand.u32 %v67, 4294901760
    %130 = vmatpush1.msra.mxu0 %v129
    %131 = vmatprep.subr.mxu0 0.0
    %v132 = vand.u32 %v66, 4294901760
    %133 = vmatpush1.msra.mxu0 %v132
    %134 = vmatprep.subr.mxu0 0.0
    %135 = vmatpush2.msra.mxu0 0.0
    %136 = vmatprep.subr.mxu0 0.0
    %137 = vmatpush2.msra.mxu0 0.0
    %138 = vmatprep.subr.mxu0 0.0
    %139 = vmatpush2.msra.mxu0 0.0
    %140 = vmatprep.subr.mxu0 0.0
    %141 = vmatpush2.msra.mxu0 0.0
    %142 = vmatprep.subr.mxu0 0.0
    %143 = vmatpush2.msra.mxu0 0.0
    %144 = vmatprep.subr.mxu0 0.0
    %145 = vmatpush2.msra.mxu0 0.0
    %146 = vmatprep.subr.mxu0 0.0
    %147 = vmatpush2.msra.mxu0 0.0
    %148 = vmatprep.subr.mxu0 0.0
    %149 = vmatpush2.msra.mxu0 0.0
    %150 = vmatprep.subr.mxu0 0.0
    %151 = vmatpush2.msra.mxu0 0.0
    %152 = vmatprep.subr.mxu0 0.0
    %153 = vmatpush2.msra.mxu0 0.0
    %154 = vmatprep.subr.mxu0 0.0
    %155 = vmatpush2.msra.mxu0 0.0
    %156 = vmatprep.subr.mxu0 0.0
    %157 = vmatpush2.msra.mxu0 0.0
    %158 = vmatprep.subr.mxu0 0.0
    %159 = vmatpush2.msra.mxu0 0.0
    %160 = vmatprep.subr.mxu0 0.0
    %161 = vmatpush2.msra.mxu0 0.0
    %162 = vmatprep.subr.mxu0 0.0
    %163 = vmatpush2.msra.mxu0 0.0
    %164 = vmatprep.subr.mxu0 0.0
    %165 = vmatpush2.msra.mxu0 0.0
    %166 = vmatprep.mubr.f32.mxu0 0.0
    %v167 = vand.u32 %v77, 4294901760
    %v168 = vsub.f32 %v77, %v167
    %v169 = vand.u32 %v168, 4294901760
    %v170 = vsub.f32 %v168, %v169
    %v171 = vand.u32 %v170, 4294901760
    %172 = vmatmul.mubr.f32.gmra.mxu0 %v171
    %v173 = vpop.f32.mrf.mxu0
    %v174 = vadd.f32 %v73, %v173
    %v175 = vpop.f32.mrf.mxu0
    %176 = vmatprep.mubr.f32.mxu0 0.0
    %v177 = vand.u32 %v80, 4294901760
    %v178 = vsub.f32 %v80, %v177
    %v179 = vand.u32 %v178, 4294901760
    %v180 = vsub.f32 %v178, %v179
    %v181 = vand.u32 %v180, 4294901760
    %182 = vmatmul.mubr.f32.gmra.mxu0 %v181
    %v183 = vpop.f32.mrf.mxu0
    %v184 = vadd.f32 %v73, %v183
    %v185 = vpop.f32.mrf.mxu0
    %186 = vmatprep.mubr.f32.mxu0 0.0
    %v187 = vand.u32 %v83, 4294901760
    %v188 = vsub.f32 %v83, %v187
    %v189 = vand.u32 %v188, 4294901760
    %v190 = vsub.f32 %v188, %v189
    %v191 = vand.u32 %v190, 4294901760
    %192 = vmatmul.mubr.f32.gmra.mxu0 %v191
    %v193 = vpop.f32.mrf.mxu0
    %v194 = vadd.f32 %v73, %v193
    %v195 = vpop.f32.mrf.mxu0
    %196 = vmatprep.mubr.f32.mxu0 0.0
    %v197 = vand.u32 %v86, 4294901760
    %v198 = vsub.f32 %v86, %v197
    %v199 = vand.u32 %v198, 4294901760
    %v200 = vsub.f32 %v198, %v199
    %v201 = vand.u32 %v200, 4294901760
    %202 = vmatmul.mubr.f32.gmra.mxu0 %v201
    %v203 = vpop.f32.mrf.mxu0
    %v204 = vadd.f32 %v73, %v203
    %v205 = vpop.f32.mrf.mxu0
    %206 = vmatprep.mubr.f32.mxu0 0.0
    %v207 = vand.u32 %v89, 4294901760
    %v208 = vsub.f32 %v89, %v207
    %v209 = vand.u32 %v208, 4294901760
    %v210 = vsub.f32 %v208, %v209
    %v211 = vand.u32 %v210, 4294901760
    %212 = vmatmul.mubr.f32.gmra.mxu0 %v211
    %v213 = vpop.f32.mrf.mxu0
    %v214 = vadd.f32 %v73, %v213
    %v215 = vpop.f32.mrf.mxu0
    %216 = vmatprep.mubr.f32.mxu0 0.0
    %v217 = vand.u32 %v92, 4294901760
    %v218 = vsub.f32 %v92, %v217
    %v219 = vand.u32 %v218, 4294901760
    %v220 = vsub.f32 %v218, %v219
    %v221 = vand.u32 %v220, 4294901760
    %222 = vmatmul.mubr.f32.gmra.mxu0 %v221
    %v223 = vpop.f32.mrf.mxu0
    %v224 = vadd.f32 %v73, %v223
    %v225 = vpop.f32.mrf.mxu0
    %226 = vmatprep.mubr.f32.mxu0 0.0
    %v227 = vand.u32 %v95, 4294901760
    %v228 = vsub.f32 %v95, %v227
    %v229 = vand.u32 %v228, 4294901760
    %v230 = vsub.f32 %v228, %v229
    %v231 = vand.u32 %v230, 4294901760
    %232 = vmatmul.mubr.f32.gmra.mxu0 %v231
    %v233 = vpop.f32.mrf.mxu0
    %v234 = vadd.f32 %v73, %v233
    %v235 = vpop.f32.mrf.mxu0
    %236 = vmatprep.mubr.f32.mxu0 0.0
    %v237 = vand.u32 %v98, 4294901760
    %v238 = vsub.f32 %v98, %v237
    %v239 = vand.u32 %v238, 4294901760
    %v240 = vsub.f32 %v238, %v239
    %v241 = vand.u32 %v240, 4294901760
    %242 = vmatmul.mubr.f32.gmra.mxu0 %v241
    %v243 = vpop.f32.mrf.mxu0
    %v244 = vadd.f32 %v73, %v243
    %v245 = vpop.f32.mrf.mxu0
    %246 = vdwg.mxu0
    %247 = vmatprep.subr.mxu0 0.0
    %248 = vmatpush1.msra.mxu0 0.0
    %249 = vmatprep.subr.mxu0 0.0
    %250 = vmatpush1.msra.mxu0 0.0
    %251 = vmatprep.subr.mxu0 0.0
    %252 = vmatpush1.msra.mxu0 0.0
    %253 = vmatprep.subr.mxu0 0.0
    %254 = vmatpush1.msra.mxu0 0.0
    %255 = vmatprep.subr.mxu0 0.0
    %256 = vmatpush1.msra.mxu0 0.0
    %257 = vmatprep.subr.mxu0 0.0
    %258 = vmatpush1.msra.mxu0 0.0
    %259 = vmatprep.subr.mxu0 0.0
    %260 = vmatpush1.msra.mxu0 0.0
    %261 = vmatprep.subr.mxu0 0.0
    %262 = vmatpush1.msra.mxu0 0.0
    %263 = vmatprep.subr.mxu0 0.0
    %264 = vmatpush1.msra.mxu0 0.0
    %265 = vmatprep.subr.mxu0 0.0
    %266 = vmatpush1.msra.mxu0 0.0
    %267 = vmatprep.subr.mxu0 0.0
    %268 = vmatpush1.msra.mxu0 0.0
    %269 = vmatprep.subr.mxu0 0.0
    %270 = vmatpush1.msra.mxu0 0.0
    %271 = vmatprep.subr.mxu0 0.0
    %272 = vmatpush1.msra.mxu0 0.0
    %273 = vmatprep.subr.mxu0 0.0
    %274 = vmatpush1.msra.mxu0 0.0
    %275 = vmatprep.subr.mxu0 0.0
    %v276 = vand.u32 %v67, 4294901760
    %v277 = vsub.f32 %v67, %v276
    %v278 = vand.u32 %v277, 4294901760
    %v279 = vsub.f32 %v277, %v278
    %v280 = vand.u32 %v279, 4294901760
    %281 = vmatpush1.msra.mxu0 %v280
    %282 = vmatprep.subr.mxu0 0.0
    %v283 = vand.u32 %v66, 4294901760
    %v284 = vsub.f32 %v66, %v283
    %v285 = vand.u32 %v284, 4294901760
    %v286 = vsub.f32 %v284, %v285
    %v287 = vand.u32 %v286, 4294901760
    %288 = vmatpush1.msra.mxu0 %v287
    %289 = vmatprep.subr.mxu0 0.0
    %290 = vmatpush2.msra.mxu0 0.0
    %291 = vmatprep.subr.mxu0 0.0
    %292 = vmatpush2.msra.mxu0 0.0
    %293 = vmatprep.subr.mxu0 0.0
    %294 = vmatpush2.msra.mxu0 0.0
    %295 = vmatprep.subr.mxu0 0.0
    %296 = vmatpush2.msra.mxu0 0.0
    %297 = vmatprep.subr.mxu0 0.0
    %298 = vmatpush2.msra.mxu0 0.0
    %299 = vmatprep.subr.mxu0 0.0
    %300 = vmatpush2.msra.mxu0 0.0
    %301 = vmatprep.subr.mxu0 0.0
    %302 = vmatpush2.msra.mxu0 0.0
    %303 = vmatprep.subr.mxu0 0.0
    %304 = vmatpush2.msra.mxu0 0.0
    %305 = vmatprep.subr.mxu0 0.0
    %306 = vmatpush2.msra.mxu0 0.0
    %307 = vmatprep.subr.mxu0 0.0
    %308 = vmatpush2.msra.mxu0 0.0
    %309 = vmatprep.subr.mxu0 0.0
    %310 = vmatpush2.msra.mxu0 0.0
    %311 = vmatprep.subr.mxu0 0.0
    %312 = vmatpush2.msra.mxu0 0.0
    %313 = vmatprep.subr.mxu0 0.0
    %314 = vmatpush2.msra.mxu0 0.0
    %315 = vmatprep.subr.mxu0 0.0
    %316 = vmatpush2.msra.mxu0 0.0
    %317 = vmatprep.subr.mxu0 0.0
    %318 = vmatpush2.msra.mxu0 0.0
    %319 = vmatprep.subr.mxu0 0.0
    %320 = vmatpush2.msra.mxu0 0.0
    %321 = vmatprep.mubr.f32.mxu0 0.0
    %v322 = vand.u32 %v77, 4294901760
    %323 = vmatmul.mubr.f32.gmra.mxu0 %v322
    %v324 = vpop.f32.mrf.mxu0
    %v325 = vadd.f32 %v174, %v324
    %v326 = vpop.f32.mrf.mxu0
    %327 = vmatprep.mubr.f32.mxu0 0.0
    %v328 = vand.u32 %v80, 4294901760
    %329 = vmatmul.mubr.f32.gmra.mxu0 %v328
    %v330 = vpop.f32.mrf.mxu0
    %v331 = vadd.f32 %v184, %v330
    %v332 = vpop.f32.mrf.mxu0
    %333 = vmatprep.mubr.f32.mxu0 0.0
    %v334 = vand.u32 %v83, 4294901760
    %335 = vmatmul.mubr.f32.gmra.mxu0 %v334
    %v336 = vpop.f32.mrf.mxu0
    %v337 = vadd.f32 %v194, %v336
    %v338 = vpop.f32.mrf.mxu0
    %339 = vmatprep.mubr.f32.mxu0 0.0
    %v340 = vand.u32 %v86, 4294901760
    %341 = vmatmul.mubr.f32.gmra.mxu0 %v340
    %v342 = vpop.f32.mrf.mxu0
    %v343 = vadd.f32 %v204, %v342
    %v344 = vpop.f32.mrf.mxu0
    %345 = vmatprep.mubr.f32.mxu0 0.0
    %v346 = vand.u32 %v89, 4294901760
    %347 = vmatmul.mubr.f32.gmra.mxu0 %v346
    %v348 = vpop.f32.mrf.mxu0
    %v349 = vadd.f32 %v214, %v348
    %v350 = vpop.f32.mrf.mxu0
    %351 = vmatprep.mubr.f32.mxu0 0.0
    %v352 = vand.u32 %v92, 4294901760
    %353 = vmatmul.mubr.f32.gmra.mxu0 %v352
    %v354 = vpop.f32.mrf.mxu0
    %v355 = vadd.f32 %v224, %v354
    %v356 = vpop.f32.mrf.mxu0
    %357 = vmatprep.mubr.f32.mxu0 0.0
    %v358 = vand.u32 %v95, 4294901760
    %359 = vmatmul.mubr.f32.gmra.mxu0 %v358
    %v360 = vpop.f32.mrf.mxu0
    %v361 = vadd.f32 %v234, %v360
    %v362 = vpop.f32.mrf.mxu0
    %363 = vmatprep.mubr.f32.mxu0 0.0
    %v364 = vand.u32 %v98, 4294901760
    %365 = vmatmul.mubr.f32.gmra.mxu0 %v364
    %v366 = vpop.f32.mrf.mxu0
    %v367 = vadd.f32 %v244, %v366
    %v368 = vpop.f32.mrf.mxu0
    %369 = vdwg.mxu0
    %370 = vmatprep.subr.mxu0 0.0
    %371 = vmatpush1.msra.mxu0 0.0
    %372 = vmatprep.subr.mxu0 0.0
    %373 = vmatpush1.msra.mxu0 0.0
    %374 = vmatprep.subr.mxu0 0.0
    %375 = vmatpush1.msra.mxu0 0.0
    %376 = vmatprep.subr.mxu0 0.0
    %377 = vmatpush1.msra.mxu0 0.0
    %378 = vmatprep.subr.mxu0 0.0
    %379 = vmatpush1.msra.mxu0 0.0
    %380 = vmatprep.subr.mxu0 0.0
    %381 = vmatpush1.msra.mxu0 0.0
    %382 = vmatprep.subr.mxu0 0.0
    %383 = vmatpush1.msra.mxu0 0.0
    %384 = vmatprep.subr.mxu0 0.0
    %385 = vmatpush1.msra.mxu0 0.0
    %386 = vmatprep.subr.mxu0 0.0
    %387 = vmatpush1.msra.mxu0 0.0
    %388 = vmatprep.subr.mxu0 0.0
    %389 = vmatpush1.msra.mxu0 0.0
    %390 = vmatprep.subr.mxu0 0.0
    %391 = vmatpush1.msra.mxu0 0.0
    %392 = vmatprep.subr.mxu0 0.0
    %393 = vmatpush1.msra.mxu0 0.0
    %394 = vmatprep.subr.mxu0 0.0
    %395 = vmatpush1.msra.mxu0 0.0
    %396 = vmatprep.subr.mxu0 0.0
    %397 = vmatpush1.msra.mxu0 0.0
    %398 = vmatprep.subr.mxu0 0.0
    %v399 = vand.u32 %v67, 4294901760
    %v400 = vsub.f32 %v67, %v399
    %401 = vmatpush1.msra.mxu0 %v400
    %402 = vmatprep.subr.mxu0 0.0
    %v403 = vand.u32 %v66, 4294901760
    %v404 = vsub.f32 %v66, %v403
    %405 = vmatpush1.msra.mxu0 %v404
    %406 = vmatprep.subr.mxu0 0.0
    %407 = vmatpush2.msra.mxu0 0.0
    %408 = vmatprep.subr.mxu0 0.0
    %409 = vmatpush2.msra.mxu0 0.0
    %410 = vmatprep.subr.mxu0 0.0
    %411 = vmatpush2.msra.mxu0 0.0
    %412 = vmatprep.subr.mxu0 0.0
    %413 = vmatpush2.msra.mxu0 0.0
    %414 = vmatprep.subr.mxu0 0.0
    %415 = vmatpush2.msra.mxu0 0.0
    %416 = vmatprep.subr.mxu0 0.0
    %417 = vmatpush2.msra.mxu0 0.0
    %418 = vmatprep.subr.mxu0 0.0
    %419 = vmatpush2.msra.mxu0 0.0
    %420 = vmatprep.subr.mxu0 0.0
    %421 = vmatpush2.msra.mxu0 0.0
    %422 = vmatprep.subr.mxu0 0.0
    %423 = vmatpush2.msra.mxu0 0.0
    %424 = vmatprep.subr.mxu0 0.0
    %425 = vmatpush2.msra.mxu0 0.0
    %426 = vmatprep.subr.mxu0 0.0
    %427 = vmatpush2.msra.mxu0 0.0
    %428 = vmatprep.subr.mxu0 0.0
    %429 = vmatpush2.msra.mxu0 0.0
    %430 = vmatprep.subr.mxu0 0.0
    %431 = vmatpush2.msra.mxu0 0.0
    %432 = vmatprep.subr.mxu0 0.0
    %433 = vmatpush2.msra.mxu0 0.0
    %434 = vmatprep.subr.mxu0 0.0
    %435 = vmatpush2.msra.mxu0 0.0
    %436 = vmatprep.subr.mxu0 0.0
    %437 = vmatpush2.msra.mxu0 0.0
    %438 = vmatprep.mubr.f32.mxu0 0.0
    %v439 = vand.u32 %v77, 4294901760
    %v440 = vsub.f32 %v77, %v439
    %441 = vmatmul.mubr.f32.gmra.mxu0 %v440
    %v442 = vpop.f32.mrf.mxu0
    %v443 = vadd.f32 %v325, %v442
    %v444 = vpop.f32.mrf.mxu0
    %445 = vmatprep.mubr.f32.mxu0 0.0
    %v446 = vand.u32 %v80, 4294901760
    %v447 = vsub.f32 %v80, %v446
    %448 = vmatmul.mubr.f32.gmra.mxu0 %v447
    %v449 = vpop.f32.mrf.mxu0
    %v450 = vadd.f32 %v331, %v449
    %v451 = vpop.f32.mrf.mxu0
    %452 = vmatprep.mubr.f32.mxu0 0.0
    %v453 = vand.u32 %v83, 4294901760
    %v454 = vsub.f32 %v83, %v453
    %455 = vmatmul.mubr.f32.gmra.mxu0 %v454
    %v456 = vpop.f32.mrf.mxu0
    %v457 = vadd.f32 %v337, %v456
    %v458 = vpop.f32.mrf.mxu0
    %459 = vmatprep.mubr.f32.mxu0 0.0
    %v460 = vand.u32 %v86, 4294901760
    %v461 = vsub.f32 %v86, %v460
    %462 = vmatmul.mubr.f32.gmra.mxu0 %v461
    %v463 = vpop.f32.mrf.mxu0
    %v464 = vadd.f32 %v343, %v463
    %v465 = vpop.f32.mrf.mxu0
    %466 = vmatprep.mubr.f32.mxu0 0.0
    %v467 = vand.u32 %v89, 4294901760
    %v468 = vsub.f32 %v89, %v467
    %469 = vmatmul.mubr.f32.gmra.mxu0 %v468
    %v470 = vpop.f32.mrf.mxu0
    %v471 = vadd.f32 %v349, %v470
    %v472 = vpop.f32.mrf.mxu0
    %473 = vmatprep.mubr.f32.mxu0 0.0
    %v474 = vand.u32 %v92, 4294901760
    %v475 = vsub.f32 %v92, %v474
    %476 = vmatmul.mubr.f32.gmra.mxu0 %v475
    %v477 = vpop.f32.mrf.mxu0
    %v478 = vadd.f32 %v355, %v477
    %v479 = vpop.f32.mrf.mxu0
    %480 = vmatprep.mubr.f32.mxu0 0.0
    %v481 = vand.u32 %v95, 4294901760
    %v482 = vsub.f32 %v95, %v481
    %483 = vmatmul.mubr.f32.gmra.mxu0 %v482
    %v484 = vpop.f32.mrf.mxu0
    %v485 = vadd.f32 %v361, %v484
    %v486 = vpop.f32.mrf.mxu0
    %487 = vmatprep.mubr.f32.mxu0 0.0
    %v488 = vand.u32 %v98, 4294901760
    %v489 = vsub.f32 %v98, %v488
    %490 = vmatmul.mubr.f32.gmra.mxu0 %v489
    %v491 = vpop.f32.mrf.mxu0
    %v492 = vadd.f32 %v367, %v491
    %v493 = vpop.f32.mrf.mxu0
    %494 = vdwg.mxu0
    %495 = vmatprep.subr.mxu0 0.0
    %496 = vmatpush1.msra.mxu0 0.0
    %497 = vmatprep.subr.mxu0 0.0
    %498 = vmatpush1.msra.mxu0 0.0
    %499 = vmatprep.subr.mxu0 0.0
    %500 = vmatpush1.msra.mxu0 0.0
    %501 = vmatprep.subr.mxu0 0.0
    %502 = vmatpush1.msra.mxu0 0.0
    %503 = vmatprep.subr.mxu0 0.0
    %504 = vmatpush1.msra.mxu0 0.0
    %505 = vmatprep.subr.mxu0 0.0
    %506 = vmatpush1.msra.mxu0 0.0
    %507 = vmatprep.subr.mxu0 0.0
    %508 = vmatpush1.msra.mxu0 0.0
    %509 = vmatprep.subr.mxu0 0.0
    %510 = vmatpush1.msra.mxu0 0.0
    %511 = vmatprep.subr.mxu0 0.0
    %512 = vmatpush1.msra.mxu0 0.0
    %513 = vmatprep.subr.mxu0 0.0
    %514 = vmatpush1.msra.mxu0 0.0
    %515 = vmatprep.subr.mxu0 0.0
    %516 = vmatpush1.msra.mxu0 0.0
    %517 = vmatprep.subr.mxu0 0.0
    %518 = vmatpush1.msra.mxu0 0.0
    %519 = vmatprep.subr.mxu0 0.0
    %520 = vmatpush1.msra.mxu0 0.0
    %521 = vmatprep.subr.mxu0 0.0
    %522 = vmatpush1.msra.mxu0 0.0
    %523 = vmatprep.subr.mxu0 0.0
    %v524 = vand.u32 %v67, 4294901760
    %525 = vmatpush1.msra.mxu0 %v524
    %526 = vmatprep.subr.mxu0 0.0
    %v527 = vand.u32 %v66, 4294901760
    %528 = vmatpush1.msra.mxu0 %v527
    %529 = vmatprep.subr.mxu0 0.0
    %530 = vmatpush2.msra.mxu0 0.0
    %531 = vmatprep.subr.mxu0 0.0
    %532 = vmatpush2.msra.mxu0 0.0
    %533 = vmatprep.subr.mxu0 0.0
    %534 = vmatpush2.msra.mxu0 0.0
    %535 = vmatprep.subr.mxu0 0.0
    %536 = vmatpush2.msra.mxu0 0.0
    %537 = vmatprep.subr.mxu0 0.0
    %538 = vmatpush2.msra.mxu0 0.0
    %539 = vmatprep.subr.mxu0 0.0
    %540 = vmatpush2.msra.mxu0 0.0
    %541 = vmatprep.subr.mxu0 0.0
    %542 = vmatpush2.msra.mxu0 0.0
    %543 = vmatprep.subr.mxu0 0.0
    %544 = vmatpush2.msra.mxu0 0.0
    %545 = vmatprep.subr.mxu0 0.0
    %546 = vmatpush2.msra.mxu0 0.0
    %547 = vmatprep.subr.mxu0 0.0
    %548 = vmatpush2.msra.mxu0 0.0
    %549 = vmatprep.subr.mxu0 0.0
    %550 = vmatpush2.msra.mxu0 0.0
    %551 = vmatprep.subr.mxu0 0.0
    %552 = vmatpush2.msra.mxu0 0.0
    %553 = vmatprep.subr.mxu0 0.0
    %554 = vmatpush2.msra.mxu0 0.0
    %555 = vmatprep.subr.mxu0 0.0
    %556 = vmatpush2.msra.mxu0 0.0
    %557 = vmatprep.subr.mxu0 0.0
    %558 = vmatpush2.msra.mxu0 0.0
    %559 = vmatprep.subr.mxu0 0.0
    %560 = vmatpush2.msra.mxu0 0.0
    %561 = vmatprep.mubr.f32.mxu0 0.0
    %v562 = vand.u32 %v77, 4294901760
    %v563 = vsub.f32 %v77, %v562
    %v564 = vand.u32 %v563, 4294901760
    %565 = vmatmul.mubr.f32.gmra.mxu0 %v564
    %v566 = vpop.f32.mrf.mxu0
    %v567 = vadd.f32 %v443, %v566
    %v568 = vpop.f32.mrf.mxu0
    %569 = vmatprep.mubr.f32.mxu0 0.0
    %v570 = vand.u32 %v80, 4294901760
    %v571 = vsub.f32 %v80, %v570
    %v572 = vand.u32 %v571, 4294901760
    %573 = vmatmul.mubr.f32.gmra.mxu0 %v572
    %v574 = vpop.f32.mrf.mxu0
    %v575 = vadd.f32 %v450, %v574
    %v576 = vpop.f32.mrf.mxu0
    %577 = vmatprep.mubr.f32.mxu0 0.0
    %v578 = vand.u32 %v83, 4294901760
    %v579 = vsub.f32 %v83, %v578
    %v580 = vand.u32 %v579, 4294901760
    %581 = vmatmul.mubr.f32.gmra.mxu0 %v580
    %v582 = vpop.f32.mrf.mxu0
    %v583 = vadd.f32 %v457, %v582
    %v584 = vpop.f32.mrf.mxu0
    %585 = vmatprep.mubr.f32.mxu0 0.0
    %v586 = vand.u32 %v86, 4294901760
    %v587 = vsub.f32 %v86, %v586
    %v588 = vand.u32 %v587, 4294901760
    %589 = vmatmul.mubr.f32.gmra.mxu0 %v588
    %v590 = vpop.f32.mrf.mxu0
    %v591 = vadd.f32 %v464, %v590
    %v592 = vpop.f32.mrf.mxu0
    %593 = vmatprep.mubr.f32.mxu0 0.0
    %v594 = vand.u32 %v89, 4294901760
    %v595 = vsub.f32 %v89, %v594
    %v596 = vand.u32 %v595, 4294901760
    %597 = vmatmul.mubr.f32.gmra.mxu0 %v596
    %v598 = vpop.f32.mrf.mxu0
    %v599 = vadd.f32 %v471, %v598
    %v600 = vpop.f32.mrf.mxu0
    %601 = vmatprep.mubr.f32.mxu0 0.0
    %v602 = vand.u32 %v92, 4294901760
    %v603 = vsub.f32 %v92, %v602
    %v604 = vand.u32 %v603, 4294901760
    %605 = vmatmul.mubr.f32.gmra.mxu0 %v604
    %v606 = vpop.f32.mrf.mxu0
    %v607 = vadd.f32 %v478, %v606
    %v608 = vpop.f32.mrf.mxu0
    %609 = vmatprep.mubr.f32.mxu0 0.0
    %v610 = vand.u32 %v95, 4294901760
    %v611 = vsub.f32 %v95, %v610
    %v612 = vand.u32 %v611, 4294901760
    %613 = vmatmul.mubr.f32.gmra.mxu0 %v612
    %v614 = vpop.f32.mrf.mxu0
    %v615 = vadd.f32 %v485, %v614
    %v616 = vpop.f32.mrf.mxu0
    %617 = vmatprep.mubr.f32.mxu0 0.0
    %v618 = vand.u32 %v98, 4294901760
    %v619 = vsub.f32 %v98, %v618
    %v620 = vand.u32 %v619, 4294901760
    %621 = vmatmul.mubr.f32.gmra.mxu0 %v620
    %v622 = vpop.f32.mrf.mxu0
    %v623 = vadd.f32 %v492, %v622
    %v624 = vpop.f32.mrf.mxu0
    %625 = vdwg.mxu0
    %626 = vmatprep.subr.mxu0 0.0
    %627 = vmatpush1.msra.mxu0 0.0
    %628 = vmatprep.subr.mxu0 0.0
    %629 = vmatpush1.msra.mxu0 0.0
    %630 = vmatprep.subr.mxu0 0.0
    %631 = vmatpush1.msra.mxu0 0.0
    %632 = vmatprep.subr.mxu0 0.0
    %633 = vmatpush1.msra.mxu0 0.0
    %634 = vmatprep.subr.mxu0 0.0
    %635 = vmatpush1.msra.mxu0 0.0
    %636 = vmatprep.subr.mxu0 0.0
    %637 = vmatpush1.msra.mxu0 0.0
    %638 = vmatprep.subr.mxu0 0.0
    %639 = vmatpush1.msra.mxu0 0.0
    %640 = vmatprep.subr.mxu0 0.0
    %641 = vmatpush1.msra.mxu0 0.0
    %642 = vmatprep.subr.mxu0 0.0
    %643 = vmatpush1.msra.mxu0 0.0
    %644 = vmatprep.subr.mxu0 0.0
    %645 = vmatpush1.msra.mxu0 0.0
    %646 = vmatprep.subr.mxu0 0.0
    %647 = vmatpush1.msra.mxu0 0.0
    %648 = vmatprep.subr.mxu0 0.0
    %649 = vmatpush1.msra.mxu0 0.0
    %650 = vmatprep.subr.mxu0 0.0
    %651 = vmatpush1.msra.mxu0 0.0
    %652 = vmatprep.subr.mxu0 0.0
    %653 = vmatpush1.msra.mxu0 0.0
    %654 = vmatprep.subr.mxu0 0.0
    %v655 = vand.u32 %v67, 4294901760
    %v656 = vsub.f32 %v67, %v655
    %v657 = vand.u32 %v656, 4294901760
    %658 = vmatpush1.msra.mxu0 %v657
    %659 = vmatprep.subr.mxu0 0.0
    %v660 = vand.u32 %v66, 4294901760
    %v661 = vsub.f32 %v66, %v660
    %v662 = vand.u32 %v661, 4294901760
    %663 = vmatpush1.msra.mxu0 %v662
    %664 = vmatprep.subr.mxu0 0.0
    %665 = vmatpush2.msra.mxu0 0.0
    %666 = vmatprep.subr.mxu0 0.0
    %667 = vmatpush2.msra.mxu0 0.0
    %668 = vmatprep.subr.mxu0 0.0
    %669 = vmatpush2.msra.mxu0 0.0
    %670 = vmatprep.subr.mxu0 0.0
    %671 = vmatpush2.msra.mxu0 0.0
    %672 = vmatprep.subr.mxu0 0.0
    %673 = vmatpush2.msra.mxu0 0.0
    %674 = vmatprep.subr.mxu0 0.0
    %675 = vmatpush2.msra.mxu0 0.0
    %676 = vmatprep.subr.mxu0 0.0
    %677 = vmatpush2.msra.mxu0 0.0
    %678 = vmatprep.subr.mxu0 0.0
    %679 = vmatpush2.msra.mxu0 0.0
    %680 = vmatprep.subr.mxu0 0.0
    %681 = vmatpush2.msra.mxu0 0.0
    %682 = vmatprep.subr.mxu0 0.0
    %683 = vmatpush2.msra.mxu0 0.0
    %684 = vmatprep.subr.mxu0 0.0
    %685 = vmatpush2.msra.mxu0 0.0
    %686 = vmatprep.subr.mxu0 0.0
    %687 = vmatpush2.msra.mxu0 0.0
    %688 = vmatprep.subr.mxu0 0.0
    %689 = vmatpush2.msra.mxu0 0.0
    %690 = vmatprep.subr.mxu0 0.0
    %691 = vmatpush2.msra.mxu0 0.0
    %692 = vmatprep.subr.mxu0 0.0
    %693 = vmatpush2.msra.mxu0 0.0
    %694 = vmatprep.subr.mxu0 0.0
    %695 = vmatpush2.msra.mxu0 0.0
    %696 = vmatprep.mubr.f32.mxu0 0.0
    %v697 = vand.u32 %v77, 4294901760
    %698 = vmatmul.mubr.f32.gmra.mxu0 %v697
    %v699 = vpop.f32.mrf.mxu0
    %v700 = vadd.f32 %v567, %v699
    %v701 = vpop.f32.mrf.mxu0
    %702 = vmatprep.mubr.f32.mxu0 0.0
    %v703 = vand.u32 %v80, 4294901760
    %704 = vmatmul.mubr.f32.gmra.mxu0 %v703
    %v705 = vpop.f32.mrf.mxu0
    %v706 = vadd.f32 %v575, %v705
    %v707 = vpop.f32.mrf.mxu0
    %708 = vmatprep.mubr.f32.mxu0 0.0
    %v709 = vand.u32 %v83, 4294901760
    %710 = vmatmul.mubr.f32.gmra.mxu0 %v709
    %v711 = vpop.f32.mrf.mxu0
    %v712 = vadd.f32 %v583, %v711
    %v713 = vpop.f32.mrf.mxu0
    %714 = vmatprep.mubr.f32.mxu0 0.0
    %v715 = vand.u32 %v86, 4294901760
    %716 = vmatmul.mubr.f32.gmra.mxu0 %v715
    %v717 = vpop.f32.mrf.mxu0
    %v718 = vadd.f32 %v591, %v717
    %v719 = vpop.f32.mrf.mxu0
    %720 = vmatprep.mubr.f32.mxu0 0.0
    %v721 = vand.u32 %v89, 4294901760
    %722 = vmatmul.mubr.f32.gmra.mxu0 %v721
    %v723 = vpop.f32.mrf.mxu0
    %v724 = vadd.f32 %v599, %v723
    %v725 = vpop.f32.mrf.mxu0
    %726 = vmatprep.mubr.f32.mxu0 0.0
    %v727 = vand.u32 %v92, 4294901760
    %728 = vmatmul.mubr.f32.gmra.mxu0 %v727
    %v729 = vpop.f32.mrf.mxu0
    %v730 = vadd.f32 %v607, %v729
    %v731 = vpop.f32.mrf.mxu0
    %732 = vmatprep.mubr.f32.mxu0 0.0
    %v733 = vand.u32 %v95, 4294901760
    %734 = vmatmul.mubr.f32.gmra.mxu0 %v733
    %v735 = vpop.f32.mrf.mxu0
    %v736 = vadd.f32 %v615, %v735
    %v737 = vpop.f32.mrf.mxu0
    %738 = vmatprep.mubr.f32.mxu0 0.0
    %v739 = vand.u32 %v98, 4294901760
    %740 = vmatmul.mubr.f32.gmra.mxu0 %v739
    %v741 = vpop.f32.mrf.mxu0
    %v742 = vadd.f32 %v623, %v741
    %v743 = vpop.f32.mrf.mxu0
    %744 = vdwg.mxu0
    %745 = vmatprep.subr.mxu0 0.0
    %746 = vmatpush1.msra.mxu0 0.0
    %747 = vmatprep.subr.mxu0 0.0
    %748 = vmatpush1.msra.mxu0 0.0
    %749 = vmatprep.subr.mxu0 0.0
    %750 = vmatpush1.msra.mxu0 0.0
    %751 = vmatprep.subr.mxu0 0.0
    %752 = vmatpush1.msra.mxu0 0.0
    %753 = vmatprep.subr.mxu0 0.0
    %754 = vmatpush1.msra.mxu0 0.0
    %755 = vmatprep.subr.mxu0 0.0
    %756 = vmatpush1.msra.mxu0 0.0
    %757 = vmatprep.subr.mxu0 0.0
    %758 = vmatpush1.msra.mxu0 0.0
    %759 = vmatprep.subr.mxu0 0.0
    %760 = vmatpush1.msra.mxu0 0.0
    %761 = vmatprep.subr.mxu0 0.0
    %762 = vmatpush1.msra.mxu0 0.0
    %763 = vmatprep.subr.mxu0 0.0
    %764 = vmatpush1.msra.mxu0 0.0
    %765 = vmatprep.subr.mxu0 0.0
    %766 = vmatpush1.msra.mxu0 0.0
    %767 = vmatprep.subr.mxu0 0.0
    %768 = vmatpush1.msra.mxu0 0.0
    %769 = vmatprep.subr.mxu0 0.0
    %770 = vmatpush1.msra.mxu0 0.0
    %771 = vmatprep.subr.mxu0 0.0
    %772 = vmatpush1.msra.mxu0 0.0
    %773 = vmatprep.subr.mxu0 0.0
    %v774 = vand.u32 %v67, 4294901760
    %775 = vmatpush1.msra.mxu0 %v774
    %776 = vmatprep.subr.mxu0 0.0
    %v777 = vand.u32 %v66, 4294901760
    %778 = vmatpush1.msra.mxu0 %v777
    %779 = vmatprep.subr.mxu0 0.0
    %780 = vmatpush2.msra.mxu0 0.0
    %781 = vmatprep.subr.mxu0 0.0
    %782 = vmatpush2.msra.mxu0 0.0
    %783 = vmatprep.subr.mxu0 0.0
    %784 = vmatpush2.msra.mxu0 0.0
    %785 = vmatprep.subr.mxu0 0.0
    %786 = vmatpush2.msra.mxu0 0.0
    %787 = vmatprep.subr.mxu0 0.0
    %788 = vmatpush2.msra.mxu0 0.0
    %789 = vmatprep.subr.mxu0 0.0
    %790 = vmatpush2.msra.mxu0 0.0
    %791 = vmatprep.subr.mxu0 0.0
    %792 = vmatpush2.msra.mxu0 0.0
    %793 = vmatprep.subr.mxu0 0.0
    %794 = vmatpush2.msra.mxu0 0.0
    %795 = vmatprep.subr.mxu0 0.0
    %796 = vmatpush2.msra.mxu0 0.0
    %797 = vmatprep.subr.mxu0 0.0
    %798 = vmatpush2.msra.mxu0 0.0
    %799 = vmatprep.subr.mxu0 0.0
    %800 = vmatpush2.msra.mxu0 0.0
    %801 = vmatprep.subr.mxu0 0.0
    %802 = vmatpush2.msra.mxu0 0.0
    %803 = vmatprep.subr.mxu0 0.0
    %804 = vmatpush2.msra.mxu0 0.0
    %805 = vmatprep.subr.mxu0 0.0
    %806 = vmatpush2.msra.mxu0 0.0
    %807 = vmatprep.subr.mxu0 0.0
    %808 = vmatpush2.msra.mxu0 0.0
    %809 = vmatprep.subr.mxu0 0.0
    %810 = vmatpush2.msra.mxu0 0.0
    %811 = vmatprep.mubr.f32.mxu0 0.0
    %v812 = vand.u32 %v77, 4294901760
    %813 = vmatmul.mubr.f32.gmra.mxu0 %v812
    %v814 = vpop.f32.mrf.mxu0
    %v815 = vadd.f32 %v700, %v814
    %v816 = vpop.f32.mrf.mxu0
    %817 = vmatprep.mubr.f32.mxu0 0.0
    %v818 = vand.u32 %v80, 4294901760
    %819 = vmatmul.mubr.f32.gmra.mxu0 %v818
    %v820 = vpop.f32.mrf.mxu0
    %v821 = vadd.f32 %v706, %v820
    %v822 = vpop.f32.mrf.mxu0
    %823 = vmatprep.mubr.f32.mxu0 0.0
    %v824 = vand.u32 %v83, 4294901760
    %825 = vmatmul.mubr.f32.gmra.mxu0 %v824
    %v826 = vpop.f32.mrf.mxu0
    %v827 = vadd.f32 %v712, %v826
    %v828 = vpop.f32.mrf.mxu0
    %829 = vmatprep.mubr.f32.mxu0 0.0
    %v830 = vand.u32 %v86, 4294901760
    %831 = vmatmul.mubr.f32.gmra.mxu0 %v830
    %v832 = vpop.f32.mrf.mxu0
    %v833 = vadd.f32 %v718, %v832
    %v834 = vpop.f32.mrf.mxu0
    %835 = vmatprep.mubr.f32.mxu0 0.0
    %v836 = vand.u32 %v89, 4294901760
    %837 = vmatmul.mubr.f32.gmra.mxu0 %v836
    %v838 = vpop.f32.mrf.mxu0
    %v839 = vadd.f32 %v724, %v838
    %v840 = vpop.f32.mrf.mxu0
    %841 = vmatprep.mubr.f32.mxu0 0.0
    %v842 = vand.u32 %v92, 4294901760
    %843 = vmatmul.mubr.f32.gmra.mxu0 %v842
    %v844 = vpop.f32.mrf.mxu0
    %v845 = vadd.f32 %v730, %v844
    %v846 = vpop.f32.mrf.mxu0
    %847 = vmatprep.mubr.f32.mxu0 0.0
    %v848 = vand.u32 %v95, 4294901760
    %849 = vmatmul.mubr.f32.gmra.mxu0 %v848
    %v850 = vpop.f32.mrf.mxu0
    %v851 = vadd.f32 %v736, %v850
    %v852 = vpop.f32.mrf.mxu0
    %853 = vmatprep.mubr.f32.mxu0 0.0
    %v854 = vand.u32 %v98, 4294901760
    %855 = vmatmul.mubr.f32.gmra.mxu0 %v854
    %v856 = vpop.f32.mrf.mxu0
    %v857 = vadd.f32 %v742, %v856
    %v858 = vpop.f32.mrf.mxu0
    %859 = vdwg.mxu0
    %v860 = vld [vmem:[%s5] sm:$0xff]
    %v861 = vld [vmem:[%s5 + $0x8] sm:$0xff]
    %v862 = vld [vmem:[%s5 + $0x10] sm:$0xff]
    %v863 = vld [vmem:[%s5 + $0x18] sm:$0xff]
    %v864 = vld [vmem:[%s6] sm:$0x1]
    %v866 = vlaneseq
    %v867 = vshrl.u32 %v866, 7
    %v868 = vsub.s32 0, %v867
    %v869 = vrot.slane %v864, %v868
    %vm871 = vcmask 261120
    %v873 = vsel %vm871, %v815, 0
    %v876 = vsel %vm871, %v821, 0
    %v879 = vsel %vm871, %v827, 0
    %v882 = vsel %vm871, %v833, 0
    %v885 = vsel %vm871, %v839, 0
    %v888 = vsel %vm871, %v845, 0
    %v891 = vsel %vm871, %v851, 0
    %v894 = vsel %vm871, %v857, 0
    %896 = vmatprep.subr.mxu0 0.0
    %897 = vmatpush1.msra.mxu0 0.0
    %898 = vmatprep.subr.mxu0 0.0
    %899 = vmatpush1.msra.mxu0 0.0
    %900 = vmatprep.subr.mxu0 0.0
    %901 = vmatpush1.msra.mxu0 0.0
    %902 = vmatprep.subr.mxu0 0.0
    %903 = vmatpush1.msra.mxu0 0.0
    %904 = vmatprep.subr.mxu0 0.0
    %905 = vmatpush1.msra.mxu0 0.0
    %906 = vmatprep.subr.mxu0 0.0
    %907 = vmatpush1.msra.mxu0 0.0
    %908 = vmatprep.subr.mxu0 0.0
    %909 = vmatpush1.msra.mxu0 0.0
    %910 = vmatprep.subr.mxu0 0.0
    %911 = vmatpush1.msra.mxu0 0.0
    %912 = vmatprep.subr.mxu0 0.0
    %913 = vmatpush1.msra.mxu0 0.0
    %914 = vmatprep.subr.mxu0 0.0
    %915 = vmatpush1.msra.mxu0 0.0
    %916 = vmatprep.subr.mxu0 0.0
    %917 = vmatpush1.msra.mxu0 0.0
    %918 = vmatprep.subr.mxu0 0.0
    %919 = vmatpush1.msra.mxu0 0.0
    %920 = vmatprep.subr.mxu0 0.0
    %v921 = vand.u32 %v863, 4294901760
    %922 = vmatpush1.msra.mxu0 %v921
    %923 = vmatprep.subr.mxu0 0.0
    %v924 = vand.u32 %v862, 4294901760
    %925 = vmatpush1.msra.mxu0 %v924
    %926 = vmatprep.subr.mxu0 0.0
    %v927 = vand.u32 %v861, 4294901760
    %928 = vmatpush1.msra.mxu0 %v927
    %929 = vmatprep.subr.mxu0 0.0
    %v930 = vand.u32 %v860, 4294901760
    %931 = vmatpush1.msra.mxu0 %v930
    %932 = vmatprep.subr.mxu0 0.0
    %933 = vmatpush2.msra.mxu0 0.0
    %934 = vmatprep.subr.mxu0 0.0
    %935 = vmatpush2.msra.mxu0 0.0
    %936 = vmatprep.subr.mxu0 0.0
    %937 = vmatpush2.msra.mxu0 0.0
    %938 = vmatprep.subr.mxu0 0.0
    %939 = vmatpush2.msra.mxu0 0.0
    %940 = vmatprep.subr.mxu0 0.0
    %941 = vmatpush2.msra.mxu0 0.0
    %942 = vmatprep.subr.mxu0 0.0
    %943 = vmatpush2.msra.mxu0 0.0
    %944 = vmatprep.subr.mxu0 0.0
    %945 = vmatpush2.msra.mxu0 0.0
    %946 = vmatprep.subr.mxu0 0.0
    %947 = vmatpush2.msra.mxu0 0.0
    %948 = vmatprep.subr.mxu0 0.0
    %949 = vmatpush2.msra.mxu0 0.0
    %950 = vmatprep.subr.mxu0 0.0
    %951 = vmatpush2.msra.mxu0 0.0
    %952 = vmatprep.subr.mxu0 0.0
    %953 = vmatpush2.msra.mxu0 0.0
    %954 = vmatprep.subr.mxu0 0.0
    %955 = vmatpush2.msra.mxu0 0.0
    %956 = vmatprep.subr.mxu0 0.0
    %957 = vmatpush2.msra.mxu0 0.0
    %958 = vmatprep.subr.mxu0 0.0
    %959 = vmatpush2.msra.mxu0 0.0
    %960 = vmatprep.subr.mxu0 0.0
    %961 = vmatpush2.msra.mxu0 0.0
    %962 = vmatprep.subr.mxu0 0.0
    %963 = vmatpush2.msra.mxu0 0.0
    %964 = vmatprep.mubr.f32.mxu0 0.0
    %v965 = vand.u32 %v873, 4294901760
    %v966 = vsub.f32 %v873, %v965
    %v967 = vand.u32 %v966, 4294901760
    %v968 = vsub.f32 %v966, %v967
    %v969 = vand.u32 %v968, 4294901760
    %970 = vmatmul.mubr.f32.gmra.mxu0 %v969
    %v971 = vpop.f32.mrf.mxu0
    %v972 = vadd.f32 %v869, %v971
    %v973 = vpop.f32.mrf.mxu0
    %974 = vmatprep.mubr.f32.mxu0 0.0
    %v975 = vand.u32 %v876, 4294901760
    %v976 = vsub.f32 %v876, %v975
    %v977 = vand.u32 %v976, 4294901760
    %v978 = vsub.f32 %v976, %v977
    %v979 = vand.u32 %v978, 4294901760
    %980 = vmatmul.mubr.f32.gmra.mxu0 %v979
    %v981 = vpop.f32.mrf.mxu0
    %v982 = vadd.f32 %v869, %v981
    %v983 = vpop.f32.mrf.mxu0
    %984 = vmatprep.mubr.f32.mxu0 0.0
    %v985 = vand.u32 %v879, 4294901760
    %v986 = vsub.f32 %v879, %v985
    %v987 = vand.u32 %v986, 4294901760
    %v988 = vsub.f32 %v986, %v987
    %v989 = vand.u32 %v988, 4294901760
    %990 = vmatmul.mubr.f32.gmra.mxu0 %v989
    %v991 = vpop.f32.mrf.mxu0
    %v992 = vadd.f32 %v869, %v991
    %v993 = vpop.f32.mrf.mxu0
    %994 = vmatprep.mubr.f32.mxu0 0.0
    %v995 = vand.u32 %v882, 4294901760
    %v996 = vsub.f32 %v882, %v995
    %v997 = vand.u32 %v996, 4294901760
    %v998 = vsub.f32 %v996, %v997
    %v999 = vand.u32 %v998, 4294901760
    %1000 = vmatmul.mubr.f32.gmra.mxu0 %v999
    %v1001 = vpop.f32.mrf.mxu0
    %v1002 = vadd.f32 %v869, %v1001
    %v1003 = vpop.f32.mrf.mxu0
    %1004 = vmatprep.mubr.f32.mxu0 0.0
    %v1005 = vand.u32 %v885, 4294901760
    %v1006 = vsub.f32 %v885, %v1005
    %v1007 = vand.u32 %v1006, 4294901760
    %v1008 = vsub.f32 %v1006, %v1007
    %v1009 = vand.u32 %v1008, 4294901760
    %1010 = vmatmul.mubr.f32.gmra.mxu0 %v1009
    %v1011 = vpop.f32.mrf.mxu0
    %v1012 = vadd.f32 %v869, %v1011
    %v1013 = vpop.f32.mrf.mxu0
    %1014 = vmatprep.mubr.f32.mxu0 0.0
    %v1015 = vand.u32 %v888, 4294901760
    %v1016 = vsub.f32 %v888, %v1015
    %v1017 = vand.u32 %v1016, 4294901760
    %v1018 = vsub.f32 %v1016, %v1017
    %v1019 = vand.u32 %v1018, 4294901760
    %1020 = vmatmul.mubr.f32.gmra.mxu0 %v1019
    %v1021 = vpop.f32.mrf.mxu0
    %v1022 = vadd.f32 %v869, %v1021
    %v1023 = vpop.f32.mrf.mxu0
    %1024 = vmatprep.mubr.f32.mxu0 0.0
    %v1025 = vand.u32 %v891, 4294901760
    %v1026 = vsub.f32 %v891, %v1025
    %v1027 = vand.u32 %v1026, 4294901760
    %v1028 = vsub.f32 %v1026, %v1027
    %v1029 = vand.u32 %v1028, 4294901760
    %1030 = vmatmul.mubr.f32.gmra.mxu0 %v1029
    %v1031 = vpop.f32.mrf.mxu0
    %v1032 = vadd.f32 %v869, %v1031
    %v1033 = vpop.f32.mrf.mxu0
    %1034 = vmatprep.mubr.f32.mxu0 0.0
    %v1035 = vand.u32 %v894, 4294901760
    %v1036 = vsub.f32 %v894, %v1035
    %v1037 = vand.u32 %v1036, 4294901760
    %v1038 = vsub.f32 %v1036, %v1037
    %v1039 = vand.u32 %v1038, 4294901760
    %1040 = vmatmul.mubr.f32.gmra.mxu0 %v1039
    %v1041 = vpop.f32.mrf.mxu0
    %v1042 = vadd.f32 %v869, %v1041
    %v1043 = vpop.f32.mrf.mxu0
    %1044 = vdwg.mxu0
    %1045 = vmatprep.subr.mxu0 0.0
    %1046 = vmatpush1.msra.mxu0 0.0
    %1047 = vmatprep.subr.mxu0 0.0
    %1048 = vmatpush1.msra.mxu0 0.0
    %1049 = vmatprep.subr.mxu0 0.0
    %1050 = vmatpush1.msra.mxu0 0.0
    %1051 = vmatprep.subr.mxu0 0.0
    %1052 = vmatpush1.msra.mxu0 0.0
    %1053 = vmatprep.subr.mxu0 0.0
    %1054 = vmatpush1.msra.mxu0 0.0
    %1055 = vmatprep.subr.mxu0 0.0
    %1056 = vmatpush1.msra.mxu0 0.0
    %1057 = vmatprep.subr.mxu0 0.0
    %1058 = vmatpush1.msra.mxu0 0.0
    %1059 = vmatprep.subr.mxu0 0.0
    %1060 = vmatpush1.msra.mxu0 0.0
    %1061 = vmatprep.subr.mxu0 0.0
    %1062 = vmatpush1.msra.mxu0 0.0
    %1063 = vmatprep.subr.mxu0 0.0
    %1064 = vmatpush1.msra.mxu0 0.0
    %1065 = vmatprep.subr.mxu0 0.0
    %1066 = vmatpush1.msra.mxu0 0.0
    %1067 = vmatprep.subr.mxu0 0.0
    %1068 = vmatpush1.msra.mxu0 0.0
    %1069 = vmatprep.subr.mxu0 0.0
    %v1070 = vand.u32 %v863, 4294901760
    %v1071 = vsub.f32 %v863, %v1070
    %v1072 = vand.u32 %v1071, 4294901760
    %v1073 = vsub.f32 %v1071, %v1072
    %v1074 = vand.u32 %v1073, 4294901760
    %1075 = vmatpush1.msra.mxu0 %v1074
    %1076 = vmatprep.subr.mxu0 0.0
    %v1077 = vand.u32 %v862, 4294901760
    %v1078 = vsub.f32 %v862, %v1077
    %v1079 = vand.u32 %v1078, 4294901760
    %v1080 = vsub.f32 %v1078, %v1079
    %v1081 = vand.u32 %v1080, 4294901760
    %1082 = vmatpush1.msra.mxu0 %v1081
    %1083 = vmatprep.subr.mxu0 0.0
    %v1084 = vand.u32 %v861, 4294901760
    %v1085 = vsub.f32 %v861, %v1084
    %v1086 = vand.u32 %v1085, 4294901760
    %v1087 = vsub.f32 %v1085, %v1086
    %v1088 = vand.u32 %v1087, 4294901760
    %1089 = vmatpush1.msra.mxu0 %v1088
    %1090 = vmatprep.subr.mxu0 0.0
    %v1091 = vand.u32 %v860, 4294901760
    %v1092 = vsub.f32 %v860, %v1091
    %v1093 = vand.u32 %v1092, 4294901760
    %v1094 = vsub.f32 %v1092, %v1093
    %v1095 = vand.u32 %v1094, 4294901760
    %1096 = vmatpush1.msra.mxu0 %v1095
    %1097 = vmatprep.subr.mxu0 0.0
    %1098 = vmatpush2.msra.mxu0 0.0
    %1099 = vmatprep.subr.mxu0 0.0
    %1100 = vmatpush2.msra.mxu0 0.0
    %1101 = vmatprep.subr.mxu0 0.0
    %1102 = vmatpush2.msra.mxu0 0.0
    %1103 = vmatprep.subr.mxu0 0.0
    %1104 = vmatpush2.msra.mxu0 0.0
    %1105 = vmatprep.subr.mxu0 0.0
    %1106 = vmatpush2.msra.mxu0 0.0
    %1107 = vmatprep.subr.mxu0 0.0
    %1108 = vmatpush2.msra.mxu0 0.0
    %1109 = vmatprep.subr.mxu0 0.0
    %1110 = vmatpush2.msra.mxu0 0.0
    %1111 = vmatprep.subr.mxu0 0.0
    %1112 = vmatpush2.msra.mxu0 0.0
    %1113 = vmatprep.subr.mxu0 0.0
    %1114 = vmatpush2.msra.mxu0 0.0
    %1115 = vmatprep.subr.mxu0 0.0
    %1116 = vmatpush2.msra.mxu0 0.0
    %1117 = vmatprep.subr.mxu0 0.0
    %1118 = vmatpush2.msra.mxu0 0.0
    %1119 = vmatprep.subr.mxu0 0.0
    %1120 = vmatpush2.msra.mxu0 0.0
    %1121 = vmatprep.subr.mxu0 0.0
    %1122 = vmatpush2.msra.mxu0 0.0
    %1123 = vmatprep.subr.mxu0 0.0
    %1124 = vmatpush2.msra.mxu0 0.0
    %1125 = vmatprep.subr.mxu0 0.0
    %1126 = vmatpush2.msra.mxu0 0.0
    %1127 = vmatprep.subr.mxu0 0.0
    %1128 = vmatpush2.msra.mxu0 0.0
    %1129 = vmatprep.mubr.f32.mxu0 0.0
    %v1130 = vand.u32 %v873, 4294901760
    %1131 = vmatmul.mubr.f32.gmra.mxu0 %v1130
    %v1132 = vpop.f32.mrf.mxu0
    %v1133 = vadd.f32 %v972, %v1132
    %v1134 = vpop.f32.mrf.mxu0
    %1135 = vmatprep.mubr.f32.mxu0 0.0
    %v1136 = vand.u32 %v876, 4294901760
    %1137 = vmatmul.mubr.f32.gmra.mxu0 %v1136
    %v1138 = vpop.f32.mrf.mxu0
    %v1139 = vadd.f32 %v982, %v1138
    %v1140 = vpop.f32.mrf.mxu0
    %1141 = vmatprep.mubr.f32.mxu0 0.0
    %v1142 = vand.u32 %v879, 4294901760
    %1143 = vmatmul.mubr.f32.gmra.mxu0 %v1142
    %v1144 = vpop.f32.mrf.mxu0
    %v1145 = vadd.f32 %v992, %v1144
    %v1146 = vpop.f32.mrf.mxu0
    %1147 = vmatprep.mubr.f32.mxu0 0.0
    %v1148 = vand.u32 %v882, 4294901760
    %1149 = vmatmul.mubr.f32.gmra.mxu0 %v1148
    %v1150 = vpop.f32.mrf.mxu0
    %v1151 = vadd.f32 %v1002, %v1150
    %v1152 = vpop.f32.mrf.mxu0
    %1153 = vmatprep.mubr.f32.mxu0 0.0
    %v1154 = vand.u32 %v885, 4294901760
    %1155 = vmatmul.mubr.f32.gmra.mxu0 %v1154
    %v1156 = vpop.f32.mrf.mxu0
    %v1157 = vadd.f32 %v1012, %v1156
    %v1158 = vpop.f32.mrf.mxu0
    %1159 = vmatprep.mubr.f32.mxu0 0.0
    %v1160 = vand.u32 %v888, 4294901760
    %1161 = vmatmul.mubr.f32.gmra.mxu0 %v1160
    %v1162 = vpop.f32.mrf.mxu0
    %v1163 = vadd.f32 %v1022, %v1162
    %v1164 = vpop.f32.mrf.mxu0
    %1165 = vmatprep.mubr.f32.mxu0 0.0
    %v1166 = vand.u32 %v891, 4294901760
    %1167 = vmatmul.mubr.f32.gmra.mxu0 %v1166
    %v1168 = vpop.f32.mrf.mxu0
    %v1169 = vadd.f32 %v1032, %v1168
    %v1170 = vpop.f32.mrf.mxu0
    %1171 = vmatprep.mubr.f32.mxu0 0.0
    %v1172 = vand.u32 %v894, 4294901760
    %1173 = vmatmul.mubr.f32.gmra.mxu0 %v1172
    %v1174 = vpop.f32.mrf.mxu0
    %v1175 = vadd.f32 %v1042, %v1174
    %v1176 = vpop.f32.mrf.mxu0
    %1177 = vdwg.mxu0
    %1178 = vmatprep.subr.mxu0 0.0
    %1179 = vmatpush1.msra.mxu0 0.0
    %1180 = vmatprep.subr.mxu0 0.0
    %1181 = vmatpush1.msra.mxu0 0.0
    %1182 = vmatprep.subr.mxu0 0.0
    %1183 = vmatpush1.msra.mxu0 0.0
    %1184 = vmatprep.subr.mxu0 0.0
    %1185 = vmatpush1.msra.mxu0 0.0
    %1186 = vmatprep.subr.mxu0 0.0
    %1187 = vmatpush1.msra.mxu0 0.0
    %1188 = vmatprep.subr.mxu0 0.0
    %1189 = vmatpush1.msra.mxu0 0.0
    %1190 = vmatprep.subr.mxu0 0.0
    %1191 = vmatpush1.msra.mxu0 0.0
    %1192 = vmatprep.subr.mxu0 0.0
    %1193 = vmatpush1.msra.mxu0 0.0
    %1194 = vmatprep.subr.mxu0 0.0
    %1195 = vmatpush1.msra.mxu0 0.0
    %1196 = vmatprep.subr.mxu0 0.0
    %1197 = vmatpush1.msra.mxu0 0.0
    %1198 = vmatprep.subr.mxu0 0.0
    %1199 = vmatpush1.msra.mxu0 0.0
    %1200 = vmatprep.subr.mxu0 0.0
    %1201 = vmatpush1.msra.mxu0 0.0
    %1202 = vmatprep.subr.mxu0 0.0
    %v1203 = vand.u32 %v863, 4294901760
    %v1204 = vsub.f32 %v863, %v1203
    %1205 = vmatpush1.msra.mxu0 %v1204
    %1206 = vmatprep.subr.mxu0 0.0
    %v1207 = vand.u32 %v862, 4294901760
    %v1208 = vsub.f32 %v862, %v1207
    %1209 = vmatpush1.msra.mxu0 %v1208
    %1210 = vmatprep.subr.mxu0 0.0
    %v1211 = vand.u32 %v861, 4294901760
    %v1212 = vsub.f32 %v861, %v1211
    %1213 = vmatpush1.msra.mxu0 %v1212
    %1214 = vmatprep.subr.mxu0 0.0
    %v1215 = vand.u32 %v860, 4294901760
    %v1216 = vsub.f32 %v860, %v1215
    %1217 = vmatpush1.msra.mxu0 %v1216
    %1218 = vmatprep.subr.mxu0 0.0
    %1219 = vmatpush2.msra.mxu0 0.0
    %1220 = vmatprep.subr.mxu0 0.0
    %1221 = vmatpush2.msra.mxu0 0.0
    %1222 = vmatprep.subr.mxu0 0.0
    %1223 = vmatpush2.msra.mxu0 0.0
    %1224 = vmatprep.subr.mxu0 0.0
    %1225 = vmatpush2.msra.mxu0 0.0
    %1226 = vmatprep.subr.mxu0 0.0
    %1227 = vmatpush2.msra.mxu0 0.0
    %1228 = vmatprep.subr.mxu0 0.0
    %1229 = vmatpush2.msra.mxu0 0.0
    %1230 = vmatprep.subr.mxu0 0.0
    %1231 = vmatpush2.msra.mxu0 0.0
    %1232 = vmatprep.subr.mxu0 0.0
    %1233 = vmatpush2.msra.mxu0 0.0
    %1234 = vmatprep.subr.mxu0 0.0
    %1235 = vmatpush2.msra.mxu0 0.0
    %1236 = vmatprep.subr.mxu0 0.0
    %1237 = vmatpush2.msra.mxu0 0.0
    %1238 = vmatprep.subr.mxu0 0.0
    %1239 = vmatpush2.msra.mxu0 0.0
    %1240 = vmatprep.subr.mxu0 0.0
    %1241 = vmatpush2.msra.mxu0 0.0
    %1242 = vmatprep.subr.mxu0 0.0
    %1243 = vmatpush2.msra.mxu0 0.0
    %1244 = vmatprep.subr.mxu0 0.0
    %1245 = vmatpush2.msra.mxu0 0.0
    %1246 = vmatprep.subr.mxu0 0.0
    %1247 = vmatpush2.msra.mxu0 0.0
    %1248 = vmatprep.subr.mxu0 0.0
    %1249 = vmatpush2.msra.mxu0 0.0
    %1250 = vmatprep.mubr.f32.mxu0 0.0
    %v1251 = vand.u32 %v873, 4294901760
    %v1252 = vsub.f32 %v873, %v1251
    %1253 = vmatmul.mubr.f32.gmra.mxu0 %v1252
    %v1254 = vpop.f32.mrf.mxu0
    %v1255 = vadd.f32 %v1133, %v1254
    %v1256 = vpop.f32.mrf.mxu0
    %1257 = vmatprep.mubr.f32.mxu0 0.0
    %v1258 = vand.u32 %v876, 4294901760
    %v1259 = vsub.f32 %v876, %v1258
    %1260 = vmatmul.mubr.f32.gmra.mxu0 %v1259
    %v1261 = vpop.f32.mrf.mxu0
    %v1262 = vadd.f32 %v1139, %v1261
    %v1263 = vpop.f32.mrf.mxu0
    %1264 = vmatprep.mubr.f32.mxu0 0.0
    %v1265 = vand.u32 %v879, 4294901760
    %v1266 = vsub.f32 %v879, %v1265
    %1267 = vmatmul.mubr.f32.gmra.mxu0 %v1266
    %v1268 = vpop.f32.mrf.mxu0
    %v1269 = vadd.f32 %v1145, %v1268
    %v1270 = vpop.f32.mrf.mxu0
    %1271 = vmatprep.mubr.f32.mxu0 0.0
    %v1272 = vand.u32 %v882, 4294901760
    %v1273 = vsub.f32 %v882, %v1272
    %1274 = vmatmul.mubr.f32.gmra.mxu0 %v1273
    %v1275 = vpop.f32.mrf.mxu0
    %v1276 = vadd.f32 %v1151, %v1275
    %v1277 = vpop.f32.mrf.mxu0
    %1278 = vmatprep.mubr.f32.mxu0 0.0
    %v1279 = vand.u32 %v885, 4294901760
    %v1280 = vsub.f32 %v885, %v1279
    %1281 = vmatmul.mubr.f32.gmra.mxu0 %v1280
    %v1282 = vpop.f32.mrf.mxu0
    %v1283 = vadd.f32 %v1157, %v1282
    %v1284 = vpop.f32.mrf.mxu0
    %1285 = vmatprep.mubr.f32.mxu0 0.0
    %v1286 = vand.u32 %v888, 4294901760
    %v1287 = vsub.f32 %v888, %v1286
    %1288 = vmatmul.mubr.f32.gmra.mxu0 %v1287
    %v1289 = vpop.f32.mrf.mxu0
    %v1290 = vadd.f32 %v1163, %v1289
    %v1291 = vpop.f32.mrf.mxu0
    %1292 = vmatprep.mubr.f32.mxu0 0.0
    %v1293 = vand.u32 %v891, 4294901760
    %v1294 = vsub.f32 %v891, %v1293
    %1295 = vmatmul.mubr.f32.gmra.mxu0 %v1294
    %v1296 = vpop.f32.mrf.mxu0
    %v1297 = vadd.f32 %v1169, %v1296
    %v1298 = vpop.f32.mrf.mxu0
    %1299 = vmatprep.mubr.f32.mxu0 0.0
    %v1300 = vand.u32 %v894, 4294901760
    %v1301 = vsub.f32 %v894, %v1300
    %1302 = vmatmul.mubr.f32.gmra.mxu0 %v1301
    %v1303 = vpop.f32.mrf.mxu0
    %v1304 = vadd.f32 %v1175, %v1303
    %v1305 = vpop.f32.mrf.mxu0
    %1306 = vdwg.mxu0
    %1307 = vmatprep.subr.mxu0 0.0
    %1308 = vmatpush1.msra.mxu0 0.0
    %1309 = vmatprep.subr.mxu0 0.0
    %1310 = vmatpush1.msra.mxu0 0.0
    %1311 = vmatprep.subr.mxu0 0.0
    %1312 = vmatpush1.msra.mxu0 0.0
    %1313 = vmatprep.subr.mxu0 0.0
    %1314 = vmatpush1.msra.mxu0 0.0
    %1315 = vmatprep.subr.mxu0 0.0
    %1316 = vmatpush1.msra.mxu0 0.0
    %1317 = vmatprep.subr.mxu0 0.0
    %1318 = vmatpush1.msra.mxu0 0.0
    %1319 = vmatprep.subr.mxu0 0.0
    %1320 = vmatpush1.msra.mxu0 0.0
    %1321 = vmatprep.subr.mxu0 0.0
    %1322 = vmatpush1.msra.mxu0 0.0
    %1323 = vmatprep.subr.mxu0 0.0
    %1324 = vmatpush1.msra.mxu0 0.0
    %1325 = vmatprep.subr.mxu0 0.0
    %1326 = vmatpush1.msra.mxu0 0.0
    %1327 = vmatprep.subr.mxu0 0.0
    %1328 = vmatpush1.msra.mxu0 0.0
    %1329 = vmatprep.subr.mxu0 0.0
    %1330 = vmatpush1.msra.mxu0 0.0
    %1331 = vmatprep.subr.mxu0 0.0
    %v1332 = vand.u32 %v863, 4294901760
    %1333 = vmatpush1.msra.mxu0 %v1332
    %1334 = vmatprep.subr.mxu0 0.0
    %v1335 = vand.u32 %v862, 4294901760
    %1336 = vmatpush1.msra.mxu0 %v1335
    %1337 = vmatprep.subr.mxu0 0.0
    %v1338 = vand.u32 %v861, 4294901760
    %1339 = vmatpush1.msra.mxu0 %v1338
    %1340 = vmatprep.subr.mxu0 0.0
    %v1341 = vand.u32 %v860, 4294901760
    %1342 = vmatpush1.msra.mxu0 %v1341
    %1343 = vmatprep.subr.mxu0 0.0
    %1344 = vmatpush2.msra.mxu0 0.0
    %1345 = vmatprep.subr.mxu0 0.0
    %1346 = vmatpush2.msra.mxu0 0.0
    %1347 = vmatprep.subr.mxu0 0.0
    %1348 = vmatpush2.msra.mxu0 0.0
    %1349 = vmatprep.subr.mxu0 0.0
    %1350 = vmatpush2.msra.mxu0 0.0
    %1351 = vmatprep.subr.mxu0 0.0
    %1352 = vmatpush2.msra.mxu0 0.0
    %1353 = vmatprep.subr.mxu0 0.0
    %1354 = vmatpush2.msra.mxu0 0.0
    %1355 = vmatprep.subr.mxu0 0.0
    %1356 = vmatpush2.msra.mxu0 0.0
    %1357 = vmatprep.subr.mxu0 0.0
    %1358 = vmatpush2.msra.mxu0 0.0
    %1359 = vmatprep.subr.mxu0 0.0
    %1360 = vmatpush2.msra.mxu0 0.0
    %1361 = vmatprep.subr.mxu0 0.0
    %1362 = vmatpush2.msra.mxu0 0.0
    %1363 = vmatprep.subr.mxu0 0.0
    %1364 = vmatpush2.msra.mxu0 0.0
    %1365 = vmatprep.subr.mxu0 0.0
    %1366 = vmatpush2.msra.mxu0 0.0
    %1367 = vmatprep.subr.mxu0 0.0
    %1368 = vmatpush2.msra.mxu0 0.0
    %1369 = vmatprep.subr.mxu0 0.0
    %1370 = vmatpush2.msra.mxu0 0.0
    %1371 = vmatprep.subr.mxu0 0.0
    %1372 = vmatpush2.msra.mxu0 0.0
    %1373 = vmatprep.subr.mxu0 0.0
    %1374 = vmatpush2.msra.mxu0 0.0
    %1375 = vmatprep.mubr.f32.mxu0 0.0
    %v1376 = vand.u32 %v873, 4294901760
    %v1377 = vsub.f32 %v873, %v1376
    %v1378 = vand.u32 %v1377, 4294901760
    %1379 = vmatmul.mubr.f32.gmra.mxu0 %v1378
    %v1380 = vpop.f32.mrf.mxu0
    %v1381 = vadd.f32 %v1255, %v1380
    %v1382 = vpop.f32.mrf.mxu0
    %1383 = vmatprep.mubr.f32.mxu0 0.0
    %v1384 = vand.u32 %v876, 4294901760
    %v1385 = vsub.f32 %v876, %v1384
    %v1386 = vand.u32 %v1385, 4294901760
    %1387 = vmatmul.mubr.f32.gmra.mxu0 %v1386
    %v1388 = vpop.f32.mrf.mxu0
    %v1389 = vadd.f32 %v1262, %v1388
    %v1390 = vpop.f32.mrf.mxu0
    %1391 = vmatprep.mubr.f32.mxu0 0.0
    %v1392 = vand.u32 %v879, 4294901760
    %v1393 = vsub.f32 %v879, %v1392
    %v1394 = vand.u32 %v1393, 4294901760
    %1395 = vmatmul.mubr.f32.gmra.mxu0 %v1394
    %v1396 = vpop.f32.mrf.mxu0
    %v1397 = vadd.f32 %v1269, %v1396
    %v1398 = vpop.f32.mrf.mxu0
    %1399 = vmatprep.mubr.f32.mxu0 0.0
    %v1400 = vand.u32 %v882, 4294901760
    %v1401 = vsub.f32 %v882, %v1400
    %v1402 = vand.u32 %v1401, 4294901760
    %1403 = vmatmul.mubr.f32.gmra.mxu0 %v1402
    %v1404 = vpop.f32.mrf.mxu0
    %v1405 = vadd.f32 %v1276, %v1404
    %v1406 = vpop.f32.mrf.mxu0
    %1407 = vmatprep.mubr.f32.mxu0 0.0
    %v1408 = vand.u32 %v885, 4294901760
    %v1409 = vsub.f32 %v885, %v1408
    %v1410 = vand.u32 %v1409, 4294901760
    %1411 = vmatmul.mubr.f32.gmra.mxu0 %v1410
    %v1412 = vpop.f32.mrf.mxu0
    %v1413 = vadd.f32 %v1283, %v1412
    %v1414 = vpop.f32.mrf.mxu0
    %1415 = vmatprep.mubr.f32.mxu0 0.0
    %v1416 = vand.u32 %v888, 4294901760
    %v1417 = vsub.f32 %v888, %v1416
    %v1418 = vand.u32 %v1417, 4294901760
    %1419 = vmatmul.mubr.f32.gmra.mxu0 %v1418
    %v1420 = vpop.f32.mrf.mxu0
    %v1421 = vadd.f32 %v1290, %v1420
    %v1422 = vpop.f32.mrf.mxu0
    %1423 = vmatprep.mubr.f32.mxu0 0.0
    %v1424 = vand.u32 %v891, 4294901760
    %v1425 = vsub.f32 %v891, %v1424
    %v1426 = vand.u32 %v1425, 4294901760
    %1427 = vmatmul.mubr.f32.gmra.mxu0 %v1426
    %v1428 = vpop.f32.mrf.mxu0
    %v1429 = vadd.f32 %v1297, %v1428
    %v1430 = vpop.f32.mrf.mxu0
    %1431 = vmatprep.mubr.f32.mxu0 0.0
    %v1432 = vand.u32 %v894, 4294901760
    %v1433 = vsub.f32 %v894, %v1432
    %v1434 = vand.u32 %v1433, 4294901760
    %1435 = vmatmul.mubr.f32.gmra.mxu0 %v1434
    %v1436 = vpop.f32.mrf.mxu0
    %v1437 = vadd.f32 %v1304, %v1436
    %v1438 = vpop.f32.mrf.mxu0
    %1439 = vdwg.mxu0
    %1440 = vmatprep.subr.mxu0 0.0
    %1441 = vmatpush1.msra.mxu0 0.0
    %1442 = vmatprep.subr.mxu0 0.0
    %1443 = vmatpush1.msra.mxu0 0.0
    %1444 = vmatprep.subr.mxu0 0.0
    %1445 = vmatpush1.msra.mxu0 0.0
    %1446 = vmatprep.subr.mxu0 0.0
    %1447 = vmatpush1.msra.mxu0 0.0
    %1448 = vmatprep.subr.mxu0 0.0
    %1449 = vmatpush1.msra.mxu0 0.0
    %1450 = vmatprep.subr.mxu0 0.0
    %1451 = vmatpush1.msra.mxu0 0.0
    %1452 = vmatprep.subr.mxu0 0.0
    %1453 = vmatpush1.msra.mxu0 0.0
    %1454 = vmatprep.subr.mxu0 0.0
    %1455 = vmatpush1.msra.mxu0 0.0
    %1456 = vmatprep.subr.mxu0 0.0
    %1457 = vmatpush1.msra.mxu0 0.0
    %1458 = vmatprep.subr.mxu0 0.0
    %1459 = vmatpush1.msra.mxu0 0.0
    %1460 = vmatprep.subr.mxu0 0.0
    %1461 = vmatpush1.msra.mxu0 0.0
    %1462 = vmatprep.subr.mxu0 0.0
    %1463 = vmatpush1.msra.mxu0 0.0
    %1464 = vmatprep.subr.mxu0 0.0
    %v1465 = vand.u32 %v863, 4294901760
    %v1466 = vsub.f32 %v863, %v1465
    %v1467 = vand.u32 %v1466, 4294901760
    %1468 = vmatpush1.msra.mxu0 %v1467
    %1469 = vmatprep.subr.mxu0 0.0
    %v1470 = vand.u32 %v862, 4294901760
    %v1471 = vsub.f32 %v862, %v1470
    %v1472 = vand.u32 %v1471, 4294901760
    %1473 = vmatpush1.msra.mxu0 %v1472
    %1474 = vmatprep.subr.mxu0 0.0
    %v1475 = vand.u32 %v861, 4294901760
    %v1476 = vsub.f32 %v861, %v1475
    %v1477 = vand.u32 %v1476, 4294901760
    %1478 = vmatpush1.msra.mxu0 %v1477
    %1479 = vmatprep.subr.mxu0 0.0
    %v1480 = vand.u32 %v860, 4294901760
    %v1481 = vsub.f32 %v860, %v1480
    %v1482 = vand.u32 %v1481, 4294901760
    %1483 = vmatpush1.msra.mxu0 %v1482
    %1484 = vmatprep.subr.mxu0 0.0
    %1485 = vmatpush2.msra.mxu0 0.0
    %1486 = vmatprep.subr.mxu0 0.0
    %1487 = vmatpush2.msra.mxu0 0.0
    %1488 = vmatprep.subr.mxu0 0.0
    %1489 = vmatpush2.msra.mxu0 0.0
    %1490 = vmatprep.subr.mxu0 0.0
    %1491 = vmatpush2.msra.mxu0 0.0
    %1492 = vmatprep.subr.mxu0 0.0
    %1493 = vmatpush2.msra.mxu0 0.0
    %1494 = vmatprep.subr.mxu0 0.0
    %1495 = vmatpush2.msra.mxu0 0.0
    %1496 = vmatprep.subr.mxu0 0.0
    %1497 = vmatpush2.msra.mxu0 0.0
    %1498 = vmatprep.subr.mxu0 0.0
    %1499 = vmatpush2.msra.mxu0 0.0
    %1500 = vmatprep.subr.mxu0 0.0
    %1501 = vmatpush2.msra.mxu0 0.0
    %1502 = vmatprep.subr.mxu0 0.0
    %1503 = vmatpush2.msra.mxu0 0.0
    %1504 = vmatprep.subr.mxu0 0.0
    %1505 = vmatpush2.msra.mxu0 0.0
    %1506 = vmatprep.subr.mxu0 0.0
    %1507 = vmatpush2.msra.mxu0 0.0
    %1508 = vmatprep.subr.mxu0 0.0
    %1509 = vmatpush2.msra.mxu0 0.0
    %1510 = vmatprep.subr.mxu0 0.0
    %1511 = vmatpush2.msra.mxu0 0.0
    %1512 = vmatprep.subr.mxu0 0.0
    %1513 = vmatpush2.msra.mxu0 0.0
    %1514 = vmatprep.subr.mxu0 0.0
    %1515 = vmatpush2.msra.mxu0 0.0
    %1516 = vmatprep.mubr.f32.mxu0 0.0
    %v1517 = vand.u32 %v873, 4294901760
    %1518 = vmatmul.mubr.f32.gmra.mxu0 %v1517
    %v1519 = vpop.f32.mrf.mxu0
    %v1520 = vadd.f32 %v1381, %v1519
    %v1521 = vpop.f32.mrf.mxu0
    %1522 = vmatprep.mubr.f32.mxu0 0.0
    %v1523 = vand.u32 %v876, 4294901760
    %1524 = vmatmul.mubr.f32.gmra.mxu0 %v1523
    %v1525 = vpop.f32.mrf.mxu0
    %v1526 = vadd.f32 %v1389, %v1525
    %v1527 = vpop.f32.mrf.mxu0
    %1528 = vmatprep.mubr.f32.mxu0 0.0
    %v1529 = vand.u32 %v879, 4294901760
    %1530 = vmatmul.mubr.f32.gmra.mxu0 %v1529
    %v1531 = vpop.f32.mrf.mxu0
    %v1532 = vadd.f32 %v1397, %v1531
    %v1533 = vpop.f32.mrf.mxu0
    %1534 = vmatprep.mubr.f32.mxu0 0.0
    %v1535 = vand.u32 %v882, 4294901760
    %1536 = vmatmul.mubr.f32.gmra.mxu0 %v1535
    %v1537 = vpop.f32.mrf.mxu0
    %v1538 = vadd.f32 %v1405, %v1537
    %v1539 = vpop.f32.mrf.mxu0
    %1540 = vmatprep.mubr.f32.mxu0 0.0
    %v1541 = vand.u32 %v885, 4294901760
    %1542 = vmatmul.mubr.f32.gmra.mxu0 %v1541
    %v1543 = vpop.f32.mrf.mxu0
    %v1544 = vadd.f32 %v1413, %v1543
    %v1545 = vpop.f32.mrf.mxu0
    %1546 = vmatprep.mubr.f32.mxu0 0.0
    %v1547 = vand.u32 %v888, 4294901760
    %1548 = vmatmul.mubr.f32.gmra.mxu0 %v1547
    %v1549 = vpop.f32.mrf.mxu0
    %v1550 = vadd.f32 %v1421, %v1549
    %v1551 = vpop.f32.mrf.mxu0
    %1552 = vmatprep.mubr.f32.mxu0 0.0
    %v1553 = vand.u32 %v891, 4294901760
    %1554 = vmatmul.mubr.f32.gmra.mxu0 %v1553
    %v1555 = vpop.f32.mrf.mxu0
    %v1556 = vadd.f32 %v1429, %v1555
    %v1557 = vpop.f32.mrf.mxu0
    %1558 = vmatprep.mubr.f32.mxu0 0.0
    %v1559 = vand.u32 %v894, 4294901760
    %1560 = vmatmul.mubr.f32.gmra.mxu0 %v1559
    %v1561 = vpop.f32.mrf.mxu0
    %v1562 = vadd.f32 %v1437, %v1561
    %v1563 = vpop.f32.mrf.mxu0
    %1564 = vdwg.mxu0
    %1565 = vmatprep.subr.mxu0 0.0
    %1566 = vmatpush1.msra.mxu0 0.0
    %1567 = vmatprep.subr.mxu0 0.0
    %1568 = vmatpush1.msra.mxu0 0.0
    %1569 = vmatprep.subr.mxu0 0.0
    %1570 = vmatpush1.msra.mxu0 0.0
    %1571 = vmatprep.subr.mxu0 0.0
    %1572 = vmatpush1.msra.mxu0 0.0
    %1573 = vmatprep.subr.mxu0 0.0
    %1574 = vmatpush1.msra.mxu0 0.0
    %1575 = vmatprep.subr.mxu0 0.0
    %1576 = vmatpush1.msra.mxu0 0.0
    %1577 = vmatprep.subr.mxu0 0.0
    %1578 = vmatpush1.msra.mxu0 0.0
    %1579 = vmatprep.subr.mxu0 0.0
    %1580 = vmatpush1.msra.mxu0 0.0
    %1581 = vmatprep.subr.mxu0 0.0
    %1582 = vmatpush1.msra.mxu0 0.0
    %1583 = vmatprep.subr.mxu0 0.0
    %1584 = vmatpush1.msra.mxu0 0.0
    %1585 = vmatprep.subr.mxu0 0.0
    %1586 = vmatpush1.msra.mxu0 0.0
    %1587 = vmatprep.subr.mxu0 0.0
    %1588 = vmatpush1.msra.mxu0 0.0
    %1589 = vmatprep.subr.mxu0 0.0
    %v1590 = vand.u32 %v863, 4294901760
    %1591 = vmatpush1.msra.mxu0 %v1590
    %1592 = vmatprep.subr.mxu0 0.0
    %v1593 = vand.u32 %v862, 4294901760
    %1594 = vmatpush1.msra.mxu0 %v1593
    %1595 = vmatprep.subr.mxu0 0.0
    %v1596 = vand.u32 %v861, 4294901760
    %1597 = vmatpush1.msra.mxu0 %v1596
    %1598 = vmatprep.subr.mxu0 0.0
    %v1599 = vand.u32 %v860, 4294901760
    %1600 = vmatpush1.msra.mxu0 %v1599
    %1601 = vmatprep.subr.mxu0 0.0
    %1602 = vmatpush2.msra.mxu0 0.0
    %1603 = vmatprep.subr.mxu0 0.0
    %1604 = vmatpush2.msra.mxu0 0.0
    %1605 = vmatprep.subr.mxu0 0.0
    %1606 = vmatpush2.msra.mxu0 0.0
    %1607 = vmatprep.subr.mxu0 0.0
    %1608 = vmatpush2.msra.mxu0 0.0
    %1609 = vmatprep.subr.mxu0 0.0
    %1610 = vmatpush2.msra.mxu0 0.0
    %1611 = vmatprep.subr.mxu0 0.0
    %1612 = vmatpush2.msra.mxu0 0.0
    %1613 = vmatprep.subr.mxu0 0.0
    %1614 = vmatpush2.msra.mxu0 0.0
    %1615 = vmatprep.subr.mxu0 0.0
    %1616 = vmatpush2.msra.mxu0 0.0
    %1617 = vmatprep.subr.mxu0 0.0
    %1618 = vmatpush2.msra.mxu0 0.0
    %1619 = vmatprep.subr.mxu0 0.0
    %1620 = vmatpush2.msra.mxu0 0.0
    %1621 = vmatprep.subr.mxu0 0.0
    %1622 = vmatpush2.msra.mxu0 0.0
    %1623 = vmatprep.subr.mxu0 0.0
    %1624 = vmatpush2.msra.mxu0 0.0
    %1625 = vmatprep.subr.mxu0 0.0
    %1626 = vmatpush2.msra.mxu0 0.0
    %1627 = vmatprep.subr.mxu0 0.0
    %1628 = vmatpush2.msra.mxu0 0.0
    %1629 = vmatprep.subr.mxu0 0.0
    %1630 = vmatpush2.msra.mxu0 0.0
    %1631 = vmatprep.subr.mxu0 0.0
    %1632 = vmatpush2.msra.mxu0 0.0
    %1633 = vmatprep.mubr.f32.mxu0 0.0
    %v1634 = vand.u32 %v873, 4294901760
    %1635 = vmatmul.mubr.f32.gmra.mxu0 %v1634
    %v1636 = vpop.f32.mrf.mxu0
    %v1637 = vadd.f32 %v1520, %v1636
    %v1638 = vpop.f32.mrf.mxu0
    %1639 = vmatprep.mubr.f32.mxu0 0.0
    %v1640 = vand.u32 %v876, 4294901760
    %1641 = vmatmul.mubr.f32.gmra.mxu0 %v1640
    %v1642 = vpop.f32.mrf.mxu0
    %v1643 = vadd.f32 %v1526, %v1642
    %v1644 = vpop.f32.mrf.mxu0
    %1645 = vmatprep.mubr.f32.mxu0 0.0
    %v1646 = vand.u32 %v879, 4294901760
    %1647 = vmatmul.mubr.f32.gmra.mxu0 %v1646
    %v1648 = vpop.f32.mrf.mxu0
    %v1649 = vadd.f32 %v1532, %v1648
    %v1650 = vpop.f32.mrf.mxu0
    %1651 = vmatprep.mubr.f32.mxu0 0.0
    %v1652 = vand.u32 %v882, 4294901760
    %1653 = vmatmul.mubr.f32.gmra.mxu0 %v1652
    %v1654 = vpop.f32.mrf.mxu0
    %v1655 = vadd.f32 %v1538, %v1654
    %v1656 = vpop.f32.mrf.mxu0
    %1657 = vmatprep.mubr.f32.mxu0 0.0
    %v1658 = vand.u32 %v885, 4294901760
    %1659 = vmatmul.mubr.f32.gmra.mxu0 %v1658
    %v1660 = vpop.f32.mrf.mxu0
    %v1661 = vadd.f32 %v1544, %v1660
    %v1662 = vpop.f32.mrf.mxu0
    %1663 = vmatprep.mubr.f32.mxu0 0.0
    %v1664 = vand.u32 %v888, 4294901760
    %1665 = vmatmul.mubr.f32.gmra.mxu0 %v1664
    %v1666 = vpop.f32.mrf.mxu0
    %v1667 = vadd.f32 %v1550, %v1666
    %v1668 = vpop.f32.mrf.mxu0
    %1669 = vmatprep.mubr.f32.mxu0 0.0
    %v1670 = vand.u32 %v891, 4294901760
    %1671 = vmatmul.mubr.f32.gmra.mxu0 %v1670
    %v1672 = vpop.f32.mrf.mxu0
    %v1673 = vadd.f32 %v1556, %v1672
    %v1674 = vpop.f32.mrf.mxu0
    %1675 = vmatprep.mubr.f32.mxu0 0.0
    %v1676 = vand.u32 %v894, 4294901760
    %1677 = vmatmul.mubr.f32.gmra.mxu0 %v1676
    %v1678 = vpop.f32.mrf.mxu0
    %v1679 = vadd.f32 %v1562, %v1678
    %v1680 = vpop.f32.mrf.mxu0
    %1681 = vdwg.mxu0
    %1682 = vst.msk [vmem:[#allocation2] sm:$0xff] %vm871, %v815
    %1683 = vst.msk [vmem:[#allocation2 + $0x8] sm:$0xff] %vm871, %v821
    %1684 = vst.msk [vmem:[#allocation2 + $0x10] sm:$0xff] %vm871, %v827
    %1685 = vst.msk [vmem:[#allocation2 + $0x18] sm:$0xff] %vm871, %v833
    %1686 = vst.msk [vmem:[#allocation2 + $0x20] sm:$0xff] %vm871, %v839
    %1687 = vst.msk [vmem:[#allocation2 + $0x28] sm:$0xff] %vm871, %v845
    %1688 = vst.msk [vmem:[#allocation2 + $0x30] sm:$0xff] %vm871, %v851
    %1689 = vst.msk [vmem:[#allocation2 + $0x38] sm:$0xff] %vm871, %v857
    %1698 = vrot.lane.b32.xlu0 %v1637, 31
    %v1699 = vpop.permute.xlu0 %1698
    %1700 = vrot.lane.b32.xlu0 %v1643, 31
    %v1701 = vpop.permute.xlu0 %1700
    %1702 = vrot.lane.b32.xlu0 %v1649, 31
    %v1703 = vpop.permute.xlu0 %1702
    %1704 = vrot.lane.b32.xlu0 %v1655, 31
    %v1705 = vpop.permute.xlu0 %1704
    %1706 = vrot.lane.b32.xlu0 %v1661, 31
    %v1707 = vpop.permute.xlu0 %1706
    %1708 = vrot.lane.b32.xlu0 %v1667, 31
    %v1709 = vpop.permute.xlu0 %1708
    %1710 = vrot.lane.b32.xlu0 %v1673, 31
    %v1711 = vpop.permute.xlu0 %1710
    %1712 = vrot.lane.b32.xlu0 %v1679, 31
    %v1713 = vpop.permute.xlu0 %1712
    %vm1722 = vcmask 269568
    %1723 = vst.msk [vmem:[#allocation2] sm:$0xff] %vm1722, %v1699
    %1724 = vst.msk [vmem:[#allocation2 + $0x8] sm:$0xff] %vm1722, %v1701
    %1725 = vst.msk [vmem:[#allocation2 + $0x10] sm:$0xff] %vm1722, %v1703
    %1726 = vst.msk [vmem:[#allocation2 + $0x18] sm:$0xff] %vm1722, %v1705
    %1727 = vst.msk [vmem:[#allocation2 + $0x20] sm:$0xff] %vm1722, %v1707
    %1728 = vst.msk [vmem:[#allocation2 + $0x28] sm:$0xff] %vm1722, %v1709
    %1729 = vst.msk [vmem:[#allocation2 + $0x30] sm:$0xff] %vm1722, %v1711
    %1730 = vst.msk [vmem:[#allocation2 + $0x38] sm:$0xff] %vm1722, %v1713
    %v1731 = vld [vmem:[#allocation2] sm:$0xff]
    %v1732 = vld [vmem:[#allocation2 + $0x8] sm:$0xff]
    %v1733 = vld [vmem:[#allocation2 + $0x10] sm:$0xff]
    %v1734 = vld [vmem:[#allocation2 + $0x18] sm:$0xff]
    %v1735 = vld [vmem:[#allocation2 + $0x20] sm:$0xff]
    %v1736 = vld [vmem:[#allocation2 + $0x28] sm:$0xff]
    %v1737 = vld [vmem:[#allocation2 + $0x30] sm:$0xff]
    %v1738 = vld [vmem:[#allocation2 + $0x38] sm:$0xff]
    %v1739 = vpack.c.bf16 %v1732, %v1731
    %v1740 = vpack.c.bf16 %v1734, %v1733
    %v1741 = vpack.c.bf16 %v1736, %v1735
    %v1742 = vpack.c.bf16 %v1738, %v1737
    %v1743 = vunpack.c.l.bf16 %v1739
    %v1744 = vunpack.c.h.bf16 %v1739
    %v1745 = vunpack.c.l.bf16 %v1740
    %v1746 = vunpack.c.h.bf16 %v1740
    %v1747 = vunpack.c.l.bf16 %v1741
    %v1748 = vunpack.c.h.bf16 %v1741
    %v1749 = vunpack.c.l.bf16 %v1742
    %v1750 = vunpack.c.h.bf16 %v1742
    %v1751 = vsub.f32 %v1731, %v1743
    %v1752 = vsub.f32 %v1732, %v1744
    %v1753 = vsub.f32 %v1733, %v1745
    %v1754 = vsub.f32 %v1734, %v1746
    %v1755 = vsub.f32 %v1735, %v1747
    %v1756 = vsub.f32 %v1736, %v1748
    %v1757 = vsub.f32 %v1737, %v1749
    %v1758 = vsub.f32 %v1738, %v1750
    %v1759 = vpack.c.bf16 %v1752, %v1751
    %v1760 = vpack.c.bf16 %v1754, %v1753
    %v1761 = vpack.c.bf16 %v1756, %v1755
    %v1762 = vpack.c.bf16 %v1758, %v1757
    %v1763 = vld [vmem:[%s1] sm:$0xf]
    %v1764 = vld [vmem:[%s1 + $0x4] sm:$0xf]
    %v1765 = vld [vmem:[%s1 + $0x8] sm:$0xf]
    %v1766 = vld [vmem:[%s1 + $0xc] sm:$0xf]
    %v1767 = vld [vmem:[%s1 + $0x10] sm:$0xf]
    %v1768 = vld [vmem:[%s1 + $0x14] sm:$0xf]
    %v1769 = vld [vmem:[%s1 + $0x18] sm:$0xf]
    %v1770 = vld [vmem:[%s1 + $0x1c] sm:$0xf]
    %v1771 = vld [vmem:[%s1 + $0x20] sm:$0xf]
    %v1772 = vld [vmem:[%s1 + $0x24] sm:$0xf]
    %v1773 = vld [vmem:[%s1 + $0x28] sm:$0xf]
    %v1774 = vld [vmem:[%s1 + $0x2c] sm:$0xf]
    %v1775 = vld [vmem:[%s1 + $0x30] sm:$0xf]
    %v1776 = vld [vmem:[%s1 + $0x34] sm:$0xf]
    %v1777 = vld [vmem:[%s1 + $0x38] sm:$0xf]
    %v1778 = vld [vmem:[%s1 + $0x3c] sm:$0xf]
    %v1779 = vld [vmem:[%s1 + $0x40] sm:$0xf]
    %v1780 = vld [vmem:[%s1 + $0x44] sm:$0xf]
    %v1781 = vld [vmem:[%s1 + $0x48] sm:$0xf]
    %v1782 = vld [vmem:[%s1 + $0x4c] sm:$0xf]
    %v1783 = vld [vmem:[%s1 + $0x50] sm:$0xf]
    %v1784 = vld [vmem:[%s1 + $0x54] sm:$0xf]
    %v1785 = vld [vmem:[%s1 + $0x58] sm:$0xf]
    %v1786 = vld [vmem:[%s1 + $0x5c] sm:$0xf]
    %v1787 = vld [vmem:[%s1 + $0x60] sm:$0xf]
    %v1788 = vld [vmem:[%s1 + $0x64] sm:$0xf]
    %v1789 = vld [vmem:[%s1 + $0x68] sm:$0xf]
    %v1790 = vld [vmem:[%s1 + $0x6c] sm:$0xf]
    %v1791 = vld [vmem:[%s1 + $0x70] sm:$0xf]
    %v1792 = vld [vmem:[%s1 + $0x74] sm:$0xf]
    %v1793 = vld [vmem:[%s1 + $0x78] sm:$0xf]
    %v1794 = vld [vmem:[%s1 + $0x7c] sm:$0xf]
    %v1795 = vld [vmem:[%s1 + $0x80] sm:$0xf]
    %v1796 = vld [vmem:[%s1 + $0x84] sm:$0xf]
    %v1797 = vld [vmem:[%s1 + $0x88] sm:$0xf]
    %v1798 = vld [vmem:[%s1 + $0x8c] sm:$0xf]
    %v1799 = vld [vmem:[%s1 + $0x90] sm:$0xf]
    %v1800 = vld [vmem:[%s1 + $0x94] sm:$0xf]
    %v1801 = vld [vmem:[%s1 + $0x98] sm:$0xf]
    %v1802 = vld [vmem:[%s1 + $0x9c] sm:$0xf]
    %v1803 = vld [vmem:[%s1 + $0xa0] sm:$0xf]
    %v1804 = vld [vmem:[%s1 + $0xa4] sm:$0xf]
    %v1805 = vld [vmem:[%s1 + $0xa8] sm:$0xf]
    %v1806 = vld [vmem:[%s1 + $0xac] sm:$0xf]
    %v1807 = vld [vmem:[%s1 + $0xb0] sm:$0xf]
    %v1808 = vld [vmem:[%s1 + $0xb4] sm:$0xf]
    %v1809 = vld [vmem:[%s1 + $0xb8] sm:$0xf]
    %v1810 = vld [vmem:[%s1 + $0xbc] sm:$0xf]
    %v1811 = vld [vmem:[%s1 + $0xc0] sm:$0xf]
    %v1812 = vld [vmem:[%s1 + $0xc4] sm:$0xf]
    %v1813 = vld [vmem:[%s1 + $0xc8] sm:$0xf]
    %v1814 = vld [vmem:[%s1 + $0xcc] sm:$0xf]
    %v1815 = vld [vmem:[%s1 + $0xd0] sm:$0xf]
    %v1816 = vld [vmem:[%s1 + $0xd4] sm:$0xf]
    %v1817 = vld [vmem:[%s1 + $0xd8] sm:$0xf]
    %v1818 = vld [vmem:[%s1 + $0xdc] sm:$0xf]
    %v1819 = vld [vmem:[%s1 + $0xe0] sm:$0xf]
    %v1820 = vld [vmem:[%s1 + $0xe4] sm:$0xf]
    %v1821 = vld [vmem:[%s1 + $0xe8] sm:$0xf]
    %v1822 = vld [vmem:[%s1 + $0xec] sm:$0xf]
    %v1823 = vld [vmem:[%s1 + $0xf0] sm:$0xf]
    %v1824 = vld [vmem:[%s1 + $0xf4] sm:$0xf]
    %v1825 = vld [vmem:[%s1 + $0xf8] sm:$0xf]
    %v1826 = vld [vmem:[%s1 + $0xfc] sm:$0xf]
    %v1827 = vld [vmem:[%s1 + $0x100] sm:$0xf]
    %v1828 = vld [vmem:[%s1 + $0x104] sm:$0xf]
    %v1829 = vld [vmem:[%s1 + $0x108] sm:$0xf]
    %v1830 = vld [vmem:[%s1 + $0x10c] sm:$0xf]
    %v1831 = vld [vmem:[%s1 + $0x110] sm:$0xf]
    %v1832 = vld [vmem:[%s1 + $0x114] sm:$0xf]
    %v1833 = vld [vmem:[%s1 + $0x118] sm:$0xf]
    %v1834 = vld [vmem:[%s1 + $0x11c] sm:$0xf]
    %v1835 = vld [vmem:[%s1 + $0x120] sm:$0xf]
    %v1836 = vld [vmem:[%s1 + $0x124] sm:$0xf]
    %v1837 = vld [vmem:[%s1 + $0x128] sm:$0xf]
    %v1838 = vld [vmem:[%s1 + $0x12c] sm:$0xf]
    %v1839 = vld [vmem:[%s1 + $0x130] sm:$0xf]
    %v1840 = vld [vmem:[%s1 + $0x134] sm:$0xf]
    %v1841 = vld [vmem:[%s1 + $0x138] sm:$0xf]
    %v1842 = vld [vmem:[%s1 + $0x13c] sm:$0xf]
    %v1843 = vld [vmem:[%s1 + $0x140] sm:$0xf]
    %v1844 = vld [vmem:[%s1 + $0x144] sm:$0xf]
    %v1845 = vld [vmem:[%s1 + $0x148] sm:$0xf]
    %v1846 = vld [vmem:[%s1 + $0x14c] sm:$0xf]
    %v1847 = vld [vmem:[%s1 + $0x150] sm:$0xf]
    %v1848 = vld [vmem:[%s1 + $0x154] sm:$0xf]
    %v1849 = vld [vmem:[%s1 + $0x158] sm:$0xf]
    %v1850 = vld [vmem:[%s1 + $0x15c] sm:$0xf]
    %v1851 = vld [vmem:[%s1 + $0x160] sm:$0xf]
    %v1852 = vld [vmem:[%s1 + $0x164] sm:$0xf]
    %v1853 = vld [vmem:[%s1 + $0x168] sm:$0xf]
    %v1854 = vld [vmem:[%s1 + $0x16c] sm:$0xf]
    %v1855 = vld [vmem:[%s1 + $0x170] sm:$0xf]
    %v1856 = vld [vmem:[%s1 + $0x174] sm:$0xf]
    %v1857 = vld [vmem:[%s1 + $0x178] sm:$0xf]
    %v1858 = vld [vmem:[%s1 + $0x17c] sm:$0xf]
    %v1955 = vunpack.c.l.b16 %v1763
    %v1956 = vunpack.c.l.b16 %v1764
    %v1957 = vunpack.c.l.b16 %v1765
    %v1958 = vunpack.c.l.b16 %v1766
    %v1959 = vunpack.c.l.b16 %v1767
    %v1960 = vunpack.c.l.b16 %v1768
    %v1961 = vunpack.c.l.b16 %v1769
    %v1962 = vunpack.c.l.b16 %v1770
    %v1963 = vunpack.c.l.b16 %v1771
    %v1964 = vunpack.c.l.b16 %v1772
    %v1965 = vunpack.c.l.b16 %v1773
    %v1966 = vunpack.c.l.b16 %v1774
    %v1967 = vunpack.c.l.b16 %v1775
    %v1968 = vunpack.c.l.b16 %v1776
    %v1969 = vunpack.c.l.b16 %v1777
    %v1970 = vunpack.c.l.b16 %v1778
    %v1971 = vunpack.c.l.b16 %v1779
    %v1972 = vunpack.c.l.b16 %v1780
    %v1973 = vunpack.c.l.b16 %v1781
    %v1974 = vunpack.c.l.b16 %v1782
    %v1975 = vunpack.c.l.b16 %v1783
    %v1976 = vunpack.c.l.b16 %v1784
    %v1977 = vunpack.c.l.b16 %v1785
    %v1978 = vunpack.c.l.b16 %v1786
    %v1979 = vunpack.c.l.b16 %v1787
    %v1980 = vunpack.c.l.b16 %v1788
    %v1981 = vunpack.c.l.b16 %v1789
    %v1982 = vunpack.c.l.b16 %v1790
    %v1983 = vunpack.c.l.b16 %v1791
    %v1984 = vunpack.c.l.b16 %v1792
    %v1985 = vunpack.c.l.b16 %v1793
    %v1986 = vunpack.c.l.b16 %v1794
    %v1987 = vunpack.c.l.b16 %v1795
    %v1988 = vunpack.c.l.b16 %v1796
    %v1989 = vunpack.c.l.b16 %v1797
    %v1990 = vunpack.c.l.b16 %v1798
    %v1991 = vunpack.c.l.b16 %v1799
    %v1992 = vunpack.c.l.b16 %v1800
    %v1993 = vunpack.c.l.b16 %v1801
    %v1994 = vunpack.c.l.b16 %v1802
    %v1995 = vunpack.c.l.b16 %v1803
    %v1996 = vunpack.c.l.b16 %v1804
    %v1997 = vunpack.c.l.b16 %v1805
    %v1998 = vunpack.c.l.b16 %v1806
    %v1999 = vunpack.c.l.b16 %v1807
    %v2000 = vunpack.c.l.b16 %v1808
    %v2001 = vunpack.c.l.b16 %v1809
    %v2002 = vunpack.c.l.b16 %v1810
    %v2003 = vunpack.c.l.b16 %v1811
    %v2004 = vunpack.c.l.b16 %v1812
    %v2005 = vunpack.c.l.b16 %v1813
    %v2006 = vunpack.c.l.b16 %v1814
    %v2007 = vunpack.c.l.b16 %v1815
    %v2008 = vunpack.c.l.b16 %v1816
    %v2009 = vunpack.c.l.b16 %v1817
    %v2010 = vunpack.c.l.b16 %v1818
    %v2011 = vunpack.c.l.b16 %v1819
    %v2012 = vunpack.c.l.b16 %v1820
    %v2013 = vunpack.c.l.b16 %v1821
    %v2014 = vunpack.c.l.b16 %v1822
    %v2015 = vunpack.c.l.b16 %v1823
    %v2016 = vunpack.c.l.b16 %v1824
    %v2017 = vunpack.c.l.b16 %v1825
    %v2018 = vunpack.c.l.b16 %v1826
    %v2019 = vunpack.c.l.b16 %v1827
    %v2020 = vunpack.c.l.b16 %v1828
    %v2021 = vunpack.c.l.b16 %v1829
    %v2022 = vunpack.c.l.b16 %v1830
    %v2023 = vunpack.c.l.b16 %v1831
    %v2024 = vunpack.c.l.b16 %v1832
    %v2025 = vunpack.c.l.b16 %v1833
    %v2026 = vunpack.c.l.b16 %v1834
    %v2027 = vunpack.c.l.b16 %v1835
    %v2028 = vunpack.c.l.b16 %v1836
    %v2029 = vunpack.c.l.b16 %v1837
    %v2030 = vunpack.c.l.b16 %v1838
    %v2031 = vunpack.c.l.b16 %v1839
    %v2032 = vunpack.c.l.b16 %v1840
    %v2033 = vunpack.c.l.b16 %v1841
    %v2034 = vunpack.c.l.b16 %v1842
    %v2035 = vunpack.c.l.b16 %v1843
    %v2036 = vunpack.c.l.b16 %v1844
    %v2037 = vunpack.c.l.b16 %v1845
    %v2038 = vunpack.c.l.b16 %v1846
    %v2039 = vunpack.c.l.b16 %v1847
    %v2040 = vunpack.c.l.b16 %v1848
    %v2041 = vunpack.c.l.b16 %v1849
    %v2042 = vunpack.c.l.b16 %v1850
    %v2043 = vunpack.c.l.b16 %v1851
    %v2044 = vunpack.c.l.b16 %v1852
    %v2045 = vunpack.c.l.b16 %v1853
    %v2046 = vunpack.c.l.b16 %v1854
    %v2047 = vunpack.c.l.b16 %v1855
    %v2048 = vunpack.c.l.b16 %v1856
    %v2049 = vunpack.c.l.b16 %v1857
    %v2050 = vunpack.c.l.b16 %v1858
    %v2051 = vpack.c.b16 %v1956, %v1955
    %v2052 = vpack.c.b16 %v1958, %v1957
    %v2053 = vpack.c.b16 %v1960, %v1959
    %v2054 = vpack.c.b16 %v1962, %v1961
    %v2055 = vpack.c.b16 %v1964, %v1963
    %v2056 = vpack.c.b16 %v1966, %v1965
    %v2057 = vpack.c.b16 %v1968, %v1967
    %v2058 = vpack.c.b16 %v1970, %v1969
    %v2059 = vpack.c.b16 %v1972, %v1971
    %v2060 = vpack.c.b16 %v1974, %v1973
    %v2061 = vpack.c.b16 %v1976, %v1975
    %v2062 = vpack.c.b16 %v1978, %v1977
    %v2063 = vpack.c.b16 %v1980, %v1979
    %v2064 = vpack.c.b16 %v1982, %v1981
    %v2065 = vpack.c.b16 %v1984, %v1983
    %v2066 = vpack.c.b16 %v1986, %v1985
    %v2067 = vpack.c.b16 %v1988, %v1987
    %v2068 = vpack.c.b16 %v1990, %v1989
    %v2069 = vpack.c.b16 %v1992, %v1991
    %v2070 = vpack.c.b16 %v1994, %v1993
    %v2071 = vpack.c.b16 %v1996, %v1995
    %v2072 = vpack.c.b16 %v1998, %v1997
    %v2073 = vpack.c.b16 %v2000, %v1999
    %v2074 = vpack.c.b16 %v2002, %v2001
    %v2075 = vpack.c.b16 %v2004, %v2003
    %v2076 = vpack.c.b16 %v2006, %v2005
    %v2077 = vpack.c.b16 %v2008, %v2007
    %v2078 = vpack.c.b16 %v2010, %v2009
    %v2079 = vpack.c.b16 %v2012, %v2011
    %v2080 = vpack.c.b16 %v2014, %v2013
    %v2081 = vpack.c.b16 %v2016, %v2015
    %v2082 = vpack.c.b16 %v2018, %v2017
    %v2083 = vpack.c.b16 %v2020, %v2019
    %v2084 = vpack.c.b16 %v2022, %v2021
    %v2085 = vpack.c.b16 %v2024, %v2023
    %v2086 = vpack.c.b16 %v2026, %v2025
    %v2087 = vpack.c.b16 %v2028, %v2027
    %v2088 = vpack.c.b16 %v2030, %v2029
    %v2089 = vpack.c.b16 %v2032, %v2031
    %v2090 = vpack.c.b16 %v2034, %v2033
    %v2091 = vpack.c.b16 %v2036, %v2035
    %v2092 = vpack.c.b16 %v2038, %v2037
    %v2093 = vpack.c.b16 %v2040, %v2039
    %v2094 = vpack.c.b16 %v2042, %v2041
    %v2095 = vpack.c.b16 %v2044, %v2043
    %v2096 = vpack.c.b16 %v2046, %v2045
    %v2097 = vpack.c.b16 %v2048, %v2047
    %v2098 = vpack.c.b16 %v2050, %v2049
    %vm2099 = vcmask 523264
    %v2101 = vsel %vm2099, %v2051, 0
    %v2104 = vsel %vm2099, %v2052, 0
    %v2107 = vsel %vm2099, %v2053, 0
    %v2110 = vsel %vm2099, %v2054, 0
    %v2113 = vsel %vm2099, %v2055, 0
    %v2116 = vsel %vm2099, %v2056, 0
    %v2119 = vsel %vm2099, %v2057, 0
    %v2122 = vsel %vm2099, %v2058, 0
    %v2125 = vsel %vm2099, %v2059, 0
    %v2128 = vsel %vm2099, %v2060, 0
    %v2131 = vsel %vm2099, %v2061, 0
    %v2134 = vsel %vm2099, %v2062, 0
    %v2137 = vsel %vm2099, %v2063, 0
    %v2140 = vsel %vm2099, %v2064, 0
    %v2143 = vsel %vm2099, %v2065, 0
    %v2146 = vsel %vm2099, %v2066, 0
    %v2149 = vsel %vm2099, %v2067, 0
    %v2152 = vsel %vm2099, %v2068, 0
    %v2155 = vsel %vm2099, %v2069, 0
    %v2158 = vsel %vm2099, %v2070, 0
    %v2161 = vsel %vm2099, %v2071, 0
    %v2164 = vsel %vm2099, %v2072, 0
    %v2167 = vsel %vm2099, %v2073, 0
    %v2170 = vsel %vm2099, %v2074, 0
    %v2173 = vsel %vm2099, %v2075, 0
    %v2176 = vsel %vm2099, %v2076, 0
    %v2179 = vsel %vm2099, %v2077, 0
    %v2182 = vsel %vm2099, %v2078, 0
    %v2185 = vsel %vm2099, %v2079, 0
    %v2188 = vsel %vm2099, %v2080, 0
    %v2191 = vsel %vm2099, %v2081, 0
    %v2194 = vsel %vm2099, %v2082, 0
    %v2197 = vsel %vm2099, %v2083, 0
    %v2200 = vsel %vm2099, %v2084, 0
    %v2203 = vsel %vm2099, %v2085, 0
    %v2206 = vsel %vm2099, %v2086, 0
    %v2209 = vsel %vm2099, %v2087, 0
    %v2212 = vsel %vm2099, %v2088, 0
    %v2215 = vsel %vm2099, %v2089, 0
    %v2218 = vsel %vm2099, %v2090, 0
    %v2221 = vsel %vm2099, %v2091, 0
    %v2224 = vsel %vm2099, %v2092, 0
    %v2227 = vsel %vm2099, %v2093, 0
    %v2230 = vsel %vm2099, %v2094, 0
    %v2233 = vsel %vm2099, %v2095, 0
    %v2236 = vsel %vm2099, %v2096, 0
    %v2239 = vsel %vm2099, %v2097, 0
    %v2242 = vsel %vm2099, %v2098, 0
    %2244 = vmatprep.subr.bf16.mxu0 0
    %2245 = vmatpush1.bf16.msra.mxu0 0
    %2246 = vmatprep.subr.bf16.mxu0 0
    %2247 = vmatpush1.bf16.msra.mxu0 0
    %2248 = vmatprep.subr.bf16.mxu0 0
    %2249 = vmatpush1.bf16.msra.mxu0 0
    %2250 = vmatprep.subr.bf16.mxu0 0
    %2251 = vmatpush1.bf16.msra.mxu0 0
    %2252 = vmatprep.subr.bf16.mxu0 0
    %2253 = vmatpush1.bf16.msra.mxu0 %v1762
    %2254 = vmatprep.subr.bf16.mxu0 0
    %2255 = vmatpush1.bf16.msra.mxu0 %v1761
    %2256 = vmatprep.subr.bf16.mxu0 0
    %2257 = vmatpush1.bf16.msra.mxu0 %v1760
    %2258 = vmatprep.subr.bf16.mxu0 0
    %2259 = vmatpush1.bf16.msra.mxu0 %v1759
    %2260 = vmatprep.subr.bf16.mxu0 0
    %2261 = vmatpush2.bf16.msra.mxu0 0
    %2262 = vmatprep.subr.bf16.mxu0 0
    %2263 = vmatpush2.bf16.msra.mxu0 0
    %2264 = vmatprep.subr.bf16.mxu0 0
    %2265 = vmatpush2.bf16.msra.mxu0 0
    %2266 = vmatprep.subr.bf16.mxu0 0
    %2267 = vmatpush2.bf16.msra.mxu0 0
    %2268 = vmatprep.subr.bf16.mxu0 0
    %2269 = vmatpush2.bf16.msra.mxu0 0
    %2270 = vmatprep.subr.bf16.mxu0 0
    %2271 = vmatpush2.bf16.msra.mxu0 0
    %2272 = vmatprep.subr.bf16.mxu0 0
    %2273 = vmatpush2.bf16.msra.mxu0 0
    %2274 = vmatprep.subr.bf16.mxu0 0
    %2275 = vmatpush2.bf16.msra.mxu0 0
    %2276 = vmatprep.mubr.bf16.mxu0 0
    %2277 = vmatmul.mubr.bf16.gmra.mxu0 %v2101
    %v2278 = vpop.f32.mrf.mxu0
    %v2279 = vadd.f32 0.0, %v2278
    %v2280 = vpop.f32.mrf.mxu0
    %v2281 = vpop.f32.mrf.mxu0
    %v2282 = vadd.f32 0.0, %v2281
    %v2283 = vpop.f32.mrf.mxu0
    %2284 = vmatprep.mubr.bf16.mxu0 0
    %2285 = vmatmul.mubr.bf16.gmra.mxu0 %v2104
    %v2286 = vpop.f32.mrf.mxu0
    %v2287 = vadd.f32 0.0, %v2286
    %v2288 = vpop.f32.mrf.mxu0
    %v2289 = vpop.f32.mrf.mxu0
    %v2290 = vadd.f32 0.0, %v2289
    %v2291 = vpop.f32.mrf.mxu0
    %2292 = vmatprep.mubr.bf16.mxu0 0
    %2293 = vmatmul.mubr.bf16.gmra.mxu0 %v2107
    %v2294 = vpop.f32.mrf.mxu0
    %v2295 = vadd.f32 0.0, %v2294
    %v2296 = vpop.f32.mrf.mxu0
    %v2297 = vpop.f32.mrf.mxu0
    %v2298 = vadd.f32 0.0, %v2297
    %v2299 = vpop.f32.mrf.mxu0
    %2300 = vmatprep.mubr.bf16.mxu0 0
    %2301 = vmatmul.mubr.bf16.gmra.mxu0 %v2110
    %v2302 = vpop.f32.mrf.mxu0
    %v2303 = vadd.f32 0.0, %v2302
    %v2304 = vpop.f32.mrf.mxu0
    %v2305 = vpop.f32.mrf.mxu0
    %v2306 = vadd.f32 0.0, %v2305
    %v2307 = vpop.f32.mrf.mxu0
    %2308 = vmatprep.mubr.bf16.mxu0 0
    %2309 = vmatmul.mubr.bf16.gmra.mxu0 %v2113
    %v2310 = vpop.f32.mrf.mxu0
    %v2311 = vadd.f32 0.0, %v2310
    %v2312 = vpop.f32.mrf.mxu0
    %v2313 = vpop.f32.mrf.mxu0
    %v2314 = vadd.f32 0.0, %v2313
    %v2315 = vpop.f32.mrf.mxu0
    %2316 = vmatprep.mubr.bf16.mxu0 0
    %2317 = vmatmul.mubr.bf16.gmra.mxu0 %v2116
    %v2318 = vpop.f32.mrf.mxu0
    %v2319 = vadd.f32 0.0, %v2318
    %v2320 = vpop.f32.mrf.mxu0
    %v2321 = vpop.f32.mrf.mxu0
    %v2322 = vadd.f32 0.0, %v2321
    %v2323 = vpop.f32.mrf.mxu0
    %2324 = vmatprep.mubr.bf16.mxu0 0
    %2325 = vmatmul.mubr.bf16.gmra.mxu0 %v2119
    %v2326 = vpop.f32.mrf.mxu0
    %v2327 = vadd.f32 0.0, %v2326
    %v2328 = vpop.f32.mrf.mxu0
    %v2329 = vpop.f32.mrf.mxu0
    %v2330 = vadd.f32 0.0, %v2329
    %v2331 = vpop.f32.mrf.mxu0
    %2332 = vmatprep.mubr.bf16.mxu0 0
    %2333 = vmatmul.mubr.bf16.gmra.mxu0 %v2122
    %v2334 = vpop.f32.mrf.mxu0
    %v2335 = vadd.f32 0.0, %v2334
    %v2336 = vpop.f32.mrf.mxu0
    %v2337 = vpop.f32.mrf.mxu0
    %v2338 = vadd.f32 0.0, %v2337
    %v2339 = vpop.f32.mrf.mxu0
    %2340 = vmatprep.mubr.bf16.mxu0 0
    %2341 = vmatmul.mubr.bf16.gmra.mxu0 %v2125
    %v2342 = vpop.f32.mrf.mxu0
    %v2343 = vadd.f32 0.0, %v2342
    %v2344 = vpop.f32.mrf.mxu0
    %v2345 = vpop.f32.mrf.mxu0
    %v2346 = vadd.f32 0.0, %v2345
    %v2347 = vpop.f32.mrf.mxu0
    %2348 = vmatprep.mubr.bf16.mxu0 0
    %2349 = vmatmul.mubr.bf16.gmra.mxu0 %v2128
    %v2350 = vpop.f32.mrf.mxu0
    %v2351 = vadd.f32 0.0, %v2350
    %v2352 = vpop.f32.mrf.mxu0
    %v2353 = vpop.f32.mrf.mxu0
    %v2354 = vadd.f32 0.0, %v2353
    %v2355 = vpop.f32.mrf.mxu0
    %2356 = vmatprep.mubr.bf16.mxu0 0
    %2357 = vmatmul.mubr.bf16.gmra.mxu0 %v2131
    %v2358 = vpop.f32.mrf.mxu0
    %v2359 = vadd.f32 0.0, %v2358
    %v2360 = vpop.f32.mrf.mxu0
    %v2361 = vpop.f32.mrf.mxu0
    %v2362 = vadd.f32 0.0, %v2361
    %v2363 = vpop.f32.mrf.mxu0
    %2364 = vmatprep.mubr.bf16.mxu0 0
    %2365 = vmatmul.mubr.bf16.gmra.mxu0 %v2134
    %v2366 = vpop.f32.mrf.mxu0
    %v2367 = vadd.f32 0.0, %v2366
    %v2368 = vpop.f32.mrf.mxu0
    %v2369 = vpop.f32.mrf.mxu0
    %v2370 = vadd.f32 0.0, %v2369
    %v2371 = vpop.f32.mrf.mxu0
    %2372 = vmatprep.mubr.bf16.mxu0 0
    %2373 = vmatmul.mubr.bf16.gmra.mxu0 %v2137
    %v2374 = vpop.f32.mrf.mxu0
    %v2375 = vadd.f32 0.0, %v2374
    %v2376 = vpop.f32.mrf.mxu0
    %v2377 = vpop.f32.mrf.mxu0
    %v2378 = vadd.f32 0.0, %v2377
    %v2379 = vpop.f32.mrf.mxu0
    %2380 = vmatprep.mubr.bf16.mxu0 0
    %2381 = vmatmul.mubr.bf16.gmra.mxu0 %v2140
    %v2382 = vpop.f32.mrf.mxu0
    %v2383 = vadd.f32 0.0, %v2382
    %v2384 = vpop.f32.mrf.mxu0
    %v2385 = vpop.f32.mrf.mxu0
    %v2386 = vadd.f32 0.0, %v2385
    %v2387 = vpop.f32.mrf.mxu0
    %2388 = vmatprep.mubr.bf16.mxu0 0
    %2389 = vmatmul.mubr.bf16.gmra.mxu0 %v2143
    %v2390 = vpop.f32.mrf.mxu0
    %v2391 = vadd.f32 0.0, %v2390
    %v2392 = vpop.f32.mrf.mxu0
    %v2393 = vpop.f32.mrf.mxu0
    %v2394 = vadd.f32 0.0, %v2393
    %v2395 = vpop.f32.mrf.mxu0
    %2396 = vmatprep.mubr.bf16.mxu0 0
    %2397 = vmatmul.mubr.bf16.gmra.mxu0 %v2146
    %v2398 = vpop.f32.mrf.mxu0
    %v2399 = vadd.f32 0.0, %v2398
    %v2400 = vpop.f32.mrf.mxu0
    %v2401 = vpop.f32.mrf.mxu0
    %v2402 = vadd.f32 0.0, %v2401
    %v2403 = vpop.f32.mrf.mxu0
    %2404 = vmatprep.mubr.bf16.mxu0 0
    %2405 = vmatmul.mubr.bf16.gmra.mxu0 %v2149
    %v2406 = vpop.f32.mrf.mxu0
    %v2407 = vadd.f32 0.0, %v2406
    %v2408 = vpop.f32.mrf.mxu0
    %v2409 = vpop.f32.mrf.mxu0
    %v2410 = vadd.f32 0.0, %v2409
    %v2411 = vpop.f32.mrf.mxu0
    %2412 = vmatprep.mubr.bf16.mxu0 0
    %2413 = vmatmul.mubr.bf16.gmra.mxu0 %v2152
    %v2414 = vpop.f32.mrf.mxu0
    %v2415 = vadd.f32 0.0, %v2414
    %v2416 = vpop.f32.mrf.mxu0
    %v2417 = vpop.f32.mrf.mxu0
    %v2418 = vadd.f32 0.0, %v2417
    %v2419 = vpop.f32.mrf.mxu0
    %2420 = vmatprep.mubr.bf16.mxu0 0
    %2421 = vmatmul.mubr.bf16.gmra.mxu0 %v2155
    %v2422 = vpop.f32.mrf.mxu0
    %v2423 = vadd.f32 0.0, %v2422
    %v2424 = vpop.f32.mrf.mxu0
    %v2425 = vpop.f32.mrf.mxu0
    %v2426 = vadd.f32 0.0, %v2425
    %v2427 = vpop.f32.mrf.mxu0
    %2428 = vmatprep.mubr.bf16.mxu0 0
    %2429 = vmatmul.mubr.bf16.gmra.mxu0 %v2158
    %v2430 = vpop.f32.mrf.mxu0
    %v2431 = vadd.f32 0.0, %v2430
    %v2432 = vpop.f32.mrf.mxu0
    %v2433 = vpop.f32.mrf.mxu0
    %v2434 = vadd.f32 0.0, %v2433
    %v2435 = vpop.f32.mrf.mxu0
    %2436 = vmatprep.mubr.bf16.mxu0 0
    %2437 = vmatmul.mubr.bf16.gmra.mxu0 %v2161
    %v2438 = vpop.f32.mrf.mxu0
    %v2439 = vadd.f32 0.0, %v2438
    %v2440 = vpop.f32.mrf.mxu0
    %v2441 = vpop.f32.mrf.mxu0
    %v2442 = vadd.f32 0.0, %v2441
    %v2443 = vpop.f32.mrf.mxu0
    %2444 = vmatprep.mubr.bf16.mxu0 0
    %2445 = vmatmul.mubr.bf16.gmra.mxu0 %v2164
    %v2446 = vpop.f32.mrf.mxu0
    %v2447 = vadd.f32 0.0, %v2446
    %v2448 = vpop.f32.mrf.mxu0
    %v2449 = vpop.f32.mrf.mxu0
    %v2450 = vadd.f32 0.0, %v2449
    %v2451 = vpop.f32.mrf.mxu0
    %2452 = vmatprep.mubr.bf16.mxu0 0
    %2453 = vmatmul.mubr.bf16.gmra.mxu0 %v2167
    %v2454 = vpop.f32.mrf.mxu0
    %v2455 = vadd.f32 0.0, %v2454
    %v2456 = vpop.f32.mrf.mxu0
    %v2457 = vpop.f32.mrf.mxu0
    %v2458 = vadd.f32 0.0, %v2457
    %v2459 = vpop.f32.mrf.mxu0
    %2460 = vmatprep.mubr.bf16.mxu0 0
    %2461 = vmatmul.mubr.bf16.gmra.mxu0 %v2170
    %v2462 = vpop.f32.mrf.mxu0
    %v2463 = vadd.f32 0.0, %v2462
    %v2464 = vpop.f32.mrf.mxu0
    %v2465 = vpop.f32.mrf.mxu0
    %v2466 = vadd.f32 0.0, %v2465
    %v2467 = vpop.f32.mrf.mxu0
    %2468 = vmatprep.mubr.bf16.mxu0 0
    %2469 = vmatmul.mubr.bf16.gmra.mxu0 %v2173
    %v2470 = vpop.f32.mrf.mxu0
    %v2471 = vadd.f32 0.0, %v2470
    %v2472 = vpop.f32.mrf.mxu0
    %v2473 = vpop.f32.mrf.mxu0
    %v2474 = vadd.f32 0.0, %v2473
    %v2475 = vpop.f32.mrf.mxu0
    %2476 = vmatprep.mubr.bf16.mxu0 0
    %2477 = vmatmul.mubr.bf16.gmra.mxu0 %v2176
    %v2478 = vpop.f32.mrf.mxu0
    %v2479 = vadd.f32 0.0, %v2478
    %v2480 = vpop.f32.mrf.mxu0
    %v2481 = vpop.f32.mrf.mxu0
    %v2482 = vadd.f32 0.0, %v2481
    %v2483 = vpop.f32.mrf.mxu0
    %2484 = vmatprep.mubr.bf16.mxu0 0
    %2485 = vmatmul.mubr.bf16.gmra.mxu0 %v2179
    %v2486 = vpop.f32.mrf.mxu0
    %v2487 = vadd.f32 0.0, %v2486
    %v2488 = vpop.f32.mrf.mxu0
    %v2489 = vpop.f32.mrf.mxu0
    %v2490 = vadd.f32 0.0, %v2489
    %v2491 = vpop.f32.mrf.mxu0
    %2492 = vmatprep.mubr.bf16.mxu0 0
    %2493 = vmatmul.mubr.bf16.gmra.mxu0 %v2182
    %v2494 = vpop.f32.mrf.mxu0
    %v2495 = vadd.f32 0.0, %v2494
    %v2496 = vpop.f32.mrf.mxu0
    %v2497 = vpop.f32.mrf.mxu0
    %v2498 = vadd.f32 0.0, %v2497
    %v2499 = vpop.f32.mrf.mxu0
    %2500 = vmatprep.mubr.bf16.mxu0 0
    %2501 = vmatmul.mubr.bf16.gmra.mxu0 %v2185
    %v2502 = vpop.f32.mrf.mxu0
    %v2503 = vadd.f32 0.0, %v2502
    %v2504 = vpop.f32.mrf.mxu0
    %v2505 = vpop.f32.mrf.mxu0
    %v2506 = vadd.f32 0.0, %v2505
    %v2507 = vpop.f32.mrf.mxu0
    %2508 = vmatprep.mubr.bf16.mxu0 0
    %2509 = vmatmul.mubr.bf16.gmra.mxu0 %v2188
    %v2510 = vpop.f32.mrf.mxu0
    %v2511 = vadd.f32 0.0, %v2510
    %v2512 = vpop.f32.mrf.mxu0
    %v2513 = vpop.f32.mrf.mxu0
    %v2514 = vadd.f32 0.0, %v2513
    %v2515 = vpop.f32.mrf.mxu0
    %2516 = vmatprep.mubr.bf16.mxu0 0
    %2517 = vmatmul.mubr.bf16.gmra.mxu0 %v2191
    %v2518 = vpop.f32.mrf.mxu0
    %v2519 = vadd.f32 0.0, %v2518
    %v2520 = vpop.f32.mrf.mxu0
    %v2521 = vpop.f32.mrf.mxu0
    %v2522 = vadd.f32 0.0, %v2521
    %v2523 = vpop.f32.mrf.mxu0
    %2524 = vmatprep.mubr.bf16.mxu0 0
    %2525 = vmatmul.mubr.bf16.gmra.mxu0 %v2194
    %v2526 = vpop.f32.mrf.mxu0
    %v2527 = vadd.f32 0.0, %v2526
    %v2528 = vpop.f32.mrf.mxu0
    %v2529 = vpop.f32.mrf.mxu0
    %v2530 = vadd.f32 0.0, %v2529
    %v2531 = vpop.f32.mrf.mxu0
    %2532 = vmatprep.mubr.bf16.mxu0 0
    %2533 = vmatmul.mubr.bf16.gmra.mxu0 %v2197
    %v2534 = vpop.f32.mrf.mxu0
    %v2535 = vadd.f32 0.0, %v2534
    %v2536 = vpop.f32.mrf.mxu0
    %v2537 = vpop.f32.mrf.mxu0
    %v2538 = vadd.f32 0.0, %v2537
    %v2539 = vpop.f32.mrf.mxu0
    %2540 = vmatprep.mubr.bf16.mxu0 0
    %2541 = vmatmul.mubr.bf16.gmra.mxu0 %v2200
    %v2542 = vpop.f32.mrf.mxu0
    %v2543 = vadd.f32 0.0, %v2542
    %v2544 = vpop.f32.mrf.mxu0
    %v2545 = vpop.f32.mrf.mxu0
    %v2546 = vadd.f32 0.0, %v2545
    %v2547 = vpop.f32.mrf.mxu0
    %2548 = vmatprep.mubr.bf16.mxu0 0
    %2549 = vmatmul.mubr.bf16.gmra.mxu0 %v2203
    %v2550 = vpop.f32.mrf.mxu0
    %v2551 = vadd.f32 0.0, %v2550
    %v2552 = vpop.f32.mrf.mxu0
    %v2553 = vpop.f32.mrf.mxu0
    %v2554 = vadd.f32 0.0, %v2553
    %v2555 = vpop.f32.mrf.mxu0
    %2556 = vmatprep.mubr.bf16.mxu0 0
    %2557 = vmatmul.mubr.bf16.gmra.mxu0 %v2206
    %v2558 = vpop.f32.mrf.mxu0
    %v2559 = vadd.f32 0.0, %v2558
    %v2560 = vpop.f32.mrf.mxu0
    %v2561 = vpop.f32.mrf.mxu0
    %v2562 = vadd.f32 0.0, %v2561
    %v2563 = vpop.f32.mrf.mxu0
    %2564 = vmatprep.mubr.bf16.mxu0 0
    %2565 = vmatmul.mubr.bf16.gmra.mxu0 %v2209
    %v2566 = vpop.f32.mrf.mxu0
    %v2567 = vadd.f32 0.0, %v2566
    %v2568 = vpop.f32.mrf.mxu0
    %v2569 = vpop.f32.mrf.mxu0
    %v2570 = vadd.f32 0.0, %v2569
    %v2571 = vpop.f32.mrf.mxu0
    %2572 = vmatprep.mubr.bf16.mxu0 0
    %2573 = vmatmul.mubr.bf16.gmra.mxu0 %v2212
    %v2574 = vpop.f32.mrf.mxu0
    %v2575 = vadd.f32 0.0, %v2574
    %v2576 = vpop.f32.mrf.mxu0
    %v2577 = vpop.f32.mrf.mxu0
    %v2578 = vadd.f32 0.0, %v2577
    %v2579 = vpop.f32.mrf.mxu0
    %2580 = vmatprep.mubr.bf16.mxu0 0
    %2581 = vmatmul.mubr.bf16.gmra.mxu0 %v2215
    %v2582 = vpop.f32.mrf.mxu0
    %v2583 = vadd.f32 0.0, %v2582
    %v2584 = vpop.f32.mrf.mxu0
    %v2585 = vpop.f32.mrf.mxu0
    %v2586 = vadd.f32 0.0, %v2585
    %v2587 = vpop.f32.mrf.mxu0
    %2588 = vmatprep.mubr.bf16.mxu0 0
    %2589 = vmatmul.mubr.bf16.gmra.mxu0 %v2218
    %v2590 = vpop.f32.mrf.mxu0
    %v2591 = vadd.f32 0.0, %v2590
    %v2592 = vpop.f32.mrf.mxu0
    %v2593 = vpop.f32.mrf.mxu0
    %v2594 = vadd.f32 0.0, %v2593
    %v2595 = vpop.f32.mrf.mxu0
    %2596 = vmatprep.mubr.bf16.mxu0 0
    %2597 = vmatmul.mubr.bf16.gmra.mxu0 %v2221
    %v2598 = vpop.f32.mrf.mxu0
    %v2599 = vadd.f32 0.0, %v2598
    %v2600 = vpop.f32.mrf.mxu0
    %v2601 = vpop.f32.mrf.mxu0
    %v2602 = vadd.f32 0.0, %v2601
    %v2603 = vpop.f32.mrf.mxu0
    %2604 = vmatprep.mubr.bf16.mxu0 0
    %2605 = vmatmul.mubr.bf16.gmra.mxu0 %v2224
    %v2606 = vpop.f32.mrf.mxu0
    %v2607 = vadd.f32 0.0, %v2606
    %v2608 = vpop.f32.mrf.mxu0
    %v2609 = vpop.f32.mrf.mxu0
    %v2610 = vadd.f32 0.0, %v2609
    %v2611 = vpop.f32.mrf.mxu0
    %2612 = vmatprep.mubr.bf16.mxu0 0
    %2613 = vmatmul.mubr.bf16.gmra.mxu0 %v2227
    %v2614 = vpop.f32.mrf.mxu0
    %v2615 = vadd.f32 0.0, %v2614
    %v2616 = vpop.f32.mrf.mxu0
    %v2617 = vpop.f32.mrf.mxu0
    %v2618 = vadd.f32 0.0, %v2617
    %v2619 = vpop.f32.mrf.mxu0
    %2620 = vmatprep.mubr.bf16.mxu0 0
    %2621 = vmatmul.mubr.bf16.gmra.mxu0 %v2230
    %v2622 = vpop.f32.mrf.mxu0
    %v2623 = vadd.f32 0.0, %v2622
    %v2624 = vpop.f32.mrf.mxu0
    %v2625 = vpop.f32.mrf.mxu0
    %v2626 = vadd.f32 0.0, %v2625
    %v2627 = vpop.f32.mrf.mxu0
    %2628 = vmatprep.mubr.bf16.mxu0 0
    %2629 = vmatmul.mubr.bf16.gmra.mxu0 %v2233
    %v2630 = vpop.f32.mrf.mxu0
    %v2631 = vadd.f32 0.0, %v2630
    %v2632 = vpop.f32.mrf.mxu0
    %v2633 = vpop.f32.mrf.mxu0
    %v2634 = vadd.f32 0.0, %v2633
    %v2635 = vpop.f32.mrf.mxu0
    %2636 = vmatprep.mubr.bf16.mxu0 0
    %2637 = vmatmul.mubr.bf16.gmra.mxu0 %v2236
    %v2638 = vpop.f32.mrf.mxu0
    %v2639 = vadd.f32 0.0, %v2638
    %v2640 = vpop.f32.mrf.mxu0
    %v2641 = vpop.f32.mrf.mxu0
    %v2642 = vadd.f32 0.0, %v2641
    %v2643 = vpop.f32.mrf.mxu0
    %2644 = vmatprep.mubr.bf16.mxu0 0
    %2645 = vmatmul.mubr.bf16.gmra.mxu0 %v2239
    %v2646 = vpop.f32.mrf.mxu0
    %v2647 = vadd.f32 0.0, %v2646
    %v2648 = vpop.f32.mrf.mxu0
    %v2649 = vpop.f32.mrf.mxu0
    %v2650 = vadd.f32 0.0, %v2649
    %v2651 = vpop.f32.mrf.mxu0
    %2652 = vmatprep.mubr.bf16.mxu0 0
    %2653 = vmatmul.mubr.bf16.gmra.mxu0 %v2242
    %v2654 = vpop.f32.mrf.mxu0
    %v2655 = vadd.f32 0.0, %v2654
    %v2656 = vpop.f32.mrf.mxu0
    %v2657 = vpop.f32.mrf.mxu0
    %v2658 = vadd.f32 0.0, %v2657
    %v2659 = vpop.f32.mrf.mxu0
    %2660 = vdwg.mxu0
    %2661 = vmatprep.subr.bf16.mxu0 0
    %2662 = vmatpush1.bf16.msra.mxu0 0
    %2663 = vmatprep.subr.bf16.mxu0 0
    %2664 = vmatpush1.bf16.msra.mxu0 0
    %2665 = vmatprep.subr.bf16.mxu0 0
    %2666 = vmatpush1.bf16.msra.mxu0 0
    %2667 = vmatprep.subr.bf16.mxu0 0
    %2668 = vmatpush1.bf16.msra.mxu0 0
    %2669 = vmatprep.subr.bf16.mxu0 0
    %2670 = vmatpush1.bf16.msra.mxu0 %v1742
    %2671 = vmatprep.subr.bf16.mxu0 0
    %2672 = vmatpush1.bf16.msra.mxu0 %v1741
    %2673 = vmatprep.subr.bf16.mxu0 0
    %2674 = vmatpush1.bf16.msra.mxu0 %v1740
    %2675 = vmatprep.subr.bf16.mxu0 0
    %2676 = vmatpush1.bf16.msra.mxu0 %v1739
    %2677 = vmatprep.subr.bf16.mxu0 0
    %2678 = vmatpush2.bf16.msra.mxu0 0
    %2679 = vmatprep.subr.bf16.mxu0 0
    %2680 = vmatpush2.bf16.msra.mxu0 0
    %2681 = vmatprep.subr.bf16.mxu0 0
    %2682 = vmatpush2.bf16.msra.mxu0 0
    %2683 = vmatprep.subr.bf16.mxu0 0
    %2684 = vmatpush2.bf16.msra.mxu0 0
    %2685 = vmatprep.subr.bf16.mxu0 0
    %2686 = vmatpush2.bf16.msra.mxu0 0
    %2687 = vmatprep.subr.bf16.mxu0 0
    %2688 = vmatpush2.bf16.msra.mxu0 0
    %2689 = vmatprep.subr.bf16.mxu0 0
    %2690 = vmatpush2.bf16.msra.mxu0 0
    %2691 = vmatprep.subr.bf16.mxu0 0
    %2692 = vmatpush2.bf16.msra.mxu0 0
    %2693 = vmatprep.mubr.bf16.mxu0 0
    %2694 = vmatmul.mubr.bf16.gmra.mxu0 %v2101
    %v2695 = vpop.f32.mrf.mxu0
    %v2696 = vadd.f32 %v2279, %v2695
    %v2697 = vpop.f32.mrf.mxu0
    %v2698 = vpop.f32.mrf.mxu0
    %v2699 = vadd.f32 %v2282, %v2698
    %v2700 = vpop.f32.mrf.mxu0
    %2701 = vmatprep.mubr.bf16.mxu0 0
    %2702 = vmatmul.mubr.bf16.gmra.mxu0 %v2104
    %v2703 = vpop.f32.mrf.mxu0
    %v2704 = vadd.f32 %v2287, %v2703
    %v2705 = vpop.f32.mrf.mxu0
    %v2706 = vpop.f32.mrf.mxu0
    %v2707 = vadd.f32 %v2290, %v2706
    %v2708 = vpop.f32.mrf.mxu0
    %2709 = vmatprep.mubr.bf16.mxu0 0
    %2710 = vmatmul.mubr.bf16.gmra.mxu0 %v2107
    %v2711 = vpop.f32.mrf.mxu0
    %v2712 = vadd.f32 %v2295, %v2711
    %v2713 = vpop.f32.mrf.mxu0
    %v2714 = vpop.f32.mrf.mxu0
    %v2715 = vadd.f32 %v2298, %v2714
    %v2716 = vpop.f32.mrf.mxu0
    %2717 = vmatprep.mubr.bf16.mxu0 0
    %2718 = vmatmul.mubr.bf16.gmra.mxu0 %v2110
    %v2719 = vpop.f32.mrf.mxu0
    %v2720 = vadd.f32 %v2303, %v2719
    %v2721 = vpop.f32.mrf.mxu0
    %v2722 = vpop.f32.mrf.mxu0
    %v2723 = vadd.f32 %v2306, %v2722
    %v2724 = vpop.f32.mrf.mxu0
    %2725 = vmatprep.mubr.bf16.mxu0 0
    %2726 = vmatmul.mubr.bf16.gmra.mxu0 %v2113
    %v2727 = vpop.f32.mrf.mxu0
    %v2728 = vadd.f32 %v2311, %v2727
    %v2729 = vpop.f32.mrf.mxu0
    %v2730 = vpop.f32.mrf.mxu0
    %v2731 = vadd.f32 %v2314, %v2730
    %v2732 = vpop.f32.mrf.mxu0
    %2733 = vmatprep.mubr.bf16.mxu0 0
    %2734 = vmatmul.mubr.bf16.gmra.mxu0 %v2116
    %v2735 = vpop.f32.mrf.mxu0
    %v2736 = vadd.f32 %v2319, %v2735
    %v2737 = vpop.f32.mrf.mxu0
    %v2738 = vpop.f32.mrf.mxu0
    %v2739 = vadd.f32 %v2322, %v2738
    %v2740 = vpop.f32.mrf.mxu0
    %2741 = vmatprep.mubr.bf16.mxu0 0
    %2742 = vmatmul.mubr.bf16.gmra.mxu0 %v2119
    %v2743 = vpop.f32.mrf.mxu0
    %v2744 = vadd.f32 %v2327, %v2743
    %v2745 = vpop.f32.mrf.mxu0
    %v2746 = vpop.f32.mrf.mxu0
    %v2747 = vadd.f32 %v2330, %v2746
    %v2748 = vpop.f32.mrf.mxu0
    %2749 = vmatprep.mubr.bf16.mxu0 0
    %2750 = vmatmul.mubr.bf16.gmra.mxu0 %v2122
    %v2751 = vpop.f32.mrf.mxu0
    %v2752 = vadd.f32 %v2335, %v2751
    %v2753 = vpop.f32.mrf.mxu0
    %v2754 = vpop.f32.mrf.mxu0
    %v2755 = vadd.f32 %v2338, %v2754
    %v2756 = vpop.f32.mrf.mxu0
    %2757 = vmatprep.mubr.bf16.mxu0 0
    %2758 = vmatmul.mubr.bf16.gmra.mxu0 %v2125
    %v2759 = vpop.f32.mrf.mxu0
    %v2760 = vadd.f32 %v2343, %v2759
    %v2761 = vpop.f32.mrf.mxu0
    %v2762 = vpop.f32.mrf.mxu0
    %v2763 = vadd.f32 %v2346, %v2762
    %v2764 = vpop.f32.mrf.mxu0
    %2765 = vmatprep.mubr.bf16.mxu0 0
    %2766 = vmatmul.mubr.bf16.gmra.mxu0 %v2128
    %v2767 = vpop.f32.mrf.mxu0
    %v2768 = vadd.f32 %v2351, %v2767
    %v2769 = vpop.f32.mrf.mxu0
    %v2770 = vpop.f32.mrf.mxu0
    %v2771 = vadd.f32 %v2354, %v2770
    %v2772 = vpop.f32.mrf.mxu0
    %2773 = vmatprep.mubr.bf16.mxu0 0
    %2774 = vmatmul.mubr.bf16.gmra.mxu0 %v2131
    %v2775 = vpop.f32.mrf.mxu0
    %v2776 = vadd.f32 %v2359, %v2775
    %v2777 = vpop.f32.mrf.mxu0
    %v2778 = vpop.f32.mrf.mxu0
    %v2779 = vadd.f32 %v2362, %v2778
    %v2780 = vpop.f32.mrf.mxu0
    %2781 = vmatprep.mubr.bf16.mxu0 0
    %2782 = vmatmul.mubr.bf16.gmra.mxu0 %v2134
    %v2783 = vpop.f32.mrf.mxu0
    %v2784 = vadd.f32 %v2367, %v2783
    %v2785 = vpop.f32.mrf.mxu0
    %v2786 = vpop.f32.mrf.mxu0
    %v2787 = vadd.f32 %v2370, %v2786
    %v2788 = vpop.f32.mrf.mxu0
    %2789 = vmatprep.mubr.bf16.mxu0 0
    %2790 = vmatmul.mubr.bf16.gmra.mxu0 %v2137
    %v2791 = vpop.f32.mrf.mxu0
    %v2792 = vadd.f32 %v2375, %v2791
    %v2793 = vpop.f32.mrf.mxu0
    %v2794 = vpop.f32.mrf.mxu0
    %v2795 = vadd.f32 %v2378, %v2794
    %v2796 = vpop.f32.mrf.mxu0
    %2797 = vmatprep.mubr.bf16.mxu0 0
    %2798 = vmatmul.mubr.bf16.gmra.mxu0 %v2140
    %v2799 = vpop.f32.mrf.mxu0
    %v2800 = vadd.f32 %v2383, %v2799
    %v2801 = vpop.f32.mrf.mxu0
    %v2802 = vpop.f32.mrf.mxu0
    %v2803 = vadd.f32 %v2386, %v2802
    %v2804 = vpop.f32.mrf.mxu0
    %2805 = vmatprep.mubr.bf16.mxu0 0
    %2806 = vmatmul.mubr.bf16.gmra.mxu0 %v2143
    %v2807 = vpop.f32.mrf.mxu0
    %v2808 = vadd.f32 %v2391, %v2807
    %v2809 = vpop.f32.mrf.mxu0
    %v2810 = vpop.f32.mrf.mxu0
    %v2811 = vadd.f32 %v2394, %v2810
    %v2812 = vpop.f32.mrf.mxu0
    %2813 = vmatprep.mubr.bf16.mxu0 0
    %2814 = vmatmul.mubr.bf16.gmra.mxu0 %v2146
    %v2815 = vpop.f32.mrf.mxu0
    %v2816 = vadd.f32 %v2399, %v2815
    %v2817 = vpop.f32.mrf.mxu0
    %v2818 = vpop.f32.mrf.mxu0
    %v2819 = vadd.f32 %v2402, %v2818
    %v2820 = vpop.f32.mrf.mxu0
    %2821 = vmatprep.mubr.bf16.mxu0 0
    %2822 = vmatmul.mubr.bf16.gmra.mxu0 %v2149
    %v2823 = vpop.f32.mrf.mxu0
    %v2824 = vadd.f32 %v2407, %v2823
    %v2825 = vpop.f32.mrf.mxu0
    %v2826 = vpop.f32.mrf.mxu0
    %v2827 = vadd.f32 %v2410, %v2826
    %v2828 = vpop.f32.mrf.mxu0
    %2829 = vmatprep.mubr.bf16.mxu0 0
    %2830 = vmatmul.mubr.bf16.gmra.mxu0 %v2152
    %v2831 = vpop.f32.mrf.mxu0
    %v2832 = vadd.f32 %v2415, %v2831
    %v2833 = vpop.f32.mrf.mxu0
    %v2834 = vpop.f32.mrf.mxu0
    %v2835 = vadd.f32 %v2418, %v2834
    %v2836 = vpop.f32.mrf.mxu0
    %2837 = vmatprep.mubr.bf16.mxu0 0
    %2838 = vmatmul.mubr.bf16.gmra.mxu0 %v2155
    %v2839 = vpop.f32.mrf.mxu0
    %v2840 = vadd.f32 %v2423, %v2839
    %v2841 = vpop.f32.mrf.mxu0
    %v2842 = vpop.f32.mrf.mxu0
    %v2843 = vadd.f32 %v2426, %v2842
    %v2844 = vpop.f32.mrf.mxu0
    %2845 = vmatprep.mubr.bf16.mxu0 0
    %2846 = vmatmul.mubr.bf16.gmra.mxu0 %v2158
    %v2847 = vpop.f32.mrf.mxu0
    %v2848 = vadd.f32 %v2431, %v2847
    %v2849 = vpop.f32.mrf.mxu0
    %v2850 = vpop.f32.mrf.mxu0
    %v2851 = vadd.f32 %v2434, %v2850
    %v2852 = vpop.f32.mrf.mxu0
    %2853 = vmatprep.mubr.bf16.mxu0 0
    %2854 = vmatmul.mubr.bf16.gmra.mxu0 %v2161
    %v2855 = vpop.f32.mrf.mxu0
    %v2856 = vadd.f32 %v2439, %v2855
    %v2857 = vpop.f32.mrf.mxu0
    %v2858 = vpop.f32.mrf.mxu0
    %v2859 = vadd.f32 %v2442, %v2858
    %v2860 = vpop.f32.mrf.mxu0
    %2861 = vmatprep.mubr.bf16.mxu0 0
    %2862 = vmatmul.mubr.bf16.gmra.mxu0 %v2164
    %v2863 = vpop.f32.mrf.mxu0
    %v2864 = vadd.f32 %v2447, %v2863
    %v2865 = vpop.f32.mrf.mxu0
    %v2866 = vpop.f32.mrf.mxu0
    %v2867 = vadd.f32 %v2450, %v2866
    %v2868 = vpop.f32.mrf.mxu0
    %2869 = vmatprep.mubr.bf16.mxu0 0
    %2870 = vmatmul.mubr.bf16.gmra.mxu0 %v2167
    %v2871 = vpop.f32.mrf.mxu0
    %v2872 = vadd.f32 %v2455, %v2871
    %v2873 = vpop.f32.mrf.mxu0
    %v2874 = vpop.f32.mrf.mxu0
    %v2875 = vadd.f32 %v2458, %v2874
    %v2876 = vpop.f32.mrf.mxu0
    %2877 = vmatprep.mubr.bf16.mxu0 0
    %2878 = vmatmul.mubr.bf16.gmra.mxu0 %v2170
    %v2879 = vpop.f32.mrf.mxu0
    %v2880 = vadd.f32 %v2463, %v2879
    %v2881 = vpop.f32.mrf.mxu0
    %v2882 = vpop.f32.mrf.mxu0
    %v2883 = vadd.f32 %v2466, %v2882
    %v2884 = vpop.f32.mrf.mxu0
    %2885 = vmatprep.mubr.bf16.mxu0 0
    %2886 = vmatmul.mubr.bf16.gmra.mxu0 %v2173
    %v2887 = vpop.f32.mrf.mxu0
    %v2888 = vadd.f32 %v2471, %v2887
    %v2889 = vpop.f32.mrf.mxu0
    %v2890 = vpop.f32.mrf.mxu0
    %v2891 = vadd.f32 %v2474, %v2890
    %v2892 = vpop.f32.mrf.mxu0
    %2893 = vmatprep.mubr.bf16.mxu0 0
    %2894 = vmatmul.mubr.bf16.gmra.mxu0 %v2176
    %v2895 = vpop.f32.mrf.mxu0
    %v2896 = vadd.f32 %v2479, %v2895
    %v2897 = vpop.f32.mrf.mxu0
    %v2898 = vpop.f32.mrf.mxu0
    %v2899 = vadd.f32 %v2482, %v2898
    %v2900 = vpop.f32.mrf.mxu0
    %2901 = vmatprep.mubr.bf16.mxu0 0
    %2902 = vmatmul.mubr.bf16.gmra.mxu0 %v2179
    %v2903 = vpop.f32.mrf.mxu0
    %v2904 = vadd.f32 %v2487, %v2903
    %v2905 = vpop.f32.mrf.mxu0
    %v2906 = vpop.f32.mrf.mxu0
    %v2907 = vadd.f32 %v2490, %v2906
    %v2908 = vpop.f32.mrf.mxu0
    %2909 = vmatprep.mubr.bf16.mxu0 0
    %2910 = vmatmul.mubr.bf16.gmra.mxu0 %v2182
    %v2911 = vpop.f32.mrf.mxu0
    %v2912 = vadd.f32 %v2495, %v2911
    %v2913 = vpop.f32.mrf.mxu0
    %v2914 = vpop.f32.mrf.mxu0
    %v2915 = vadd.f32 %v2498, %v2914
    %v2916 = vpop.f32.mrf.mxu0
    %2917 = vmatprep.mubr.bf16.mxu0 0
    %2918 = vmatmul.mubr.bf16.gmra.mxu0 %v2185
    %v2919 = vpop.f32.mrf.mxu0
    %v2920 = vadd.f32 %v2503, %v2919
    %v2921 = vpop.f32.mrf.mxu0
    %v2922 = vpop.f32.mrf.mxu0
    %v2923 = vadd.f32 %v2506, %v2922
    %v2924 = vpop.f32.mrf.mxu0
    %2925 = vmatprep.mubr.bf16.mxu0 0
    %2926 = vmatmul.mubr.bf16.gmra.mxu0 %v2188
    %v2927 = vpop.f32.mrf.mxu0
    %v2928 = vadd.f32 %v2511, %v2927
    %v2929 = vpop.f32.mrf.mxu0
    %v2930 = vpop.f32.mrf.mxu0
    %v2931 = vadd.f32 %v2514, %v2930
    %v2932 = vpop.f32.mrf.mxu0
    %2933 = vmatprep.mubr.bf16.mxu0 0
    %2934 = vmatmul.mubr.bf16.gmra.mxu0 %v2191
    %v2935 = vpop.f32.mrf.mxu0
    %v2936 = vadd.f32 %v2519, %v2935
    %v2937 = vpop.f32.mrf.mxu0
    %v2938 = vpop.f32.mrf.mxu0
    %v2939 = vadd.f32 %v2522, %v2938
    %v2940 = vpop.f32.mrf.mxu0
    %2941 = vmatprep.mubr.bf16.mxu0 0
    %2942 = vmatmul.mubr.bf16.gmra.mxu0 %v2194
    %v2943 = vpop.f32.mrf.mxu0
    %v2944 = vadd.f32 %v2527, %v2943
    %v2945 = vpop.f32.mrf.mxu0
    %v2946 = vpop.f32.mrf.mxu0
    %v2947 = vadd.f32 %v2530, %v2946
    %v2948 = vpop.f32.mrf.mxu0
    %2949 = vmatprep.mubr.bf16.mxu0 0
    %2950 = vmatmul.mubr.bf16.gmra.mxu0 %v2197
    %v2951 = vpop.f32.mrf.mxu0
    %v2952 = vadd.f32 %v2535, %v2951
    %v2953 = vpop.f32.mrf.mxu0
    %v2954 = vpop.f32.mrf.mxu0
    %v2955 = vadd.f32 %v2538, %v2954
    %v2956 = vpop.f32.mrf.mxu0
    %2957 = vmatprep.mubr.bf16.mxu0 0
    %2958 = vmatmul.mubr.bf16.gmra.mxu0 %v2200
    %v2959 = vpop.f32.mrf.mxu0
    %v2960 = vadd.f32 %v2543, %v2959
    %v2961 = vpop.f32.mrf.mxu0
    %v2962 = vpop.f32.mrf.mxu0
    %v2963 = vadd.f32 %v2546, %v2962
    %v2964 = vpop.f32.mrf.mxu0
    %2965 = vmatprep.mubr.bf16.mxu0 0
    %2966 = vmatmul.mubr.bf16.gmra.mxu0 %v2203
    %v2967 = vpop.f32.mrf.mxu0
    %v2968 = vadd.f32 %v2551, %v2967
    %v2969 = vpop.f32.mrf.mxu0
    %v2970 = vpop.f32.mrf.mxu0
    %v2971 = vadd.f32 %v2554, %v2970
    %v2972 = vpop.f32.mrf.mxu0
    %2973 = vmatprep.mubr.bf16.mxu0 0
    %2974 = vmatmul.mubr.bf16.gmra.mxu0 %v2206
    %v2975 = vpop.f32.mrf.mxu0
    %v2976 = vadd.f32 %v2559, %v2975
    %v2977 = vpop.f32.mrf.mxu0
    %v2978 = vpop.f32.mrf.mxu0
    %v2979 = vadd.f32 %v2562, %v2978
    %v2980 = vpop.f32.mrf.mxu0
    %2981 = vmatprep.mubr.bf16.mxu0 0
    %2982 = vmatmul.mubr.bf16.gmra.mxu0 %v2209
    %v2983 = vpop.f32.mrf.mxu0
    %v2984 = vadd.f32 %v2567, %v2983
    %v2985 = vpop.f32.mrf.mxu0
    %v2986 = vpop.f32.mrf.mxu0
    %v2987 = vadd.f32 %v2570, %v2986
    %v2988 = vpop.f32.mrf.mxu0
    %2989 = vmatprep.mubr.bf16.mxu0 0
    %2990 = vmatmul.mubr.bf16.gmra.mxu0 %v2212
    %v2991 = vpop.f32.mrf.mxu0
    %v2992 = vadd.f32 %v2575, %v2991
    %v2993 = vpop.f32.mrf.mxu0
    %v2994 = vpop.f32.mrf.mxu0
    %v2995 = vadd.f32 %v2578, %v2994
    %v2996 = vpop.f32.mrf.mxu0
    %2997 = vmatprep.mubr.bf16.mxu0 0
    %2998 = vmatmul.mubr.bf16.gmra.mxu0 %v2215
    %v2999 = vpop.f32.mrf.mxu0
    %v3000 = vadd.f32 %v2583, %v2999
    %v3001 = vpop.f32.mrf.mxu0
    %v3002 = vpop.f32.mrf.mxu0
    %v3003 = vadd.f32 %v2586, %v3002
    %v3004 = vpop.f32.mrf.mxu0
    %3005 = vmatprep.mubr.bf16.mxu0 0
    %3006 = vmatmul.mubr.bf16.gmra.mxu0 %v2218
    %v3007 = vpop.f32.mrf.mxu0
    %v3008 = vadd.f32 %v2591, %v3007
    %v3009 = vpop.f32.mrf.mxu0
    %v3010 = vpop.f32.mrf.mxu0
    %v3011 = vadd.f32 %v2594, %v3010
    %v3012 = vpop.f32.mrf.mxu0
    %3013 = vmatprep.mubr.bf16.mxu0 0
    %3014 = vmatmul.mubr.bf16.gmra.mxu0 %v2221
    %v3015 = vpop.f32.mrf.mxu0
    %v3016 = vadd.f32 %v2599, %v3015
    %v3017 = vpop.f32.mrf.mxu0
    %v3018 = vpop.f32.mrf.mxu0
    %v3019 = vadd.f32 %v2602, %v3018
    %v3020 = vpop.f32.mrf.mxu0
    %3021 = vmatprep.mubr.bf16.mxu0 0
    %3022 = vmatmul.mubr.bf16.gmra.mxu0 %v2224
    %v3023 = vpop.f32.mrf.mxu0
    %v3024 = vadd.f32 %v2607, %v3023
    %v3025 = vpop.f32.mrf.mxu0
    %v3026 = vpop.f32.mrf.mxu0
    %v3027 = vadd.f32 %v2610, %v3026
    %v3028 = vpop.f32.mrf.mxu0
    %3029 = vmatprep.mubr.bf16.mxu0 0
    %3030 = vmatmul.mubr.bf16.gmra.mxu0 %v2227
    %v3031 = vpop.f32.mrf.mxu0
    %v3032 = vadd.f32 %v2615, %v3031
    %v3033 = vpop.f32.mrf.mxu0
    %v3034 = vpop.f32.mrf.mxu0
    %v3035 = vadd.f32 %v2618, %v3034
    %v3036 = vpop.f32.mrf.mxu0
    %3037 = vmatprep.mubr.bf16.mxu0 0
    %3038 = vmatmul.mubr.bf16.gmra.mxu0 %v2230
    %v3039 = vpop.f32.mrf.mxu0
    %v3040 = vadd.f32 %v2623, %v3039
    %v3041 = vpop.f32.mrf.mxu0
    %v3042 = vpop.f32.mrf.mxu0
    %v3043 = vadd.f32 %v2626, %v3042
    %v3044 = vpop.f32.mrf.mxu0
    %3045 = vmatprep.mubr.bf16.mxu0 0
    %3046 = vmatmul.mubr.bf16.gmra.mxu0 %v2233
    %v3047 = vpop.f32.mrf.mxu0
    %v3048 = vadd.f32 %v2631, %v3047
    %v3049 = vpop.f32.mrf.mxu0
    %v3050 = vpop.f32.mrf.mxu0
    %v3051 = vadd.f32 %v2634, %v3050
    %v3052 = vpop.f32.mrf.mxu0
    %3053 = vmatprep.mubr.bf16.mxu0 0
    %3054 = vmatmul.mubr.bf16.gmra.mxu0 %v2236
    %v3055 = vpop.f32.mrf.mxu0
    %v3056 = vadd.f32 %v2639, %v3055
    %v3057 = vpop.f32.mrf.mxu0
    %v3058 = vpop.f32.mrf.mxu0
    %v3059 = vadd.f32 %v2642, %v3058
    %v3060 = vpop.f32.mrf.mxu0
    %3061 = vmatprep.mubr.bf16.mxu0 0
    %3062 = vmatmul.mubr.bf16.gmra.mxu0 %v2239
    %v3063 = vpop.f32.mrf.mxu0
    %v3064 = vadd.f32 %v2647, %v3063
    %v3065 = vpop.f32.mrf.mxu0
    %v3066 = vpop.f32.mrf.mxu0
    %v3067 = vadd.f32 %v2650, %v3066
    %v3068 = vpop.f32.mrf.mxu0
    %3069 = vmatprep.mubr.bf16.mxu0 0
    %3070 = vmatmul.mubr.bf16.gmra.mxu0 %v2242
    %v3071 = vpop.f32.mrf.mxu0
    %v3072 = vadd.f32 %v2655, %v3071
    %v3073 = vpop.f32.mrf.mxu0
    %v3074 = vpop.f32.mrf.mxu0
    %v3075 = vadd.f32 %v2658, %v3074
    %v3076 = vpop.f32.mrf.mxu0
    %3077 = vdwg.mxu0
    %s3078 = sld [smem:[#allocation3]]
    %v3079 = vstv %s3078
    %v3080 = vmul.f32 %v3079, %v815
    %v3081 = vmul.f32 %v3079, %v821
    %v3082 = vmul.f32 %v3079, %v827
    %v3083 = vmul.f32 %v3079, %v833
    %v3084 = vmul.f32 %v3079, %v839
    %v3085 = vmul.f32 %v3079, %v845
    %v3086 = vmul.f32 %v3079, %v851
    %v3087 = vmul.f32 %v3079, %v857
    %3096 = vrot.lane.b32.xlu0 %v2696, 96
    %v3097 = vpop.permute.xlu0 %3096
    %3098 = vrot.lane.b32.xlu0 %v2699, 96
    %v3099 = vpop.permute.xlu0 %3098
    %3100 = vrot.lane.b32.xlu0 %v2704, 96
    %v3101 = vpop.permute.xlu0 %3100
    %3102 = vrot.lane.b32.xlu0 %v2707, 96
    %v3103 = vpop.permute.xlu0 %3102
    %3104 = vrot.lane.b32.xlu0 %v2712, 96
    %v3105 = vpop.permute.xlu0 %3104
    %3106 = vrot.lane.b32.xlu0 %v2715, 96
    %v3107 = vpop.permute.xlu0 %3106
    %3108 = vrot.lane.b32.xlu0 %v2720, 96
    %v3109 = vpop.permute.xlu0 %3108
    %3110 = vrot.lane.b32.xlu0 %v2723, 96
    %v3111 = vpop.permute.xlu0 %3110
    %v3120 = vadd.f32 %v1637, %v3097
    %v3121 = vadd.f32 %v1643, %v3099
    %v3122 = vadd.f32 %v1649, %v3101
    %v3123 = vadd.f32 %v1655, %v3103
    %v3124 = vadd.f32 %v1661, %v3105
    %v3125 = vadd.f32 %v1667, %v3107
    %v3126 = vadd.f32 %v1673, %v3109
    %v3127 = vadd.f32 %v1679, %v3111
    %vm3128 = vcmp.gt.f32.partialorder %v3120, 0.0
    %vm3129 = vcmp.gt.f32.partialorder %v3121, 0.0
    %vm3130 = vcmp.gt.f32.partialorder %v3122, 0.0
    %vm3131 = vcmp.gt.f32.partialorder %v3123, 0.0
    %vm3132 = vcmp.gt.f32.partialorder %v3124, 0.0
    %vm3133 = vcmp.gt.f32.partialorder %v3125, 0.0
    %vm3134 = vcmp.gt.f32.partialorder %v3126, 0.0
    %vm3135 = vcmp.gt.f32.partialorder %v3127, 0.0
    %v3136 = vmul.f32 %v3120, 0.2
    %v3137 = vmul.f32 %v3121, 0.2
    %v3138 = vmul.f32 %v3122, 0.2
    %v3139 = vmul.f32 %v3123, 0.2
    %v3140 = vmul.f32 %v3124, 0.2
    %v3141 = vmul.f32 %v3125, 0.2
    %v3142 = vmul.f32 %v3126, 0.2
    %v3143 = vmul.f32 %v3127, 0.2
    %v3144 = vsel %vm3128, %v3120, %v3136
    %v3145 = vsel %vm3129, %v3121, %v3137
    %v3146 = vsel %vm3130, %v3122, %v3138
    %v3147 = vsel %vm3131, %v3123, %v3139
    %v3148 = vsel %vm3132, %v3124, %v3140
    %v3149 = vsel %vm3133, %v3125, %v3141
    %v3150 = vsel %vm3134, %v3126, %v3142
    %v3151 = vsel %vm3135, %v3127, %v3143
    %3160 = vrot.lane.b32.xlu0 %v2728, 96
    %v3161 = vpop.permute.xlu0 %3160
    %3162 = vrot.lane.b32.xlu0 %v2731, 96
    %v3163 = vpop.permute.xlu0 %3162
    %3164 = vrot.lane.b32.xlu0 %v2736, 96
    %v3165 = vpop.permute.xlu0 %3164
    %3166 = vrot.lane.b32.xlu0 %v2739, 96
    %v3167 = vpop.permute.xlu0 %3166
    %3168 = vrot.lane.b32.xlu0 %v2744, 96
    %v3169 = vpop.permute.xlu0 %3168
    %3170 = vrot.lane.b32.xlu0 %v2747, 96
    %v3171 = vpop.permute.xlu0 %3170
    %3172 = vrot.lane.b32.xlu0 %v2752, 96
    %v3173 = vpop.permute.xlu0 %3172
    %3174 = vrot.lane.b32.xlu0 %v2755, 96
    %v3175 = vpop.permute.xlu0 %3174
    %v3184 = vadd.f32 %v1637, %v3161
    %v3185 = vadd.f32 %v1643, %v3163
    %v3186 = vadd.f32 %v1649, %v3165
    %v3187 = vadd.f32 %v1655, %v3167
    %v3188 = vadd.f32 %v1661, %v3169
    %v3189 = vadd.f32 %v1667, %v3171
    %v3190 = vadd.f32 %v1673, %v3173
    %v3191 = vadd.f32 %v1679, %v3175
    %vm3192 = vcmp.gt.f32.partialorder %v3184, 0.0
    %vm3193 = vcmp.gt.f32.partialorder %v3185, 0.0
    %vm3194 = vcmp.gt.f32.partialorder %v3186, 0.0
    %vm3195 = vcmp.gt.f32.partialorder %v3187, 0.0
    %vm3196 = vcmp.gt.f32.partialorder %v3188, 0.0
    %vm3197 = vcmp.gt.f32.partialorder %v3189, 0.0
    %vm3198 = vcmp.gt.f32.partialorder %v3190, 0.0
    %vm3199 = vcmp.gt.f32.partialorder %v3191, 0.0
    %v3200 = vmul.f32 %v3184, 0.2
    %v3201 = vmul.f32 %v3185, 0.2
    %v3202 = vmul.f32 %v3186, 0.2
    %v3203 = vmul.f32 %v3187, 0.2
    %v3204 = vmul.f32 %v3188, 0.2
    %v3205 = vmul.f32 %v3189, 0.2
    %v3206 = vmul.f32 %v3190, 0.2
    %v3207 = vmul.f32 %v3191, 0.2
    %v3208 = vsel %vm3192, %v3184, %v3200
    %v3209 = vsel %vm3193, %v3185, %v3201
    %v3210 = vsel %vm3194, %v3186, %v3202
    %v3211 = vsel %vm3195, %v3187, %v3203
    %v3212 = vsel %vm3196, %v3188, %v3204
    %v3213 = vsel %vm3197, %v3189, %v3205
    %v3214 = vsel %vm3198, %v3190, %v3206
    %v3215 = vsel %vm3199, %v3191, %v3207
    %3224 = vrot.lane.b32.xlu0 %v2760, 96
    %v3225 = vpop.permute.xlu0 %3224
    %3226 = vrot.lane.b32.xlu0 %v2763, 96
    %v3227 = vpop.permute.xlu0 %3226
    %3228 = vrot.lane.b32.xlu0 %v2768, 96
    %v3229 = vpop.permute.xlu0 %3228
    %3230 = vrot.lane.b32.xlu0 %v2771, 96
    %v3231 = vpop.permute.xlu0 %3230
    %3232 = vrot.lane.b32.xlu0 %v2776, 96
    %v3233 = vpop.permute.xlu0 %3232
    %3234 = vrot.lane.b32.xlu0 %v2779, 96
    %v3235 = vpop.permute.xlu0 %3234
    %3236 = vrot.lane.b32.xlu0 %v2784, 96
    %v3237 = vpop.permute.xlu0 %3236
    %3238 = vrot.lane.b32.xlu0 %v2787, 96
    %v3239 = vpop.permute.xlu0 %3238
    %v3248 = vadd.f32 %v1637, %v3225
    %v3249 = vadd.f32 %v1643, %v3227
    %v3250 = vadd.f32 %v1649, %v3229
    %v3251 = vadd.f32 %v1655, %v3231
    %v3252 = vadd.f32 %v1661, %v3233
    %v3253 = vadd.f32 %v1667, %v3235
    %v3254 = vadd.f32 %v1673, %v3237
    %v3255 = vadd.f32 %v1679, %v3239
    %vm3256 = vcmp.gt.f32.partialorder %v3248, 0.0
    %vm3257 = vcmp.gt.f32.partialorder %v3249, 0.0
    %vm3258 = vcmp.gt.f32.partialorder %v3250, 0.0
    %vm3259 = vcmp.gt.f32.partialorder %v3251, 0.0
    %vm3260 = vcmp.gt.f32.partialorder %v3252, 0.0
    %vm3261 = vcmp.gt.f32.partialorder %v3253, 0.0
    %vm3262 = vcmp.gt.f32.partialorder %v3254, 0.0
    %vm3263 = vcmp.gt.f32.partialorder %v3255, 0.0
    %v3264 = vmul.f32 %v3248, 0.2
    %v3265 = vmul.f32 %v3249, 0.2
    %v3266 = vmul.f32 %v3250, 0.2
    %v3267 = vmul.f32 %v3251, 0.2
    %v3268 = vmul.f32 %v3252, 0.2
    %v3269 = vmul.f32 %v3253, 0.2
    %v3270 = vmul.f32 %v3254, 0.2
    %v3271 = vmul.f32 %v3255, 0.2
    %v3272 = vsel %vm3256, %v3248, %v3264
    %v3273 = vsel %vm3257, %v3249, %v3265
    %v3274 = vsel %vm3258, %v3250, %v3266
    %v3275 = vsel %vm3259, %v3251, %v3267
    %v3276 = vsel %vm3260, %v3252, %v3268
    %v3277 = vsel %vm3261, %v3253, %v3269
    %v3278 = vsel %vm3262, %v3254, %v3270
    %v3279 = vsel %vm3263, %v3255, %v3271
    %3288 = vrot.lane.b32.xlu0 %v2792, 96
    %v3289 = vpop.permute.xlu0 %3288
    %3290 = vrot.lane.b32.xlu0 %v2795, 96
    %v3291 = vpop.permute.xlu0 %3290
    %3292 = vrot.lane.b32.xlu0 %v2800, 96
    %v3293 = vpop.permute.xlu0 %3292
    %3294 = vrot.lane.b32.xlu0 %v2803, 96
    %v3295 = vpop.permute.xlu0 %3294
    %3296 = vrot.lane.b32.xlu0 %v2808, 96
    %v3297 = vpop.permute.xlu0 %3296
    %3298 = vrot.lane.b32.xlu0 %v2811, 96
    %v3299 = vpop.permute.xlu0 %3298
    %3300 = vrot.lane.b32.xlu0 %v2816, 96
    %v3301 = vpop.permute.xlu0 %3300
    %3302 = vrot.lane.b32.xlu0 %v2819, 96
    %v3303 = vpop.permute.xlu0 %3302
    %v3312 = vadd.f32 %v1637, %v3289
    %v3313 = vadd.f32 %v1643, %v3291
    %v3314 = vadd.f32 %v1649, %v3293
    %v3315 = vadd.f32 %v1655, %v3295
    %v3316 = vadd.f32 %v1661, %v3297
    %v3317 = vadd.f32 %v1667, %v3299
    %v3318 = vadd.f32 %v1673, %v3301
    %v3319 = vadd.f32 %v1679, %v3303
    %vm3320 = vcmp.gt.f32.partialorder %v3312, 0.0
    %vm3321 = vcmp.gt.f32.partialorder %v3313, 0.0
    %vm3322 = vcmp.gt.f32.partialorder %v3314, 0.0
    %vm3323 = vcmp.gt.f32.partialorder %v3315, 0.0
    %vm3324 = vcmp.gt.f32.partialorder %v3316, 0.0
    %vm3325 = vcmp.gt.f32.partialorder %v3317, 0.0
    %vm3326 = vcmp.gt.f32.partialorder %v3318, 0.0
    %vm3327 = vcmp.gt.f32.partialorder %v3319, 0.0
    %v3328 = vmul.f32 %v3312, 0.2
    %v3329 = vmul.f32 %v3313, 0.2
    %v3330 = vmul.f32 %v3314, 0.2
    %v3331 = vmul.f32 %v3315, 0.2
    %v3332 = vmul.f32 %v3316, 0.2
    %v3333 = vmul.f32 %v3317, 0.2
    %v3334 = vmul.f32 %v3318, 0.2
    %v3335 = vmul.f32 %v3319, 0.2
    %v3336 = vsel %vm3320, %v3312, %v3328
    %v3337 = vsel %vm3321, %v3313, %v3329
    %v3338 = vsel %vm3322, %v3314, %v3330
    %v3339 = vsel %vm3323, %v3315, %v3331
    %v3340 = vsel %vm3324, %v3316, %v3332
    %v3341 = vsel %vm3325, %v3317, %v3333
    %v3342 = vsel %vm3326, %v3318, %v3334
    %v3343 = vsel %vm3327, %v3319, %v3335
    %v3344 = vmax.f32 %v3144, %v3208
    %v3345 = vmax.f32 %v3145, %v3209
    %v3346 = vmax.f32 %v3146, %v3210
    %v3347 = vmax.f32 %v3147, %v3211
    %v3348 = vmax.f32 %v3148, %v3212
    %v3349 = vmax.f32 %v3149, %v3213
    %v3350 = vmax.f32 %v3150, %v3214
    %v3351 = vmax.f32 %v3151, %v3215
    %v3352 = vmax.f32 %v3344, %v3272
    %v3353 = vmax.f32 %v3345, %v3273
    %v3354 = vmax.f32 %v3346, %v3274
    %v3355 = vmax.f32 %v3347, %v3275
    %v3356 = vmax.f32 %v3348, %v3276
    %v3357 = vmax.f32 %v3349, %v3277
    %v3358 = vmax.f32 %v3350, %v3278
    %v3359 = vmax.f32 %v3351, %v3279
    %v3360 = vmax.f32 %v3352, %v3336
    %v3361 = vmax.f32 %v3353, %v3337
    %v3362 = vmax.f32 %v3354, %v3338
    %v3363 = vmax.f32 %v3355, %v3339
    %v3364 = vmax.f32 %v3356, %v3340
    %v3365 = vmax.f32 %v3357, %v3341
    %v3366 = vmax.f32 %v3358, %v3342
    %v3367 = vmax.f32 %v3359, %v3343
    %v3368 = vsub.f32 %v3144, %v3360
    %v3369 = vsub.f32 %v3145, %v3361
    %v3370 = vsub.f32 %v3146, %v3362
    %v3371 = vsub.f32 %v3147, %v3363
    %v3372 = vsub.f32 %v3148, %v3364
    %v3373 = vsub.f32 %v3149, %v3365
    %v3374 = vsub.f32 %v3150, %v3366
    %v3375 = vsub.f32 %v3151, %v3367
    %v3376 = vmul.f32 %v3368, 1.442695
    %v3377 = vpow.pop %v3376
    %v3378 = vmul.f32 %v3369, 1.442695
    %v3379 = vpow.pop %v3378
    %v3380 = vmul.f32 %v3370, 1.442695
    %v3381 = vpow.pop %v3380
    %v3382 = vmul.f32 %v3371, 1.442695
    %v3383 = vpow.pop %v3382
    %v3384 = vmul.f32 %v3372, 1.442695
    %v3385 = vpow.pop %v3384
    %v3386 = vmul.f32 %v3373, 1.442695
    %v3387 = vpow.pop %v3386
    %v3388 = vmul.f32 %v3374, 1.442695
    %v3389 = vpow.pop %v3388
    %v3390 = vmul.f32 %v3375, 1.442695
    %v3391 = vpow.pop %v3390
    %v3392 = vsub.f32 %v3208, %v3360
    %v3393 = vsub.f32 %v3209, %v3361
    %v3394 = vsub.f32 %v3210, %v3362
    %v3395 = vsub.f32 %v3211, %v3363
    %v3396 = vsub.f32 %v3212, %v3364
    %v3397 = vsub.f32 %v3213, %v3365
    %v3398 = vsub.f32 %v3214, %v3366
    %v3399 = vsub.f32 %v3215, %v3367
    %v3400 = vmul.f32 %v3392, 1.442695
    %v3401 = vpow.pop %v3400
    %v3402 = vmul.f32 %v3393, 1.442695
    %v3403 = vpow.pop %v3402
    %v3404 = vmul.f32 %v3394, 1.442695
    %v3405 = vpow.pop %v3404
    %v3406 = vmul.f32 %v3395, 1.442695
    %v3407 = vpow.pop %v3406
    %v3408 = vmul.f32 %v3396, 1.442695
    %v3409 = vpow.pop %v3408
    %v3410 = vmul.f32 %v3397, 1.442695
    %v3411 = vpow.pop %v3410
    %v3412 = vmul.f32 %v3398, 1.442695
    %v3413 = vpow.pop %v3412
    %v3414 = vmul.f32 %v3399, 1.442695
    %v3415 = vpow.pop %v3414
    %v3416 = vsub.f32 %v3272, %v3360
    %v3417 = vsub.f32 %v3273, %v3361
    %v3418 = vsub.f32 %v3274, %v3362
    %v3419 = vsub.f32 %v3275, %v3363
    %v3420 = vsub.f32 %v3276, %v3364
    %v3421 = vsub.f32 %v3277, %v3365
    %v3422 = vsub.f32 %v3278, %v3366
    %v3423 = vsub.f32 %v3279, %v3367
    %v3424 = vmul.f32 %v3416, 1.442695
    %v3425 = vpow.pop %v3424
    %v3426 = vmul.f32 %v3417, 1.442695
    %v3427 = vpow.pop %v3426
    %v3428 = vmul.f32 %v3418, 1.442695
    %v3429 = vpow.pop %v3428
    %v3430 = vmul.f32 %v3419, 1.442695
    %v3431 = vpow.pop %v3430
    %v3432 = vmul.f32 %v3420, 1.442695
    %v3433 = vpow.pop %v3432
    %v3434 = vmul.f32 %v3421, 1.442695
    %v3435 = vpow.pop %v3434
    %v3436 = vmul.f32 %v3422, 1.442695
    %v3437 = vpow.pop %v3436
    %v3438 = vmul.f32 %v3423, 1.442695
    %v3439 = vpow.pop %v3438
    %v3440 = vsub.f32 %v3336, %v3360
    %v3441 = vsub.f32 %v3337, %v3361
    %v3442 = vsub.f32 %v3338, %v3362
    %v3443 = vsub.f32 %v3339, %v3363
    %v3444 = vsub.f32 %v3340, %v3364
    %v3445 = vsub.f32 %v3341, %v3365
    %v3446 = vsub.f32 %v3342, %v3366
    %v3447 = vsub.f32 %v3343, %v3367
    %v3448 = vmul.f32 %v3440, 1.442695
    %v3449 = vpow.pop %v3448
    %v3450 = vmul.f32 %v3441, 1.442695
    %v3451 = vpow.pop %v3450
    %v3452 = vmul.f32 %v3442, 1.442695
    %v3453 = vpow.pop %v3452
    %v3454 = vmul.f32 %v3443, 1.442695
    %v3455 = vpow.pop %v3454
    %v3456 = vmul.f32 %v3444, 1.442695
    %v3457 = vpow.pop %v3456
    %v3458 = vmul.f32 %v3445, 1.442695
    %v3459 = vpow.pop %v3458
    %v3460 = vmul.f32 %v3446, 1.442695
    %v3461 = vpow.pop %v3460
    %v3462 = vmul.f32 %v3447, 1.442695
    %v3463 = vpow.pop %v3462
    %v3464 = vadd.f32 %v3377, %v3401
    %v3465 = vadd.f32 %v3379, %v3403
    %v3466 = vadd.f32 %v3381, %v3405
    %v3467 = vadd.f32 %v3383, %v3407
    %v3468 = vadd.f32 %v3385, %v3409
    %v3469 = vadd.f32 %v3387, %v3411
    %v3470 = vadd.f32 %v3389, %v3413
    %v3471 = vadd.f32 %v3391, %v3415
    %v3472 = vadd.f32 %v3464, %v3425
    %v3473 = vadd.f32 %v3465, %v3427
    %v3474 = vadd.f32 %v3466, %v3429
    %v3475 = vadd.f32 %v3467, %v3431
    %v3476 = vadd.f32 %v3468, %v3433
    %v3477 = vadd.f32 %v3469, %v3435
    %v3478 = vadd.f32 %v3470, %v3437
    %v3479 = vadd.f32 %v3471, %v3439
    %v3480 = vadd.f32 %v3472, %v3449
    %v3481 = vadd.f32 %v3473, %v3451
    %v3482 = vadd.f32 %v3474, %v3453
    %v3483 = vadd.f32 %v3475, %v3455
    %v3484 = vadd.f32 %v3476, %v3457
    %v3485 = vadd.f32 %v3477, %v3459
    %v3486 = vadd.f32 %v3478, %v3461
    %v3487 = vadd.f32 %v3479, %v3463
    %v3488 = vrcp.pop %v3480
    %v3489 = vmul.f32 1.0, %v3488
    %v3490 = vrcp.pop %v3481
    %v3491 = vmul.f32 1.0, %v3490
    %v3492 = vrcp.pop %v3482
    %v3493 = vmul.f32 1.0, %v3492
    %v3494 = vrcp.pop %v3483
    %v3495 = vmul.f32 1.0, %v3494
    %v3496 = vrcp.pop %v3484
    %v3497 = vmul.f32 1.0, %v3496
    %v3498 = vrcp.pop %v3485
    %v3499 = vmul.f32 1.0, %v3498
    %v3500 = vrcp.pop %v3486
    %v3501 = vmul.f32 1.0, %v3500
    %v3502 = vrcp.pop %v3487
    %v3503 = vmul.f32 1.0, %v3502
    %v3504 = vmul.f32 %v3377, %v3489
    %v3505 = vmul.f32 %v3379, %v3491
    %v3506 = vmul.f32 %v3381, %v3493
    %v3507 = vmul.f32 %v3383, %v3495
    %v3508 = vmul.f32 %v3385, %v3497
    %v3509 = vmul.f32 %v3387, %v3499
    %v3510 = vmul.f32 %v3389, %v3501
    %v3511 = vmul.f32 %v3391, %v3503
    %3513 = vset.pattern.permute.xlu0 0
    %3514 = vperm.xlu0 %3513, %v3504
    %v3515 = vpop.permute.xlu0 %3514
    %3518 = vset.pattern.permute.xlu0 0
    %3519 = vperm.xlu0 %3518, %v3505
    %v3520 = vpop.permute.xlu0 %3519
    %3523 = vset.pattern.permute.xlu0 0
    %3524 = vperm.xlu0 %3523, %v3506
    %v3525 = vpop.permute.xlu0 %3524
    %3528 = vset.pattern.permute.xlu0 0
    %3529 = vperm.xlu0 %3528, %v3507
    %v3530 = vpop.permute.xlu0 %3529
    %3533 = vset.pattern.permute.xlu0 0
    %3534 = vperm.xlu0 %3533, %v3508
    %v3535 = vpop.permute.xlu0 %3534
    %3538 = vset.pattern.permute.xlu0 0
    %3539 = vperm.xlu0 %3538, %v3509
    %v3540 = vpop.permute.xlu0 %3539
    %3543 = vset.pattern.permute.xlu0 0
    %3544 = vperm.xlu0 %3543, %v3510
    %v3545 = vpop.permute.xlu0 %3544
    %3548 = vset.pattern.permute.xlu0 0
    %3549 = vperm.xlu0 %3548, %v3511
    %v3550 = vpop.permute.xlu0 %3549
    %v3552 = vmul.f32 %v3515, %v2696
    %v3553 = vmul.f32 %v3520, %v2699
    %v3554 = vmul.f32 %v3525, %v2704
    %v3555 = vmul.f32 %v3530, %v2707
    %v3556 = vmul.f32 %v3535, %v2712
    %v3557 = vmul.f32 %v3540, %v2715
    %v3558 = vmul.f32 %v3545, %v2720
    %v3559 = vmul.f32 %v3550, %v2723
    %v3560 = vmul.f32 %v3401, %v3489
    %v3561 = vmul.f32 %v3403, %v3491
    %v3562 = vmul.f32 %v3405, %v3493
    %v3563 = vmul.f32 %v3407, %v3495
    %v3564 = vmul.f32 %v3409, %v3497
    %v3565 = vmul.f32 %v3411, %v3499
    %v3566 = vmul.f32 %v3413, %v3501
    %v3567 = vmul.f32 %v3415, %v3503
    %3569 = vset.pattern.permute.xlu0 0
    %3570 = vperm.xlu0 %3569, %v3560
    %v3571 = vpop.permute.xlu0 %3570
    %3574 = vset.pattern.permute.xlu0 0
    %3575 = vperm.xlu0 %3574, %v3561
    %v3576 = vpop.permute.xlu0 %3575
    %3579 = vset.pattern.permute.xlu0 0
    %3580 = vperm.xlu0 %3579, %v3562
    %v3581 = vpop.permute.xlu0 %3580
    %3584 = vset.pattern.permute.xlu0 0
    %3585 = vperm.xlu0 %3584, %v3563
    %v3586 = vpop.permute.xlu0 %3585
    %3589 = vset.pattern.permute.xlu0 0
    %3590 = vperm.xlu0 %3589, %v3564
    %v3591 = vpop.permute.xlu0 %3590
    %3594 = vset.pattern.permute.xlu0 0
    %3595 = vperm.xlu0 %3594, %v3565
    %v3596 = vpop.permute.xlu0 %3595
    %3599 = vset.pattern.permute.xlu0 0
    %3600 = vperm.xlu0 %3599, %v3566
    %v3601 = vpop.permute.xlu0 %3600
    %3604 = vset.pattern.permute.xlu0 0
    %3605 = vperm.xlu0 %3604, %v3567
    %v3606 = vpop.permute.xlu0 %3605
    %v3608 = vmul.f32 %v3571, %v2728
    %v3609 = vmul.f32 %v3576, %v2731
    %v3610 = vmul.f32 %v3581, %v2736
    %v3611 = vmul.f32 %v3586, %v2739
    %v3612 = vmul.f32 %v3591, %v2744
    %v3613 = vmul.f32 %v3596, %v2747
    %v3614 = vmul.f32 %v3601, %v2752
    %v3615 = vmul.f32 %v3606, %v2755
    %v3616 = vadd.f32 %v3552, %v3608
    %v3617 = vadd.f32 %v3553, %v3609
    %v3618 = vadd.f32 %v3554, %v3610
    %v3619 = vadd.f32 %v3555, %v3611
    %v3620 = vadd.f32 %v3556, %v3612
    %v3621 = vadd.f32 %v3557, %v3613
    %v3622 = vadd.f32 %v3558, %v3614
    %v3623 = vadd.f32 %v3559, %v3615
    %v3624 = vmul.f32 %v3425, %v3489
    %v3625 = vmul.f32 %v3427, %v3491
    %v3626 = vmul.f32 %v3429, %v3493
    %v3627 = vmul.f32 %v3431, %v3495
    %v3628 = vmul.f32 %v3433, %v3497
    %v3629 = vmul.f32 %v3435, %v3499
    %v3630 = vmul.f32 %v3437, %v3501
    %v3631 = vmul.f32 %v3439, %v3503
    %3633 = vset.pattern.permute.xlu0 0
    %3634 = vperm.xlu0 %3633, %v3624
    %v3635 = vpop.permute.xlu0 %3634
    %3638 = vset.pattern.permute.xlu0 0
    %3639 = vperm.xlu0 %3638, %v3625
    %v3640 = vpop.permute.xlu0 %3639
    %3643 = vset.pattern.permute.xlu0 0
    %3644 = vperm.xlu0 %3643, %v3626
    %v3645 = vpop.permute.xlu0 %3644
    %3648 = vset.pattern.permute.xlu0 0
    %3649 = vperm.xlu0 %3648, %v3627
    %v3650 = vpop.permute.xlu0 %3649
    %3653 = vset.pattern.permute.xlu0 0
    %3654 = vperm.xlu0 %3653, %v3628
    %v3655 = vpop.permute.xlu0 %3654
    %3658 = vset.pattern.permute.xlu0 0
    %3659 = vperm.xlu0 %3658, %v3629
    %v3660 = vpop.permute.xlu0 %3659
    %3663 = vset.pattern.permute.xlu0 0
    %3664 = vperm.xlu0 %3663, %v3630
    %v3665 = vpop.permute.xlu0 %3664
    %3668 = vset.pattern.permute.xlu0 0
    %3669 = vperm.xlu0 %3668, %v3631
    %v3670 = vpop.permute.xlu0 %3669
    %v3672 = vmul.f32 %v3635, %v2760
    %v3673 = vmul.f32 %v3640, %v2763
    %v3674 = vmul.f32 %v3645, %v2768
    %v3675 = vmul.f32 %v3650, %v2771
    %v3676 = vmul.f32 %v3655, %v2776
    %v3677 = vmul.f32 %v3660, %v2779
    %v3678 = vmul.f32 %v3665, %v2784
    %v3679 = vmul.f32 %v3670, %v2787
    %v3680 = vadd.f32 %v3616, %v3672
    %v3681 = vadd.f32 %v3617, %v3673
    %v3682 = vadd.f32 %v3618, %v3674
    %v3683 = vadd.f32 %v3619, %v3675
    %v3684 = vadd.f32 %v3620, %v3676
    %v3685 = vadd.f32 %v3621, %v3677
    %v3686 = vadd.f32 %v3622, %v3678
    %v3687 = vadd.f32 %v3623, %v3679
    %v3688 = vmul.f32 %v3449, %v3489
    %v3689 = vmul.f32 %v3451, %v3491
    %v3690 = vmul.f32 %v3453, %v3493
    %v3691 = vmul.f32 %v3455, %v3495
    %v3692 = vmul.f32 %v3457, %v3497
    %v3693 = vmul.f32 %v3459, %v3499
    %v3694 = vmul.f32 %v3461, %v3501
    %v3695 = vmul.f32 %v3463, %v3503
    %3697 = vset.pattern.permute.xlu0 0
    %3698 = vperm.xlu0 %3697, %v3688
    %v3699 = vpop.permute.xlu0 %3698
    %3702 = vset.pattern.permute.xlu0 0
    %3703 = vperm.xlu0 %3702, %v3689
    %v3704 = vpop.permute.xlu0 %3703
    %3707 = vset.pattern.permute.xlu0 0
    %3708 = vperm.xlu0 %3707, %v3690
    %v3709 = vpop.permute.xlu0 %3708
    %3712 = vset.pattern.permute.xlu0 0
    %3713 = vperm.xlu0 %3712, %v3691
    %v3714 = vpop.permute.xlu0 %3713
    %3717 = vset.pattern.permute.xlu0 0
    %3718 = vperm.xlu0 %3717, %v3692
    %v3719 = vpop.permute.xlu0 %3718
    %3722 = vset.pattern.permute.xlu0 0
    %3723 = vperm.xlu0 %3722, %v3693
    %v3724 = vpop.permute.xlu0 %3723
    %3727 = vset.pattern.permute.xlu0 0
    %3728 = vperm.xlu0 %3727, %v3694
    %v3729 = vpop.permute.xlu0 %3728
    %3732 = vset.pattern.permute.xlu0 0
    %3733 = vperm.xlu0 %3732, %v3695
    %v3734 = vpop.permute.xlu0 %3733
    %v3736 = vmul.f32 %v3699, %v2792
    %v3737 = vmul.f32 %v3704, %v2795
    %v3738 = vmul.f32 %v3709, %v2800
    %v3739 = vmul.f32 %v3714, %v2803
    %v3740 = vmul.f32 %v3719, %v2808
    %v3741 = vmul.f32 %v3724, %v2811
    %v3742 = vmul.f32 %v3729, %v2816
    %v3743 = vmul.f32 %v3734, %v2819
    %v3744 = vadd.f32 %v3680, %v3736
    %v3745 = vadd.f32 %v3681, %v3737
    %v3746 = vadd.f32 %v3682, %v3738
    %v3747 = vadd.f32 %v3683, %v3739
    %v3748 = vadd.f32 %v3684, %v3740
    %v3749 = vadd.f32 %v3685, %v3741
    %v3750 = vadd.f32 %v3686, %v3742
    %v3751 = vadd.f32 %v3687, %v3743
    %s3752 = sld [smem:[#allocation3 + $0x1]]
    %s3753 = smul.f32 %s3752, 0.25
    %v3754 = vstv %s3753
    %v3755 = vmul.f32 %v3754, %v3744
    %v3756 = vmul.f32 %v3754, %v3745
    %v3757 = vmul.f32 %v3754, %v3746
    %v3758 = vmul.f32 %v3754, %v3747
    %v3759 = vmul.f32 %v3754, %v3748
    %v3760 = vmul.f32 %v3754, %v3749
    %v3761 = vmul.f32 %v3754, %v3750
    %v3762 = vmul.f32 %v3754, %v3751
    %v3763 = vadd.f32 %v3080, %v3755
    %v3764 = vadd.f32 %v3081, %v3756
    %v3765 = vadd.f32 %v3082, %v3757
    %v3766 = vadd.f32 %v3083, %v3758
    %v3767 = vadd.f32 %v3084, %v3759
    %v3768 = vadd.f32 %v3085, %v3760
    %v3769 = vadd.f32 %v3086, %v3761
    %v3770 = vadd.f32 %v3087, %v3762
    %3779 = vrot.lane.b32.xlu0 %v2824, 96
    %v3780 = vpop.permute.xlu0 %3779
    %3781 = vrot.lane.b32.xlu0 %v2827, 96
    %v3782 = vpop.permute.xlu0 %3781
    %3783 = vrot.lane.b32.xlu0 %v2832, 96
    %v3784 = vpop.permute.xlu0 %3783
    %3785 = vrot.lane.b32.xlu0 %v2835, 96
    %v3786 = vpop.permute.xlu0 %3785
    %3787 = vrot.lane.b32.xlu0 %v2840, 96
    %v3788 = vpop.permute.xlu0 %3787
    %3789 = vrot.lane.b32.xlu0 %v2843, 96
    %v3790 = vpop.permute.xlu0 %3789
    %3791 = vrot.lane.b32.xlu0 %v2848, 96
    %v3792 = vpop.permute.xlu0 %3791
    %3793 = vrot.lane.b32.xlu0 %v2851, 96
    %v3794 = vpop.permute.xlu0 %3793
    %v3803 = vadd.f32 %v1637, %v3780
    %v3804 = vadd.f32 %v1643, %v3782
    %v3805 = vadd.f32 %v1649, %v3784
    %v3806 = vadd.f32 %v1655, %v3786
    %v3807 = vadd.f32 %v1661, %v3788
    %v3808 = vadd.f32 %v1667, %v3790
    %v3809 = vadd.f32 %v1673, %v3792
    %v3810 = vadd.f32 %v1679, %v3794
    %vm3811 = vcmp.gt.f32.partialorder %v3803, 0.0
    %vm3812 = vcmp.gt.f32.partialorder %v3804, 0.0
    %vm3813 = vcmp.gt.f32.partialorder %v3805, 0.0
    %vm3814 = vcmp.gt.f32.partialorder %v3806, 0.0
    %vm3815 = vcmp.gt.f32.partialorder %v3807, 0.0
    %vm3816 = vcmp.gt.f32.partialorder %v3808, 0.0
    %vm3817 = vcmp.gt.f32.partialorder %v3809, 0.0
    %vm3818 = vcmp.gt.f32.partialorder %v3810, 0.0
    %v3819 = vmul.f32 %v3803, 0.2
    %v3820 = vmul.f32 %v3804, 0.2
    %v3821 = vmul.f32 %v3805, 0.2
    %v3822 = vmul.f32 %v3806, 0.2
    %v3823 = vmul.f32 %v3807, 0.2
    %v3824 = vmul.f32 %v3808, 0.2
    %v3825 = vmul.f32 %v3809, 0.2
    %v3826 = vmul.f32 %v3810, 0.2
    %v3827 = vsel %vm3811, %v3803, %v3819
    %v3828 = vsel %vm3812, %v3804, %v3820
    %v3829 = vsel %vm3813, %v3805, %v3821
    %v3830 = vsel %vm3814, %v3806, %v3822
    %v3831 = vsel %vm3815, %v3807, %v3823
    %v3832 = vsel %vm3816, %v3808, %v3824
    %v3833 = vsel %vm3817, %v3809, %v3825
    %v3834 = vsel %vm3818, %v3810, %v3826
    %3843 = vrot.lane.b32.xlu0 %v2856, 96
    %v3844 = vpop.permute.xlu0 %3843
    %3845 = vrot.lane.b32.xlu0 %v2859, 96
    %v3846 = vpop.permute.xlu0 %3845
    %3847 = vrot.lane.b32.xlu0 %v2864, 96
    %v3848 = vpop.permute.xlu0 %3847
    %3849 = vrot.lane.b32.xlu0 %v2867, 96
    %v3850 = vpop.permute.xlu0 %3849
    %3851 = vrot.lane.b32.xlu0 %v2872, 96
    %v3852 = vpop.permute.xlu0 %3851
    %3853 = vrot.lane.b32.xlu0 %v2875, 96
    %v3854 = vpop.permute.xlu0 %3853
    %3855 = vrot.lane.b32.xlu0 %v2880, 96
    %v3856 = vpop.permute.xlu0 %3855
    %3857 = vrot.lane.b32.xlu0 %v2883, 96
    %v3858 = vpop.permute.xlu0 %3857
    %v3867 = vadd.f32 %v1637, %v3844
    %v3868 = vadd.f32 %v1643, %v3846
    %v3869 = vadd.f32 %v1649, %v3848
    %v3870 = vadd.f32 %v1655, %v3850
    %v3871 = vadd.f32 %v1661, %v3852
    %v3872 = vadd.f32 %v1667, %v3854
    %v3873 = vadd.f32 %v1673, %v3856
    %v3874 = vadd.f32 %v1679, %v3858
    %vm3875 = vcmp.gt.f32.partialorder %v3867, 0.0
    %vm3876 = vcmp.gt.f32.partialorder %v3868, 0.0
    %vm3877 = vcmp.gt.f32.partialorder %v3869, 0.0
    %vm3878 = vcmp.gt.f32.partialorder %v3870, 0.0
    %vm3879 = vcmp.gt.f32.partialorder %v3871, 0.0
    %vm3880 = vcmp.gt.f32.partialorder %v3872, 0.0
    %vm3881 = vcmp.gt.f32.partialorder %v3873, 0.0
    %vm3882 = vcmp.gt.f32.partialorder %v3874, 0.0
    %v3883 = vmul.f32 %v3867, 0.2
    %v3884 = vmul.f32 %v3868, 0.2
    %v3885 = vmul.f32 %v3869, 0.2
    %v3886 = vmul.f32 %v3870, 0.2
    %v3887 = vmul.f32 %v3871, 0.2
    %v3888 = vmul.f32 %v3872, 0.2
    %v3889 = vmul.f32 %v3873, 0.2
    %v3890 = vmul.f32 %v3874, 0.2
    %v3891 = vsel %vm3875, %v3867, %v3883
    %v3892 = vsel %vm3876, %v3868, %v3884
    %v3893 = vsel %vm3877, %v3869, %v3885
    %v3894 = vsel %vm3878, %v3870, %v3886
    %v3895 = vsel %vm3879, %v3871, %v3887
    %v3896 = vsel %vm3880, %v3872, %v3888
    %v3897 = vsel %vm3881, %v3873, %v3889
    %v3898 = vsel %vm3882, %v3874, %v3890
    %3907 = vrot.lane.b32.xlu0 %v2888, 96
    %v3908 = vpop.permute.xlu0 %3907
    %3909 = vrot.lane.b32.xlu0 %v2891, 96
    %v3910 = vpop.permute.xlu0 %3909
    %3911 = vrot.lane.b32.xlu0 %v2896, 96
    %v3912 = vpop.permute.xlu0 %3911
    %3913 = vrot.lane.b32.xlu0 %v2899, 96
    %v3914 = vpop.permute.xlu0 %3913
    %3915 = vrot.lane.b32.xlu0 %v2904, 96
    %v3916 = vpop.permute.xlu0 %3915
    %3917 = vrot.lane.b32.xlu0 %v2907, 96
    %v3918 = vpop.permute.xlu0 %3917
    %3919 = vrot.lane.b32.xlu0 %v2912, 96
    %v3920 = vpop.permute.xlu0 %3919
    %3921 = vrot.lane.b32.xlu0 %v2915, 96
    %v3922 = vpop.permute.xlu0 %3921
    %v3931 = vadd.f32 %v1637, %v3908
    %v3932 = vadd.f32 %v1643, %v3910
    %v3933 = vadd.f32 %v1649, %v3912
    %v3934 = vadd.f32 %v1655, %v3914
    %v3935 = vadd.f32 %v1661, %v3916
    %v3936 = vadd.f32 %v1667, %v3918
    %v3937 = vadd.f32 %v1673, %v3920
    %v3938 = vadd.f32 %v1679, %v3922
    %vm3939 = vcmp.gt.f32.partialorder %v3931, 0.0
    %vm3940 = vcmp.gt.f32.partialorder %v3932, 0.0
    %vm3941 = vcmp.gt.f32.partialorder %v3933, 0.0
    %vm3942 = vcmp.gt.f32.partialorder %v3934, 0.0
    %vm3943 = vcmp.gt.f32.partialorder %v3935, 0.0
    %vm3944 = vcmp.gt.f32.partialorder %v3936, 0.0
    %vm3945 = vcmp.gt.f32.partialorder %v3937, 0.0
    %vm3946 = vcmp.gt.f32.partialorder %v3938, 0.0
    %v3947 = vmul.f32 %v3931, 0.2
    %v3948 = vmul.f32 %v3932, 0.2
    %v3949 = vmul.f32 %v3933, 0.2
    %v3950 = vmul.f32 %v3934, 0.2
    %v3951 = vmul.f32 %v3935, 0.2
    %v3952 = vmul.f32 %v3936, 0.2
    %v3953 = vmul.f32 %v3937, 0.2
    %v3954 = vmul.f32 %v3938, 0.2
    %v3955 = vsel %vm3939, %v3931, %v3947
    %v3956 = vsel %vm3940, %v3932, %v3948
    %v3957 = vsel %vm3941, %v3933, %v3949
    %v3958 = vsel %vm3942, %v3934, %v3950
    %v3959 = vsel %vm3943, %v3935, %v3951
    %v3960 = vsel %vm3944, %v3936, %v3952
    %v3961 = vsel %vm3945, %v3937, %v3953
    %v3962 = vsel %vm3946, %v3938, %v3954
    %3971 = vrot.lane.b32.xlu0 %v2920, 96
    %v3972 = vpop.permute.xlu0 %3971
    %3973 = vrot.lane.b32.xlu0 %v2923, 96
    %v3974 = vpop.permute.xlu0 %3973
    %3975 = vrot.lane.b32.xlu0 %v2928, 96
    %v3976 = vpop.permute.xlu0 %3975
    %3977 = vrot.lane.b32.xlu0 %v2931, 96
    %v3978 = vpop.permute.xlu0 %3977
    %3979 = vrot.lane.b32.xlu0 %v2936, 96
    %v3980 = vpop.permute.xlu0 %3979
    %3981 = vrot.lane.b32.xlu0 %v2939, 96
    %v3982 = vpop.permute.xlu0 %3981
    %3983 = vrot.lane.b32.xlu0 %v2944, 96
    %v3984 = vpop.permute.xlu0 %3983
    %3985 = vrot.lane.b32.xlu0 %v2947, 96
    %v3986 = vpop.permute.xlu0 %3985
    %v3995 = vadd.f32 %v1637, %v3972
    %v3996 = vadd.f32 %v1643, %v3974
    %v3997 = vadd.f32 %v1649, %v3976
    %v3998 = vadd.f32 %v1655, %v3978
    %v3999 = vadd.f32 %v1661, %v3980
    %v4000 = vadd.f32 %v1667, %v3982
    %v4001 = vadd.f32 %v1673, %v3984
    %v4002 = vadd.f32 %v1679, %v3986
    %vm4003 = vcmp.gt.f32.partialorder %v3995, 0.0
    %vm4004 = vcmp.gt.f32.partialorder %v3996, 0.0
    %vm4005 = vcmp.gt.f32.partialorder %v3997, 0.0
    %vm4006 = vcmp.gt.f32.partialorder %v3998, 0.0
    %vm4007 = vcmp.gt.f32.partialorder %v3999, 0.0
    %vm4008 = vcmp.gt.f32.partialorder %v4000, 0.0
    %vm4009 = vcmp.gt.f32.partialorder %v4001, 0.0
    %vm4010 = vcmp.gt.f32.partialorder %v4002, 0.0
    %v4011 = vmul.f32 %v3995, 0.2
    %v4012 = vmul.f32 %v3996, 0.2
    %v4013 = vmul.f32 %v3997, 0.2
    %v4014 = vmul.f32 %v3998, 0.2
    %v4015 = vmul.f32 %v3999, 0.2
    %v4016 = vmul.f32 %v4000, 0.2
    %v4017 = vmul.f32 %v4001, 0.2
    %v4018 = vmul.f32 %v4002, 0.2
    %v4019 = vsel %vm4003, %v3995, %v4011
    %v4020 = vsel %vm4004, %v3996, %v4012
    %v4021 = vsel %vm4005, %v3997, %v4013
    %v4022 = vsel %vm4006, %v3998, %v4014
    %v4023 = vsel %vm4007, %v3999, %v4015
    %v4024 = vsel %vm4008, %v4000, %v4016
    %v4025 = vsel %vm4009, %v4001, %v4017
    %v4026 = vsel %vm4010, %v4002, %v4018
    %v4027 = vmax.f32 %v3827, %v3891
    %v4028 = vmax.f32 %v3828, %v3892
    %v4029 = vmax.f32 %v3829, %v3893
    %v4030 = vmax.f32 %v3830, %v3894
    %v4031 = vmax.f32 %v3831, %v3895
    %v4032 = vmax.f32 %v3832, %v3896
    %v4033 = vmax.f32 %v3833, %v3897
    %v4034 = vmax.f32 %v3834, %v3898
    %v4035 = vmax.f32 %v4027, %v3955
    %v4036 = vmax.f32 %v4028, %v3956
    %v4037 = vmax.f32 %v4029, %v3957
    %v4038 = vmax.f32 %v4030, %v3958
    %v4039 = vmax.f32 %v4031, %v3959
    %v4040 = vmax.f32 %v4032, %v3960
    %v4041 = vmax.f32 %v4033, %v3961
    %v4042 = vmax.f32 %v4034, %v3962
    %v4043 = vmax.f32 %v4035, %v4019
    %v4044 = vmax.f32 %v4036, %v4020
    %v4045 = vmax.f32 %v4037, %v4021
    %v4046 = vmax.f32 %v4038, %v4022
    %v4047 = vmax.f32 %v4039, %v4023
    %v4048 = vmax.f32 %v4040, %v4024
    %v4049 = vmax.f32 %v4041, %v4025
    %v4050 = vmax.f32 %v4042, %v4026
    %v4051 = vsub.f32 %v3827, %v4043
    %v4052 = vsub.f32 %v3828, %v4044
    %v4053 = vsub.f32 %v3829, %v4045
    %v4054 = vsub.f32 %v3830, %v4046
    %v4055 = vsub.f32 %v3831, %v4047
    %v4056 = vsub.f32 %v3832, %v4048
    %v4057 = vsub.f32 %v3833, %v4049
    %v4058 = vsub.f32 %v3834, %v4050
    %v4059 = vmul.f32 %v4051, 1.442695
    %v4060 = vpow.pop %v4059
    %v4061 = vmul.f32 %v4052, 1.442695
    %v4062 = vpow.pop %v4061
    %v4063 = vmul.f32 %v4053, 1.442695
    %v4064 = vpow.pop %v4063
    %v4065 = vmul.f32 %v4054, 1.442695
    %v4066 = vpow.pop %v4065
    %v4067 = vmul.f32 %v4055, 1.442695
    %v4068 = vpow.pop %v4067
    %v4069 = vmul.f32 %v4056, 1.442695
    %v4070 = vpow.pop %v4069
    %v4071 = vmul.f32 %v4057, 1.442695
    %v4072 = vpow.pop %v4071
    %v4073 = vmul.f32 %v4058, 1.442695
    %v4074 = vpow.pop %v4073
    %v4075 = vsub.f32 %v3891, %v4043
    %v4076 = vsub.f32 %v3892, %v4044
    %v4077 = vsub.f32 %v3893, %v4045
    %v4078 = vsub.f32 %v3894, %v4046
    %v4079 = vsub.f32 %v3895, %v4047
    %v4080 = vsub.f32 %v3896, %v4048
    %v4081 = vsub.f32 %v3897, %v4049
    %v4082 = vsub.f32 %v3898, %v4050
    %v4083 = vmul.f32 %v4075, 1.442695
    %v4084 = vpow.pop %v4083
    %v4085 = vmul.f32 %v4076, 1.442695
    %v4086 = vpow.pop %v4085
    %v4087 = vmul.f32 %v4077, 1.442695
    %v4088 = vpow.pop %v4087
    %v4089 = vmul.f32 %v4078, 1.442695
    %v4090 = vpow.pop %v4089
    %v4091 = vmul.f32 %v4079, 1.442695
    %v4092 = vpow.pop %v4091
    %v4093 = vmul.f32 %v4080, 1.442695
    %v4094 = vpow.pop %v4093
    %v4095 = vmul.f32 %v4081, 1.442695
    %v4096 = vpow.pop %v4095
    %v4097 = vmul.f32 %v4082, 1.442695
    %v4098 = vpow.pop %v4097
    %v4099 = vsub.f32 %v3955, %v4043
    %v4100 = vsub.f32 %v3956, %v4044
    %v4101 = vsub.f32 %v3957, %v4045
    %v4102 = vsub.f32 %v3958, %v4046
    %v4103 = vsub.f32 %v3959, %v4047
    %v4104 = vsub.f32 %v3960, %v4048
    %v4105 = vsub.f32 %v3961, %v4049
    %v4106 = vsub.f32 %v3962, %v4050
    %v4107 = vmul.f32 %v4099, 1.442695
    %v4108 = vpow.pop %v4107
    %v4109 = vmul.f32 %v4100, 1.442695
    %v4110 = vpow.pop %v4109
    %v4111 = vmul.f32 %v4101, 1.442695
    %v4112 = vpow.pop %v4111
    %v4113 = vmul.f32 %v4102, 1.442695
    %v4114 = vpow.pop %v4113
    %v4115 = vmul.f32 %v4103, 1.442695
    %v4116 = vpow.pop %v4115
    %v4117 = vmul.f32 %v4104, 1.442695
    %v4118 = vpow.pop %v4117
    %v4119 = vmul.f32 %v4105, 1.442695
    %v4120 = vpow.pop %v4119
    %v4121 = vmul.f32 %v4106, 1.442695
    %v4122 = vpow.pop %v4121
    %v4123 = vsub.f32 %v4019, %v4043
    %v4124 = vsub.f32 %v4020, %v4044
    %v4125 = vsub.f32 %v4021, %v4045
    %v4126 = vsub.f32 %v4022, %v4046
    %v4127 = vsub.f32 %v4023, %v4047
    %v4128 = vsub.f32 %v4024, %v4048
    %v4129 = vsub.f32 %v4025, %v4049
    %v4130 = vsub.f32 %v4026, %v4050
    %v4131 = vmul.f32 %v4123, 1.442695
    %v4132 = vpow.pop %v4131
    %v4133 = vmul.f32 %v4124, 1.442695
    %v4134 = vpow.pop %v4133
    %v4135 = vmul.f32 %v4125, 1.442695
    %v4136 = vpow.pop %v4135
    %v4137 = vmul.f32 %v4126, 1.442695
    %v4138 = vpow.pop %v4137
    %v4139 = vmul.f32 %v4127, 1.442695
    %v4140 = vpow.pop %v4139
    %v4141 = vmul.f32 %v4128, 1.442695
    %v4142 = vpow.pop %v4141
    %v4143 = vmul.f32 %v4129, 1.442695
    %v4144 = vpow.pop %v4143
    %v4145 = vmul.f32 %v4130, 1.442695
    %v4146 = vpow.pop %v4145
    %v4147 = vadd.f32 %v4060, %v4084
    %v4148 = vadd.f32 %v4062, %v4086
    %v4149 = vadd.f32 %v4064, %v4088
    %v4150 = vadd.f32 %v4066, %v4090
    %v4151 = vadd.f32 %v4068, %v4092
    %v4152 = vadd.f32 %v4070, %v4094
    %v4153 = vadd.f32 %v4072, %v4096
    %v4154 = vadd.f32 %v4074, %v4098
    %v4155 = vadd.f32 %v4147, %v4108
    %v4156 = vadd.f32 %v4148, %v4110
    %v4157 = vadd.f32 %v4149, %v4112
    %v4158 = vadd.f32 %v4150, %v4114
    %v4159 = vadd.f32 %v4151, %v4116
    %v4160 = vadd.f32 %v4152, %v4118
    %v4161 = vadd.f32 %v4153, %v4120
    %v4162 = vadd.f32 %v4154, %v4122
    %v4163 = vadd.f32 %v4155, %v4132
    %v4164 = vadd.f32 %v4156, %v4134
    %v4165 = vadd.f32 %v4157, %v4136
    %v4166 = vadd.f32 %v4158, %v4138
    %v4167 = vadd.f32 %v4159, %v4140
    %v4168 = vadd.f32 %v4160, %v4142
    %v4169 = vadd.f32 %v4161, %v4144
    %v4170 = vadd.f32 %v4162, %v4146
    %v4171 = vrcp.pop %v4163
    %v4172 = vmul.f32 1.0, %v4171
    %v4173 = vrcp.pop %v4164
    %v4174 = vmul.f32 1.0, %v4173
    %v4175 = vrcp.pop %v4165
    %v4176 = vmul.f32 1.0, %v4175
    %v4177 = vrcp.pop %v4166
    %v4178 = vmul.f32 1.0, %v4177
    %v4179 = vrcp.pop %v4167
    %v4180 = vmul.f32 1.0, %v4179
    %v4181 = vrcp.pop %v4168
    %v4182 = vmul.f32 1.0, %v4181
    %v4183 = vrcp.pop %v4169
    %v4184 = vmul.f32 1.0, %v4183
    %v4185 = vrcp.pop %v4170
    %v4186 = vmul.f32 1.0, %v4185
    %v4187 = vmul.f32 %v4060, %v4172
    %v4188 = vmul.f32 %v4062, %v4174
    %v4189 = vmul.f32 %v4064, %v4176
    %v4190 = vmul.f32 %v4066, %v4178
    %v4191 = vmul.f32 %v4068, %v4180
    %v4192 = vmul.f32 %v4070, %v4182
    %v4193 = vmul.f32 %v4072, %v4184
    %v4194 = vmul.f32 %v4074, %v4186
    %4196 = vset.pattern.permute.xlu0 0
    %4197 = vperm.xlu0 %4196, %v4187
    %v4198 = vpop.permute.xlu0 %4197
    %4201 = vset.pattern.permute.xlu0 0
    %4202 = vperm.xlu0 %4201, %v4188
    %v4203 = vpop.permute.xlu0 %4202
    %4206 = vset.pattern.permute.xlu0 0
    %4207 = vperm.xlu0 %4206, %v4189
    %v4208 = vpop.permute.xlu0 %4207
    %4211 = vset.pattern.permute.xlu0 0
    %4212 = vperm.xlu0 %4211, %v4190
    %v4213 = vpop.permute.xlu0 %4212
    %4216 = vset.pattern.permute.xlu0 0
    %4217 = vperm.xlu0 %4216, %v4191
    %v4218 = vpop.permute.xlu0 %4217
    %4221 = vset.pattern.permute.xlu0 0
    %4222 = vperm.xlu0 %4221, %v4192
    %v4223 = vpop.permute.xlu0 %4222
    %4226 = vset.pattern.permute.xlu0 0
    %4227 = vperm.xlu0 %4226, %v4193
    %v4228 = vpop.permute.xlu0 %4227
    %4231 = vset.pattern.permute.xlu0 0
    %4232 = vperm.xlu0 %4231, %v4194
    %v4233 = vpop.permute.xlu0 %4232
    %v4235 = vmul.f32 %v4198, %v2824
    %v4236 = vmul.f32 %v4203, %v2827
    %v4237 = vmul.f32 %v4208, %v2832
    %v4238 = vmul.f32 %v4213, %v2835
    %v4239 = vmul.f32 %v4218, %v2840
    %v4240 = vmul.f32 %v4223, %v2843
    %v4241 = vmul.f32 %v4228, %v2848
    %v4242 = vmul.f32 %v4233, %v2851
    %v4243 = vmul.f32 %v4084, %v4172
    %v4244 = vmul.f32 %v4086, %v4174
    %v4245 = vmul.f32 %v4088, %v4176
    %v4246 = vmul.f32 %v4090, %v4178
    %v4247 = vmul.f32 %v4092, %v4180
    %v4248 = vmul.f32 %v4094, %v4182
    %v4249 = vmul.f32 %v4096, %v4184
    %v4250 = vmul.f32 %v4098, %v4186
    %4252 = vset.pattern.permute.xlu0 0
    %4253 = vperm.xlu0 %4252, %v4243
    %v4254 = vpop.permute.xlu0 %4253
    %4257 = vset.pattern.permute.xlu0 0
    %4258 = vperm.xlu0 %4257, %v4244
    %v4259 = vpop.permute.xlu0 %4258
    %4262 = vset.pattern.permute.xlu0 0
    %4263 = vperm.xlu0 %4262, %v4245
    %v4264 = vpop.permute.xlu0 %4263
    %4267 = vset.pattern.permute.xlu0 0
    %4268 = vperm.xlu0 %4267, %v4246
    %v4269 = vpop.permute.xlu0 %4268
    %4272 = vset.pattern.permute.xlu0 0
    %4273 = vperm.xlu0 %4272, %v4247
    %v4274 = vpop.permute.xlu0 %4273
    %4277 = vset.pattern.permute.xlu0 0
    %4278 = vperm.xlu0 %4277, %v4248
    %v4279 = vpop.permute.xlu0 %4278
    %4282 = vset.pattern.permute.xlu0 0
    %4283 = vperm.xlu0 %4282, %v4249
    %v4284 = vpop.permute.xlu0 %4283
    %4287 = vset.pattern.permute.xlu0 0
    %4288 = vperm.xlu0 %4287, %v4250
    %v4289 = vpop.permute.xlu0 %4288
    %v4291 = vmul.f32 %v4254, %v2856
    %v4292 = vmul.f32 %v4259, %v2859
    %v4293 = vmul.f32 %v4264, %v2864
    %v4294 = vmul.f32 %v4269, %v2867
    %v4295 = vmul.f32 %v4274, %v2872
    %v4296 = vmul.f32 %v4279, %v2875
    %v4297 = vmul.f32 %v4284, %v2880
    %v4298 = vmul.f32 %v4289, %v2883
    %v4299 = vadd.f32 %v4235, %v4291
    %v4300 = vadd.f32 %v4236, %v4292
    %v4301 = vadd.f32 %v4237, %v4293
    %v4302 = vadd.f32 %v4238, %v4294
    %v4303 = vadd.f32 %v4239, %v4295
    %v4304 = vadd.f32 %v4240, %v4296
    %v4305 = vadd.f32 %v4241, %v4297
    %v4306 = vadd.f32 %v4242, %v4298
    %v4307 = vmul.f32 %v4108, %v4172
    %v4308 = vmul.f32 %v4110, %v4174
    %v4309 = vmul.f32 %v4112, %v4176
    %v4310 = vmul.f32 %v4114, %v4178
    %v4311 = vmul.f32 %v4116, %v4180
    %v4312 = vmul.f32 %v4118, %v4182
    %v4313 = vmul.f32 %v4120, %v4184
    %v4314 = vmul.f32 %v4122, %v4186
    %4316 = vset.pattern.permute.xlu0 0
    %4317 = vperm.xlu0 %4316, %v4307
    %v4318 = vpop.permute.xlu0 %4317
    %4321 = vset.pattern.permute.xlu0 0
    %4322 = vperm.xlu0 %4321, %v4308
    %v4323 = vpop.permute.xlu0 %4322
    %4326 = vset.pattern.permute.xlu0 0
    %4327 = vperm.xlu0 %4326, %v4309
    %v4328 = vpop.permute.xlu0 %4327
    %4331 = vset.pattern.permute.xlu0 0
    %4332 = vperm.xlu0 %4331, %v4310
    %v4333 = vpop.permute.xlu0 %4332
    %4336 = vset.pattern.permute.xlu0 0
    %4337 = vperm.xlu0 %4336, %v4311
    %v4338 = vpop.permute.xlu0 %4337
    %4341 = vset.pattern.permute.xlu0 0
    %4342 = vperm.xlu0 %4341, %v4312
    %v4343 = vpop.permute.xlu0 %4342
    %4346 = vset.pattern.permute.xlu0 0
    %4347 = vperm.xlu0 %4346, %v4313
    %v4348 = vpop.permute.xlu0 %4347
    %4351 = vset.pattern.permute.xlu0 0
    %4352 = vperm.xlu0 %4351, %v4314
    %v4353 = vpop.permute.xlu0 %4352
    %v4355 = vmul.f32 %v4318, %v2888
    %v4356 = vmul.f32 %v4323, %v2891
    %v4357 = vmul.f32 %v4328, %v2896
    %v4358 = vmul.f32 %v4333, %v2899
    %v4359 = vmul.f32 %v4338, %v2904
    %v4360 = vmul.f32 %v4343, %v2907
    %v4361 = vmul.f32 %v4348, %v2912
    %v4362 = vmul.f32 %v4353, %v2915
    %v4363 = vadd.f32 %v4299, %v4355
    %v4364 = vadd.f32 %v4300, %v4356
    %v4365 = vadd.f32 %v4301, %v4357
    %v4366 = vadd.f32 %v4302, %v4358
    %v4367 = vadd.f32 %v4303, %v4359
    %v4368 = vadd.f32 %v4304, %v4360
    %v4369 = vadd.f32 %v4305, %v4361
    %v4370 = vadd.f32 %v4306, %v4362
    %v4371 = vmul.f32 %v4132, %v4172
    %v4372 = vmul.f32 %v4134, %v4174
    %v4373 = vmul.f32 %v4136, %v4176
    %v4374 = vmul.f32 %v4138, %v4178
    %v4375 = vmul.f32 %v4140, %v4180
    %v4376 = vmul.f32 %v4142, %v4182
    %v4377 = vmul.f32 %v4144, %v4184
    %v4378 = vmul.f32 %v4146, %v4186
    %4380 = vset.pattern.permute.xlu0 0
    %4381 = vperm.xlu0 %4380, %v4371
    %v4382 = vpop.permute.xlu0 %4381
    %4385 = vset.pattern.permute.xlu0 0
    %4386 = vperm.xlu0 %4385, %v4372
    %v4387 = vpop.permute.xlu0 %4386
    %4390 = vset.pattern.permute.xlu0 0
    %4391 = vperm.xlu0 %4390, %v4373
    %v4392 = vpop.permute.xlu0 %4391
    %4395 = vset.pattern.permute.xlu0 0
    %4396 = vperm.xlu0 %4395, %v4374
    %v4397 = vpop.permute.xlu0 %4396
    %4400 = vset.pattern.permute.xlu0 0
    %4401 = vperm.xlu0 %4400, %v4375
    %v4402 = vpop.permute.xlu0 %4401
    %4405 = vset.pattern.permute.xlu0 0
    %4406 = vperm.xlu0 %4405, %v4376
    %v4407 = vpop.permute.xlu0 %4406
    %4410 = vset.pattern.permute.xlu0 0
    %4411 = vperm.xlu0 %4410, %v4377
    %v4412 = vpop.permute.xlu0 %4411
    %4415 = vset.pattern.permute.xlu0 0
    %4416 = vperm.xlu0 %4415, %v4378
    %v4417 = vpop.permute.xlu0 %4416
    %v4419 = vmul.f32 %v4382, %v2920
    %v4420 = vmul.f32 %v4387, %v2923
    %v4421 = vmul.f32 %v4392, %v2928
    %v4422 = vmul.f32 %v4397, %v2931
    %v4423 = vmul.f32 %v4402, %v2936
    %v4424 = vmul.f32 %v4407, %v2939
    %v4425 = vmul.f32 %v4412, %v2944
    %v4426 = vmul.f32 %v4417, %v2947
    %v4427 = vadd.f32 %v4363, %v4419
    %v4428 = vadd.f32 %v4364, %v4420
    %v4429 = vadd.f32 %v4365, %v4421
    %v4430 = vadd.f32 %v4366, %v4422
    %v4431 = vadd.f32 %v4367, %v4423
    %v4432 = vadd.f32 %v4368, %v4424
    %v4433 = vadd.f32 %v4369, %v4425
    %v4434 = vadd.f32 %v4370, %v4426
    %s4435 = sld [smem:[#allocation3 + $0x2]]
    %s4436 = smul.f32 %s4435, 0.25
    %v4437 = vstv %s4436
    %v4438 = vmul.f32 %v4437, %v4427
    %v4439 = vmul.f32 %v4437, %v4428
    %v4440 = vmul.f32 %v4437, %v4429
    %v4441 = vmul.f32 %v4437, %v4430
    %v4442 = vmul.f32 %v4437, %v4431
    %v4443 = vmul.f32 %v4437, %v4432
    %v4444 = vmul.f32 %v4437, %v4433
    %v4445 = vmul.f32 %v4437, %v4434
    %v4446 = vadd.f32 %v3763, %v4438
    %v4447 = vadd.f32 %v3764, %v4439
    %v4448 = vadd.f32 %v3765, %v4440
    %v4449 = vadd.f32 %v3766, %v4441
    %v4450 = vadd.f32 %v3767, %v4442
    %v4451 = vadd.f32 %v3768, %v4443
    %v4452 = vadd.f32 %v3769, %v4444
    %v4453 = vadd.f32 %v3770, %v4445
    %4462 = vrot.lane.b32.xlu0 %v2952, 96
    %v4463 = vpop.permute.xlu0 %4462
    %4464 = vrot.lane.b32.xlu0 %v2955, 96
    %v4465 = vpop.permute.xlu0 %4464
    %4466 = vrot.lane.b32.xlu0 %v2960, 96
    %v4467 = vpop.permute.xlu0 %4466
    %4468 = vrot.lane.b32.xlu0 %v2963, 96
    %v4469 = vpop.permute.xlu0 %4468
    %4470 = vrot.lane.b32.xlu0 %v2968, 96
    %v4471 = vpop.permute.xlu0 %4470
    %4472 = vrot.lane.b32.xlu0 %v2971, 96
    %v4473 = vpop.permute.xlu0 %4472
    %4474 = vrot.lane.b32.xlu0 %v2976, 96
    %v4475 = vpop.permute.xlu0 %4474
    %4476 = vrot.lane.b32.xlu0 %v2979, 96
    %v4477 = vpop.permute.xlu0 %4476
    %v4486 = vadd.f32 %v1637, %v4463
    %v4487 = vadd.f32 %v1643, %v4465
    %v4488 = vadd.f32 %v1649, %v4467
    %v4489 = vadd.f32 %v1655, %v4469
    %v4490 = vadd.f32 %v1661, %v4471
    %v4491 = vadd.f32 %v1667, %v4473
    %v4492 = vadd.f32 %v1673, %v4475
    %v4493 = vadd.f32 %v1679, %v4477
    %vm4494 = vcmp.gt.f32.partialorder %v4486, 0.0
    %vm4495 = vcmp.gt.f32.partialorder %v4487, 0.0
    %vm4496 = vcmp.gt.f32.partialorder %v4488, 0.0
    %vm4497 = vcmp.gt.f32.partialorder %v4489, 0.0
    %vm4498 = vcmp.gt.f32.partialorder %v4490, 0.0
    %vm4499 = vcmp.gt.f32.partialorder %v4491, 0.0
    %vm4500 = vcmp.gt.f32.partialorder %v4492, 0.0
    %vm4501 = vcmp.gt.f32.partialorder %v4493, 0.0
    %v4502 = vmul.f32 %v4486, 0.2
    %v4503 = vmul.f32 %v4487, 0.2
    %v4504 = vmul.f32 %v4488, 0.2
    %v4505 = vmul.f32 %v4489, 0.2
    %v4506 = vmul.f32 %v4490, 0.2
    %v4507 = vmul.f32 %v4491, 0.2
    %v4508 = vmul.f32 %v4492, 0.2
    %v4509 = vmul.f32 %v4493, 0.2
    %v4510 = vsel %vm4494, %v4486, %v4502
    %v4511 = vsel %vm4495, %v4487, %v4503
    %v4512 = vsel %vm4496, %v4488, %v4504
    %v4513 = vsel %vm4497, %v4489, %v4505
    %v4514 = vsel %vm4498, %v4490, %v4506
    %v4515 = vsel %vm4499, %v4491, %v4507
    %v4516 = vsel %vm4500, %v4492, %v4508
    %v4517 = vsel %vm4501, %v4493, %v4509
    %4526 = vrot.lane.b32.xlu0 %v2984, 96
    %v4527 = vpop.permute.xlu0 %4526
    %4528 = vrot.lane.b32.xlu0 %v2987, 96
    %v4529 = vpop.permute.xlu0 %4528
    %4530 = vrot.lane.b32.xlu0 %v2992, 96
    %v4531 = vpop.permute.xlu0 %4530
    %4532 = vrot.lane.b32.xlu0 %v2995, 96
    %v4533 = vpop.permute.xlu0 %4532
    %4534 = vrot.lane.b32.xlu0 %v3000, 96
    %v4535 = vpop.permute.xlu0 %4534
    %4536 = vrot.lane.b32.xlu0 %v3003, 96
    %v4537 = vpop.permute.xlu0 %4536
    %4538 = vrot.lane.b32.xlu0 %v3008, 96
    %v4539 = vpop.permute.xlu0 %4538
    %4540 = vrot.lane.b32.xlu0 %v3011, 96
    %v4541 = vpop.permute.xlu0 %4540
    %v4550 = vadd.f32 %v1637, %v4527
    %v4551 = vadd.f32 %v1643, %v4529
    %v4552 = vadd.f32 %v1649, %v4531
    %v4553 = vadd.f32 %v1655, %v4533
    %v4554 = vadd.f32 %v1661, %v4535
    %v4555 = vadd.f32 %v1667, %v4537
    %v4556 = vadd.f32 %v1673, %v4539
    %v4557 = vadd.f32 %v1679, %v4541
    %vm4558 = vcmp.gt.f32.partialorder %v4550, 0.0
    %vm4559 = vcmp.gt.f32.partialorder %v4551, 0.0
    %vm4560 = vcmp.gt.f32.partialorder %v4552, 0.0
    %vm4561 = vcmp.gt.f32.partialorder %v4553, 0.0
    %vm4562 = vcmp.gt.f32.partialorder %v4554, 0.0
    %vm4563 = vcmp.gt.f32.partialorder %v4555, 0.0
    %vm4564 = vcmp.gt.f32.partialorder %v4556, 0.0
    %vm4565 = vcmp.gt.f32.partialorder %v4557, 0.0
    %v4566 = vmul.f32 %v4550, 0.2
    %v4567 = vmul.f32 %v4551, 0.2
    %v4568 = vmul.f32 %v4552, 0.2
    %v4569 = vmul.f32 %v4553, 0.2
    %v4570 = vmul.f32 %v4554, 0.2
    %v4571 = vmul.f32 %v4555, 0.2
    %v4572 = vmul.f32 %v4556, 0.2
    %v4573 = vmul.f32 %v4557, 0.2
    %v4574 = vsel %vm4558, %v4550, %v4566
    %v4575 = vsel %vm4559, %v4551, %v4567
    %v4576 = vsel %vm4560, %v4552, %v4568
    %v4577 = vsel %vm4561, %v4553, %v4569
    %v4578 = vsel %vm4562, %v4554, %v4570
    %v4579 = vsel %vm4563, %v4555, %v4571
    %v4580 = vsel %vm4564, %v4556, %v4572
    %v4581 = vsel %vm4565, %v4557, %v4573
    %4590 = vrot.lane.b32.xlu0 %v3016, 96
    %v4591 = vpop.permute.xlu0 %4590
    %4592 = vrot.lane.b32.xlu0 %v3019, 96
    %v4593 = vpop.permute.xlu0 %4592
    %4594 = vrot.lane.b32.xlu0 %v3024, 96
    %v4595 = vpop.permute.xlu0 %4594
    %4596 = vrot.lane.b32.xlu0 %v3027, 96
    %v4597 = vpop.permute.xlu0 %4596
    %4598 = vrot.lane.b32.xlu0 %v3032, 96
    %v4599 = vpop.permute.xlu0 %4598
    %4600 = vrot.lane.b32.xlu0 %v3035, 96
    %v4601 = vpop.permute.xlu0 %4600
    %4602 = vrot.lane.b32.xlu0 %v3040, 96
    %v4603 = vpop.permute.xlu0 %4602
    %4604 = vrot.lane.b32.xlu0 %v3043, 96
    %v4605 = vpop.permute.xlu0 %4604
    %v4614 = vadd.f32 %v1637, %v4591
    %v4615 = vadd.f32 %v1643, %v4593
    %v4616 = vadd.f32 %v1649, %v4595
    %v4617 = vadd.f32 %v1655, %v4597
    %v4618 = vadd.f32 %v1661, %v4599
    %v4619 = vadd.f32 %v1667, %v4601
    %v4620 = vadd.f32 %v1673, %v4603
    %v4621 = vadd.f32 %v1679, %v4605
    %vm4622 = vcmp.gt.f32.partialorder %v4614, 0.0
    %vm4623 = vcmp.gt.f32.partialorder %v4615, 0.0
    %vm4624 = vcmp.gt.f32.partialorder %v4616, 0.0
    %vm4625 = vcmp.gt.f32.partialorder %v4617, 0.0
    %vm4626 = vcmp.gt.f32.partialorder %v4618, 0.0
    %vm4627 = vcmp.gt.f32.partialorder %v4619, 0.0
    %vm4628 = vcmp.gt.f32.partialorder %v4620, 0.0
    %vm4629 = vcmp.gt.f32.partialorder %v4621, 0.0
    %v4630 = vmul.f32 %v4614, 0.2
    %v4631 = vmul.f32 %v4615, 0.2
    %v4632 = vmul.f32 %v4616, 0.2
    %v4633 = vmul.f32 %v4617, 0.2
    %v4634 = vmul.f32 %v4618, 0.2
    %v4635 = vmul.f32 %v4619, 0.2
    %v4636 = vmul.f32 %v4620, 0.2
    %v4637 = vmul.f32 %v4621, 0.2
    %v4638 = vsel %vm4622, %v4614, %v4630
    %v4639 = vsel %vm4623, %v4615, %v4631
    %v4640 = vsel %vm4624, %v4616, %v4632
    %v4641 = vsel %vm4625, %v4617, %v4633
    %v4642 = vsel %vm4626, %v4618, %v4634
    %v4643 = vsel %vm4627, %v4619, %v4635
    %v4644 = vsel %vm4628, %v4620, %v4636
    %v4645 = vsel %vm4629, %v4621, %v4637
    %4654 = vrot.lane.b32.xlu0 %v3048, 96
    %v4655 = vpop.permute.xlu0 %4654
    %4656 = vrot.lane.b32.xlu0 %v3051, 96
    %v4657 = vpop.permute.xlu0 %4656
    %4658 = vrot.lane.b32.xlu0 %v3056, 96
    %v4659 = vpop.permute.xlu0 %4658
    %4660 = vrot.lane.b32.xlu0 %v3059, 96
    %v4661 = vpop.permute.xlu0 %4660
    %4662 = vrot.lane.b32.xlu0 %v3064, 96
    %v4663 = vpop.permute.xlu0 %4662
    %4664 = vrot.lane.b32.xlu0 %v3067, 96
    %v4665 = vpop.permute.xlu0 %4664
    %4666 = vrot.lane.b32.xlu0 %v3072, 96
    %v4667 = vpop.permute.xlu0 %4666
    %4668 = vrot.lane.b32.xlu0 %v3075, 96
    %v4669 = vpop.permute.xlu0 %4668
    %v4678 = vadd.f32 %v1637, %v4655
    %v4679 = vadd.f32 %v1643, %v4657
    %v4680 = vadd.f32 %v1649, %v4659
    %v4681 = vadd.f32 %v1655, %v4661
    %v4682 = vadd.f32 %v1661, %v4663
    %v4683 = vadd.f32 %v1667, %v4665
    %v4684 = vadd.f32 %v1673, %v4667
    %v4685 = vadd.f32 %v1679, %v4669
    %vm4686 = vcmp.gt.f32.partialorder %v4678, 0.0
    %vm4687 = vcmp.gt.f32.partialorder %v4679, 0.0
    %vm4688 = vcmp.gt.f32.partialorder %v4680, 0.0
    %vm4689 = vcmp.gt.f32.partialorder %v4681, 0.0
    %vm4690 = vcmp.gt.f32.partialorder %v4682, 0.0
    %vm4691 = vcmp.gt.f32.partialorder %v4683, 0.0
    %vm4692 = vcmp.gt.f32.partialorder %v4684, 0.0
    %vm4693 = vcmp.gt.f32.partialorder %v4685, 0.0
    %v4694 = vmul.f32 %v4678, 0.2
    %v4695 = vmul.f32 %v4679, 0.2
    %v4696 = vmul.f32 %v4680, 0.2
    %v4697 = vmul.f32 %v4681, 0.2
    %v4698 = vmul.f32 %v4682, 0.2
    %v4699 = vmul.f32 %v4683, 0.2
    %v4700 = vmul.f32 %v4684, 0.2
    %v4701 = vmul.f32 %v4685, 0.2
    %v4702 = vsel %vm4686, %v4678, %v4694
    %v4703 = vsel %vm4687, %v4679, %v4695
    %v4704 = vsel %vm4688, %v4680, %v4696
    %v4705 = vsel %vm4689, %v4681, %v4697
    %v4706 = vsel %vm4690, %v4682, %v4698
    %v4707 = vsel %vm4691, %v4683, %v4699
    %v4708 = vsel %vm4692, %v4684, %v4700
    %v4709 = vsel %vm4693, %v4685, %v4701
    %v4710 = vmax.f32 %v4510, %v4574
    %v4711 = vmax.f32 %v4511, %v4575
    %v4712 = vmax.f32 %v4512, %v4576
    %v4713 = vmax.f32 %v4513, %v4577
    %v4714 = vmax.f32 %v4514, %v4578
    %v4715 = vmax.f32 %v4515, %v4579
    %v4716 = vmax.f32 %v4516, %v4580
    %v4717 = vmax.f32 %v4517, %v4581
    %v4718 = vmax.f32 %v4710, %v4638
    %v4719 = vmax.f32 %v4711, %v4639
    %v4720 = vmax.f32 %v4712, %v4640
    %v4721 = vmax.f32 %v4713, %v4641
    %v4722 = vmax.f32 %v4714, %v4642
    %v4723 = vmax.f32 %v4715, %v4643
    %v4724 = vmax.f32 %v4716, %v4644
    %v4725 = vmax.f32 %v4717, %v4645
    %v4726 = vmax.f32 %v4718, %v4702
    %v4727 = vmax.f32 %v4719, %v4703
    %v4728 = vmax.f32 %v4720, %v4704
    %v4729 = vmax.f32 %v4721, %v4705
    %v4730 = vmax.f32 %v4722, %v4706
    %v4731 = vmax.f32 %v4723, %v4707
    %v4732 = vmax.f32 %v4724, %v4708
    %v4733 = vmax.f32 %v4725, %v4709
    %v4734 = vsub.f32 %v4510, %v4726
    %v4735 = vsub.f32 %v4511, %v4727
    %v4736 = vsub.f32 %v4512, %v4728
    %v4737 = vsub.f32 %v4513, %v4729
    %v4738 = vsub.f32 %v4514, %v4730
    %v4739 = vsub.f32 %v4515, %v4731
    %v4740 = vsub.f32 %v4516, %v4732
    %v4741 = vsub.f32 %v4517, %v4733
    %v4742 = vmul.f32 %v4734, 1.442695
    %v4743 = vpow.pop %v4742
    %v4744 = vmul.f32 %v4735, 1.442695
    %v4745 = vpow.pop %v4744
    %v4746 = vmul.f32 %v4736, 1.442695
    %v4747 = vpow.pop %v4746
    %v4748 = vmul.f32 %v4737, 1.442695
    %v4749 = vpow.pop %v4748
    %v4750 = vmul.f32 %v4738, 1.442695
    %v4751 = vpow.pop %v4750
    %v4752 = vmul.f32 %v4739, 1.442695
    %v4753 = vpow.pop %v4752
    %v4754 = vmul.f32 %v4740, 1.442695
    %v4755 = vpow.pop %v4754
    %v4756 = vmul.f32 %v4741, 1.442695
    %v4757 = vpow.pop %v4756
    %v4758 = vsub.f32 %v4574, %v4726
    %v4759 = vsub.f32 %v4575, %v4727
    %v4760 = vsub.f32 %v4576, %v4728
    %v4761 = vsub.f32 %v4577, %v4729
    %v4762 = vsub.f32 %v4578, %v4730
    %v4763 = vsub.f32 %v4579, %v4731
    %v4764 = vsub.f32 %v4580, %v4732
    %v4765 = vsub.f32 %v4581, %v4733
    %v4766 = vmul.f32 %v4758, 1.442695
    %v4767 = vpow.pop %v4766
    %v4768 = vmul.f32 %v4759, 1.442695
    %v4769 = vpow.pop %v4768
    %v4770 = vmul.f32 %v4760, 1.442695
    %v4771 = vpow.pop %v4770
    %v4772 = vmul.f32 %v4761, 1.442695
    %v4773 = vpow.pop %v4772
    %v4774 = vmul.f32 %v4762, 1.442695
    %v4775 = vpow.pop %v4774
    %v4776 = vmul.f32 %v4763, 1.442695
    %v4777 = vpow.pop %v4776
    %v4778 = vmul.f32 %v4764, 1.442695
    %v4779 = vpow.pop %v4778
    %v4780 = vmul.f32 %v4765, 1.442695
    %v4781 = vpow.pop %v4780
    %v4782 = vsub.f32 %v4638, %v4726
    %v4783 = vsub.f32 %v4639, %v4727
    %v4784 = vsub.f32 %v4640, %v4728
    %v4785 = vsub.f32 %v4641, %v4729
    %v4786 = vsub.f32 %v4642, %v4730
    %v4787 = vsub.f32 %v4643, %v4731
    %v4788 = vsub.f32 %v4644, %v4732
    %v4789 = vsub.f32 %v4645, %v4733
    %v4790 = vmul.f32 %v4782, 1.442695
    %v4791 = vpow.pop %v4790
    %v4792 = vmul.f32 %v4783, 1.442695
    %v4793 = vpow.pop %v4792
    %v4794 = vmul.f32 %v4784, 1.442695
    %v4795 = vpow.pop %v4794
    %v4796 = vmul.f32 %v4785, 1.442695
    %v4797 = vpow.pop %v4796
    %v4798 = vmul.f32 %v4786, 1.442695
    %v4799 = vpow.pop %v4798
    %v4800 = vmul.f32 %v4787, 1.442695
    %v4801 = vpow.pop %v4800
    %v4802 = vmul.f32 %v4788, 1.442695
    %v4803 = vpow.pop %v4802
    %v4804 = vmul.f32 %v4789, 1.442695
    %v4805 = vpow.pop %v4804
    %v4806 = vsub.f32 %v4702, %v4726
    %v4807 = vsub.f32 %v4703, %v4727
    %v4808 = vsub.f32 %v4704, %v4728
    %v4809 = vsub.f32 %v4705, %v4729
    %v4810 = vsub.f32 %v4706, %v4730
    %v4811 = vsub.f32 %v4707, %v4731
    %v4812 = vsub.f32 %v4708, %v4732
    %v4813 = vsub.f32 %v4709, %v4733
    %v4814 = vmul.f32 %v4806, 1.442695
    %v4815 = vpow.pop %v4814
    %v4816 = vmul.f32 %v4807, 1.442695
    %v4817 = vpow.pop %v4816
    %v4818 = vmul.f32 %v4808, 1.442695
    %v4819 = vpow.pop %v4818
    %v4820 = vmul.f32 %v4809, 1.442695
    %v4821 = vpow.pop %v4820
    %v4822 = vmul.f32 %v4810, 1.442695
    %v4823 = vpow.pop %v4822
    %v4824 = vmul.f32 %v4811, 1.442695
    %v4825 = vpow.pop %v4824
    %v4826 = vmul.f32 %v4812, 1.442695
    %v4827 = vpow.pop %v4826
    %v4828 = vmul.f32 %v4813, 1.442695
    %v4829 = vpow.pop %v4828
    %v4830 = vadd.f32 %v4743, %v4767
    %v4831 = vadd.f32 %v4745, %v4769
    %v4832 = vadd.f32 %v4747, %v4771
    %v4833 = vadd.f32 %v4749, %v4773
    %v4834 = vadd.f32 %v4751, %v4775
    %v4835 = vadd.f32 %v4753, %v4777
    %v4836 = vadd.f32 %v4755, %v4779
    %v4837 = vadd.f32 %v4757, %v4781
    %v4838 = vadd.f32 %v4830, %v4791
    %v4839 = vadd.f32 %v4831, %v4793
    %v4840 = vadd.f32 %v4832, %v4795
    %v4841 = vadd.f32 %v4833, %v4797
    %v4842 = vadd.f32 %v4834, %v4799
    %v4843 = vadd.f32 %v4835, %v4801
    %v4844 = vadd.f32 %v4836, %v4803
    %v4845 = vadd.f32 %v4837, %v4805
    %v4846 = vadd.f32 %v4838, %v4815
    %v4847 = vadd.f32 %v4839, %v4817
    %v4848 = vadd.f32 %v4840, %v4819
    %v4849 = vadd.f32 %v4841, %v4821
    %v4850 = vadd.f32 %v4842, %v4823
    %v4851 = vadd.f32 %v4843, %v4825
    %v4852 = vadd.f32 %v4844, %v4827
    %v4853 = vadd.f32 %v4845, %v4829
    %v4854 = vrcp.pop %v4846
    %v4855 = vmul.f32 1.0, %v4854
    %v4856 = vrcp.pop %v4847
    %v4857 = vmul.f32 1.0, %v4856
    %v4858 = vrcp.pop %v4848
    %v4859 = vmul.f32 1.0, %v4858
    %v4860 = vrcp.pop %v4849
    %v4861 = vmul.f32 1.0, %v4860
    %v4862 = vrcp.pop %v4850
    %v4863 = vmul.f32 1.0, %v4862
    %v4864 = vrcp.pop %v4851
    %v4865 = vmul.f32 1.0, %v4864
    %v4866 = vrcp.pop %v4852
    %v4867 = vmul.f32 1.0, %v4866
    %v4868 = vrcp.pop %v4853
    %v4869 = vmul.f32 1.0, %v4868
    %v4870 = vmul.f32 %v4743, %v4855
    %v4871 = vmul.f32 %v4745, %v4857
    %v4872 = vmul.f32 %v4747, %v4859
    %v4873 = vmul.f32 %v4749, %v4861
    %v4874 = vmul.f32 %v4751, %v4863
    %v4875 = vmul.f32 %v4753, %v4865
    %v4876 = vmul.f32 %v4755, %v4867
    %v4877 = vmul.f32 %v4757, %v4869
    %4879 = vset.pattern.permute.xlu0 0
    %4880 = vperm.xlu0 %4879, %v4870
    %v4881 = vpop.permute.xlu0 %4880
    %4884 = vset.pattern.permute.xlu0 0
    %4885 = vperm.xlu0 %4884, %v4871
    %v4886 = vpop.permute.xlu0 %4885
    %4889 = vset.pattern.permute.xlu0 0
    %4890 = vperm.xlu0 %4889, %v4872
    %v4891 = vpop.permute.xlu0 %4890
    %4894 = vset.pattern.permute.xlu0 0
    %4895 = vperm.xlu0 %4894, %v4873
    %v4896 = vpop.permute.xlu0 %4895
    %4899 = vset.pattern.permute.xlu0 0
    %4900 = vperm.xlu0 %4899, %v4874
    %v4901 = vpop.permute.xlu0 %4900
    %4904 = vset.pattern.permute.xlu0 0
    %4905 = vperm.xlu0 %4904, %v4875
    %v4906 = vpop.permute.xlu0 %4905
    %4909 = vset.pattern.permute.xlu0 0
    %4910 = vperm.xlu0 %4909, %v4876
    %v4911 = vpop.permute.xlu0 %4910
    %4914 = vset.pattern.permute.xlu0 0
    %4915 = vperm.xlu0 %4914, %v4877
    %v4916 = vpop.permute.xlu0 %4915
    %v4918 = vmul.f32 %v4881, %v2952
    %v4919 = vmul.f32 %v4886, %v2955
    %v4920 = vmul.f32 %v4891, %v2960
    %v4921 = vmul.f32 %v4896, %v2963
    %v4922 = vmul.f32 %v4901, %v2968
    %v4923 = vmul.f32 %v4906, %v2971
    %v4924 = vmul.f32 %v4911, %v2976
    %v4925 = vmul.f32 %v4916, %v2979
    %v4926 = vmul.f32 %v4767, %v4855
    %v4927 = vmul.f32 %v4769, %v4857
    %v4928 = vmul.f32 %v4771, %v4859
    %v4929 = vmul.f32 %v4773, %v4861
    %v4930 = vmul.f32 %v4775, %v4863
    %v4931 = vmul.f32 %v4777, %v4865
    %v4932 = vmul.f32 %v4779, %v4867
    %v4933 = vmul.f32 %v4781, %v4869
    %4935 = vset.pattern.permute.xlu0 0
    %4936 = vperm.xlu0 %4935, %v4926
    %v4937 = vpop.permute.xlu0 %4936
    %4940 = vset.pattern.permute.xlu0 0
    %4941 = vperm.xlu0 %4940, %v4927
    %v4942 = vpop.permute.xlu0 %4941
    %4945 = vset.pattern.permute.xlu0 0
    %4946 = vperm.xlu0 %4945, %v4928
    %v4947 = vpop.permute.xlu0 %4946
    %4950 = vset.pattern.permute.xlu0 0
    %4951 = vperm.xlu0 %4950, %v4929
    %v4952 = vpop.permute.xlu0 %4951
    %4955 = vset.pattern.permute.xlu0 0
    %4956 = vperm.xlu0 %4955, %v4930
    %v4957 = vpop.permute.xlu0 %4956
    %4960 = vset.pattern.permute.xlu0 0
    %4961 = vperm.xlu0 %4960, %v4931
    %v4962 = vpop.permute.xlu0 %4961
    %4965 = vset.pattern.permute.xlu0 0
    %4966 = vperm.xlu0 %4965, %v4932
    %v4967 = vpop.permute.xlu0 %4966
    %4970 = vset.pattern.permute.xlu0 0
    %4971 = vperm.xlu0 %4970, %v4933
    %v4972 = vpop.permute.xlu0 %4971
    %v4974 = vmul.f32 %v4937, %v2984
    %v4975 = vmul.f32 %v4942, %v2987
    %v4976 = vmul.f32 %v4947, %v2992
    %v4977 = vmul.f32 %v4952, %v2995
    %v4978 = vmul.f32 %v4957, %v3000
    %v4979 = vmul.f32 %v4962, %v3003
    %v4980 = vmul.f32 %v4967, %v3008
    %v4981 = vmul.f32 %v4972, %v3011
    %v4982 = vadd.f32 %v4918, %v4974
    %v4983 = vadd.f32 %v4919, %v4975
    %v4984 = vadd.f32 %v4920, %v4976
    %v4985 = vadd.f32 %v4921, %v4977
    %v4986 = vadd.f32 %v4922, %v4978
    %v4987 = vadd.f32 %v4923, %v4979
    %v4988 = vadd.f32 %v4924, %v4980
    %v4989 = vadd.f32 %v4925, %v4981
    %v4990 = vmul.f32 %v4791, %v4855
    %v4991 = vmul.f32 %v4793, %v4857
    %v4992 = vmul.f32 %v4795, %v4859
    %v4993 = vmul.f32 %v4797, %v4861
    %v4994 = vmul.f32 %v4799, %v4863
    %v4995 = vmul.f32 %v4801, %v4865
    %v4996 = vmul.f32 %v4803, %v4867
    %v4997 = vmul.f32 %v4805, %v4869
    %4999 = vset.pattern.permute.xlu0 0
    %5000 = vperm.xlu0 %4999, %v4990
    %v5001 = vpop.permute.xlu0 %5000
    %5004 = vset.pattern.permute.xlu0 0
    %5005 = vperm.xlu0 %5004, %v4991
    %v5006 = vpop.permute.xlu0 %5005
    %5009 = vset.pattern.permute.xlu0 0
    %5010 = vperm.xlu0 %5009, %v4992
    %v5011 = vpop.permute.xlu0 %5010
    %5014 = vset.pattern.permute.xlu0 0
    %5015 = vperm.xlu0 %5014, %v4993
    %v5016 = vpop.permute.xlu0 %5015
    %5019 = vset.pattern.permute.xlu0 0
    %5020 = vperm.xlu0 %5019, %v4994
    %v5021 = vpop.permute.xlu0 %5020
    %5024 = vset.pattern.permute.xlu0 0
    %5025 = vperm.xlu0 %5024, %v4995
    %v5026 = vpop.permute.xlu0 %5025
    %5029 = vset.pattern.permute.xlu0 0
    %5030 = vperm.xlu0 %5029, %v4996
    %v5031 = vpop.permute.xlu0 %5030
    %5034 = vset.pattern.permute.xlu0 0
    %5035 = vperm.xlu0 %5034, %v4997
    %v5036 = vpop.permute.xlu0 %5035
    %v5038 = vmul.f32 %v5001, %v3016
    %v5039 = vmul.f32 %v5006, %v3019
    %v5040 = vmul.f32 %v5011, %v3024
    %v5041 = vmul.f32 %v5016, %v3027
    %v5042 = vmul.f32 %v5021, %v3032
    %v5043 = vmul.f32 %v5026, %v3035
    %v5044 = vmul.f32 %v5031, %v3040
    %v5045 = vmul.f32 %v5036, %v3043
    %v5046 = vadd.f32 %v4982, %v5038
    %v5047 = vadd.f32 %v4983, %v5039
    %v5048 = vadd.f32 %v4984, %v5040
    %v5049 = vadd.f32 %v4985, %v5041
    %v5050 = vadd.f32 %v4986, %v5042
    %v5051 = vadd.f32 %v4987, %v5043
    %v5052 = vadd.f32 %v4988, %v5044
    %v5053 = vadd.f32 %v4989, %v5045
    %v5054 = vmul.f32 %v4815, %v4855
    %v5055 = vmul.f32 %v4817, %v4857
    %v5056 = vmul.f32 %v4819, %v4859
    %v5057 = vmul.f32 %v4821, %v4861
    %v5058 = vmul.f32 %v4823, %v4863
    %v5059 = vmul.f32 %v4825, %v4865
    %v5060 = vmul.f32 %v4827, %v4867
    %v5061 = vmul.f32 %v4829, %v4869
    %5063 = vset.pattern.permute.xlu0 0
    %5064 = vperm.xlu0 %5063, %v5054
    %v5065 = vpop.permute.xlu0 %5064
    %5068 = vset.pattern.permute.xlu0 0
    %5069 = vperm.xlu0 %5068, %v5055
    %v5070 = vpop.permute.xlu0 %5069
    %5073 = vset.pattern.permute.xlu0 0
    %5074 = vperm.xlu0 %5073, %v5056
    %v5075 = vpop.permute.xlu0 %5074
    %5078 = vset.pattern.permute.xlu0 0
    %5079 = vperm.xlu0 %5078, %v5057
    %v5080 = vpop.permute.xlu0 %5079
    %5083 = vset.pattern.permute.xlu0 0
    %5084 = vperm.xlu0 %5083, %v5058
    %v5085 = vpop.permute.xlu0 %5084
    %5088 = vset.pattern.permute.xlu0 0
    %5089 = vperm.xlu0 %5088, %v5059
    %v5090 = vpop.permute.xlu0 %5089
    %5093 = vset.pattern.permute.xlu0 0
    %5094 = vperm.xlu0 %5093, %v5060
    %v5095 = vpop.permute.xlu0 %5094
    %5098 = vset.pattern.permute.xlu0 0
    %5099 = vperm.xlu0 %5098, %v5061
    %v5100 = vpop.permute.xlu0 %5099
    %v5102 = vmul.f32 %v5065, %v3048
    %v5103 = vmul.f32 %v5070, %v3051
    %v5104 = vmul.f32 %v5075, %v3056
    %v5105 = vmul.f32 %v5080, %v3059
    %v5106 = vmul.f32 %v5085, %v3064
    %v5107 = vmul.f32 %v5090, %v3067
    %v5108 = vmul.f32 %v5095, %v3072
    %v5109 = vmul.f32 %v5100, %v3075
    %v5110 = vadd.f32 %v5046, %v5102
    %v5111 = vadd.f32 %v5047, %v5103
    %v5112 = vadd.f32 %v5048, %v5104
    %v5113 = vadd.f32 %v5049, %v5105
    %v5114 = vadd.f32 %v5050, %v5106
    %v5115 = vadd.f32 %v5051, %v5107
    %v5116 = vadd.f32 %v5052, %v5108
    %v5117 = vadd.f32 %v5053, %v5109
    %s5118 = sld [smem:[#allocation3 + $0x3]]
    %s5119 = smul.f32 %s5118, 0.25
    %v5120 = vstv %s5119
    %v5121 = vmul.f32 %v5120, %v5110
    %v5122 = vmul.f32 %v5120, %v5111
    %v5123 = vmul.f32 %v5120, %v5112
    %v5124 = vmul.f32 %v5120, %v5113
    %v5125 = vmul.f32 %v5120, %v5114
    %v5126 = vmul.f32 %v5120, %v5115
    %v5127 = vmul.f32 %v5120, %v5116
    %v5128 = vmul.f32 %v5120, %v5117
    %v5129 = vadd.f32 %v4446, %v5121
    %v5130 = vadd.f32 %v4447, %v5122
    %v5131 = vadd.f32 %v4448, %v5123
    %v5132 = vadd.f32 %v4449, %v5124
    %v5133 = vadd.f32 %v4450, %v5125
    %v5134 = vadd.f32 %v4451, %v5126
    %v5135 = vadd.f32 %v4452, %v5127
    %v5136 = vadd.f32 %v4453, %v5128
    %v5137 = vld [vmem:[%s7] sm:$0xff]
    %v5138 = vld [vmem:[%s7 + $0x8] sm:$0xff]
    %v5139 = vld [vmem:[%s7 + $0x10] sm:$0xff]
    %v5140 = vld [vmem:[%s7 + $0x18] sm:$0xff]
    %v5141 = vld [vmem:[%s8] sm:$0x1]
    %v5143 = vlaneseq
    %v5144 = vshrl.u32 %v5143, 7
    %v5145 = vsub.s32 0, %v5144
    %v5146 = vrot.slane %v5141, %v5145
    %v5149 = vsel %vm871, %v5129, 0
    %v5152 = vsel %vm871, %v5130, 0
    %v5155 = vsel %vm871, %v5131, 0
    %v5158 = vsel %vm871, %v5132, 0
    %v5161 = vsel %vm871, %v5133, 0
    %v5164 = vsel %vm871, %v5134, 0
    %v5167 = vsel %vm871, %v5135, 0
    %v5170 = vsel %vm871, %v5136, 0
    %5172 = vmatprep.subr.mxu0 0.0
    %5173 = vmatpush1.msra.mxu0 0.0
    %5174 = vmatprep.subr.mxu0 0.0
    %5175 = vmatpush1.msra.mxu0 0.0
    %5176 = vmatprep.subr.mxu0 0.0
    %5177 = vmatpush1.msra.mxu0 0.0
    %5178 = vmatprep.subr.mxu0 0.0
    %5179 = vmatpush1.msra.mxu0 0.0
    %5180 = vmatprep.subr.mxu0 0.0
    %5181 = vmatpush1.msra.mxu0 0.0
    %5182 = vmatprep.subr.mxu0 0.0
    %5183 = vmatpush1.msra.mxu0 0.0
    %5184 = vmatprep.subr.mxu0 0.0
    %5185 = vmatpush1.msra.mxu0 0.0
    %5186 = vmatprep.subr.mxu0 0.0
    %5187 = vmatpush1.msra.mxu0 0.0
    %5188 = vmatprep.subr.mxu0 0.0
    %5189 = vmatpush1.msra.mxu0 0.0
    %5190 = vmatprep.subr.mxu0 0.0
    %5191 = vmatpush1.msra.mxu0 0.0
    %5192 = vmatprep.subr.mxu0 0.0
    %5193 = vmatpush1.msra.mxu0 0.0
    %5194 = vmatprep.subr.mxu0 0.0
    %5195 = vmatpush1.msra.mxu0 0.0
    %5196 = vmatprep.subr.mxu0 0.0
    %v5197 = vand.u32 %v5140, 4294901760
    %5198 = vmatpush1.msra.mxu0 %v5197
    %5199 = vmatprep.subr.mxu0 0.0
    %v5200 = vand.u32 %v5139, 4294901760
    %5201 = vmatpush1.msra.mxu0 %v5200
    %5202 = vmatprep.subr.mxu0 0.0
    %v5203 = vand.u32 %v5138, 4294901760
    %5204 = vmatpush1.msra.mxu0 %v5203
    %5205 = vmatprep.subr.mxu0 0.0
    %v5206 = vand.u32 %v5137, 4294901760
    %5207 = vmatpush1.msra.mxu0 %v5206
    %5208 = vmatprep.subr.mxu0 0.0
    %5209 = vmatpush2.msra.mxu0 0.0
    %5210 = vmatprep.subr.mxu0 0.0
    %5211 = vmatpush2.msra.mxu0 0.0
    %5212 = vmatprep.subr.mxu0 0.0
    %5213 = vmatpush2.msra.mxu0 0.0
    %5214 = vmatprep.subr.mxu0 0.0
    %5215 = vmatpush2.msra.mxu0 0.0
    %5216 = vmatprep.subr.mxu0 0.0
    %5217 = vmatpush2.msra.mxu0 0.0
    %5218 = vmatprep.subr.mxu0 0.0
    %5219 = vmatpush2.msra.mxu0 0.0
    %5220 = vmatprep.subr.mxu0 0.0
    %5221 = vmatpush2.msra.mxu0 0.0
    %5222 = vmatprep.subr.mxu0 0.0
    %5223 = vmatpush2.msra.mxu0 0.0
    %5224 = vmatprep.subr.mxu0 0.0
    %5225 = vmatpush2.msra.mxu0 0.0
    %5226 = vmatprep.subr.mxu0 0.0
    %5227 = vmatpush2.msra.mxu0 0.0
    %5228 = vmatprep.subr.mxu0 0.0
    %5229 = vmatpush2.msra.mxu0 0.0
    %5230 = vmatprep.subr.mxu0 0.0
    %5231 = vmatpush2.msra.mxu0 0.0
    %5232 = vmatprep.subr.mxu0 0.0
    %5233 = vmatpush2.msra.mxu0 0.0
    %5234 = vmatprep.subr.mxu0 0.0
    %5235 = vmatpush2.msra.mxu0 0.0
    %5236 = vmatprep.subr.mxu0 0.0
    %5237 = vmatpush2.msra.mxu0 0.0
    %5238 = vmatprep.subr.mxu0 0.0
    %5239 = vmatpush2.msra.mxu0 0.0
    %5240 = vmatprep.mubr.f32.mxu0 0.0
    %v5241 = vand.u32 %v5149, 4294901760
    %v5242 = vsub.f32 %v5149, %v5241
    %v5243 = vand.u32 %v5242, 4294901760
    %v5244 = vsub.f32 %v5242, %v5243
    %v5245 = vand.u32 %v5244, 4294901760
    %5246 = vmatmul.mubr.f32.gmra.mxu0 %v5245
    %v5247 = vpop.f32.mrf.mxu0
    %v5248 = vadd.f32 %v5146, %v5247
    %v5249 = vpop.f32.mrf.mxu0
    %5250 = vmatprep.mubr.f32.mxu0 0.0
    %v5251 = vand.u32 %v5152, 4294901760
    %v5252 = vsub.f32 %v5152, %v5251
    %v5253 = vand.u32 %v5252, 4294901760
    %v5254 = vsub.f32 %v5252, %v5253
    %v5255 = vand.u32 %v5254, 4294901760
    %5256 = vmatmul.mubr.f32.gmra.mxu0 %v5255
    %v5257 = vpop.f32.mrf.mxu0
    %v5258 = vadd.f32 %v5146, %v5257
    %v5259 = vpop.f32.mrf.mxu0
    %5260 = vmatprep.mubr.f32.mxu0 0.0
    %v5261 = vand.u32 %v5155, 4294901760
    %v5262 = vsub.f32 %v5155, %v5261
    %v5263 = vand.u32 %v5262, 4294901760
    %v5264 = vsub.f32 %v5262, %v5263
    %v5265 = vand.u32 %v5264, 4294901760
    %5266 = vmatmul.mubr.f32.gmra.mxu0 %v5265
    %v5267 = vpop.f32.mrf.mxu0
    %v5268 = vadd.f32 %v5146, %v5267
    %v5269 = vpop.f32.mrf.mxu0
    %5270 = vmatprep.mubr.f32.mxu0 0.0
    %v5271 = vand.u32 %v5158, 4294901760
    %v5272 = vsub.f32 %v5158, %v5271
    %v5273 = vand.u32 %v5272, 4294901760
    %v5274 = vsub.f32 %v5272, %v5273
    %v5275 = vand.u32 %v5274, 4294901760
    %5276 = vmatmul.mubr.f32.gmra.mxu0 %v5275
    %v5277 = vpop.f32.mrf.mxu0
    %v5278 = vadd.f32 %v5146, %v5277
    %v5279 = vpop.f32.mrf.mxu0
    %5280 = vmatprep.mubr.f32.mxu0 0.0
    %v5281 = vand.u32 %v5161, 4294901760
    %v5282 = vsub.f32 %v5161, %v5281
    %v5283 = vand.u32 %v5282, 4294901760
    %v5284 = vsub.f32 %v5282, %v5283
    %v5285 = vand.u32 %v5284, 4294901760
    %5286 = vmatmul.mubr.f32.gmra.mxu0 %v5285
    %v5287 = vpop.f32.mrf.mxu0
    %v5288 = vadd.f32 %v5146, %v5287
    %v5289 = vpop.f32.mrf.mxu0
    %5290 = vmatprep.mubr.f32.mxu0 0.0
    %v5291 = vand.u32 %v5164, 4294901760
    %v5292 = vsub.f32 %v5164, %v5291
    %v5293 = vand.u32 %v5292, 4294901760
    %v5294 = vsub.f32 %v5292, %v5293
    %v5295 = vand.u32 %v5294, 4294901760
    %5296 = vmatmul.mubr.f32.gmra.mxu0 %v5295
    %v5297 = vpop.f32.mrf.mxu0
    %v5298 = vadd.f32 %v5146, %v5297
    %v5299 = vpop.f32.mrf.mxu0
    %5300 = vmatprep.mubr.f32.mxu0 0.0
    %v5301 = vand.u32 %v5167, 4294901760
    %v5302 = vsub.f32 %v5167, %v5301
    %v5303 = vand.u32 %v5302, 4294901760
    %v5304 = vsub.f32 %v5302, %v5303
    %v5305 = vand.u32 %v5304, 4294901760
    %5306 = vmatmul.mubr.f32.gmra.mxu0 %v5305
    %v5307 = vpop.f32.mrf.mxu0
    %v5308 = vadd.f32 %v5146, %v5307
    %v5309 = vpop.f32.mrf.mxu0
    %5310 = vmatprep.mubr.f32.mxu0 0.0
    %v5311 = vand.u32 %v5170, 4294901760
    %v5312 = vsub.f32 %v5170, %v5311
    %v5313 = vand.u32 %v5312, 4294901760
    %v5314 = vsub.f32 %v5312, %v5313
    %v5315 = vand.u32 %v5314, 4294901760
    %5316 = vmatmul.mubr.f32.gmra.mxu0 %v5315
    %v5317 = vpop.f32.mrf.mxu0
    %v5318 = vadd.f32 %v5146, %v5317
    %v5319 = vpop.f32.mrf.mxu0
    %5320 = vdwg.mxu0
    %5321 = vmatprep.subr.mxu0 0.0
    %5322 = vmatpush1.msra.mxu0 0.0
    %5323 = vmatprep.subr.mxu0 0.0
    %5324 = vmatpush1.msra.mxu0 0.0
    %5325 = vmatprep.subr.mxu0 0.0
    %5326 = vmatpush1.msra.mxu0 0.0
    %5327 = vmatprep.subr.mxu0 0.0
    %5328 = vmatpush1.msra.mxu0 0.0
    %5329 = vmatprep.subr.mxu0 0.0
    %5330 = vmatpush1.msra.mxu0 0.0
    %5331 = vmatprep.subr.mxu0 0.0
    %5332 = vmatpush1.msra.mxu0 0.0
    %5333 = vmatprep.subr.mxu0 0.0
    %5334 = vmatpush1.msra.mxu0 0.0
    %5335 = vmatprep.subr.mxu0 0.0
    %5336 = vmatpush1.msra.mxu0 0.0
    %5337 = vmatprep.subr.mxu0 0.0
    %5338 = vmatpush1.msra.mxu0 0.0
    %5339 = vmatprep.subr.mxu0 0.0
    %5340 = vmatpush1.msra.mxu0 0.0
    %5341 = vmatprep.subr.mxu0 0.0
    %5342 = vmatpush1.msra.mxu0 0.0
    %5343 = vmatprep.subr.mxu0 0.0
    %5344 = vmatpush1.msra.mxu0 0.0
    %5345 = vmatprep.subr.mxu0 0.0
    %v5346 = vand.u32 %v5140, 4294901760
    %v5347 = vsub.f32 %v5140, %v5346
    %v5348 = vand.u32 %v5347, 4294901760
    %v5349 = vsub.f32 %v5347, %v5348
    %v5350 = vand.u32 %v5349, 4294901760
    %5351 = vmatpush1.msra.mxu0 %v5350
    %5352 = vmatprep.subr.mxu0 0.0
    %v5353 = vand.u32 %v5139, 4294901760
    %v5354 = vsub.f32 %v5139, %v5353
    %v5355 = vand.u32 %v5354, 4294901760
    %v5356 = vsub.f32 %v5354, %v5355
    %v5357 = vand.u32 %v5356, 4294901760
    %5358 = vmatpush1.msra.mxu0 %v5357
    %5359 = vmatprep.subr.mxu0 0.0
    %v5360 = vand.u32 %v5138, 4294901760
    %v5361 = vsub.f32 %v5138, %v5360
    %v5362 = vand.u32 %v5361, 4294901760
    %v5363 = vsub.f32 %v5361, %v5362
    %v5364 = vand.u32 %v5363, 4294901760
    %5365 = vmatpush1.msra.mxu0 %v5364
    %5366 = vmatprep.subr.mxu0 0.0
    %v5367 = vand.u32 %v5137, 4294901760
    %v5368 = vsub.f32 %v5137, %v5367
    %v5369 = vand.u32 %v5368, 4294901760
    %v5370 = vsub.f32 %v5368, %v5369
    %v5371 = vand.u32 %v5370, 4294901760
    %5372 = vmatpush1.msra.mxu0 %v5371
    %5373 = vmatprep.subr.mxu0 0.0
    %5374 = vmatpush2.msra.mxu0 0.0
    %5375 = vmatprep.subr.mxu0 0.0
    %5376 = vmatpush2.msra.mxu0 0.0
    %5377 = vmatprep.subr.mxu0 0.0
    %5378 = vmatpush2.msra.mxu0 0.0
    %5379 = vmatprep.subr.mxu0 0.0
    %5380 = vmatpush2.msra.mxu0 0.0
    %5381 = vmatprep.subr.mxu0 0.0
    %5382 = vmatpush2.msra.mxu0 0.0
    %5383 = vmatprep.subr.mxu0 0.0
    %5384 = vmatpush2.msra.mxu0 0.0
    %5385 = vmatprep.subr.mxu0 0.0
    %5386 = vmatpush2.msra.mxu0 0.0
    %5387 = vmatprep.subr.mxu0 0.0
    %5388 = vmatpush2.msra.mxu0 0.0
    %5389 = vmatprep.subr.mxu0 0.0
    %5390 = vmatpush2.msra.mxu0 0.0
    %5391 = vmatprep.subr.mxu0 0.0
    %5392 = vmatpush2.msra.mxu0 0.0
    %5393 = vmatprep.subr.mxu0 0.0
    %5394 = vmatpush2.msra.mxu0 0.0
    %5395 = vmatprep.subr.mxu0 0.0
    %5396 = vmatpush2.msra.mxu0 0.0
    %5397 = vmatprep.subr.mxu0 0.0
    %5398 = vmatpush2.msra.mxu0 0.0
    %5399 = vmatprep.subr.mxu0 0.0
    %5400 = vmatpush2.msra.mxu0 0.0
    %5401 = vmatprep.subr.mxu0 0.0
    %5402 = vmatpush2.msra.mxu0 0.0
    %5403 = vmatprep.subr.mxu0 0.0
    %5404 = vmatpush2.msra.mxu0 0.0
    %5405 = vmatprep.mubr.f32.mxu0 0.0
    %v5406 = vand.u32 %v5149, 4294901760
    %5407 = vmatmul.mubr.f32.gmra.mxu0 %v5406
    %v5408 = vpop.f32.mrf.mxu0
    %v5409 = vadd.f32 %v5248, %v5408
    %v5410 = vpop.f32.mrf.mxu0
    %5411 = vmatprep.mubr.f32.mxu0 0.0
    %v5412 = vand.u32 %v5152, 4294901760
    %5413 = vmatmul.mubr.f32.gmra.mxu0 %v5412
    %v5414 = vpop.f32.mrf.mxu0
    %v5415 = vadd.f32 %v5258, %v5414
    %v5416 = vpop.f32.mrf.mxu0
    %5417 = vmatprep.mubr.f32.mxu0 0.0
    %v5418 = vand.u32 %v5155, 4294901760
    %5419 = vmatmul.mubr.f32.gmra.mxu0 %v5418
    %v5420 = vpop.f32.mrf.mxu0
    %v5421 = vadd.f32 %v5268, %v5420
    %v5422 = vpop.f32.mrf.mxu0
    %5423 = vmatprep.mubr.f32.mxu0 0.0
    %v5424 = vand.u32 %v5158, 4294901760
    %5425 = vmatmul.mubr.f32.gmra.mxu0 %v5424
    %v5426 = vpop.f32.mrf.mxu0
    %v5427 = vadd.f32 %v5278, %v5426
    %v5428 = vpop.f32.mrf.mxu0
    %5429 = vmatprep.mubr.f32.mxu0 0.0
    %v5430 = vand.u32 %v5161, 4294901760
    %5431 = vmatmul.mubr.f32.gmra.mxu0 %v5430
    %v5432 = vpop.f32.mrf.mxu0
    %v5433 = vadd.f32 %v5288, %v5432
    %v5434 = vpop.f32.mrf.mxu0
    %5435 = vmatprep.mubr.f32.mxu0 0.0
    %v5436 = vand.u32 %v5164, 4294901760
    %5437 = vmatmul.mubr.f32.gmra.mxu0 %v5436
    %v5438 = vpop.f32.mrf.mxu0
    %v5439 = vadd.f32 %v5298, %v5438
    %v5440 = vpop.f32.mrf.mxu0
    %5441 = vmatprep.mubr.f32.mxu0 0.0
    %v5442 = vand.u32 %v5167, 4294901760
    %5443 = vmatmul.mubr.f32.gmra.mxu0 %v5442
    %v5444 = vpop.f32.mrf.mxu0
    %v5445 = vadd.f32 %v5308, %v5444
    %v5446 = vpop.f32.mrf.mxu0
    %5447 = vmatprep.mubr.f32.mxu0 0.0
    %v5448 = vand.u32 %v5170, 4294901760
    %5449 = vmatmul.mubr.f32.gmra.mxu0 %v5448
    %v5450 = vpop.f32.mrf.mxu0
    %v5451 = vadd.f32 %v5318, %v5450
    %v5452 = vpop.f32.mrf.mxu0
    %5453 = vdwg.mxu0
    %5454 = vmatprep.subr.mxu0 0.0
    %5455 = vmatpush1.msra.mxu0 0.0
    %5456 = vmatprep.subr.mxu0 0.0
    %5457 = vmatpush1.msra.mxu0 0.0
    %5458 = vmatprep.subr.mxu0 0.0
    %5459 = vmatpush1.msra.mxu0 0.0
    %5460 = vmatprep.subr.mxu0 0.0
    %5461 = vmatpush1.msra.mxu0 0.0
    %5462 = vmatprep.subr.mxu0 0.0
    %5463 = vmatpush1.msra.mxu0 0.0
    %5464 = vmatprep.subr.mxu0 0.0
    %5465 = vmatpush1.msra.mxu0 0.0
    %5466 = vmatprep.subr.mxu0 0.0
    %5467 = vmatpush1.msra.mxu0 0.0
    %5468 = vmatprep.subr.mxu0 0.0
    %5469 = vmatpush1.msra.mxu0 0.0
    %5470 = vmatprep.subr.mxu0 0.0
    %5471 = vmatpush1.msra.mxu0 0.0
    %5472 = vmatprep.subr.mxu0 0.0
    %5473 = vmatpush1.msra.mxu0 0.0
    %5474 = vmatprep.subr.mxu0 0.0
    %5475 = vmatpush1.msra.mxu0 0.0
    %5476 = vmatprep.subr.mxu0 0.0
    %5477 = vmatpush1.msra.mxu0 0.0
    %5478 = vmatprep.subr.mxu0 0.0
    %v5479 = vand.u32 %v5140, 4294901760
    %v5480 = vsub.f32 %v5140, %v5479
    %5481 = vmatpush1.msra.mxu0 %v5480
    %5482 = vmatprep.subr.mxu0 0.0
    %v5483 = vand.u32 %v5139, 4294901760
    %v5484 = vsub.f32 %v5139, %v5483
    %5485 = vmatpush1.msra.mxu0 %v5484
    %5486 = vmatprep.subr.mxu0 0.0
    %v5487 = vand.u32 %v5138, 4294901760
    %v5488 = vsub.f32 %v5138, %v5487
    %5489 = vmatpush1.msra.mxu0 %v5488
    %5490 = vmatprep.subr.mxu0 0.0
    %v5491 = vand.u32 %v5137, 4294901760
    %v5492 = vsub.f32 %v5137, %v5491
    %5493 = vmatpush1.msra.mxu0 %v5492
    %5494 = vmatprep.subr.mxu0 0.0
    %5495 = vmatpush2.msra.mxu0 0.0
    %5496 = vmatprep.subr.mxu0 0.0
    %5497 = vmatpush2.msra.mxu0 0.0
    %5498 = vmatprep.subr.mxu0 0.0
    %5499 = vmatpush2.msra.mxu0 0.0
    %5500 = vmatprep.subr.mxu0 0.0
    %5501 = vmatpush2.msra.mxu0 0.0
    %5502 = vmatprep.subr.mxu0 0.0
    %5503 = vmatpush2.msra.mxu0 0.0
    %5504 = vmatprep.subr.mxu0 0.0
    %5505 = vmatpush2.msra.mxu0 0.0
    %5506 = vmatprep.subr.mxu0 0.0
    %5507 = vmatpush2.msra.mxu0 0.0
    %5508 = vmatprep.subr.mxu0 0.0
    %5509 = vmatpush2.msra.mxu0 0.0
    %5510 = vmatprep.subr.mxu0 0.0
    %5511 = vmatpush2.msra.mxu0 0.0
    %5512 = vmatprep.subr.mxu0 0.0
    %5513 = vmatpush2.msra.mxu0 0.0
    %5514 = vmatprep.subr.mxu0 0.0
    %5515 = vmatpush2.msra.mxu0 0.0
    %5516 = vmatprep.subr.mxu0 0.0
    %5517 = vmatpush2.msra.mxu0 0.0
    %5518 = vmatprep.subr.mxu0 0.0
    %5519 = vmatpush2.msra.mxu0 0.0
    %5520 = vmatprep.subr.mxu0 0.0
    %5521 = vmatpush2.msra.mxu0 0.0
    %5522 = vmatprep.subr.mxu0 0.0
    %5523 = vmatpush2.msra.mxu0 0.0
    %5524 = vmatprep.subr.mxu0 0.0
    %5525 = vmatpush2.msra.mxu0 0.0
    %5526 = vmatprep.mubr.f32.mxu0 0.0
    %v5527 = vand.u32 %v5149, 4294901760
    %v5528 = vsub.f32 %v5149, %v5527
    %5529 = vmatmul.mubr.f32.gmra.mxu0 %v5528
    %v5530 = vpop.f32.mrf.mxu0
    %v5531 = vadd.f32 %v5409, %v5530
    %v5532 = vpop.f32.mrf.mxu0
    %5533 = vmatprep.mubr.f32.mxu0 0.0
    %v5534 = vand.u32 %v5152, 4294901760
    %v5535 = vsub.f32 %v5152, %v5534
    %5536 = vmatmul.mubr.f32.gmra.mxu0 %v5535
    %v5537 = vpop.f32.mrf.mxu0
    %v5538 = vadd.f32 %v5415, %v5537
    %v5539 = vpop.f32.mrf.mxu0
    %5540 = vmatprep.mubr.f32.mxu0 0.0
    %v5541 = vand.u32 %v5155, 4294901760
    %v5542 = vsub.f32 %v5155, %v5541
    %5543 = vmatmul.mubr.f32.gmra.mxu0 %v5542
    %v5544 = vpop.f32.mrf.mxu0
    %v5545 = vadd.f32 %v5421, %v5544
    %v5546 = vpop.f32.mrf.mxu0
    %5547 = vmatprep.mubr.f32.mxu0 0.0
    %v5548 = vand.u32 %v5158, 4294901760
    %v5549 = vsub.f32 %v5158, %v5548
    %5550 = vmatmul.mubr.f32.gmra.mxu0 %v5549
    %v5551 = vpop.f32.mrf.mxu0
    %v5552 = vadd.f32 %v5427, %v5551
    %v5553 = vpop.f32.mrf.mxu0
    %5554 = vmatprep.mubr.f32.mxu0 0.0
    %v5555 = vand.u32 %v5161, 4294901760
    %v5556 = vsub.f32 %v5161, %v5555
    %5557 = vmatmul.mubr.f32.gmra.mxu0 %v5556
    %v5558 = vpop.f32.mrf.mxu0
    %v5559 = vadd.f32 %v5433, %v5558
    %v5560 = vpop.f32.mrf.mxu0
    %5561 = vmatprep.mubr.f32.mxu0 0.0
    %v5562 = vand.u32 %v5164, 4294901760
    %v5563 = vsub.f32 %v5164, %v5562
    %5564 = vmatmul.mubr.f32.gmra.mxu0 %v5563
    %v5565 = vpop.f32.mrf.mxu0
    %v5566 = vadd.f32 %v5439, %v5565
    %v5567 = vpop.f32.mrf.mxu0
    %5568 = vmatprep.mubr.f32.mxu0 0.0
    %v5569 = vand.u32 %v5167, 4294901760
    %v5570 = vsub.f32 %v5167, %v5569
    %5571 = vmatmul.mubr.f32.gmra.mxu0 %v5570
    %v5572 = vpop.f32.mrf.mxu0
    %v5573 = vadd.f32 %v5445, %v5572
    %v5574 = vpop.f32.mrf.mxu0
    %5575 = vmatprep.mubr.f32.mxu0 0.0
    %v5576 = vand.u32 %v5170, 4294901760
    %v5577 = vsub.f32 %v5170, %v5576
    %5578 = vmatmul.mubr.f32.gmra.mxu0 %v5577
    %v5579 = vpop.f32.mrf.mxu0
    %v5580 = vadd.f32 %v5451, %v5579
    %v5581 = vpop.f32.mrf.mxu0
    %5582 = vdwg.mxu0
    %5583 = vmatprep.subr.mxu0 0.0
    %5584 = vmatpush1.msra.mxu0 0.0
    %5585 = vmatprep.subr.mxu0 0.0
    %5586 = vmatpush1.msra.mxu0 0.0
    %5587 = vmatprep.subr.mxu0 0.0
    %5588 = vmatpush1.msra.mxu0 0.0
    %5589 = vmatprep.subr.mxu0 0.0
    %5590 = vmatpush1.msra.mxu0 0.0
    %5591 = vmatprep.subr.mxu0 0.0
    %5592 = vmatpush1.msra.mxu0 0.0
    %5593 = vmatprep.subr.mxu0 0.0
    %5594 = vmatpush1.msra.mxu0 0.0
    %5595 = vmatprep.subr.mxu0 0.0
    %5596 = vmatpush1.msra.mxu0 0.0
    %5597 = vmatprep.subr.mxu0 0.0
    %5598 = vmatpush1.msra.mxu0 0.0
    %5599 = vmatprep.subr.mxu0 0.0
    %5600 = vmatpush1.msra.mxu0 0.0
    %5601 = vmatprep.subr.mxu0 0.0
    %5602 = vmatpush1.msra.mxu0 0.0
    %5603 = vmatprep.subr.mxu0 0.0
    %5604 = vmatpush1.msra.mxu0 0.0
    %5605 = vmatprep.subr.mxu0 0.0
    %5606 = vmatpush1.msra.mxu0 0.0
    %5607 = vmatprep.subr.mxu0 0.0
    %v5608 = vand.u32 %v5140, 4294901760
    %5609 = vmatpush1.msra.mxu0 %v5608
    %5610 = vmatprep.subr.mxu0 0.0
    %v5611 = vand.u32 %v5139, 4294901760
    %5612 = vmatpush1.msra.mxu0 %v5611
    %5613 = vmatprep.subr.mxu0 0.0
    %v5614 = vand.u32 %v5138, 4294901760
    %5615 = vmatpush1.msra.mxu0 %v5614
    %5616 = vmatprep.subr.mxu0 0.0
    %v5617 = vand.u32 %v5137, 4294901760
    %5618 = vmatpush1.msra.mxu0 %v5617
    %5619 = vmatprep.subr.mxu0 0.0
    %5620 = vmatpush2.msra.mxu0 0.0
    %5621 = vmatprep.subr.mxu0 0.0
    %5622 = vmatpush2.msra.mxu0 0.0
    %5623 = vmatprep.subr.mxu0 0.0
    %5624 = vmatpush2.msra.mxu0 0.0
    %5625 = vmatprep.subr.mxu0 0.0
    %5626 = vmatpush2.msra.mxu0 0.0
    %5627 = vmatprep.subr.mxu0 0.0
    %5628 = vmatpush2.msra.mxu0 0.0
    %5629 = vmatprep.subr.mxu0 0.0
    %5630 = vmatpush2.msra.mxu0 0.0
    %5631 = vmatprep.subr.mxu0 0.0
    %5632 = vmatpush2.msra.mxu0 0.0
    %5633 = vmatprep.subr.mxu0 0.0
    %5634 = vmatpush2.msra.mxu0 0.0
    %5635 = vmatprep.subr.mxu0 0.0
    %5636 = vmatpush2.msra.mxu0 0.0
    %5637 = vmatprep.subr.mxu0 0.0
    %5638 = vmatpush2.msra.mxu0 0.0
    %5639 = vmatprep.subr.mxu0 0.0
    %5640 = vmatpush2.msra.mxu0 0.0
    %5641 = vmatprep.subr.mxu0 0.0
    %5642 = vmatpush2.msra.mxu0 0.0
    %5643 = vmatprep.subr.mxu0 0.0
    %5644 = vmatpush2.msra.mxu0 0.0
    %5645 = vmatprep.subr.mxu0 0.0
    %5646 = vmatpush2.msra.mxu0 0.0
    %5647 = vmatprep.subr.mxu0 0.0
    %5648 = vmatpush2.msra.mxu0 0.0
    %5649 = vmatprep.subr.mxu0 0.0
    %5650 = vmatpush2.msra.mxu0 0.0
    %5651 = vmatprep.mubr.f32.mxu0 0.0
    %v5652 = vand.u32 %v5149, 4294901760
    %v5653 = vsub.f32 %v5149, %v5652
    %v5654 = vand.u32 %v5653, 4294901760
    %5655 = vmatmul.mubr.f32.gmra.mxu0 %v5654
    %v5656 = vpop.f32.mrf.mxu0
    %v5657 = vadd.f32 %v5531, %v5656
    %v5658 = vpop.f32.mrf.mxu0
    %5659 = vmatprep.mubr.f32.mxu0 0.0
    %v5660 = vand.u32 %v5152, 4294901760
    %v5661 = vsub.f32 %v5152, %v5660
    %v5662 = vand.u32 %v5661, 4294901760
    %5663 = vmatmul.mubr.f32.gmra.mxu0 %v5662
    %v5664 = vpop.f32.mrf.mxu0
    %v5665 = vadd.f32 %v5538, %v5664
    %v5666 = vpop.f32.mrf.mxu0
    %5667 = vmatprep.mubr.f32.mxu0 0.0
    %v5668 = vand.u32 %v5155, 4294901760
    %v5669 = vsub.f32 %v5155, %v5668
    %v5670 = vand.u32 %v5669, 4294901760
    %5671 = vmatmul.mubr.f32.gmra.mxu0 %v5670
    %v5672 = vpop.f32.mrf.mxu0
    %v5673 = vadd.f32 %v5545, %v5672
    %v5674 = vpop.f32.mrf.mxu0
    %5675 = vmatprep.mubr.f32.mxu0 0.0
    %v5676 = vand.u32 %v5158, 4294901760
    %v5677 = vsub.f32 %v5158, %v5676
    %v5678 = vand.u32 %v5677, 4294901760
    %5679 = vmatmul.mubr.f32.gmra.mxu0 %v5678
    %v5680 = vpop.f32.mrf.mxu0
    %v5681 = vadd.f32 %v5552, %v5680
    %v5682 = vpop.f32.mrf.mxu0
    %5683 = vmatprep.mubr.f32.mxu0 0.0
    %v5684 = vand.u32 %v5161, 4294901760
    %v5685 = vsub.f32 %v5161, %v5684
    %v5686 = vand.u32 %v5685, 4294901760
    %5687 = vmatmul.mubr.f32.gmra.mxu0 %v5686
    %v5688 = vpop.f32.mrf.mxu0
    %v5689 = vadd.f32 %v5559, %v5688
    %v5690 = vpop.f32.mrf.mxu0
    %5691 = vmatprep.mubr.f32.mxu0 0.0
    %v5692 = vand.u32 %v5164, 4294901760
    %v5693 = vsub.f32 %v5164, %v5692
    %v5694 = vand.u32 %v5693, 4294901760
    %5695 = vmatmul.mubr.f32.gmra.mxu0 %v5694
    %v5696 = vpop.f32.mrf.mxu0
    %v5697 = vadd.f32 %v5566, %v5696
    %v5698 = vpop.f32.mrf.mxu0
    %5699 = vmatprep.mubr.f32.mxu0 0.0
    %v5700 = vand.u32 %v5167, 4294901760
    %v5701 = vsub.f32 %v5167, %v5700
    %v5702 = vand.u32 %v5701, 4294901760
    %5703 = vmatmul.mubr.f32.gmra.mxu0 %v5702
    %v5704 = vpop.f32.mrf.mxu0
    %v5705 = vadd.f32 %v5573, %v5704
    %v5706 = vpop.f32.mrf.mxu0
    %5707 = vmatprep.mubr.f32.mxu0 0.0
    %v5708 = vand.u32 %v5170, 4294901760
    %v5709 = vsub.f32 %v5170, %v5708
    %v5710 = vand.u32 %v5709, 4294901760
    %5711 = vmatmul.mubr.f32.gmra.mxu0 %v5710
    %v5712 = vpop.f32.mrf.mxu0
    %v5713 = vadd.f32 %v5580, %v5712
    %v5714 = vpop.f32.mrf.mxu0
    %5715 = vdwg.mxu0
    %5716 = vmatprep.subr.mxu0 0.0
    %5717 = vmatpush1.msra.mxu0 0.0
    %5718 = vmatprep.subr.mxu0 0.0
    %5719 = vmatpush1.msra.mxu0 0.0
    %5720 = vmatprep.subr.mxu0 0.0
    %5721 = vmatpush1.msra.mxu0 0.0
    %5722 = vmatprep.subr.mxu0 0.0
    %5723 = vmatpush1.msra.mxu0 0.0
    %5724 = vmatprep.subr.mxu0 0.0
    %5725 = vmatpush1.msra.mxu0 0.0
    %5726 = vmatprep.subr.mxu0 0.0
    %5727 = vmatpush1.msra.mxu0 0.0
    %5728 = vmatprep.subr.mxu0 0.0
    %5729 = vmatpush1.msra.mxu0 0.0
    %5730 = vmatprep.subr.mxu0 0.0
    %5731 = vmatpush1.msra.mxu0 0.0
    %5732 = vmatprep.subr.mxu0 0.0
    %5733 = vmatpush1.msra.mxu0 0.0
    %5734 = vmatprep.subr.mxu0 0.0
    %5735 = vmatpush1.msra.mxu0 0.0
    %5736 = vmatprep.subr.mxu0 0.0
    %5737 = vmatpush1.msra.mxu0 0.0
    %5738 = vmatprep.subr.mxu0 0.0
    %5739 = vmatpush1.msra.mxu0 0.0
    %5740 = vmatprep.subr.mxu0 0.0
    %v5741 = vand.u32 %v5140, 4294901760
    %v5742 = vsub.f32 %v5140, %v5741
    %v5743 = vand.u32 %v5742, 4294901760
    %5744 = vmatpush1.msra.mxu0 %v5743
    %5745 = vmatprep.subr.mxu0 0.0
    %v5746 = vand.u32 %v5139, 4294901760
    %v5747 = vsub.f32 %v5139, %v5746
    %v5748 = vand.u32 %v5747, 4294901760
    %5749 = vmatpush1.msra.mxu0 %v5748
    %5750 = vmatprep.subr.mxu0 0.0
    %v5751 = vand.u32 %v5138, 4294901760
    %v5752 = vsub.f32 %v5138, %v5751
    %v5753 = vand.u32 %v5752, 4294901760
    %5754 = vmatpush1.msra.mxu0 %v5753
    %5755 = vmatprep.subr.mxu0 0.0
    %v5756 = vand.u32 %v5137, 4294901760
    %v5757 = vsub.f32 %v5137, %v5756
    %v5758 = vand.u32 %v5757, 4294901760
    %5759 = vmatpush1.msra.mxu0 %v5758
    %5760 = vmatprep.subr.mxu0 0.0
    %5761 = vmatpush2.msra.mxu0 0.0
    %5762 = vmatprep.subr.mxu0 0.0
    %5763 = vmatpush2.msra.mxu0 0.0
    %5764 = vmatprep.subr.mxu0 0.0
    %5765 = vmatpush2.msra.mxu0 0.0
    %5766 = vmatprep.subr.mxu0 0.0
    %5767 = vmatpush2.msra.mxu0 0.0
    %5768 = vmatprep.subr.mxu0 0.0
    %5769 = vmatpush2.msra.mxu0 0.0
    %5770 = vmatprep.subr.mxu0 0.0
    %5771 = vmatpush2.msra.mxu0 0.0
    %5772 = vmatprep.subr.mxu0 0.0
    %5773 = vmatpush2.msra.mxu0 0.0
    %5774 = vmatprep.subr.mxu0 0.0
    %5775 = vmatpush2.msra.mxu0 0.0
    %5776 = vmatprep.subr.mxu0 0.0
    %5777 = vmatpush2.msra.mxu0 0.0
    %5778 = vmatprep.subr.mxu0 0.0
    %5779 = vmatpush2.msra.mxu0 0.0
    %5780 = vmatprep.subr.mxu0 0.0
    %5781 = vmatpush2.msra.mxu0 0.0
    %5782 = vmatprep.subr.mxu0 0.0
    %5783 = vmatpush2.msra.mxu0 0.0
    %5784 = vmatprep.subr.mxu0 0.0
    %5785 = vmatpush2.msra.mxu0 0.0
    %5786 = vmatprep.subr.mxu0 0.0
    %5787 = vmatpush2.msra.mxu0 0.0
    %5788 = vmatprep.subr.mxu0 0.0
    %5789 = vmatpush2.msra.mxu0 0.0
    %5790 = vmatprep.subr.mxu0 0.0
    %5791 = vmatpush2.msra.mxu0 0.0
    %5792 = vmatprep.mubr.f32.mxu0 0.0
    %v5793 = vand.u32 %v5149, 4294901760
    %5794 = vmatmul.mubr.f32.gmra.mxu0 %v5793
    %v5795 = vpop.f32.mrf.mxu0
    %v5796 = vadd.f32 %v5657, %v5795
    %v5797 = vpop.f32.mrf.mxu0
    %5798 = vmatprep.mubr.f32.mxu0 0.0
    %v5799 = vand.u32 %v5152, 4294901760
    %5800 = vmatmul.mubr.f32.gmra.mxu0 %v5799
    %v5801 = vpop.f32.mrf.mxu0
    %v5802 = vadd.f32 %v5665, %v5801
    %v5803 = vpop.f32.mrf.mxu0
    %5804 = vmatprep.mubr.f32.mxu0 0.0
    %v5805 = vand.u32 %v5155, 4294901760
    %5806 = vmatmul.mubr.f32.gmra.mxu0 %v5805
    %v5807 = vpop.f32.mrf.mxu0
    %v5808 = vadd.f32 %v5673, %v5807
    %v5809 = vpop.f32.mrf.mxu0
    %5810 = vmatprep.mubr.f32.mxu0 0.0
    %v5811 = vand.u32 %v5158, 4294901760
    %5812 = vmatmul.mubr.f32.gmra.mxu0 %v5811
    %v5813 = vpop.f32.mrf.mxu0
    %v5814 = vadd.f32 %v5681, %v5813
    %v5815 = vpop.f32.mrf.mxu0
    %5816 = vmatprep.mubr.f32.mxu0 0.0
    %v5817 = vand.u32 %v5161, 4294901760
    %5818 = vmatmul.mubr.f32.gmra.mxu0 %v5817
    %v5819 = vpop.f32.mrf.mxu0
    %v5820 = vadd.f32 %v5689, %v5819
    %v5821 = vpop.f32.mrf.mxu0
    %5822 = vmatprep.mubr.f32.mxu0 0.0
    %v5823 = vand.u32 %v5164, 4294901760
    %5824 = vmatmul.mubr.f32.gmra.mxu0 %v5823
    %v5825 = vpop.f32.mrf.mxu0
    %v5826 = vadd.f32 %v5697, %v5825
    %v5827 = vpop.f32.mrf.mxu0
    %5828 = vmatprep.mubr.f32.mxu0 0.0
    %v5829 = vand.u32 %v5167, 4294901760
    %5830 = vmatmul.mubr.f32.gmra.mxu0 %v5829
    %v5831 = vpop.f32.mrf.mxu0
    %v5832 = vadd.f32 %v5705, %v5831
    %v5833 = vpop.f32.mrf.mxu0
    %5834 = vmatprep.mubr.f32.mxu0 0.0
    %v5835 = vand.u32 %v5170, 4294901760
    %5836 = vmatmul.mubr.f32.gmra.mxu0 %v5835
    %v5837 = vpop.f32.mrf.mxu0
    %v5838 = vadd.f32 %v5713, %v5837
    %v5839 = vpop.f32.mrf.mxu0
    %5840 = vdwg.mxu0
    %5841 = vmatprep.subr.mxu0 0.0
    %5842 = vmatpush1.msra.mxu0 0.0
    %5843 = vmatprep.subr.mxu0 0.0
    %5844 = vmatpush1.msra.mxu0 0.0
    %5845 = vmatprep.subr.mxu0 0.0
    %5846 = vmatpush1.msra.mxu0 0.0
    %5847 = vmatprep.subr.mxu0 0.0
    %5848 = vmatpush1.msra.mxu0 0.0
    %5849 = vmatprep.subr.mxu0 0.0
    %5850 = vmatpush1.msra.mxu0 0.0
    %5851 = vmatprep.subr.mxu0 0.0
    %5852 = vmatpush1.msra.mxu0 0.0
    %5853 = vmatprep.subr.mxu0 0.0
    %5854 = vmatpush1.msra.mxu0 0.0
    %5855 = vmatprep.subr.mxu0 0.0
    %5856 = vmatpush1.msra.mxu0 0.0
    %5857 = vmatprep.subr.mxu0 0.0
    %5858 = vmatpush1.msra.mxu0 0.0
    %5859 = vmatprep.subr.mxu0 0.0
    %5860 = vmatpush1.msra.mxu0 0.0
    %5861 = vmatprep.subr.mxu0 0.0
    %5862 = vmatpush1.msra.mxu0 0.0
    %5863 = vmatprep.subr.mxu0 0.0
    %5864 = vmatpush1.msra.mxu0 0.0
    %5865 = vmatprep.subr.mxu0 0.0
    %v5866 = vand.u32 %v5140, 4294901760
    %5867 = vmatpush1.msra.mxu0 %v5866
    %5868 = vmatprep.subr.mxu0 0.0
    %v5869 = vand.u32 %v5139, 4294901760
    %5870 = vmatpush1.msra.mxu0 %v5869
    %5871 = vmatprep.subr.mxu0 0.0
    %v5872 = vand.u32 %v5138, 4294901760
    %5873 = vmatpush1.msra.mxu0 %v5872
    %5874 = vmatprep.subr.mxu0 0.0
    %v5875 = vand.u32 %v5137, 4294901760
    %5876 = vmatpush1.msra.mxu0 %v5875
    %5877 = vmatprep.subr.mxu0 0.0
    %5878 = vmatpush2.msra.mxu0 0.0
    %5879 = vmatprep.subr.mxu0 0.0
    %5880 = vmatpush2.msra.mxu0 0.0
    %5881 = vmatprep.subr.mxu0 0.0
    %5882 = vmatpush2.msra.mxu0 0.0
    %5883 = vmatprep.subr.mxu0 0.0
    %5884 = vmatpush2.msra.mxu0 0.0
    %5885 = vmatprep.subr.mxu0 0.0
    %5886 = vmatpush2.msra.mxu0 0.0
    %5887 = vmatprep.subr.mxu0 0.0
    %5888 = vmatpush2.msra.mxu0 0.0
    %5889 = vmatprep.subr.mxu0 0.0
    %5890 = vmatpush2.msra.mxu0 0.0
    %5891 = vmatprep.subr.mxu0 0.0
    %5892 = vmatpush2.msra.mxu0 0.0
    %5893 = vmatprep.subr.mxu0 0.0
    %5894 = vmatpush2.msra.mxu0 0.0
    %5895 = vmatprep.subr.mxu0 0.0
    %5896 = vmatpush2.msra.mxu0 0.0
    %5897 = vmatprep.subr.mxu0 0.0
    %5898 = vmatpush2.msra.mxu0 0.0
    %5899 = vmatprep.subr.mxu0 0.0
    %5900 = vmatpush2.msra.mxu0 0.0
    %5901 = vmatprep.subr.mxu0 0.0
    %5902 = vmatpush2.msra.mxu0 0.0
    %5903 = vmatprep.subr.mxu0 0.0
    %5904 = vmatpush2.msra.mxu0 0.0
    %5905 = vmatprep.subr.mxu0 0.0
    %5906 = vmatpush2.msra.mxu0 0.0
    %5907 = vmatprep.subr.mxu0 0.0
    %5908 = vmatpush2.msra.mxu0 0.0
    %5909 = vmatprep.mubr.f32.mxu0 0.0
    %v5910 = vand.u32 %v5149, 4294901760
    %5911 = vmatmul.mubr.f32.gmra.mxu0 %v5910
    %v5912 = vpop.f32.mrf.mxu0
    %v5913 = vadd.f32 %v5796, %v5912
    %v5914 = vpop.f32.mrf.mxu0
    %5915 = vmatprep.mubr.f32.mxu0 0.0
    %v5916 = vand.u32 %v5152, 4294901760
    %5917 = vmatmul.mubr.f32.gmra.mxu0 %v5916
    %v5918 = vpop.f32.mrf.mxu0
    %v5919 = vadd.f32 %v5802, %v5918
    %v5920 = vpop.f32.mrf.mxu0
    %5921 = vmatprep.mubr.f32.mxu0 0.0
    %v5922 = vand.u32 %v5155, 4294901760
    %5923 = vmatmul.mubr.f32.gmra.mxu0 %v5922
    %v5924 = vpop.f32.mrf.mxu0
    %v5925 = vadd.f32 %v5808, %v5924
    %v5926 = vpop.f32.mrf.mxu0
    %5927 = vmatprep.mubr.f32.mxu0 0.0
    %v5928 = vand.u32 %v5158, 4294901760
    %5929 = vmatmul.mubr.f32.gmra.mxu0 %v5928
    %v5930 = vpop.f32.mrf.mxu0
    %v5931 = vadd.f32 %v5814, %v5930
    %v5932 = vpop.f32.mrf.mxu0
    %5933 = vmatprep.mubr.f32.mxu0 0.0
    %v5934 = vand.u32 %v5161, 4294901760
    %5935 = vmatmul.mubr.f32.gmra.mxu0 %v5934
    %v5936 = vpop.f32.mrf.mxu0
    %v5937 = vadd.f32 %v5820, %v5936
    %v5938 = vpop.f32.mrf.mxu0
    %5939 = vmatprep.mubr.f32.mxu0 0.0
    %v5940 = vand.u32 %v5164, 4294901760
    %5941 = vmatmul.mubr.f32.gmra.mxu0 %v5940
    %v5942 = vpop.f32.mrf.mxu0
    %v5943 = vadd.f32 %v5826, %v5942
    %v5944 = vpop.f32.mrf.mxu0
    %5945 = vmatprep.mubr.f32.mxu0 0.0
    %v5946 = vand.u32 %v5167, 4294901760
    %5947 = vmatmul.mubr.f32.gmra.mxu0 %v5946
    %v5948 = vpop.f32.mrf.mxu0
    %v5949 = vadd.f32 %v5832, %v5948
    %v5950 = vpop.f32.mrf.mxu0
    %5951 = vmatprep.mubr.f32.mxu0 0.0
    %v5952 = vand.u32 %v5170, 4294901760
    %5953 = vmatmul.mubr.f32.gmra.mxu0 %v5952
    %v5954 = vpop.f32.mrf.mxu0
    %v5955 = vadd.f32 %v5838, %v5954
    %v5956 = vpop.f32.mrf.mxu0
    %5957 = vdwg.mxu0
    %v5958 = vld [vmem:[%s9] sm:$0xff]
    %v5959 = vld [vmem:[%s9 + $0x8] sm:$0xff]
    %v5960 = vld [vmem:[%s9 + $0x10] sm:$0xff]
    %v5961 = vld [vmem:[%s9 + $0x18] sm:$0xff]
    %v5962 = vld [vmem:[%s10] sm:$0x1]
    %v5964 = vlaneseq
    %v5965 = vshrl.u32 %v5964, 7
    %v5966 = vsub.s32 0, %v5965
    %v5967 = vrot.slane %v5962, %v5966
    %v5970 = vsel %vm871, %v5913, 0
    %v5973 = vsel %vm871, %v5919, 0
    %v5976 = vsel %vm871, %v5925, 0
    %v5979 = vsel %vm871, %v5931, 0
    %v5982 = vsel %vm871, %v5937, 0
    %v5985 = vsel %vm871, %v5943, 0
    %v5988 = vsel %vm871, %v5949, 0
    %v5991 = vsel %vm871, %v5955, 0
    %5993 = vmatprep.subr.mxu0 0.0
    %5994 = vmatpush1.msra.mxu0 0.0
    %5995 = vmatprep.subr.mxu0 0.0
    %5996 = vmatpush1.msra.mxu0 0.0
    %5997 = vmatprep.subr.mxu0 0.0
    %5998 = vmatpush1.msra.mxu0 0.0
    %5999 = vmatprep.subr.mxu0 0.0
    %6000 = vmatpush1.msra.mxu0 0.0
    %6001 = vmatprep.subr.mxu0 0.0
    %6002 = vmatpush1.msra.mxu0 0.0
    %6003 = vmatprep.subr.mxu0 0.0
    %6004 = vmatpush1.msra.mxu0 0.0
    %6005 = vmatprep.subr.mxu0 0.0
    %6006 = vmatpush1.msra.mxu0 0.0
    %6007 = vmatprep.subr.mxu0 0.0
    %6008 = vmatpush1.msra.mxu0 0.0
    %6009 = vmatprep.subr.mxu0 0.0
    %6010 = vmatpush1.msra.mxu0 0.0
    %6011 = vmatprep.subr.mxu0 0.0
    %6012 = vmatpush1.msra.mxu0 0.0
    %6013 = vmatprep.subr.mxu0 0.0
    %6014 = vmatpush1.msra.mxu0 0.0
    %6015 = vmatprep.subr.mxu0 0.0
    %6016 = vmatpush1.msra.mxu0 0.0
    %6017 = vmatprep.subr.mxu0 0.0
    %v6018 = vand.u32 %v5961, 4294901760
    %6019 = vmatpush1.msra.mxu0 %v6018
    %6020 = vmatprep.subr.mxu0 0.0
    %v6021 = vand.u32 %v5960, 4294901760
    %6022 = vmatpush1.msra.mxu0 %v6021
    %6023 = vmatprep.subr.mxu0 0.0
    %v6024 = vand.u32 %v5959, 4294901760
    %6025 = vmatpush1.msra.mxu0 %v6024
    %6026 = vmatprep.subr.mxu0 0.0
    %v6027 = vand.u32 %v5958, 4294901760
    %6028 = vmatpush1.msra.mxu0 %v6027
    %6029 = vmatprep.subr.mxu0 0.0
    %6030 = vmatpush2.msra.mxu0 0.0
    %6031 = vmatprep.subr.mxu0 0.0
    %6032 = vmatpush2.msra.mxu0 0.0
    %6033 = vmatprep.subr.mxu0 0.0
    %6034 = vmatpush2.msra.mxu0 0.0
    %6035 = vmatprep.subr.mxu0 0.0
    %6036 = vmatpush2.msra.mxu0 0.0
    %6037 = vmatprep.subr.mxu0 0.0
    %6038 = vmatpush2.msra.mxu0 0.0
    %6039 = vmatprep.subr.mxu0 0.0
    %6040 = vmatpush2.msra.mxu0 0.0
    %6041 = vmatprep.subr.mxu0 0.0
    %6042 = vmatpush2.msra.mxu0 0.0
    %6043 = vmatprep.subr.mxu0 0.0
    %6044 = vmatpush2.msra.mxu0 0.0
    %6045 = vmatprep.subr.mxu0 0.0
    %6046 = vmatpush2.msra.mxu0 0.0
    %6047 = vmatprep.subr.mxu0 0.0
    %6048 = vmatpush2.msra.mxu0 0.0
    %6049 = vmatprep.subr.mxu0 0.0
    %6050 = vmatpush2.msra.mxu0 0.0
    %6051 = vmatprep.subr.mxu0 0.0
    %6052 = vmatpush2.msra.mxu0 0.0
    %6053 = vmatprep.subr.mxu0 0.0
    %6054 = vmatpush2.msra.mxu0 0.0
    %6055 = vmatprep.subr.mxu0 0.0
    %6056 = vmatpush2.msra.mxu0 0.0
    %6057 = vmatprep.subr.mxu0 0.0
    %6058 = vmatpush2.msra.mxu0 0.0
    %6059 = vmatprep.subr.mxu0 0.0
    %6060 = vmatpush2.msra.mxu0 0.0
    %6061 = vmatprep.mubr.f32.mxu0 0.0
    %v6062 = vand.u32 %v5970, 4294901760
    %v6063 = vsub.f32 %v5970, %v6062
    %v6064 = vand.u32 %v6063, 4294901760
    %v6065 = vsub.f32 %v6063, %v6064
    %v6066 = vand.u32 %v6065, 4294901760
    %6067 = vmatmul.mubr.f32.gmra.mxu0 %v6066
    %v6068 = vpop.f32.mrf.mxu0
    %v6069 = vadd.f32 %v5967, %v6068
    %v6070 = vpop.f32.mrf.mxu0
    %6071 = vmatprep.mubr.f32.mxu0 0.0
    %v6072 = vand.u32 %v5973, 4294901760
    %v6073 = vsub.f32 %v5973, %v6072
    %v6074 = vand.u32 %v6073, 4294901760
    %v6075 = vsub.f32 %v6073, %v6074
    %v6076 = vand.u32 %v6075, 4294901760
    %6077 = vmatmul.mubr.f32.gmra.mxu0 %v6076
    %v6078 = vpop.f32.mrf.mxu0
    %v6079 = vadd.f32 %v5967, %v6078
    %v6080 = vpop.f32.mrf.mxu0
    %6081 = vmatprep.mubr.f32.mxu0 0.0
    %v6082 = vand.u32 %v5976, 4294901760
    %v6083 = vsub.f32 %v5976, %v6082
    %v6084 = vand.u32 %v6083, 4294901760
    %v6085 = vsub.f32 %v6083, %v6084
    %v6086 = vand.u32 %v6085, 4294901760
    %6087 = vmatmul.mubr.f32.gmra.mxu0 %v6086
    %v6088 = vpop.f32.mrf.mxu0
    %v6089 = vadd.f32 %v5967, %v6088
    %v6090 = vpop.f32.mrf.mxu0
    %6091 = vmatprep.mubr.f32.mxu0 0.0
    %v6092 = vand.u32 %v5979, 4294901760
    %v6093 = vsub.f32 %v5979, %v6092
    %v6094 = vand.u32 %v6093, 4294901760
    %v6095 = vsub.f32 %v6093, %v6094
    %v6096 = vand.u32 %v6095, 4294901760
    %6097 = vmatmul.mubr.f32.gmra.mxu0 %v6096
    %v6098 = vpop.f32.mrf.mxu0
    %v6099 = vadd.f32 %v5967, %v6098
    %v6100 = vpop.f32.mrf.mxu0
    %6101 = vmatprep.mubr.f32.mxu0 0.0
    %v6102 = vand.u32 %v5982, 4294901760
    %v6103 = vsub.f32 %v5982, %v6102
    %v6104 = vand.u32 %v6103, 4294901760
    %v6105 = vsub.f32 %v6103, %v6104
    %v6106 = vand.u32 %v6105, 4294901760
    %6107 = vmatmul.mubr.f32.gmra.mxu0 %v6106
    %v6108 = vpop.f32.mrf.mxu0
    %v6109 = vadd.f32 %v5967, %v6108
    %v6110 = vpop.f32.mrf.mxu0
    %6111 = vmatprep.mubr.f32.mxu0 0.0
    %v6112 = vand.u32 %v5985, 4294901760
    %v6113 = vsub.f32 %v5985, %v6112
    %v6114 = vand.u32 %v6113, 4294901760
    %v6115 = vsub.f32 %v6113, %v6114
    %v6116 = vand.u32 %v6115, 4294901760
    %6117 = vmatmul.mubr.f32.gmra.mxu0 %v6116
    %v6118 = vpop.f32.mrf.mxu0
    %v6119 = vadd.f32 %v5967, %v6118
    %v6120 = vpop.f32.mrf.mxu0
    %6121 = vmatprep.mubr.f32.mxu0 0.0
    %v6122 = vand.u32 %v5988, 4294901760
    %v6123 = vsub.f32 %v5988, %v6122
    %v6124 = vand.u32 %v6123, 4294901760
    %v6125 = vsub.f32 %v6123, %v6124
    %v6126 = vand.u32 %v6125, 4294901760
    %6127 = vmatmul.mubr.f32.gmra.mxu0 %v6126
    %v6128 = vpop.f32.mrf.mxu0
    %v6129 = vadd.f32 %v5967, %v6128
    %v6130 = vpop.f32.mrf.mxu0
    %6131 = vmatprep.mubr.f32.mxu0 0.0
    %v6132 = vand.u32 %v5991, 4294901760
    %v6133 = vsub.f32 %v5991, %v6132
    %v6134 = vand.u32 %v6133, 4294901760
    %v6135 = vsub.f32 %v6133, %v6134
    %v6136 = vand.u32 %v6135, 4294901760
    %6137 = vmatmul.mubr.f32.gmra.mxu0 %v6136
    %v6138 = vpop.f32.mrf.mxu0
    %v6139 = vadd.f32 %v5967, %v6138
    %v6140 = vpop.f32.mrf.mxu0
    %6141 = vdwg.mxu0
    %6142 = vmatprep.subr.mxu0 0.0
    %6143 = vmatpush1.msra.mxu0 0.0
    %6144 = vmatprep.subr.mxu0 0.0
    %6145 = vmatpush1.msra.mxu0 0.0
    %6146 = vmatprep.subr.mxu0 0.0
    %6147 = vmatpush1.msra.mxu0 0.0
    %6148 = vmatprep.subr.mxu0 0.0
    %6149 = vmatpush1.msra.mxu0 0.0
    %6150 = vmatprep.subr.mxu0 0.0
    %6151 = vmatpush1.msra.mxu0 0.0
    %6152 = vmatprep.subr.mxu0 0.0
    %6153 = vmatpush1.msra.mxu0 0.0
    %6154 = vmatprep.subr.mxu0 0.0
    %6155 = vmatpush1.msra.mxu0 0.0
    %6156 = vmatprep.subr.mxu0 0.0
    %6157 = vmatpush1.msra.mxu0 0.0
    %6158 = vmatprep.subr.mxu0 0.0
    %6159 = vmatpush1.msra.mxu0 0.0
    %6160 = vmatprep.subr.mxu0 0.0
    %6161 = vmatpush1.msra.mxu0 0.0
    %6162 = vmatprep.subr.mxu0 0.0
    %6163 = vmatpush1.msra.mxu0 0.0
    %6164 = vmatprep.subr.mxu0 0.0
    %6165 = vmatpush1.msra.mxu0 0.0
    %6166 = vmatprep.subr.mxu0 0.0
    %v6167 = vand.u32 %v5961, 4294901760
    %v6168 = vsub.f32 %v5961, %v6167
    %v6169 = vand.u32 %v6168, 4294901760
    %v6170 = vsub.f32 %v6168, %v6169
    %v6171 = vand.u32 %v6170, 4294901760
    %6172 = vmatpush1.msra.mxu0 %v6171
    %6173 = vmatprep.subr.mxu0 0.0
    %v6174 = vand.u32 %v5960, 4294901760
    %v6175 = vsub.f32 %v5960, %v6174
    %v6176 = vand.u32 %v6175, 4294901760
    %v6177 = vsub.f32 %v6175, %v6176
    %v6178 = vand.u32 %v6177, 4294901760
    %6179 = vmatpush1.msra.mxu0 %v6178
    %6180 = vmatprep.subr.mxu0 0.0
    %v6181 = vand.u32 %v5959, 4294901760
    %v6182 = vsub.f32 %v5959, %v6181
    %v6183 = vand.u32 %v6182, 4294901760
    %v6184 = vsub.f32 %v6182, %v6183
    %v6185 = vand.u32 %v6184, 4294901760
    %6186 = vmatpush1.msra.mxu0 %v6185
    %6187 = vmatprep.subr.mxu0 0.0
    %v6188 = vand.u32 %v5958, 4294901760
    %v6189 = vsub.f32 %v5958, %v6188
    %v6190 = vand.u32 %v6189, 4294901760
    %v6191 = vsub.f32 %v6189, %v6190
    %v6192 = vand.u32 %v6191, 4294901760
    %6193 = vmatpush1.msra.mxu0 %v6192
    %6194 = vmatprep.subr.mxu0 0.0
    %6195 = vmatpush2.msra.mxu0 0.0
    %6196 = vmatprep.subr.mxu0 0.0
    %6197 = vmatpush2.msra.mxu0 0.0
    %6198 = vmatprep.subr.mxu0 0.0
    %6199 = vmatpush2.msra.mxu0 0.0
    %6200 = vmatprep.subr.mxu0 0.0
    %6201 = vmatpush2.msra.mxu0 0.0
    %6202 = vmatprep.subr.mxu0 0.0
    %6203 = vmatpush2.msra.mxu0 0.0
    %6204 = vmatprep.subr.mxu0 0.0
    %6205 = vmatpush2.msra.mxu0 0.0
    %6206 = vmatprep.subr.mxu0 0.0
    %6207 = vmatpush2.msra.mxu0 0.0
    %6208 = vmatprep.subr.mxu0 0.0
    %6209 = vmatpush2.msra.mxu0 0.0
    %6210 = vmatprep.subr.mxu0 0.0
    %6211 = vmatpush2.msra.mxu0 0.0
    %6212 = vmatprep.subr.mxu0 0.0
    %6213 = vmatpush2.msra.mxu0 0.0
    %6214 = vmatprep.subr.mxu0 0.0
    %6215 = vmatpush2.msra.mxu0 0.0
    %6216 = vmatprep.subr.mxu0 0.0
    %6217 = vmatpush2.msra.mxu0 0.0
    %6218 = vmatprep.subr.mxu0 0.0
    %6219 = vmatpush2.msra.mxu0 0.0
    %6220 = vmatprep.subr.mxu0 0.0
    %6221 = vmatpush2.msra.mxu0 0.0
    %6222 = vmatprep.subr.mxu0 0.0
    %6223 = vmatpush2.msra.mxu0 0.0
    %6224 = vmatprep.subr.mxu0 0.0
    %6225 = vmatpush2.msra.mxu0 0.0
    %6226 = vmatprep.mubr.f32.mxu0 0.0
    %v6227 = vand.u32 %v5970, 4294901760
    %6228 = vmatmul.mubr.f32.gmra.mxu0 %v6227
    %v6229 = vpop.f32.mrf.mxu0
    %v6230 = vadd.f32 %v6069, %v6229
    %v6231 = vpop.f32.mrf.mxu0
    %6232 = vmatprep.mubr.f32.mxu0 0.0
    %v6233 = vand.u32 %v5973, 4294901760
    %6234 = vmatmul.mubr.f32.gmra.mxu0 %v6233
    %v6235 = vpop.f32.mrf.mxu0
    %v6236 = vadd.f32 %v6079, %v6235
    %v6237 = vpop.f32.mrf.mxu0
    %6238 = vmatprep.mubr.f32.mxu0 0.0
    %v6239 = vand.u32 %v5976, 4294901760
    %6240 = vmatmul.mubr.f32.gmra.mxu0 %v6239
    %v6241 = vpop.f32.mrf.mxu0
    %v6242 = vadd.f32 %v6089, %v6241
    %v6243 = vpop.f32.mrf.mxu0
    %6244 = vmatprep.mubr.f32.mxu0 0.0
    %v6245 = vand.u32 %v5979, 4294901760
    %6246 = vmatmul.mubr.f32.gmra.mxu0 %v6245
    %v6247 = vpop.f32.mrf.mxu0
    %v6248 = vadd.f32 %v6099, %v6247
    %v6249 = vpop.f32.mrf.mxu0
    %6250 = vmatprep.mubr.f32.mxu0 0.0
    %v6251 = vand.u32 %v5982, 4294901760
    %6252 = vmatmul.mubr.f32.gmra.mxu0 %v6251
    %v6253 = vpop.f32.mrf.mxu0
    %v6254 = vadd.f32 %v6109, %v6253
    %v6255 = vpop.f32.mrf.mxu0
    %6256 = vmatprep.mubr.f32.mxu0 0.0
    %v6257 = vand.u32 %v5985, 4294901760
    %6258 = vmatmul.mubr.f32.gmra.mxu0 %v6257
    %v6259 = vpop.f32.mrf.mxu0
    %v6260 = vadd.f32 %v6119, %v6259
    %v6261 = vpop.f32.mrf.mxu0
    %6262 = vmatprep.mubr.f32.mxu0 0.0
    %v6263 = vand.u32 %v5988, 4294901760
    %6264 = vmatmul.mubr.f32.gmra.mxu0 %v6263
    %v6265 = vpop.f32.mrf.mxu0
    %v6266 = vadd.f32 %v6129, %v6265
    %v6267 = vpop.f32.mrf.mxu0
    %6268 = vmatprep.mubr.f32.mxu0 0.0
    %v6269 = vand.u32 %v5991, 4294901760
    %6270 = vmatmul.mubr.f32.gmra.mxu0 %v6269
    %v6271 = vpop.f32.mrf.mxu0
    %v6272 = vadd.f32 %v6139, %v6271
    %v6273 = vpop.f32.mrf.mxu0
    %6274 = vdwg.mxu0
    %6275 = vmatprep.subr.mxu0 0.0
    %6276 = vmatpush1.msra.mxu0 0.0
    %6277 = vmatprep.subr.mxu0 0.0
    %6278 = vmatpush1.msra.mxu0 0.0
    %6279 = vmatprep.subr.mxu0 0.0
    %6280 = vmatpush1.msra.mxu0 0.0
    %6281 = vmatprep.subr.mxu0 0.0
    %6282 = vmatpush1.msra.mxu0 0.0
    %6283 = vmatprep.subr.mxu0 0.0
    %6284 = vmatpush1.msra.mxu0 0.0
    %6285 = vmatprep.subr.mxu0 0.0
    %6286 = vmatpush1.msra.mxu0 0.0
    %6287 = vmatprep.subr.mxu0 0.0
    %6288 = vmatpush1.msra.mxu0 0.0
    %6289 = vmatprep.subr.mxu0 0.0
    %6290 = vmatpush1.msra.mxu0 0.0
    %6291 = vmatprep.subr.mxu0 0.0
    %6292 = vmatpush1.msra.mxu0 0.0
    %6293 = vmatprep.subr.mxu0 0.0
    %6294 = vmatpush1.msra.mxu0 0.0
    %6295 = vmatprep.subr.mxu0 0.0
    %6296 = vmatpush1.msra.mxu0 0.0
    %6297 = vmatprep.subr.mxu0 0.0
    %6298 = vmatpush1.msra.mxu0 0.0
    %6299 = vmatprep.subr.mxu0 0.0
    %v6300 = vand.u32 %v5961, 4294901760
    %v6301 = vsub.f32 %v5961, %v6300
    %6302 = vmatpush1.msra.mxu0 %v6301
    %6303 = vmatprep.subr.mxu0 0.0
    %v6304 = vand.u32 %v5960, 4294901760
    %v6305 = vsub.f32 %v5960, %v6304
    %6306 = vmatpush1.msra.mxu0 %v6305
    %6307 = vmatprep.subr.mxu0 0.0
    %v6308 = vand.u32 %v5959, 4294901760
    %v6309 = vsub.f32 %v5959, %v6308
    %6310 = vmatpush1.msra.mxu0 %v6309
    %6311 = vmatprep.subr.mxu0 0.0
    %v6312 = vand.u32 %v5958, 4294901760
    %v6313 = vsub.f32 %v5958, %v6312
    %6314 = vmatpush1.msra.mxu0 %v6313
    %6315 = vmatprep.subr.mxu0 0.0
    %6316 = vmatpush2.msra.mxu0 0.0
    %6317 = vmatprep.subr.mxu0 0.0
    %6318 = vmatpush2.msra.mxu0 0.0
    %6319 = vmatprep.subr.mxu0 0.0
    %6320 = vmatpush2.msra.mxu0 0.0
    %6321 = vmatprep.subr.mxu0 0.0
    %6322 = vmatpush2.msra.mxu0 0.0
    %6323 = vmatprep.subr.mxu0 0.0
    %6324 = vmatpush2.msra.mxu0 0.0
    %6325 = vmatprep.subr.mxu0 0.0
    %6326 = vmatpush2.msra.mxu0 0.0
    %6327 = vmatprep.subr.mxu0 0.0
    %6328 = vmatpush2.msra.mxu0 0.0
    %6329 = vmatprep.subr.mxu0 0.0
    %6330 = vmatpush2.msra.mxu0 0.0
    %6331 = vmatprep.subr.mxu0 0.0
    %6332 = vmatpush2.msra.mxu0 0.0
    %6333 = vmatprep.subr.mxu0 0.0
    %6334 = vmatpush2.msra.mxu0 0.0
    %6335 = vmatprep.subr.mxu0 0.0
    %6336 = vmatpush2.msra.mxu0 0.0
    %6337 = vmatprep.subr.mxu0 0.0
    %6338 = vmatpush2.msra.mxu0 0.0
    %6339 = vmatprep.subr.mxu0 0.0
    %6340 = vmatpush2.msra.mxu0 0.0
    %6341 = vmatprep.subr.mxu0 0.0
    %6342 = vmatpush2.msra.mxu0 0.0
    %6343 = vmatprep.subr.mxu0 0.0
    %6344 = vmatpush2.msra.mxu0 0.0
    %6345 = vmatprep.subr.mxu0 0.0
    %6346 = vmatpush2.msra.mxu0 0.0
    %6347 = vmatprep.mubr.f32.mxu0 0.0
    %v6348 = vand.u32 %v5970, 4294901760
    %v6349 = vsub.f32 %v5970, %v6348
    %6350 = vmatmul.mubr.f32.gmra.mxu0 %v6349
    %v6351 = vpop.f32.mrf.mxu0
    %v6352 = vadd.f32 %v6230, %v6351
    %v6353 = vpop.f32.mrf.mxu0
    %6354 = vmatprep.mubr.f32.mxu0 0.0
    %v6355 = vand.u32 %v5973, 4294901760
    %v6356 = vsub.f32 %v5973, %v6355
    %6357 = vmatmul.mubr.f32.gmra.mxu0 %v6356
    %v6358 = vpop.f32.mrf.mxu0
    %v6359 = vadd.f32 %v6236, %v6358
    %v6360 = vpop.f32.mrf.mxu0
    %6361 = vmatprep.mubr.f32.mxu0 0.0
    %v6362 = vand.u32 %v5976, 4294901760
    %v6363 = vsub.f32 %v5976, %v6362
    %6364 = vmatmul.mubr.f32.gmra.mxu0 %v6363
    %v6365 = vpop.f32.mrf.mxu0
    %v6366 = vadd.f32 %v6242, %v6365
    %v6367 = vpop.f32.mrf.mxu0
    %6368 = vmatprep.mubr.f32.mxu0 0.0
    %v6369 = vand.u32 %v5979, 4294901760
    %v6370 = vsub.f32 %v5979, %v6369
    %6371 = vmatmul.mubr.f32.gmra.mxu0 %v6370
    %v6372 = vpop.f32.mrf.mxu0
    %v6373 = vadd.f32 %v6248, %v6372
    %v6374 = vpop.f32.mrf.mxu0
    %6375 = vmatprep.mubr.f32.mxu0 0.0
    %v6376 = vand.u32 %v5982, 4294901760
    %v6377 = vsub.f32 %v5982, %v6376
    %6378 = vmatmul.mubr.f32.gmra.mxu0 %v6377
    %v6379 = vpop.f32.mrf.mxu0
    %v6380 = vadd.f32 %v6254, %v6379
    %v6381 = vpop.f32.mrf.mxu0
    %6382 = vmatprep.mubr.f32.mxu0 0.0
    %v6383 = vand.u32 %v5985, 4294901760
    %v6384 = vsub.f32 %v5985, %v6383
    %6385 = vmatmul.mubr.f32.gmra.mxu0 %v6384
    %v6386 = vpop.f32.mrf.mxu0
    %v6387 = vadd.f32 %v6260, %v6386
    %v6388 = vpop.f32.mrf.mxu0
    %6389 = vmatprep.mubr.f32.mxu0 0.0
    %v6390 = vand.u32 %v5988, 4294901760
    %v6391 = vsub.f32 %v5988, %v6390
    %6392 = vmatmul.mubr.f32.gmra.mxu0 %v6391
    %v6393 = vpop.f32.mrf.mxu0
    %v6394 = vadd.f32 %v6266, %v6393
    %v6395 = vpop.f32.mrf.mxu0
    %6396 = vmatprep.mubr.f32.mxu0 0.0
    %v6397 = vand.u32 %v5991, 4294901760
    %v6398 = vsub.f32 %v5991, %v6397
    %6399 = vmatmul.mubr.f32.gmra.mxu0 %v6398
    %v6400 = vpop.f32.mrf.mxu0
    %v6401 = vadd.f32 %v6272, %v6400
    %v6402 = vpop.f32.mrf.mxu0
    %6403 = vdwg.mxu0
    %6404 = vmatprep.subr.mxu0 0.0
    %6405 = vmatpush1.msra.mxu0 0.0
    %6406 = vmatprep.subr.mxu0 0.0
    %6407 = vmatpush1.msra.mxu0 0.0
    %6408 = vmatprep.subr.mxu0 0.0
    %6409 = vmatpush1.msra.mxu0 0.0
    %6410 = vmatprep.subr.mxu0 0.0
    %6411 = vmatpush1.msra.mxu0 0.0
    %6412 = vmatprep.subr.mxu0 0.0
    %6413 = vmatpush1.msra.mxu0 0.0
    %6414 = vmatprep.subr.mxu0 0.0
    %6415 = vmatpush1.msra.mxu0 0.0
    %6416 = vmatprep.subr.mxu0 0.0
    %6417 = vmatpush1.msra.mxu0 0.0
    %6418 = vmatprep.subr.mxu0 0.0
    %6419 = vmatpush1.msra.mxu0 0.0
    %6420 = vmatprep.subr.mxu0 0.0
    %6421 = vmatpush1.msra.mxu0 0.0
    %6422 = vmatprep.subr.mxu0 0.0
    %6423 = vmatpush1.msra.mxu0 0.0
    %6424 = vmatprep.subr.mxu0 0.0
    %6425 = vmatpush1.msra.mxu0 0.0
    %6426 = vmatprep.subr.mxu0 0.0
    %6427 = vmatpush1.msra.mxu0 0.0
    %6428 = vmatprep.subr.mxu0 0.0
    %v6429 = vand.u32 %v5961, 4294901760
    %6430 = vmatpush1.msra.mxu0 %v6429
    %6431 = vmatprep.subr.mxu0 0.0
    %v6432 = vand.u32 %v5960, 4294901760
    %6433 = vmatpush1.msra.mxu0 %v6432
    %6434 = vmatprep.subr.mxu0 0.0
    %v6435 = vand.u32 %v5959, 4294901760
    %6436 = vmatpush1.msra.mxu0 %v6435
    %6437 = vmatprep.subr.mxu0 0.0
    %v6438 = vand.u32 %v5958, 4294901760
    %6439 = vmatpush1.msra.mxu0 %v6438
    %6440 = vmatprep.subr.mxu0 0.0
    %6441 = vmatpush2.msra.mxu0 0.0
    %6442 = vmatprep.subr.mxu0 0.0
    %6443 = vmatpush2.msra.mxu0 0.0
    %6444 = vmatprep.subr.mxu0 0.0
    %6445 = vmatpush2.msra.mxu0 0.0
    %6446 = vmatprep.subr.mxu0 0.0
    %6447 = vmatpush2.msra.mxu0 0.0
    %6448 = vmatprep.subr.mxu0 0.0
    %6449 = vmatpush2.msra.mxu0 0.0
    %6450 = vmatprep.subr.mxu0 0.0
    %6451 = vmatpush2.msra.mxu0 0.0
    %6452 = vmatprep.subr.mxu0 0.0
    %6453 = vmatpush2.msra.mxu0 0.0
    %6454 = vmatprep.subr.mxu0 0.0
    %6455 = vmatpush2.msra.mxu0 0.0
    %6456 = vmatprep.subr.mxu0 0.0
    %6457 = vmatpush2.msra.mxu0 0.0
    %6458 = vmatprep.subr.mxu0 0.0
    %6459 = vmatpush2.msra.mxu0 0.0
    %6460 = vmatprep.subr.mxu0 0.0
    %6461 = vmatpush2.msra.mxu0 0.0
    %6462 = vmatprep.subr.mxu0 0.0
    %6463 = vmatpush2.msra.mxu0 0.0
    %6464 = vmatprep.subr.mxu0 0.0
    %6465 = vmatpush2.msra.mxu0 0.0
    %6466 = vmatprep.subr.mxu0 0.0
    %6467 = vmatpush2.msra.mxu0 0.0
    %6468 = vmatprep.subr.mxu0 0.0
    %6469 = vmatpush2.msra.mxu0 0.0
    %6470 = vmatprep.subr.mxu0 0.0
    %6471 = vmatpush2.msra.mxu0 0.0
    %6472 = vmatprep.mubr.f32.mxu0 0.0
    %v6473 = vand.u32 %v5970, 4294901760
    %v6474 = vsub.f32 %v5970, %v6473
    %v6475 = vand.u32 %v6474, 4294901760
    %6476 = vmatmul.mubr.f32.gmra.mxu0 %v6475
    %v6477 = vpop.f32.mrf.mxu0
    %v6478 = vadd.f32 %v6352, %v6477
    %v6479 = vpop.f32.mrf.mxu0
    %6480 = vmatprep.mubr.f32.mxu0 0.0
    %v6481 = vand.u32 %v5973, 4294901760
    %v6482 = vsub.f32 %v5973, %v6481
    %v6483 = vand.u32 %v6482, 4294901760
    %6484 = vmatmul.mubr.f32.gmra.mxu0 %v6483
    %v6485 = vpop.f32.mrf.mxu0
    %v6486 = vadd.f32 %v6359, %v6485
    %v6487 = vpop.f32.mrf.mxu0
    %6488 = vmatprep.mubr.f32.mxu0 0.0
    %v6489 = vand.u32 %v5976, 4294901760
    %v6490 = vsub.f32 %v5976, %v6489
    %v6491 = vand.u32 %v6490, 4294901760
    %6492 = vmatmul.mubr.f32.gmra.mxu0 %v6491
    %v6493 = vpop.f32.mrf.mxu0
    %v6494 = vadd.f32 %v6366, %v6493
    %v6495 = vpop.f32.mrf.mxu0
    %6496 = vmatprep.mubr.f32.mxu0 0.0
    %v6497 = vand.u32 %v5979, 4294901760
    %v6498 = vsub.f32 %v5979, %v6497
    %v6499 = vand.u32 %v6498, 4294901760
    %6500 = vmatmul.mubr.f32.gmra.mxu0 %v6499
    %v6501 = vpop.f32.mrf.mxu0
    %v6502 = vadd.f32 %v6373, %v6501
    %v6503 = vpop.f32.mrf.mxu0
    %6504 = vmatprep.mubr.f32.mxu0 0.0
    %v6505 = vand.u32 %v5982, 4294901760
    %v6506 = vsub.f32 %v5982, %v6505
    %v6507 = vand.u32 %v6506, 4294901760
    %6508 = vmatmul.mubr.f32.gmra.mxu0 %v6507
    %v6509 = vpop.f32.mrf.mxu0
    %v6510 = vadd.f32 %v6380, %v6509
    %v6511 = vpop.f32.mrf.mxu0
    %6512 = vmatprep.mubr.f32.mxu0 0.0
    %v6513 = vand.u32 %v5985, 4294901760
    %v6514 = vsub.f32 %v5985, %v6513
    %v6515 = vand.u32 %v6514, 4294901760
    %6516 = vmatmul.mubr.f32.gmra.mxu0 %v6515
    %v6517 = vpop.f32.mrf.mxu0
    %v6518 = vadd.f32 %v6387, %v6517
    %v6519 = vpop.f32.mrf.mxu0
    %6520 = vmatprep.mubr.f32.mxu0 0.0
    %v6521 = vand.u32 %v5988, 4294901760
    %v6522 = vsub.f32 %v5988, %v6521
    %v6523 = vand.u32 %v6522, 4294901760
    %6524 = vmatmul.mubr.f32.gmra.mxu0 %v6523
    %v6525 = vpop.f32.mrf.mxu0
    %v6526 = vadd.f32 %v6394, %v6525
    %v6527 = vpop.f32.mrf.mxu0
    %6528 = vmatprep.mubr.f32.mxu0 0.0
    %v6529 = vand.u32 %v5991, 4294901760
    %v6530 = vsub.f32 %v5991, %v6529
    %v6531 = vand.u32 %v6530, 4294901760
    %6532 = vmatmul.mubr.f32.gmra.mxu0 %v6531
    %v6533 = vpop.f32.mrf.mxu0
    %v6534 = vadd.f32 %v6401, %v6533
    %v6535 = vpop.f32.mrf.mxu0
    %6536 = vdwg.mxu0
    %6537 = vmatprep.subr.mxu0 0.0
    %6538 = vmatpush1.msra.mxu0 0.0
    %6539 = vmatprep.subr.mxu0 0.0
    %6540 = vmatpush1.msra.mxu0 0.0
    %6541 = vmatprep.subr.mxu0 0.0
    %6542 = vmatpush1.msra.mxu0 0.0
    %6543 = vmatprep.subr.mxu0 0.0
    %6544 = vmatpush1.msra.mxu0 0.0
    %6545 = vmatprep.subr.mxu0 0.0
    %6546 = vmatpush1.msra.mxu0 0.0
    %6547 = vmatprep.subr.mxu0 0.0
    %6548 = vmatpush1.msra.mxu0 0.0
    %6549 = vmatprep.subr.mxu0 0.0
    %6550 = vmatpush1.msra.mxu0 0.0
    %6551 = vmatprep.subr.mxu0 0.0
    %6552 = vmatpush1.msra.mxu0 0.0
    %6553 = vmatprep.subr.mxu0 0.0
    %6554 = vmatpush1.msra.mxu0 0.0
    %6555 = vmatprep.subr.mxu0 0.0
    %6556 = vmatpush1.msra.mxu0 0.0
    %6557 = vmatprep.subr.mxu0 0.0
    %6558 = vmatpush1.msra.mxu0 0.0
    %6559 = vmatprep.subr.mxu0 0.0
    %6560 = vmatpush1.msra.mxu0 0.0
    %6561 = vmatprep.subr.mxu0 0.0
    %v6562 = vand.u32 %v5961, 4294901760
    %v6563 = vsub.f32 %v5961, %v6562
    %v6564 = vand.u32 %v6563, 4294901760
    %6565 = vmatpush1.msra.mxu0 %v6564
    %6566 = vmatprep.subr.mxu0 0.0
    %v6567 = vand.u32 %v5960, 4294901760
    %v6568 = vsub.f32 %v5960, %v6567
    %v6569 = vand.u32 %v6568, 4294901760
    %6570 = vmatpush1.msra.mxu0 %v6569
    %6571 = vmatprep.subr.mxu0 0.0
    %v6572 = vand.u32 %v5959, 4294901760
    %v6573 = vsub.f32 %v5959, %v6572
    %v6574 = vand.u32 %v6573, 4294901760
    %6575 = vmatpush1.msra.mxu0 %v6574
    %6576 = vmatprep.subr.mxu0 0.0
    %v6577 = vand.u32 %v5958, 4294901760
    %v6578 = vsub.f32 %v5958, %v6577
    %v6579 = vand.u32 %v6578, 4294901760
    %6580 = vmatpush1.msra.mxu0 %v6579
    %6581 = vmatprep.subr.mxu0 0.0
    %6582 = vmatpush2.msra.mxu0 0.0
    %6583 = vmatprep.subr.mxu0 0.0
    %6584 = vmatpush2.msra.mxu0 0.0
    %6585 = vmatprep.subr.mxu0 0.0
    %6586 = vmatpush2.msra.mxu0 0.0
    %6587 = vmatprep.subr.mxu0 0.0
    %6588 = vmatpush2.msra.mxu0 0.0
    %6589 = vmatprep.subr.mxu0 0.0
    %6590 = vmatpush2.msra.mxu0 0.0
    %6591 = vmatprep.subr.mxu0 0.0
    %6592 = vmatpush2.msra.mxu0 0.0
    %6593 = vmatprep.subr.mxu0 0.0
    %6594 = vmatpush2.msra.mxu0 0.0
    %6595 = vmatprep.subr.mxu0 0.0
    %6596 = vmatpush2.msra.mxu0 0.0
    %6597 = vmatprep.subr.mxu0 0.0
    %6598 = vmatpush2.msra.mxu0 0.0
    %6599 = vmatprep.subr.mxu0 0.0
    %6600 = vmatpush2.msra.mxu0 0.0
    %6601 = vmatprep.subr.mxu0 0.0
    %6602 = vmatpush2.msra.mxu0 0.0
    %6603 = vmatprep.subr.mxu0 0.0
    %6604 = vmatpush2.msra.mxu0 0.0
    %6605 = vmatprep.subr.mxu0 0.0
    %6606 = vmatpush2.msra.mxu0 0.0
    %6607 = vmatprep.subr.mxu0 0.0
    %6608 = vmatpush2.msra.mxu0 0.0
    %6609 = vmatprep.subr.mxu0 0.0
    %6610 = vmatpush2.msra.mxu0 0.0
    %6611 = vmatprep.subr.mxu0 0.0
    %6612 = vmatpush2.msra.mxu0 0.0
    %6613 = vmatprep.mubr.f32.mxu0 0.0
    %v6614 = vand.u32 %v5970, 4294901760
    %6615 = vmatmul.mubr.f32.gmra.mxu0 %v6614
    %v6616 = vpop.f32.mrf.mxu0
    %v6617 = vadd.f32 %v6478, %v6616
    %v6618 = vpop.f32.mrf.mxu0
    %6619 = vmatprep.mubr.f32.mxu0 0.0
    %v6620 = vand.u32 %v5973, 4294901760
    %6621 = vmatmul.mubr.f32.gmra.mxu0 %v6620
    %v6622 = vpop.f32.mrf.mxu0
    %v6623 = vadd.f32 %v6486, %v6622
    %v6624 = vpop.f32.mrf.mxu0
    %6625 = vmatprep.mubr.f32.mxu0 0.0
    %v6626 = vand.u32 %v5976, 4294901760
    %6627 = vmatmul.mubr.f32.gmra.mxu0 %v6626
    %v6628 = vpop.f32.mrf.mxu0
    %v6629 = vadd.f32 %v6494, %v6628
    %v6630 = vpop.f32.mrf.mxu0
    %6631 = vmatprep.mubr.f32.mxu0 0.0
    %v6632 = vand.u32 %v5979, 4294901760
    %6633 = vmatmul.mubr.f32.gmra.mxu0 %v6632
    %v6634 = vpop.f32.mrf.mxu0
    %v6635 = vadd.f32 %v6502, %v6634
    %v6636 = vpop.f32.mrf.mxu0
    %6637 = vmatprep.mubr.f32.mxu0 0.0
    %v6638 = vand.u32 %v5982, 4294901760
    %6639 = vmatmul.mubr.f32.gmra.mxu0 %v6638
    %v6640 = vpop.f32.mrf.mxu0
    %v6641 = vadd.f32 %v6510, %v6640
    %v6642 = vpop.f32.mrf.mxu0
    %6643 = vmatprep.mubr.f32.mxu0 0.0
    %v6644 = vand.u32 %v5985, 4294901760
    %6645 = vmatmul.mubr.f32.gmra.mxu0 %v6644
    %v6646 = vpop.f32.mrf.mxu0
    %v6647 = vadd.f32 %v6518, %v6646
    %v6648 = vpop.f32.mrf.mxu0
    %6649 = vmatprep.mubr.f32.mxu0 0.0
    %v6650 = vand.u32 %v5988, 4294901760
    %6651 = vmatmul.mubr.f32.gmra.mxu0 %v6650
    %v6652 = vpop.f32.mrf.mxu0
    %v6653 = vadd.f32 %v6526, %v6652
    %v6654 = vpop.f32.mrf.mxu0
    %6655 = vmatprep.mubr.f32.mxu0 0.0
    %v6656 = vand.u32 %v5991, 4294901760
    %6657 = vmatmul.mubr.f32.gmra.mxu0 %v6656
    %v6658 = vpop.f32.mrf.mxu0
    %v6659 = vadd.f32 %v6534, %v6658
    %v6660 = vpop.f32.mrf.mxu0
    %6661 = vdwg.mxu0
    %6662 = vmatprep.subr.mxu0 0.0
    %6663 = vmatpush1.msra.mxu0 0.0
    %6664 = vmatprep.subr.mxu0 0.0
    %6665 = vmatpush1.msra.mxu0 0.0
    %6666 = vmatprep.subr.mxu0 0.0
    %6667 = vmatpush1.msra.mxu0 0.0
    %6668 = vmatprep.subr.mxu0 0.0
    %6669 = vmatpush1.msra.mxu0 0.0
    %6670 = vmatprep.subr.mxu0 0.0
    %6671 = vmatpush1.msra.mxu0 0.0
    %6672 = vmatprep.subr.mxu0 0.0
    %6673 = vmatpush1.msra.mxu0 0.0
    %6674 = vmatprep.subr.mxu0 0.0
    %6675 = vmatpush1.msra.mxu0 0.0
    %6676 = vmatprep.subr.mxu0 0.0
    %6677 = vmatpush1.msra.mxu0 0.0
    %6678 = vmatprep.subr.mxu0 0.0
    %6679 = vmatpush1.msra.mxu0 0.0
    %6680 = vmatprep.subr.mxu0 0.0
    %6681 = vmatpush1.msra.mxu0 0.0
    %6682 = vmatprep.subr.mxu0 0.0
    %6683 = vmatpush1.msra.mxu0 0.0
    %6684 = vmatprep.subr.mxu0 0.0
    %6685 = vmatpush1.msra.mxu0 0.0
    %6686 = vmatprep.subr.mxu0 0.0
    %v6687 = vand.u32 %v5961, 4294901760
    %6688 = vmatpush1.msra.mxu0 %v6687
    %6689 = vmatprep.subr.mxu0 0.0
    %v6690 = vand.u32 %v5960, 4294901760
    %6691 = vmatpush1.msra.mxu0 %v6690
    %6692 = vmatprep.subr.mxu0 0.0
    %v6693 = vand.u32 %v5959, 4294901760
    %6694 = vmatpush1.msra.mxu0 %v6693
    %6695 = vmatprep.subr.mxu0 0.0
    %v6696 = vand.u32 %v5958, 4294901760
    %6697 = vmatpush1.msra.mxu0 %v6696
    %6698 = vmatprep.subr.mxu0 0.0
    %6699 = vmatpush2.msra.mxu0 0.0
    %6700 = vmatprep.subr.mxu0 0.0
    %6701 = vmatpush2.msra.mxu0 0.0
    %6702 = vmatprep.subr.mxu0 0.0
    %6703 = vmatpush2.msra.mxu0 0.0
    %6704 = vmatprep.subr.mxu0 0.0
    %6705 = vmatpush2.msra.mxu0 0.0
    %6706 = vmatprep.subr.mxu0 0.0
    %6707 = vmatpush2.msra.mxu0 0.0
    %6708 = vmatprep.subr.mxu0 0.0
    %6709 = vmatpush2.msra.mxu0 0.0
    %6710 = vmatprep.subr.mxu0 0.0
    %6711 = vmatpush2.msra.mxu0 0.0
    %6712 = vmatprep.subr.mxu0 0.0
    %6713 = vmatpush2.msra.mxu0 0.0
    %6714 = vmatprep.subr.mxu0 0.0
    %6715 = vmatpush2.msra.mxu0 0.0
    %6716 = vmatprep.subr.mxu0 0.0
    %6717 = vmatpush2.msra.mxu0 0.0
    %6718 = vmatprep.subr.mxu0 0.0
    %6719 = vmatpush2.msra.mxu0 0.0
    %6720 = vmatprep.subr.mxu0 0.0
    %6721 = vmatpush2.msra.mxu0 0.0
    %6722 = vmatprep.subr.mxu0 0.0
    %6723 = vmatpush2.msra.mxu0 0.0
    %6724 = vmatprep.subr.mxu0 0.0
    %6725 = vmatpush2.msra.mxu0 0.0
    %6726 = vmatprep.subr.mxu0 0.0
    %6727 = vmatpush2.msra.mxu0 0.0
    %6728 = vmatprep.subr.mxu0 0.0
    %6729 = vmatpush2.msra.mxu0 0.0
    %6730 = vmatprep.mubr.f32.mxu0 0.0
    %v6731 = vand.u32 %v5970, 4294901760
    %6732 = vmatmul.mubr.f32.gmra.mxu0 %v6731
    %v6733 = vpop.f32.mrf.mxu0
    %v6734 = vadd.f32 %v6617, %v6733
    %v6735 = vpop.f32.mrf.mxu0
    %6736 = vmatprep.mubr.f32.mxu0 0.0
    %v6737 = vand.u32 %v5973, 4294901760
    %6738 = vmatmul.mubr.f32.gmra.mxu0 %v6737
    %v6739 = vpop.f32.mrf.mxu0
    %v6740 = vadd.f32 %v6623, %v6739
    %v6741 = vpop.f32.mrf.mxu0
    %6742 = vmatprep.mubr.f32.mxu0 0.0
    %v6743 = vand.u32 %v5976, 4294901760
    %6744 = vmatmul.mubr.f32.gmra.mxu0 %v6743
    %v6745 = vpop.f32.mrf.mxu0
    %v6746 = vadd.f32 %v6629, %v6745
    %v6747 = vpop.f32.mrf.mxu0
    %6748 = vmatprep.mubr.f32.mxu0 0.0
    %v6749 = vand.u32 %v5979, 4294901760
    %6750 = vmatmul.mubr.f32.gmra.mxu0 %v6749
    %v6751 = vpop.f32.mrf.mxu0
    %v6752 = vadd.f32 %v6635, %v6751
    %v6753 = vpop.f32.mrf.mxu0
    %6754 = vmatprep.mubr.f32.mxu0 0.0
    %v6755 = vand.u32 %v5982, 4294901760
    %6756 = vmatmul.mubr.f32.gmra.mxu0 %v6755
    %v6757 = vpop.f32.mrf.mxu0
    %v6758 = vadd.f32 %v6641, %v6757
    %v6759 = vpop.f32.mrf.mxu0
    %6760 = vmatprep.mubr.f32.mxu0 0.0
    %v6761 = vand.u32 %v5985, 4294901760
    %6762 = vmatmul.mubr.f32.gmra.mxu0 %v6761
    %v6763 = vpop.f32.mrf.mxu0
    %v6764 = vadd.f32 %v6647, %v6763
    %v6765 = vpop.f32.mrf.mxu0
    %6766 = vmatprep.mubr.f32.mxu0 0.0
    %v6767 = vand.u32 %v5988, 4294901760
    %6768 = vmatmul.mubr.f32.gmra.mxu0 %v6767
    %v6769 = vpop.f32.mrf.mxu0
    %v6770 = vadd.f32 %v6653, %v6769
    %v6771 = vpop.f32.mrf.mxu0
    %6772 = vmatprep.mubr.f32.mxu0 0.0
    %v6773 = vand.u32 %v5991, 4294901760
    %6774 = vmatmul.mubr.f32.gmra.mxu0 %v6773
    %v6775 = vpop.f32.mrf.mxu0
    %v6776 = vadd.f32 %v6659, %v6775
    %v6777 = vpop.f32.mrf.mxu0
    %6778 = vdwg.mxu0
    %6779 = vst.msk [vmem:[#allocation2] sm:$0xff] %vm871, %v5913
    %6780 = vst.msk [vmem:[#allocation2 + $0x8] sm:$0xff] %vm871, %v5919
    %6781 = vst.msk [vmem:[#allocation2 + $0x10] sm:$0xff] %vm871, %v5925
    %6782 = vst.msk [vmem:[#allocation2 + $0x18] sm:$0xff] %vm871, %v5931
    %6783 = vst.msk [vmem:[#allocation2 + $0x20] sm:$0xff] %vm871, %v5937
    %6784 = vst.msk [vmem:[#allocation2 + $0x28] sm:$0xff] %vm871, %v5943
    %6785 = vst.msk [vmem:[#allocation2 + $0x30] sm:$0xff] %vm871, %v5949
    %6786 = vst.msk [vmem:[#allocation2 + $0x38] sm:$0xff] %vm871, %v5955
    %6795 = vrot.lane.b32.xlu0 %v6734, 31
    %v6796 = vpop.permute.xlu0 %6795
    %6797 = vrot.lane.b32.xlu0 %v6740, 31
    %v6798 = vpop.permute.xlu0 %6797
    %6799 = vrot.lane.b32.xlu0 %v6746, 31
    %v6800 = vpop.permute.xlu0 %6799
    %6801 = vrot.lane.b32.xlu0 %v6752, 31
    %v6802 = vpop.permute.xlu0 %6801
    %6803 = vrot.lane.b32.xlu0 %v6758, 31
    %v6804 = vpop.permute.xlu0 %6803
    %6805 = vrot.lane.b32.xlu0 %v6764, 31
    %v6806 = vpop.permute.xlu0 %6805
    %6807 = vrot.lane.b32.xlu0 %v6770, 31
    %v6808 = vpop.permute.xlu0 %6807
    %6809 = vrot.lane.b32.xlu0 %v6776, 31
    %v6810 = vpop.permute.xlu0 %6809
    %6819 = vst.msk [vmem:[#allocation2] sm:$0xff] %vm1722, %v6796
    %6820 = vst.msk [vmem:[#allocation2 + $0x8] sm:$0xff] %vm1722, %v6798
    %6821 = vst.msk [vmem:[#allocation2 + $0x10] sm:$0xff] %vm1722, %v6800
    %6822 = vst.msk [vmem:[#allocation2 + $0x18] sm:$0xff] %vm1722, %v6802
    %6823 = vst.msk [vmem:[#allocation2 + $0x20] sm:$0xff] %vm1722, %v6804
    %6824 = vst.msk [vmem:[#allocation2 + $0x28] sm:$0xff] %vm1722, %v6806
    %6825 = vst.msk [vmem:[#allocation2 + $0x30] sm:$0xff] %vm1722, %v6808
    %6826 = vst.msk [vmem:[#allocation2 + $0x38] sm:$0xff] %vm1722, %v6810
    %v6827 = vld [vmem:[#allocation2] sm:$0xff]
    %v6828 = vld [vmem:[#allocation2 + $0x8] sm:$0xff]
    %v6829 = vld [vmem:[#allocation2 + $0x10] sm:$0xff]
    %v6830 = vld [vmem:[#allocation2 + $0x18] sm:$0xff]
    %v6831 = vld [vmem:[#allocation2 + $0x20] sm:$0xff]
    %v6832 = vld [vmem:[#allocation2 + $0x28] sm:$0xff]
    %v6833 = vld [vmem:[#allocation2 + $0x30] sm:$0xff]
    %v6834 = vld [vmem:[#allocation2 + $0x38] sm:$0xff]
    %v6835 = vpack.c.bf16 %v6828, %v6827
    %v6836 = vpack.c.bf16 %v6830, %v6829
    %v6837 = vpack.c.bf16 %v6832, %v6831
    %v6838 = vpack.c.bf16 %v6834, %v6833
    %v6839 = vunpack.c.l.bf16 %v6835
    %v6840 = vunpack.c.h.bf16 %v6835
    %v6841 = vunpack.c.l.bf16 %v6836
    %v6842 = vunpack.c.h.bf16 %v6836
    %v6843 = vunpack.c.l.bf16 %v6837
    %v6844 = vunpack.c.h.bf16 %v6837
    %v6845 = vunpack.c.l.bf16 %v6838
    %v6846 = vunpack.c.h.bf16 %v6838
    %v6847 = vsub.f32 %v6827, %v6839
    %v6848 = vsub.f32 %v6828, %v6840
    %v6849 = vsub.f32 %v6829, %v6841
    %v6850 = vsub.f32 %v6830, %v6842
    %v6851 = vsub.f32 %v6831, %v6843
    %v6852 = vsub.f32 %v6832, %v6844
    %v6853 = vsub.f32 %v6833, %v6845
    %v6854 = vsub.f32 %v6834, %v6846
    %v6855 = vpack.c.bf16 %v6848, %v6847
    %v6856 = vpack.c.bf16 %v6850, %v6849
    %v6857 = vpack.c.bf16 %v6852, %v6851
    %v6858 = vpack.c.bf16 %v6854, %v6853
    %v6859 = vld [vmem:[%s1 + $0x180] sm:$0xf]
    %v6860 = vld [vmem:[%s1 + $0x184] sm:$0xf]
    %v6861 = vld [vmem:[%s1 + $0x188] sm:$0xf]
    %v6862 = vld [vmem:[%s1 + $0x18c] sm:$0xf]
    %v6863 = vld [vmem:[%s1 + $0x190] sm:$0xf]
    %v6864 = vld [vmem:[%s1 + $0x194] sm:$0xf]
    %v6865 = vld [vmem:[%s1 + $0x198] sm:$0xf]
    %v6866 = vld [vmem:[%s1 + $0x19c] sm:$0xf]
    %v6867 = vld [vmem:[%s1 + $0x1a0] sm:$0xf]
    %v6868 = vld [vmem:[%s1 + $0x1a4] sm:$0xf]
    %v6869 = vld [vmem:[%s1 + $0x1a8] sm:$0xf]
    %v6870 = vld [vmem:[%s1 + $0x1ac] sm:$0xf]
    %v6871 = vld [vmem:[%s1 + $0x1b0] sm:$0xf]
    %v6872 = vld [vmem:[%s1 + $0x1b4] sm:$0xf]
    %v6873 = vld [vmem:[%s1 + $0x1b8] sm:$0xf]
    %v6874 = vld [vmem:[%s1 + $0x1bc] sm:$0xf]
    %v6875 = vld [vmem:[%s1 + $0x1c0] sm:$0xf]
    %v6876 = vld [vmem:[%s1 + $0x1c4] sm:$0xf]
    %v6877 = vld [vmem:[%s1 + $0x1c8] sm:$0xf]
    %v6878 = vld [vmem:[%s1 + $0x1cc] sm:$0xf]
    %v6879 = vld [vmem:[%s1 + $0x1d0] sm:$0xf]
    %v6880 = vld [vmem:[%s1 + $0x1d4] sm:$0xf]
    %v6881 = vld [vmem:[%s1 + $0x1d8] sm:$0xf]
    %v6882 = vld [vmem:[%s1 + $0x1dc] sm:$0xf]
    %v6883 = vld [vmem:[%s1 + $0x1e0] sm:$0xf]
    %v6884 = vld [vmem:[%s1 + $0x1e4] sm:$0xf]
    %v6885 = vld [vmem:[%s1 + $0x1e8] sm:$0xf]
    %v6886 = vld [vmem:[%s1 + $0x1ec] sm:$0xf]
    %v6887 = vld [vmem:[%s1 + $0x1f0] sm:$0xf]
    %v6888 = vld [vmem:[%s1 + $0x1f4] sm:$0xf]
    %v6889 = vld [vmem:[%s1 + $0x1f8] sm:$0xf]
    %v6890 = vld [vmem:[%s1 + $0x1fc] sm:$0xf]
    %v6891 = vld [vmem:[%s1 + $0x200] sm:$0xf]
    %v6892 = vld [vmem:[%s1 + $0x204] sm:$0xf]
    %v6893 = vld [vmem:[%s1 + $0x208] sm:$0xf]
    %v6894 = vld [vmem:[%s1 + $0x20c] sm:$0xf]
    %v6895 = vld [vmem:[%s1 + $0x210] sm:$0xf]
    %v6896 = vld [vmem:[%s1 + $0x214] sm:$0xf]
    %v6897 = vld [vmem:[%s1 + $0x218] sm:$0xf]
    %v6898 = vld [vmem:[%s1 + $0x21c] sm:$0xf]
    %v6899 = vld [vmem:[%s1 + $0x220] sm:$0xf]
    %v6900 = vld [vmem:[%s1 + $0x224] sm:$0xf]
    %v6901 = vld [vmem:[%s1 + $0x228] sm:$0xf]
    %v6902 = vld [vmem:[%s1 + $0x22c] sm:$0xf]
    %v6903 = vld [vmem:[%s1 + $0x230] sm:$0xf]
    %v6904 = vld [vmem:[%s1 + $0x234] sm:$0xf]
    %v6905 = vld [vmem:[%s1 + $0x238] sm:$0xf]
    %v6906 = vld [vmem:[%s1 + $0x23c] sm:$0xf]
    %v6907 = vld [vmem:[%s1 + $0x240] sm:$0xf]
    %v6908 = vld [vmem:[%s1 + $0x244] sm:$0xf]
    %v6909 = vld [vmem:[%s1 + $0x248] sm:$0xf]
    %v6910 = vld [vmem:[%s1 + $0x24c] sm:$0xf]
    %v6911 = vld [vmem:[%s1 + $0x250] sm:$0xf]
    %v6912 = vld [vmem:[%s1 + $0x254] sm:$0xf]
    %v6913 = vld [vmem:[%s1 + $0x258] sm:$0xf]
    %v6914 = vld [vmem:[%s1 + $0x25c] sm:$0xf]
    %v6915 = vld [vmem:[%s1 + $0x260] sm:$0xf]
    %v6916 = vld [vmem:[%s1 + $0x264] sm:$0xf]
    %v6917 = vld [vmem:[%s1 + $0x268] sm:$0xf]
    %v6918 = vld [vmem:[%s1 + $0x26c] sm:$0xf]
    %v6919 = vld [vmem:[%s1 + $0x270] sm:$0xf]
    %v6920 = vld [vmem:[%s1 + $0x274] sm:$0xf]
    %v6921 = vld [vmem:[%s1 + $0x278] sm:$0xf]
    %v6922 = vld [vmem:[%s1 + $0x27c] sm:$0xf]
    %v6923 = vld [vmem:[%s1 + $0x280] sm:$0xf]
    %v6924 = vld [vmem:[%s1 + $0x284] sm:$0xf]
    %v6925 = vld [vmem:[%s1 + $0x288] sm:$0xf]
    %v6926 = vld [vmem:[%s1 + $0x28c] sm:$0xf]
    %v6927 = vld [vmem:[%s1 + $0x290] sm:$0xf]
    %v6928 = vld [vmem:[%s1 + $0x294] sm:$0xf]
    %v6929 = vld [vmem:[%s1 + $0x298] sm:$0xf]
    %v6930 = vld [vmem:[%s1 + $0x29c] sm:$0xf]
    %v6931 = vld [vmem:[%s1 + $0x2a0] sm:$0xf]
    %v6932 = vld [vmem:[%s1 + $0x2a4] sm:$0xf]
    %v6933 = vld [vmem:[%s1 + $0x2a8] sm:$0xf]
    %v6934 = vld [vmem:[%s1 + $0x2ac] sm:$0xf]
    %v6935 = vld [vmem:[%s1 + $0x2b0] sm:$0xf]
    %v6936 = vld [vmem:[%s1 + $0x2b4] sm:$0xf]
    %v6937 = vld [vmem:[%s1 + $0x2b8] sm:$0xf]
    %v6938 = vld [vmem:[%s1 + $0x2bc] sm:$0xf]
    %v6939 = vld [vmem:[%s1 + $0x2c0] sm:$0xf]
    %v6940 = vld [vmem:[%s1 + $0x2c4] sm:$0xf]
    %v6941 = vld [vmem:[%s1 + $0x2c8] sm:$0xf]
    %v6942 = vld [vmem:[%s1 + $0x2cc] sm:$0xf]
    %v6943 = vld [vmem:[%s1 + $0x2d0] sm:$0xf]
    %v6944 = vld [vmem:[%s1 + $0x2d4] sm:$0xf]
    %v6945 = vld [vmem:[%s1 + $0x2d8] sm:$0xf]
    %v6946 = vld [vmem:[%s1 + $0x2dc] sm:$0xf]
    %v6947 = vld [vmem:[%s1 + $0x2e0] sm:$0xf]
    %v6948 = vld [vmem:[%s1 + $0x2e4] sm:$0xf]
    %v6949 = vld [vmem:[%s1 + $0x2e8] sm:$0xf]
    %v6950 = vld [vmem:[%s1 + $0x2ec] sm:$0xf]
    %v6951 = vld [vmem:[%s1 + $0x2f0] sm:$0xf]
    %v6952 = vld [vmem:[%s1 + $0x2f4] sm:$0xf]
    %v6953 = vld [vmem:[%s1 + $0x2f8] sm:$0xf]
    %v6954 = vld [vmem:[%s1 + $0x2fc] sm:$0xf]
    %v7051 = vunpack.c.l.b16 %v6859
    %v7052 = vunpack.c.l.b16 %v6860
    %v7053 = vunpack.c.l.b16 %v6861
    %v7054 = vunpack.c.l.b16 %v6862
    %v7055 = vunpack.c.l.b16 %v6863
    %v7056 = vunpack.c.l.b16 %v6864
    %v7057 = vunpack.c.l.b16 %v6865
    %v7058 = vunpack.c.l.b16 %v6866
    %v7059 = vunpack.c.l.b16 %v6867
    %v7060 = vunpack.c.l.b16 %v6868
    %v7061 = vunpack.c.l.b16 %v6869
    %v7062 = vunpack.c.l.b16 %v6870
    %v7063 = vunpack.c.l.b16 %v6871
    %v7064 = vunpack.c.l.b16 %v6872
    %v7065 = vunpack.c.l.b16 %v6873
    %v7066 = vunpack.c.l.b16 %v6874
    %v7067 = vunpack.c.l.b16 %v6875
    %v7068 = vunpack.c.l.b16 %v6876
    %v7069 = vunpack.c.l.b16 %v6877
    %v7070 = vunpack.c.l.b16 %v6878
    %v7071 = vunpack.c.l.b16 %v6879
    %v7072 = vunpack.c.l.b16 %v6880
    %v7073 = vunpack.c.l.b16 %v6881
    %v7074 = vunpack.c.l.b16 %v6882
    %v7075 = vunpack.c.l.b16 %v6883
    %v7076 = vunpack.c.l.b16 %v6884
    %v7077 = vunpack.c.l.b16 %v6885
    %v7078 = vunpack.c.l.b16 %v6886
    %v7079 = vunpack.c.l.b16 %v6887
    %v7080 = vunpack.c.l.b16 %v6888
    %v7081 = vunpack.c.l.b16 %v6889
    %v7082 = vunpack.c.l.b16 %v6890
    %v7083 = vunpack.c.l.b16 %v6891
    %v7084 = vunpack.c.l.b16 %v6892
    %v7085 = vunpack.c.l.b16 %v6893
    %v7086 = vunpack.c.l.b16 %v6894
    %v7087 = vunpack.c.l.b16 %v6895
    %v7088 = vunpack.c.l.b16 %v6896
    %v7089 = vunpack.c.l.b16 %v6897
    %v7090 = vunpack.c.l.b16 %v6898
    %v7091 = vunpack.c.l.b16 %v6899
    %v7092 = vunpack.c.l.b16 %v6900
    %v7093 = vunpack.c.l.b16 %v6901
    %v7094 = vunpack.c.l.b16 %v6902
    %v7095 = vunpack.c.l.b16 %v6903
    %v7096 = vunpack.c.l.b16 %v6904
    %v7097 = vunpack.c.l.b16 %v6905
    %v7098 = vunpack.c.l.b16 %v6906
    %v7099 = vunpack.c.l.b16 %v6907
    %v7100 = vunpack.c.l.b16 %v6908
    %v7101 = vunpack.c.l.b16 %v6909
    %v7102 = vunpack.c.l.b16 %v6910
    %v7103 = vunpack.c.l.b16 %v6911
    %v7104 = vunpack.c.l.b16 %v6912
    %v7105 = vunpack.c.l.b16 %v6913
    %v7106 = vunpack.c.l.b16 %v6914
    %v7107 = vunpack.c.l.b16 %v6915
    %v7108 = vunpack.c.l.b16 %v6916
    %v7109 = vunpack.c.l.b16 %v6917
    %v7110 = vunpack.c.l.b16 %v6918
    %v7111 = vunpack.c.l.b16 %v6919
    %v7112 = vunpack.c.l.b16 %v6920
    %v7113 = vunpack.c.l.b16 %v6921
    %v7114 = vunpack.c.l.b16 %v6922
    %v7115 = vunpack.c.l.b16 %v6923
    %v7116 = vunpack.c.l.b16 %v6924
    %v7117 = vunpack.c.l.b16 %v6925
    %v7118 = vunpack.c.l.b16 %v6926
    %v7119 = vunpack.c.l.b16 %v6927
    %v7120 = vunpack.c.l.b16 %v6928
    %v7121 = vunpack.c.l.b16 %v6929
    %v7122 = vunpack.c.l.b16 %v6930
    %v7123 = vunpack.c.l.b16 %v6931
    %v7124 = vunpack.c.l.b16 %v6932
    %v7125 = vunpack.c.l.b16 %v6933
    %v7126 = vunpack.c.l.b16 %v6934
    %v7127 = vunpack.c.l.b16 %v6935
    %v7128 = vunpack.c.l.b16 %v6936
    %v7129 = vunpack.c.l.b16 %v6937
    %v7130 = vunpack.c.l.b16 %v6938
    %v7131 = vunpack.c.l.b16 %v6939
    %v7132 = vunpack.c.l.b16 %v6940
    %v7133 = vunpack.c.l.b16 %v6941
    %v7134 = vunpack.c.l.b16 %v6942
    %v7135 = vunpack.c.l.b16 %v6943
    %v7136 = vunpack.c.l.b16 %v6944
    %v7137 = vunpack.c.l.b16 %v6945
    %v7138 = vunpack.c.l.b16 %v6946
    %v7139 = vunpack.c.l.b16 %v6947
    %v7140 = vunpack.c.l.b16 %v6948
    %v7141 = vunpack.c.l.b16 %v6949
    %v7142 = vunpack.c.l.b16 %v6950
    %v7143 = vunpack.c.l.b16 %v6951
    %v7144 = vunpack.c.l.b16 %v6952
    %v7145 = vunpack.c.l.b16 %v6953
    %v7146 = vunpack.c.l.b16 %v6954
    %v7147 = vpack.c.b16 %v7052, %v7051
    %v7148 = vpack.c.b16 %v7054, %v7053
    %v7149 = vpack.c.b16 %v7056, %v7055
    %v7150 = vpack.c.b16 %v7058, %v7057
    %v7151 = vpack.c.b16 %v7060, %v7059
    %v7152 = vpack.c.b16 %v7062, %v7061
    %v7153 = vpack.c.b16 %v7064, %v7063
    %v7154 = vpack.c.b16 %v7066, %v7065
    %v7155 = vpack.c.b16 %v7068, %v7067
    %v7156 = vpack.c.b16 %v7070, %v7069
    %v7157 = vpack.c.b16 %v7072, %v7071
    %v7158 = vpack.c.b16 %v7074, %v7073
    %v7159 = vpack.c.b16 %v7076, %v7075
    %v7160 = vpack.c.b16 %v7078, %v7077
    %v7161 = vpack.c.b16 %v7080, %v7079
    %v7162 = vpack.c.b16 %v7082, %v7081
    %v7163 = vpack.c.b16 %v7084, %v7083
    %v7164 = vpack.c.b16 %v7086, %v7085
    %v7165 = vpack.c.b16 %v7088, %v7087
    %v7166 = vpack.c.b16 %v7090, %v7089
    %v7167 = vpack.c.b16 %v7092, %v7091
    %v7168 = vpack.c.b16 %v7094, %v7093
    %v7169 = vpack.c.b16 %v7096, %v7095
    %v7170 = vpack.c.b16 %v7098, %v7097
    %v7171 = vpack.c.b16 %v7100, %v7099
    %v7172 = vpack.c.b16 %v7102, %v7101
    %v7173 = vpack.c.b16 %v7104, %v7103
    %v7174 = vpack.c.b16 %v7106, %v7105
    %v7175 = vpack.c.b16 %v7108, %v7107
    %v7176 = vpack.c.b16 %v7110, %v7109
    %v7177 = vpack.c.b16 %v7112, %v7111
    %v7178 = vpack.c.b16 %v7114, %v7113
    %v7179 = vpack.c.b16 %v7116, %v7115
    %v7180 = vpack.c.b16 %v7118, %v7117
    %v7181 = vpack.c.b16 %v7120, %v7119
    %v7182 = vpack.c.b16 %v7122, %v7121
    %v7183 = vpack.c.b16 %v7124, %v7123
    %v7184 = vpack.c.b16 %v7126, %v7125
    %v7185 = vpack.c.b16 %v7128, %v7127
    %v7186 = vpack.c.b16 %v7130, %v7129
    %v7187 = vpack.c.b16 %v7132, %v7131
    %v7188 = vpack.c.b16 %v7134, %v7133
    %v7189 = vpack.c.b16 %v7136, %v7135
    %v7190 = vpack.c.b16 %v7138, %v7137
    %v7191 = vpack.c.b16 %v7140, %v7139
    %v7192 = vpack.c.b16 %v7142, %v7141
    %v7193 = vpack.c.b16 %v7144, %v7143
    %v7194 = vpack.c.b16 %v7146, %v7145
    %v7196 = vsel %vm2099, %v7147, 0
    %v7199 = vsel %vm2099, %v7148, 0
    %v7202 = vsel %vm2099, %v7149, 0
    %v7205 = vsel %vm2099, %v7150, 0
    %v7208 = vsel %vm2099, %v7151, 0
    %v7211 = vsel %vm2099, %v7152, 0
    %v7214 = vsel %vm2099, %v7153, 0
    %v7217 = vsel %vm2099, %v7154, 0
    %v7220 = vsel %vm2099, %v7155, 0
    %v7223 = vsel %vm2099, %v7156, 0
    %v7226 = vsel %vm2099, %v7157, 0
    %v7229 = vsel %vm2099, %v7158, 0
    %v7232 = vsel %vm2099, %v7159, 0
    %v7235 = vsel %vm2099, %v7160, 0
    %v7238 = vsel %vm2099, %v7161, 0
    %v7241 = vsel %vm2099, %v7162, 0
    %v7244 = vsel %vm2099, %v7163, 0
    %v7247 = vsel %vm2099, %v7164, 0
    %v7250 = vsel %vm2099, %v7165, 0
    %v7253 = vsel %vm2099, %v7166, 0
    %v7256 = vsel %vm2099, %v7167, 0
    %v7259 = vsel %vm2099, %v7168, 0
    %v7262 = vsel %vm2099, %v7169, 0
    %v7265 = vsel %vm2099, %v7170, 0
    %v7268 = vsel %vm2099, %v7171, 0
    %v7271 = vsel %vm2099, %v7172, 0
    %v7274 = vsel %vm2099, %v7173, 0
    %v7277 = vsel %vm2099, %v7174, 0
    %v7280 = vsel %vm2099, %v7175, 0
    %v7283 = vsel %vm2099, %v7176, 0
    %v7286 = vsel %vm2099, %v7177, 0
    %v7289 = vsel %vm2099, %v7178, 0
    %v7292 = vsel %vm2099, %v7179, 0
    %v7295 = vsel %vm2099, %v7180, 0
    %v7298 = vsel %vm2099, %v7181, 0
    %v7301 = vsel %vm2099, %v7182, 0
    %v7304 = vsel %vm2099, %v7183, 0
    %v7307 = vsel %vm2099, %v7184, 0
    %v7310 = vsel %vm2099, %v7185, 0
    %v7313 = vsel %vm2099, %v7186, 0
    %v7316 = vsel %vm2099, %v7187, 0
    %v7319 = vsel %vm2099, %v7188, 0
    %v7322 = vsel %vm2099, %v7189, 0
    %v7325 = vsel %vm2099, %v7190, 0
    %v7328 = vsel %vm2099, %v7191, 0
    %v7331 = vsel %vm2099, %v7192, 0
    %v7334 = vsel %vm2099, %v7193, 0
    %v7337 = vsel %vm2099, %v7194, 0
    %7339 = vmatprep.subr.bf16.mxu0 0
    %7340 = vmatpush1.bf16.msra.mxu0 0
    %7341 = vmatprep.subr.bf16.mxu0 0
    %7342 = vmatpush1.bf16.msra.mxu0 0
    %7343 = vmatprep.subr.bf16.mxu0 0
    %7344 = vmatpush1.bf16.msra.mxu0 0
    %7345 = vmatprep.subr.bf16.mxu0 0
    %7346 = vmatpush1.bf16.msra.mxu0 0
    %7347 = vmatprep.subr.bf16.mxu0 0
    %7348 = vmatpush1.bf16.msra.mxu0 %v6858
    %7349 = vmatprep.subr.bf16.mxu0 0
    %7350 = vmatpush1.bf16.msra.mxu0 %v6857
    %7351 = vmatprep.subr.bf16.mxu0 0
    %7352 = vmatpush1.bf16.msra.mxu0 %v6856
    %7353 = vmatprep.subr.bf16.mxu0 0
    %7354 = vmatpush1.bf16.msra.mxu0 %v6855
    %7355 = vmatprep.subr.bf16.mxu0 0
    %7356 = vmatpush2.bf16.msra.mxu0 0
    %7357 = vmatprep.subr.bf16.mxu0 0
    %7358 = vmatpush2.bf16.msra.mxu0 0
    %7359 = vmatprep.subr.bf16.mxu0 0
    %7360 = vmatpush2.bf16.msra.mxu0 0
    %7361 = vmatprep.subr.bf16.mxu0 0
    %7362 = vmatpush2.bf16.msra.mxu0 0
    %7363 = vmatprep.subr.bf16.mxu0 0
    %7364 = vmatpush2.bf16.msra.mxu0 0
    %7365 = vmatprep.subr.bf16.mxu0 0
    %7366 = vmatpush2.bf16.msra.mxu0 0
    %7367 = vmatprep.subr.bf16.mxu0 0
    %7368 = vmatpush2.bf16.msra.mxu0 0
    %7369 = vmatprep.subr.bf16.mxu0 0
    %7370 = vmatpush2.bf16.msra.mxu0 0
    %7371 = vmatprep.mubr.bf16.mxu0 0
    %7372 = vmatmul.mubr.bf16.gmra.mxu0 %v7196
    %v7373 = vpop.f32.mrf.mxu0
    %v7374 = vadd.f32 0.0, %v7373
    %v7375 = vpop.f32.mrf.mxu0
    %v7376 = vpop.f32.mrf.mxu0
    %v7377 = vadd.f32 0.0, %v7376
    %v7378 = vpop.f32.mrf.mxu0
    %7379 = vmatprep.mubr.bf16.mxu0 0
    %7380 = vmatmul.mubr.bf16.gmra.mxu0 %v7199
    %v7381 = vpop.f32.mrf.mxu0
    %v7382 = vadd.f32 0.0, %v7381
    %v7383 = vpop.f32.mrf.mxu0
    %v7384 = vpop.f32.mrf.mxu0
    %v7385 = vadd.f32 0.0, %v7384
    %v7386 = vpop.f32.mrf.mxu0
    %7387 = vmatprep.mubr.bf16.mxu0 0
    %7388 = vmatmul.mubr.bf16.gmra.mxu0 %v7202
    %v7389 = vpop.f32.mrf.mxu0
    %v7390 = vadd.f32 0.0, %v7389
    %v7391 = vpop.f32.mrf.mxu0
    %v7392 = vpop.f32.mrf.mxu0
    %v7393 = vadd.f32 0.0, %v7392
    %v7394 = vpop.f32.mrf.mxu0
    %7395 = vmatprep.mubr.bf16.mxu0 0
    %7396 = vmatmul.mubr.bf16.gmra.mxu0 %v7205
    %v7397 = vpop.f32.mrf.mxu0
    %v7398 = vadd.f32 0.0, %v7397
    %v7399 = vpop.f32.mrf.mxu0
    %v7400 = vpop.f32.mrf.mxu0
    %v7401 = vadd.f32 0.0, %v7400
    %v7402 = vpop.f32.mrf.mxu0
    %7403 = vmatprep.mubr.bf16.mxu0 0
    %7404 = vmatmul.mubr.bf16.gmra.mxu0 %v7208
    %v7405 = vpop.f32.mrf.mxu0
    %v7406 = vadd.f32 0.0, %v7405
    %v7407 = vpop.f32.mrf.mxu0
    %v7408 = vpop.f32.mrf.mxu0
    %v7409 = vadd.f32 0.0, %v7408
    %v7410 = vpop.f32.mrf.mxu0
    %7411 = vmatprep.mubr.bf16.mxu0 0
    %7412 = vmatmul.mubr.bf16.gmra.mxu0 %v7211
    %v7413 = vpop.f32.mrf.mxu0
    %v7414 = vadd.f32 0.0, %v7413
    %v7415 = vpop.f32.mrf.mxu0
    %v7416 = vpop.f32.mrf.mxu0
    %v7417 = vadd.f32 0.0, %v7416
    %v7418 = vpop.f32.mrf.mxu0
    %7419 = vmatprep.mubr.bf16.mxu0 0
    %7420 = vmatmul.mubr.bf16.gmra.mxu0 %v7214
    %v7421 = vpop.f32.mrf.mxu0
    %v7422 = vadd.f32 0.0, %v7421
    %v7423 = vpop.f32.mrf.mxu0
    %v7424 = vpop.f32.mrf.mxu0
    %v7425 = vadd.f32 0.0, %v7424
    %v7426 = vpop.f32.mrf.mxu0
    %7427 = vmatprep.mubr.bf16.mxu0 0
    %7428 = vmatmul.mubr.bf16.gmra.mxu0 %v7217
    %v7429 = vpop.f32.mrf.mxu0
    %v7430 = vadd.f32 0.0, %v7429
    %v7431 = vpop.f32.mrf.mxu0
    %v7432 = vpop.f32.mrf.mxu0
    %v7433 = vadd.f32 0.0, %v7432
    %v7434 = vpop.f32.mrf.mxu0
    %7435 = vmatprep.mubr.bf16.mxu0 0
    %7436 = vmatmul.mubr.bf16.gmra.mxu0 %v7220
    %v7437 = vpop.f32.mrf.mxu0
    %v7438 = vadd.f32 0.0, %v7437
    %v7439 = vpop.f32.mrf.mxu0
    %v7440 = vpop.f32.mrf.mxu0
    %v7441 = vadd.f32 0.0, %v7440
    %v7442 = vpop.f32.mrf.mxu0
    %7443 = vmatprep.mubr.bf16.mxu0 0
    %7444 = vmatmul.mubr.bf16.gmra.mxu0 %v7223
    %v7445 = vpop.f32.mrf.mxu0
    %v7446 = vadd.f32 0.0, %v7445
    %v7447 = vpop.f32.mrf.mxu0
    %v7448 = vpop.f32.mrf.mxu0
    %v7449 = vadd.f32 0.0, %v7448
    %v7450 = vpop.f32.mrf.mxu0
    %7451 = vmatprep.mubr.bf16.mxu0 0
    %7452 = vmatmul.mubr.bf16.gmra.mxu0 %v7226
    %v7453 = vpop.f32.mrf.mxu0
    %v7454 = vadd.f32 0.0, %v7453
    %v7455 = vpop.f32.mrf.mxu0
    %v7456 = vpop.f32.mrf.mxu0
    %v7457 = vadd.f32 0.0, %v7456
    %v7458 = vpop.f32.mrf.mxu0
    %7459 = vmatprep.mubr.bf16.mxu0 0
    %7460 = vmatmul.mubr.bf16.gmra.mxu0 %v7229
    %v7461 = vpop.f32.mrf.mxu0
    %v7462 = vadd.f32 0.0, %v7461
    %v7463 = vpop.f32.mrf.mxu0
    %v7464 = vpop.f32.mrf.mxu0
    %v7465 = vadd.f32 0.0, %v7464
    %v7466 = vpop.f32.mrf.mxu0
    %7467 = vmatprep.mubr.bf16.mxu0 0
    %7468 = vmatmul.mubr.bf16.gmra.mxu0 %v7232
    %v7469 = vpop.f32.mrf.mxu0
    %v7470 = vadd.f32 0.0, %v7469
    %v7471 = vpop.f32.mrf.mxu0
    %v7472 = vpop.f32.mrf.mxu0
    %v7473 = vadd.f32 0.0, %v7472
    %v7474 = vpop.f32.mrf.mxu0
    %7475 = vmatprep.mubr.bf16.mxu0 0
    %7476 = vmatmul.mubr.bf16.gmra.mxu0 %v7235
    %v7477 = vpop.f32.mrf.mxu0
    %v7478 = vadd.f32 0.0, %v7477
    %v7479 = vpop.f32.mrf.mxu0
    %v7480 = vpop.f32.mrf.mxu0
    %v7481 = vadd.f32 0.0, %v7480
    %v7482 = vpop.f32.mrf.mxu0
    %7483 = vmatprep.mubr.bf16.mxu0 0
    %7484 = vmatmul.mubr.bf16.gmra.mxu0 %v7238
    %v7485 = vpop.f32.mrf.mxu0
    %v7486 = vadd.f32 0.0, %v7485
    %v7487 = vpop.f32.mrf.mxu0
    %v7488 = vpop.f32.mrf.mxu0
    %v7489 = vadd.f32 0.0, %v7488
    %v7490 = vpop.f32.mrf.mxu0
    %7491 = vmatprep.mubr.bf16.mxu0 0
    %7492 = vmatmul.mubr.bf16.gmra.mxu0 %v7241
    %v7493 = vpop.f32.mrf.mxu0
    %v7494 = vadd.f32 0.0, %v7493
    %v7495 = vpop.f32.mrf.mxu0
    %v7496 = vpop.f32.mrf.mxu0
    %v7497 = vadd.f32 0.0, %v7496
    %v7498 = vpop.f32.mrf.mxu0
    %7499 = vmatprep.mubr.bf16.mxu0 0
    %7500 = vmatmul.mubr.bf16.gmra.mxu0 %v7244
    %v7501 = vpop.f32.mrf.mxu0
    %v7502 = vadd.f32 0.0, %v7501
    %v7503 = vpop.f32.mrf.mxu0
    %v7504 = vpop.f32.mrf.mxu0
    %v7505 = vadd.f32 0.0, %v7504
    %v7506 = vpop.f32.mrf.mxu0
    %7507 = vmatprep.mubr.bf16.mxu0 0
    %7508 = vmatmul.mubr.bf16.gmra.mxu0 %v7247
    %v7509 = vpop.f32.mrf.mxu0
    %v7510 = vadd.f32 0.0, %v7509
    %v7511 = vpop.f32.mrf.mxu0
    %v7512 = vpop.f32.mrf.mxu0
    %v7513 = vadd.f32 0.0, %v7512
    %v7514 = vpop.f32.mrf.mxu0
    %7515 = vmatprep.mubr.bf16.mxu0 0
    %7516 = vmatmul.mubr.bf16.gmra.mxu0 %v7250
    %v7517 = vpop.f32.mrf.mxu0
    %v7518 = vadd.f32 0.0, %v7517
    %v7519 = vpop.f32.mrf.mxu0
    %v7520 = vpop.f32.mrf.mxu0
    %v7521 = vadd.f32 0.0, %v7520
    %v7522 = vpop.f32.mrf.mxu0
    %7523 = vmatprep.mubr.bf16.mxu0 0
    %7524 = vmatmul.mubr.bf16.gmra.mxu0 %v7253
    %v7525 = vpop.f32.mrf.mxu0
    %v7526 = vadd.f32 0.0, %v7525
    %v7527 = vpop.f32.mrf.mxu0
    %v7528 = vpop.f32.mrf.mxu0
    %v7529 = vadd.f32 0.0, %v7528
    %v7530 = vpop.f32.mrf.mxu0
    %7531 = vmatprep.mubr.bf16.mxu0 0
    %7532 = vmatmul.mubr.bf16.gmra.mxu0 %v7256
    %v7533 = vpop.f32.mrf.mxu0
    %v7534 = vadd.f32 0.0, %v7533
    %v7535 = vpop.f32.mrf.mxu0
    %v7536 = vpop.f32.mrf.mxu0
    %v7537 = vadd.f32 0.0, %v7536
    %v7538 = vpop.f32.mrf.mxu0
    %7539 = vmatprep.mubr.bf16.mxu0 0
    %7540 = vmatmul.mubr.bf16.gmra.mxu0 %v7259
    %v7541 = vpop.f32.mrf.mxu0
    %v7542 = vadd.f32 0.0, %v7541
    %v7543 = vpop.f32.mrf.mxu0
    %v7544 = vpop.f32.mrf.mxu0
    %v7545 = vadd.f32 0.0, %v7544
    %v7546 = vpop.f32.mrf.mxu0
    %7547 = vmatprep.mubr.bf16.mxu0 0
    %7548 = vmatmul.mubr.bf16.gmra.mxu0 %v7262
    %v7549 = vpop.f32.mrf.mxu0
    %v7550 = vadd.f32 0.0, %v7549
    %v7551 = vpop.f32.mrf.mxu0
    %v7552 = vpop.f32.mrf.mxu0
    %v7553 = vadd.f32 0.0, %v7552
    %v7554 = vpop.f32.mrf.mxu0
    %7555 = vmatprep.mubr.bf16.mxu0 0
    %7556 = vmatmul.mubr.bf16.gmra.mxu0 %v7265
    %v7557 = vpop.f32.mrf.mxu0
    %v7558 = vadd.f32 0.0, %v7557
    %v7559 = vpop.f32.mrf.mxu0
    %v7560 = vpop.f32.mrf.mxu0
    %v7561 = vadd.f32 0.0, %v7560
    %v7562 = vpop.f32.mrf.mxu0
    %7563 = vmatprep.mubr.bf16.mxu0 0
    %7564 = vmatmul.mubr.bf16.gmra.mxu0 %v7268
    %v7565 = vpop.f32.mrf.mxu0
    %v7566 = vadd.f32 0.0, %v7565
    %v7567 = vpop.f32.mrf.mxu0
    %v7568 = vpop.f32.mrf.mxu0
    %v7569 = vadd.f32 0.0, %v7568
    %v7570 = vpop.f32.mrf.mxu0
    %7571 = vmatprep.mubr.bf16.mxu0 0
    %7572 = vmatmul.mubr.bf16.gmra.mxu0 %v7271
    %v7573 = vpop.f32.mrf.mxu0
    %v7574 = vadd.f32 0.0, %v7573
    %v7575 = vpop.f32.mrf.mxu0
    %v7576 = vpop.f32.mrf.mxu0
    %v7577 = vadd.f32 0.0, %v7576
    %v7578 = vpop.f32.mrf.mxu0
    %7579 = vmatprep.mubr.bf16.mxu0 0
    %7580 = vmatmul.mubr.bf16.gmra.mxu0 %v7274
    %v7581 = vpop.f32.mrf.mxu0
    %v7582 = vadd.f32 0.0, %v7581
    %v7583 = vpop.f32.mrf.mxu0
    %v7584 = vpop.f32.mrf.mxu0
    %v7585 = vadd.f32 0.0, %v7584
    %v7586 = vpop.f32.mrf.mxu0
    %7587 = vmatprep.mubr.bf16.mxu0 0
    %7588 = vmatmul.mubr.bf16.gmra.mxu0 %v7277
    %v7589 = vpop.f32.mrf.mxu0
    %v7590 = vadd.f32 0.0, %v7589
    %v7591 = vpop.f32.mrf.mxu0
    %v7592 = vpop.f32.mrf.mxu0
    %v7593 = vadd.f32 0.0, %v7592
    %v7594 = vpop.f32.mrf.mxu0
    %7595 = vmatprep.mubr.bf16.mxu0 0
    %7596 = vmatmul.mubr.bf16.gmra.mxu0 %v7280
    %v7597 = vpop.f32.mrf.mxu0
    %v7598 = vadd.f32 0.0, %v7597
    %v7599 = vpop.f32.mrf.mxu0
    %v7600 = vpop.f32.mrf.mxu0
    %v7601 = vadd.f32 0.0, %v7600
    %v7602 = vpop.f32.mrf.mxu0
    %7603 = vmatprep.mubr.bf16.mxu0 0
    %7604 = vmatmul.mubr.bf16.gmra.mxu0 %v7283
    %v7605 = vpop.f32.mrf.mxu0
    %v7606 = vadd.f32 0.0, %v7605
    %v7607 = vpop.f32.mrf.mxu0
    %v7608 = vpop.f32.mrf.mxu0
    %v7609 = vadd.f32 0.0, %v7608
    %v7610 = vpop.f32.mrf.mxu0
    %7611 = vmatprep.mubr.bf16.mxu0 0
    %7612 = vmatmul.mubr.bf16.gmra.mxu0 %v7286
    %v7613 = vpop.f32.mrf.mxu0
    %v7614 = vadd.f32 0.0, %v7613
    %v7615 = vpop.f32.mrf.mxu0
    %v7616 = vpop.f32.mrf.mxu0
    %v7617 = vadd.f32 0.0, %v7616
    %v7618 = vpop.f32.mrf.mxu0
    %7619 = vmatprep.mubr.bf16.mxu0 0
    %7620 = vmatmul.mubr.bf16.gmra.mxu0 %v7289
    %v7621 = vpop.f32.mrf.mxu0
    %v7622 = vadd.f32 0.0, %v7621
    %v7623 = vpop.f32.mrf.mxu0
    %v7624 = vpop.f32.mrf.mxu0
    %v7625 = vadd.f32 0.0, %v7624
    %v7626 = vpop.f32.mrf.mxu0
    %7627 = vmatprep.mubr.bf16.mxu0 0
    %7628 = vmatmul.mubr.bf16.gmra.mxu0 %v7292
    %v7629 = vpop.f32.mrf.mxu0
    %v7630 = vadd.f32 0.0, %v7629
    %v7631 = vpop.f32.mrf.mxu0
    %v7632 = vpop.f32.mrf.mxu0
    %v7633 = vadd.f32 0.0, %v7632
    %v7634 = vpop.f32.mrf.mxu0
    %7635 = vmatprep.mubr.bf16.mxu0 0
    %7636 = vmatmul.mubr.bf16.gmra.mxu0 %v7295
    %v7637 = vpop.f32.mrf.mxu0
    %v7638 = vadd.f32 0.0, %v7637
    %v7639 = vpop.f32.mrf.mxu0
    %v7640 = vpop.f32.mrf.mxu0
    %v7641 = vadd.f32 0.0, %v7640
    %v7642 = vpop.f32.mrf.mxu0
    %7643 = vmatprep.mubr.bf16.mxu0 0
    %7644 = vmatmul.mubr.bf16.gmra.mxu0 %v7298
    %v7645 = vpop.f32.mrf.mxu0
    %v7646 = vadd.f32 0.0, %v7645
    %v7647 = vpop.f32.mrf.mxu0
    %v7648 = vpop.f32.mrf.mxu0
    %v7649 = vadd.f32 0.0, %v7648
    %v7650 = vpop.f32.mrf.mxu0
    %7651 = vmatprep.mubr.bf16.mxu0 0
    %7652 = vmatmul.mubr.bf16.gmra.mxu0 %v7301
    %v7653 = vpop.f32.mrf.mxu0
    %v7654 = vadd.f32 0.0, %v7653
    %v7655 = vpop.f32.mrf.mxu0
    %v7656 = vpop.f32.mrf.mxu0
    %v7657 = vadd.f32 0.0, %v7656
    %v7658 = vpop.f32.mrf.mxu0
    %7659 = vmatprep.mubr.bf16.mxu0 0
    %7660 = vmatmul.mubr.bf16.gmra.mxu0 %v7304
    %v7661 = vpop.f32.mrf.mxu0
    %v7662 = vadd.f32 0.0, %v7661
    %v7663 = vpop.f32.mrf.mxu0
    %v7664 = vpop.f32.mrf.mxu0
    %v7665 = vadd.f32 0.0, %v7664
    %v7666 = vpop.f32.mrf.mxu0
    %7667 = vmatprep.mubr.bf16.mxu0 0
    %7668 = vmatmul.mubr.bf16.gmra.mxu0 %v7307
    %v7669 = vpop.f32.mrf.mxu0
    %v7670 = vadd.f32 0.0, %v7669
    %v7671 = vpop.f32.mrf.mxu0
    %v7672 = vpop.f32.mrf.mxu0
    %v7673 = vadd.f32 0.0, %v7672
    %v7674 = vpop.f32.mrf.mxu0
    %7675 = vmatprep.mubr.bf16.mxu0 0
    %7676 = vmatmul.mubr.bf16.gmra.mxu0 %v7310
    %v7677 = vpop.f32.mrf.mxu0
    %v7678 = vadd.f32 0.0, %v7677
    %v7679 = vpop.f32.mrf.mxu0
    %v7680 = vpop.f32.mrf.mxu0
    %v7681 = vadd.f32 0.0, %v7680
    %v7682 = vpop.f32.mrf.mxu0
    %7683 = vmatprep.mubr.bf16.mxu0 0
    %7684 = vmatmul.mubr.bf16.gmra.mxu0 %v7313
    %v7685 = vpop.f32.mrf.mxu0
    %v7686 = vadd.f32 0.0, %v7685
    %v7687 = vpop.f32.mrf.mxu0
    %v7688 = vpop.f32.mrf.mxu0
    %v7689 = vadd.f32 0.0, %v7688
    %v7690 = vpop.f32.mrf.mxu0
    %7691 = vmatprep.mubr.bf16.mxu0 0
    %7692 = vmatmul.mubr.bf16.gmra.mxu0 %v7316
    %v7693 = vpop.f32.mrf.mxu0
    %v7694 = vadd.f32 0.0, %v7693
    %v7695 = vpop.f32.mrf.mxu0
    %v7696 = vpop.f32.mrf.mxu0
    %v7697 = vadd.f32 0.0, %v7696
    %v7698 = vpop.f32.mrf.mxu0
    %7699 = vmatprep.mubr.bf16.mxu0 0
    %7700 = vmatmul.mubr.bf16.gmra.mxu0 %v7319
    %v7701 = vpop.f32.mrf.mxu0
    %v7702 = vadd.f32 0.0, %v7701
    %v7703 = vpop.f32.mrf.mxu0
    %v7704 = vpop.f32.mrf.mxu0
    %v7705 = vadd.f32 0.0, %v7704
    %v7706 = vpop.f32.mrf.mxu0
    %7707 = vmatprep.mubr.bf16.mxu0 0
    %7708 = vmatmul.mubr.bf16.gmra.mxu0 %v7322
    %v7709 = vpop.f32.mrf.mxu0
    %v7710 = vadd.f32 0.0, %v7709
    %v7711 = vpop.f32.mrf.mxu0
    %v7712 = vpop.f32.mrf.mxu0
    %v7713 = vadd.f32 0.0, %v7712
    %v7714 = vpop.f32.mrf.mxu0
    %7715 = vmatprep.mubr.bf16.mxu0 0
    %7716 = vmatmul.mubr.bf16.gmra.mxu0 %v7325
    %v7717 = vpop.f32.mrf.mxu0
    %v7718 = vadd.f32 0.0, %v7717
    %v7719 = vpop.f32.mrf.mxu0
    %v7720 = vpop.f32.mrf.mxu0
    %v7721 = vadd.f32 0.0, %v7720
    %v7722 = vpop.f32.mrf.mxu0
    %7723 = vmatprep.mubr.bf16.mxu0 0
    %7724 = vmatmul.mubr.bf16.gmra.mxu0 %v7328
    %v7725 = vpop.f32.mrf.mxu0
    %v7726 = vadd.f32 0.0, %v7725
    %v7727 = vpop.f32.mrf.mxu0
    %v7728 = vpop.f32.mrf.mxu0
    %v7729 = vadd.f32 0.0, %v7728
    %v7730 = vpop.f32.mrf.mxu0
    %7731 = vmatprep.mubr.bf16.mxu0 0
    %7732 = vmatmul.mubr.bf16.gmra.mxu0 %v7331
    %v7733 = vpop.f32.mrf.mxu0
    %v7734 = vadd.f32 0.0, %v7733
    %v7735 = vpop.f32.mrf.mxu0
    %v7736 = vpop.f32.mrf.mxu0
    %v7737 = vadd.f32 0.0, %v7736
    %v7738 = vpop.f32.mrf.mxu0
    %7739 = vmatprep.mubr.bf16.mxu0 0
    %7740 = vmatmul.mubr.bf16.gmra.mxu0 %v7334
    %v7741 = vpop.f32.mrf.mxu0
    %v7742 = vadd.f32 0.0, %v7741
    %v7743 = vpop.f32.mrf.mxu0
    %v7744 = vpop.f32.mrf.mxu0
    %v7745 = vadd.f32 0.0, %v7744
    %v7746 = vpop.f32.mrf.mxu0
    %7747 = vmatprep.mubr.bf16.mxu0 0
    %7748 = vmatmul.mubr.bf16.gmra.mxu0 %v7337
    %v7749 = vpop.f32.mrf.mxu0
    %v7750 = vadd.f32 0.0, %v7749
    %v7751 = vpop.f32.mrf.mxu0
    %v7752 = vpop.f32.mrf.mxu0
    %v7753 = vadd.f32 0.0, %v7752
    %v7754 = vpop.f32.mrf.mxu0
    %7755 = vdwg.mxu0
    %7756 = vmatprep.subr.bf16.mxu0 0
    %7757 = vmatpush1.bf16.msra.mxu0 0
    %7758 = vmatprep.subr.bf16.mxu0 0
    %7759 = vmatpush1.bf16.msra.mxu0 0
    %7760 = vmatprep.subr.bf16.mxu0 0
    %7761 = vmatpush1.bf16.msra.mxu0 0
    %7762 = vmatprep.subr.bf16.mxu0 0
    %7763 = vmatpush1.bf16.msra.mxu0 0
    %7764 = vmatprep.subr.bf16.mxu0 0
    %7765 = vmatpush1.bf16.msra.mxu0 %v6838
    %7766 = vmatprep.subr.bf16.mxu0 0
    %7767 = vmatpush1.bf16.msra.mxu0 %v6837
    %7768 = vmatprep.subr.bf16.mxu0 0
    %7769 = vmatpush1.bf16.msra.mxu0 %v6836
    %7770 = vmatprep.subr.bf16.mxu0 0
    %7771 = vmatpush1.bf16.msra.mxu0 %v6835
    %7772 = vmatprep.subr.bf16.mxu0 0
    %7773 = vmatpush2.bf16.msra.mxu0 0
    %7774 = vmatprep.subr.bf16.mxu0 0
    %7775 = vmatpush2.bf16.msra.mxu0 0
    %7776 = vmatprep.subr.bf16.mxu0 0
    %7777 = vmatpush2.bf16.msra.mxu0 0
    %7778 = vmatprep.subr.bf16.mxu0 0
    %7779 = vmatpush2.bf16.msra.mxu0 0
    %7780 = vmatprep.subr.bf16.mxu0 0
    %7781 = vmatpush2.bf16.msra.mxu0 0
    %7782 = vmatprep.subr.bf16.mxu0 0
    %7783 = vmatpush2.bf16.msra.mxu0 0
    %7784 = vmatprep.subr.bf16.mxu0 0
    %7785 = vmatpush2.bf16.msra.mxu0 0
    %7786 = vmatprep.subr.bf16.mxu0 0
    %7787 = vmatpush2.bf16.msra.mxu0 0
    %7788 = vmatprep.mubr.bf16.mxu0 0
    %7789 = vmatmul.mubr.bf16.gmra.mxu0 %v7196
    %v7790 = vpop.f32.mrf.mxu0
    %v7791 = vadd.f32 %v7374, %v7790
    %v7792 = vpop.f32.mrf.mxu0
    %v7793 = vpop.f32.mrf.mxu0
    %v7794 = vadd.f32 %v7377, %v7793
    %v7795 = vpop.f32.mrf.mxu0
    %7796 = vmatprep.mubr.bf16.mxu0 0
    %7797 = vmatmul.mubr.bf16.gmra.mxu0 %v7199
    %v7798 = vpop.f32.mrf.mxu0
    %v7799 = vadd.f32 %v7382, %v7798
    %v7800 = vpop.f32.mrf.mxu0
    %v7801 = vpop.f32.mrf.mxu0
    %v7802 = vadd.f32 %v7385, %v7801
    %v7803 = vpop.f32.mrf.mxu0
    %7804 = vmatprep.mubr.bf16.mxu0 0
    %7805 = vmatmul.mubr.bf16.gmra.mxu0 %v7202
    %v7806 = vpop.f32.mrf.mxu0
    %v7807 = vadd.f32 %v7390, %v7806
    %v7808 = vpop.f32.mrf.mxu0
    %v7809 = vpop.f32.mrf.mxu0
    %v7810 = vadd.f32 %v7393, %v7809
    %v7811 = vpop.f32.mrf.mxu0
    %7812 = vmatprep.mubr.bf16.mxu0 0
    %7813 = vmatmul.mubr.bf16.gmra.mxu0 %v7205
    %v7814 = vpop.f32.mrf.mxu0
    %v7815 = vadd.f32 %v7398, %v7814
    %v7816 = vpop.f32.mrf.mxu0
    %v7817 = vpop.f32.mrf.mxu0
    %v7818 = vadd.f32 %v7401, %v7817
    %v7819 = vpop.f32.mrf.mxu0
    %7820 = vmatprep.mubr.bf16.mxu0 0
    %7821 = vmatmul.mubr.bf16.gmra.mxu0 %v7208
    %v7822 = vpop.f32.mrf.mxu0
    %v7823 = vadd.f32 %v7406, %v7822
    %v7824 = vpop.f32.mrf.mxu0
    %v7825 = vpop.f32.mrf.mxu0
    %v7826 = vadd.f32 %v7409, %v7825
    %v7827 = vpop.f32.mrf.mxu0
    %7828 = vmatprep.mubr.bf16.mxu0 0
    %7829 = vmatmul.mubr.bf16.gmra.mxu0 %v7211
    %v7830 = vpop.f32.mrf.mxu0
    %v7831 = vadd.f32 %v7414, %v7830
    %v7832 = vpop.f32.mrf.mxu0
    %v7833 = vpop.f32.mrf.mxu0
    %v7834 = vadd.f32 %v7417, %v7833
    %v7835 = vpop.f32.mrf.mxu0
    %7836 = vmatprep.mubr.bf16.mxu0 0
    %7837 = vmatmul.mubr.bf16.gmra.mxu0 %v7214
    %v7838 = vpop.f32.mrf.mxu0
    %v7839 = vadd.f32 %v7422, %v7838
    %v7840 = vpop.f32.mrf.mxu0
    %v7841 = vpop.f32.mrf.mxu0
    %v7842 = vadd.f32 %v7425, %v7841
    %v7843 = vpop.f32.mrf.mxu0
    %7844 = vmatprep.mubr.bf16.mxu0 0
    %7845 = vmatmul.mubr.bf16.gmra.mxu0 %v7217
    %v7846 = vpop.f32.mrf.mxu0
    %v7847 = vadd.f32 %v7430, %v7846
    %v7848 = vpop.f32.mrf.mxu0
    %v7849 = vpop.f32.mrf.mxu0
    %v7850 = vadd.f32 %v7433, %v7849
    %v7851 = vpop.f32.mrf.mxu0
    %7852 = vmatprep.mubr.bf16.mxu0 0
    %7853 = vmatmul.mubr.bf16.gmra.mxu0 %v7220
    %v7854 = vpop.f32.mrf.mxu0
    %v7855 = vadd.f32 %v7438, %v7854
    %v7856 = vpop.f32.mrf.mxu0
    %v7857 = vpop.f32.mrf.mxu0
    %v7858 = vadd.f32 %v7441, %v7857
    %v7859 = vpop.f32.mrf.mxu0
    %7860 = vmatprep.mubr.bf16.mxu0 0
    %7861 = vmatmul.mubr.bf16.gmra.mxu0 %v7223
    %v7862 = vpop.f32.mrf.mxu0
    %v7863 = vadd.f32 %v7446, %v7862
    %v7864 = vpop.f32.mrf.mxu0
    %v7865 = vpop.f32.mrf.mxu0
    %v7866 = vadd.f32 %v7449, %v7865
    %v7867 = vpop.f32.mrf.mxu0
    %7868 = vmatprep.mubr.bf16.mxu0 0
    %7869 = vmatmul.mubr.bf16.gmra.mxu0 %v7226
    %v7870 = vpop.f32.mrf.mxu0
    %v7871 = vadd.f32 %v7454, %v7870
    %v7872 = vpop.f32.mrf.mxu0
    %v7873 = vpop.f32.mrf.mxu0
    %v7874 = vadd.f32 %v7457, %v7873
    %v7875 = vpop.f32.mrf.mxu0
    %7876 = vmatprep.mubr.bf16.mxu0 0
    %7877 = vmatmul.mubr.bf16.gmra.mxu0 %v7229
    %v7878 = vpop.f32.mrf.mxu0
    %v7879 = vadd.f32 %v7462, %v7878
    %v7880 = vpop.f32.mrf.mxu0
    %v7881 = vpop.f32.mrf.mxu0
    %v7882 = vadd.f32 %v7465, %v7881
    %v7883 = vpop.f32.mrf.mxu0
    %7884 = vmatprep.mubr.bf16.mxu0 0
    %7885 = vmatmul.mubr.bf16.gmra.mxu0 %v7232
    %v7886 = vpop.f32.mrf.mxu0
    %v7887 = vadd.f32 %v7470, %v7886
    %v7888 = vpop.f32.mrf.mxu0
    %v7889 = vpop.f32.mrf.mxu0
    %v7890 = vadd.f32 %v7473, %v7889
    %v7891 = vpop.f32.mrf.mxu0
    %7892 = vmatprep.mubr.bf16.mxu0 0
    %7893 = vmatmul.mubr.bf16.gmra.mxu0 %v7235
    %v7894 = vpop.f32.mrf.mxu0
    %v7895 = vadd.f32 %v7478, %v7894
    %v7896 = vpop.f32.mrf.mxu0
    %v7897 = vpop.f32.mrf.mxu0
    %v7898 = vadd.f32 %v7481, %v7897
    %v7899 = vpop.f32.mrf.mxu0
    %7900 = vmatprep.mubr.bf16.mxu0 0
    %7901 = vmatmul.mubr.bf16.gmra.mxu0 %v7238
    %v7902 = vpop.f32.mrf.mxu0
    %v7903 = vadd.f32 %v7486, %v7902
    %v7904 = vpop.f32.mrf.mxu0
    %v7905 = vpop.f32.mrf.mxu0
    %v7906 = vadd.f32 %v7489, %v7905
    %v7907 = vpop.f32.mrf.mxu0
    %7908 = vmatprep.mubr.bf16.mxu0 0
    %7909 = vmatmul.mubr.bf16.gmra.mxu0 %v7241
    %v7910 = vpop.f32.mrf.mxu0
    %v7911 = vadd.f32 %v7494, %v7910
    %v7912 = vpop.f32.mrf.mxu0
    %v7913 = vpop.f32.mrf.mxu0
    %v7914 = vadd.f32 %v7497, %v7913
    %v7915 = vpop.f32.mrf.mxu0
    %7916 = vmatprep.mubr.bf16.mxu0 0
    %7917 = vmatmul.mubr.bf16.gmra.mxu0 %v7244
    %v7918 = vpop.f32.mrf.mxu0
    %v7919 = vadd.f32 %v7502, %v7918
    %v7920 = vpop.f32.mrf.mxu0
    %v7921 = vpop.f32.mrf.mxu0
    %v7922 = vadd.f32 %v7505, %v7921
    %v7923 = vpop.f32.mrf.mxu0
    %7924 = vmatprep.mubr.bf16.mxu0 0
    %7925 = vmatmul.mubr.bf16.gmra.mxu0 %v7247
    %v7926 = vpop.f32.mrf.mxu0
    %v7927 = vadd.f32 %v7510, %v7926
    %v7928 = vpop.f32.mrf.mxu0
    %v7929 = vpop.f32.mrf.mxu0
    %v7930 = vadd.f32 %v7513, %v7929
    %v7931 = vpop.f32.mrf.mxu0
    %7932 = vmatprep.mubr.bf16.mxu0 0
    %7933 = vmatmul.mubr.bf16.gmra.mxu0 %v7250
    %v7934 = vpop.f32.mrf.mxu0
    %v7935 = vadd.f32 %v7518, %v7934
    %v7936 = vpop.f32.mrf.mxu0
    %v7937 = vpop.f32.mrf.mxu0
    %v7938 = vadd.f32 %v7521, %v7937
    %v7939 = vpop.f32.mrf.mxu0
    %7940 = vmatprep.mubr.bf16.mxu0 0
    %7941 = vmatmul.mubr.bf16.gmra.mxu0 %v7253
    %v7942 = vpop.f32.mrf.mxu0
    %v7943 = vadd.f32 %v7526, %v7942
    %v7944 = vpop.f32.mrf.mxu0
    %v7945 = vpop.f32.mrf.mxu0
    %v7946 = vadd.f32 %v7529, %v7945
    %v7947 = vpop.f32.mrf.mxu0
    %7948 = vmatprep.mubr.bf16.mxu0 0
    %7949 = vmatmul.mubr.bf16.gmra.mxu0 %v7256
    %v7950 = vpop.f32.mrf.mxu0
    %v7951 = vadd.f32 %v7534, %v7950
    %v7952 = vpop.f32.mrf.mxu0
    %v7953 = vpop.f32.mrf.mxu0
    %v7954 = vadd.f32 %v7537, %v7953
    %v7955 = vpop.f32.mrf.mxu0
    %7956 = vmatprep.mubr.bf16.mxu0 0
    %7957 = vmatmul.mubr.bf16.gmra.mxu0 %v7259
    %v7958 = vpop.f32.mrf.mxu0
    %v7959 = vadd.f32 %v7542, %v7958
    %v7960 = vpop.f32.mrf.mxu0
    %v7961 = vpop.f32.mrf.mxu0
    %v7962 = vadd.f32 %v7545, %v7961
    %v7963 = vpop.f32.mrf.mxu0
    %7964 = vmatprep.mubr.bf16.mxu0 0
    %7965 = vmatmul.mubr.bf16.gmra.mxu0 %v7262
    %v7966 = vpop.f32.mrf.mxu0
    %v7967 = vadd.f32 %v7550, %v7966
    %v7968 = vpop.f32.mrf.mxu0
    %v7969 = vpop.f32.mrf.mxu0
    %v7970 = vadd.f32 %v7553, %v7969
    %v7971 = vpop.f32.mrf.mxu0
    %7972 = vmatprep.mubr.bf16.mxu0 0
    %7973 = vmatmul.mubr.bf16.gmra.mxu0 %v7265
    %v7974 = vpop.f32.mrf.mxu0
    %v7975 = vadd.f32 %v7558, %v7974
    %v7976 = vpop.f32.mrf.mxu0
    %v7977 = vpop.f32.mrf.mxu0
    %v7978 = vadd.f32 %v7561, %v7977
    %v7979 = vpop.f32.mrf.mxu0
    %7980 = vmatprep.mubr.bf16.mxu0 0
    %7981 = vmatmul.mubr.bf16.gmra.mxu0 %v7268
    %v7982 = vpop.f32.mrf.mxu0
    %v7983 = vadd.f32 %v7566, %v7982
    %v7984 = vpop.f32.mrf.mxu0
    %v7985 = vpop.f32.mrf.mxu0
    %v7986 = vadd.f32 %v7569, %v7985
    %v7987 = vpop.f32.mrf.mxu0
    %7988 = vmatprep.mubr.bf16.mxu0 0
    %7989 = vmatmul.mubr.bf16.gmra.mxu0 %v7271
    %v7990 = vpop.f32.mrf.mxu0
    %v7991 = vadd.f32 %v7574, %v7990
    %v7992 = vpop.f32.mrf.mxu0
    %v7993 = vpop.f32.mrf.mxu0
    %v7994 = vadd.f32 %v7577, %v7993
    %v7995 = vpop.f32.mrf.mxu0
    %7996 = vmatprep.mubr.bf16.mxu0 0
    %7997 = vmatmul.mubr.bf16.gmra.mxu0 %v7274
    %v7998 = vpop.f32.mrf.mxu0
    %v7999 = vadd.f32 %v7582, %v7998
    %v8000 = vpop.f32.mrf.mxu0
    %v8001 = vpop.f32.mrf.mxu0
    %v8002 = vadd.f32 %v7585, %v8001
    %v8003 = vpop.f32.mrf.mxu0
    %8004 = vmatprep.mubr.bf16.mxu0 0
    %8005 = vmatmul.mubr.bf16.gmra.mxu0 %v7277
    %v8006 = vpop.f32.mrf.mxu0
    %v8007 = vadd.f32 %v7590, %v8006
    %v8008 = vpop.f32.mrf.mxu0
    %v8009 = vpop.f32.mrf.mxu0
    %v8010 = vadd.f32 %v7593, %v8009
    %v8011 = vpop.f32.mrf.mxu0
    %8012 = vmatprep.mubr.bf16.mxu0 0
    %8013 = vmatmul.mubr.bf16.gmra.mxu0 %v7280
    %v8014 = vpop.f32.mrf.mxu0
    %v8015 = vadd.f32 %v7598, %v8014
    %v8016 = vpop.f32.mrf.mxu0
    %v8017 = vpop.f32.mrf.mxu0
    %v8018 = vadd.f32 %v7601, %v8017
    %v8019 = vpop.f32.mrf.mxu0
    %8020 = vmatprep.mubr.bf16.mxu0 0
    %8021 = vmatmul.mubr.bf16.gmra.mxu0 %v7283
    %v8022 = vpop.f32.mrf.mxu0
    %v8023 = vadd.f32 %v7606, %v8022
    %v8024 = vpop.f32.mrf.mxu0
    %v8025 = vpop.f32.mrf.mxu0
    %v8026 = vadd.f32 %v7609, %v8025
    %v8027 = vpop.f32.mrf.mxu0
    %8028 = vmatprep.mubr.bf16.mxu0 0
    %8029 = vmatmul.mubr.bf16.gmra.mxu0 %v7286
    %v8030 = vpop.f32.mrf.mxu0
    %v8031 = vadd.f32 %v7614, %v8030
    %v8032 = vpop.f32.mrf.mxu0
    %v8033 = vpop.f32.mrf.mxu0
    %v8034 = vadd.f32 %v7617, %v8033
    %v8035 = vpop.f32.mrf.mxu0
    %8036 = vmatprep.mubr.bf16.mxu0 0
    %8037 = vmatmul.mubr.bf16.gmra.mxu0 %v7289
    %v8038 = vpop.f32.mrf.mxu0
    %v8039 = vadd.f32 %v7622, %v8038
    %v8040 = vpop.f32.mrf.mxu0
    %v8041 = vpop.f32.mrf.mxu0
    %v8042 = vadd.f32 %v7625, %v8041
    %v8043 = vpop.f32.mrf.mxu0
    %8044 = vmatprep.mubr.bf16.mxu0 0
    %8045 = vmatmul.mubr.bf16.gmra.mxu0 %v7292
    %v8046 = vpop.f32.mrf.mxu0
    %v8047 = vadd.f32 %v7630, %v8046
    %v8048 = vpop.f32.mrf.mxu0
    %v8049 = vpop.f32.mrf.mxu0
    %v8050 = vadd.f32 %v7633, %v8049
    %v8051 = vpop.f32.mrf.mxu0
    %8052 = vmatprep.mubr.bf16.mxu0 0
    %8053 = vmatmul.mubr.bf16.gmra.mxu0 %v7295
    %v8054 = vpop.f32.mrf.mxu0
    %v8055 = vadd.f32 %v7638, %v8054
    %v8056 = vpop.f32.mrf.mxu0
    %v8057 = vpop.f32.mrf.mxu0
    %v8058 = vadd.f32 %v7641, %v8057
    %v8059 = vpop.f32.mrf.mxu0
    %8060 = vmatprep.mubr.bf16.mxu0 0
    %8061 = vmatmul.mubr.bf16.gmra.mxu0 %v7298
    %v8062 = vpop.f32.mrf.mxu0
    %v8063 = vadd.f32 %v7646, %v8062
    %v8064 = vpop.f32.mrf.mxu0
    %v8065 = vpop.f32.mrf.mxu0
    %v8066 = vadd.f32 %v7649, %v8065
    %v8067 = vpop.f32.mrf.mxu0
    %8068 = vmatprep.mubr.bf16.mxu0 0
    %8069 = vmatmul.mubr.bf16.gmra.mxu0 %v7301
    %v8070 = vpop.f32.mrf.mxu0
    %v8071 = vadd.f32 %v7654, %v8070
    %v8072 = vpop.f32.mrf.mxu0
    %v8073 = vpop.f32.mrf.mxu0
    %v8074 = vadd.f32 %v7657, %v8073
    %v8075 = vpop.f32.mrf.mxu0
    %8076 = vmatprep.mubr.bf16.mxu0 0
    %8077 = vmatmul.mubr.bf16.gmra.mxu0 %v7304
    %v8078 = vpop.f32.mrf.mxu0
    %v8079 = vadd.f32 %v7662, %v8078
    %v8080 = vpop.f32.mrf.mxu0
    %v8081 = vpop.f32.mrf.mxu0
    %v8082 = vadd.f32 %v7665, %v8081
    %v8083 = vpop.f32.mrf.mxu0
    %8084 = vmatprep.mubr.bf16.mxu0 0
    %8085 = vmatmul.mubr.bf16.gmra.mxu0 %v7307
    %v8086 = vpop.f32.mrf.mxu0
    %v8087 = vadd.f32 %v7670, %v8086
    %v8088 = vpop.f32.mrf.mxu0
    %v8089 = vpop.f32.mrf.mxu0
    %v8090 = vadd.f32 %v7673, %v8089
    %v8091 = vpop.f32.mrf.mxu0
    %8092 = vmatprep.mubr.bf16.mxu0 0
    %8093 = vmatmul.mubr.bf16.gmra.mxu0 %v7310
    %v8094 = vpop.f32.mrf.mxu0
    %v8095 = vadd.f32 %v7678, %v8094
    %v8096 = vpop.f32.mrf.mxu0
    %v8097 = vpop.f32.mrf.mxu0
    %v8098 = vadd.f32 %v7681, %v8097
    %v8099 = vpop.f32.mrf.mxu0
    %8100 = vmatprep.mubr.bf16.mxu0 0
    %8101 = vmatmul.mubr.bf16.gmra.mxu0 %v7313
    %v8102 = vpop.f32.mrf.mxu0
    %v8103 = vadd.f32 %v7686, %v8102
    %v8104 = vpop.f32.mrf.mxu0
    %v8105 = vpop.f32.mrf.mxu0
    %v8106 = vadd.f32 %v7689, %v8105
    %v8107 = vpop.f32.mrf.mxu0
    %8108 = vmatprep.mubr.bf16.mxu0 0
    %8109 = vmatmul.mubr.bf16.gmra.mxu0 %v7316
    %v8110 = vpop.f32.mrf.mxu0
    %v8111 = vadd.f32 %v7694, %v8110
    %v8112 = vpop.f32.mrf.mxu0
    %v8113 = vpop.f32.mrf.mxu0
    %v8114 = vadd.f32 %v7697, %v8113
    %v8115 = vpop.f32.mrf.mxu0
    %8116 = vmatprep.mubr.bf16.mxu0 0
    %8117 = vmatmul.mubr.bf16.gmra.mxu0 %v7319
    %v8118 = vpop.f32.mrf.mxu0
    %v8119 = vadd.f32 %v7702, %v8118
    %v8120 = vpop.f32.mrf.mxu0
    %v8121 = vpop.f32.mrf.mxu0
    %v8122 = vadd.f32 %v7705, %v8121
    %v8123 = vpop.f32.mrf.mxu0
    %8124 = vmatprep.mubr.bf16.mxu0 0
    %8125 = vmatmul.mubr.bf16.gmra.mxu0 %v7322
    %v8126 = vpop.f32.mrf.mxu0
    %v8127 = vadd.f32 %v7710, %v8126
    %v8128 = vpop.f32.mrf.mxu0
    %v8129 = vpop.f32.mrf.mxu0
    %v8130 = vadd.f32 %v7713, %v8129
    %v8131 = vpop.f32.mrf.mxu0
    %8132 = vmatprep.mubr.bf16.mxu0 0
    %8133 = vmatmul.mubr.bf16.gmra.mxu0 %v7325
    %v8134 = vpop.f32.mrf.mxu0
    %v8135 = vadd.f32 %v7718, %v8134
    %v8136 = vpop.f32.mrf.mxu0
    %v8137 = vpop.f32.mrf.mxu0
    %v8138 = vadd.f32 %v7721, %v8137
    %v8139 = vpop.f32.mrf.mxu0
    %8140 = vmatprep.mubr.bf16.mxu0 0
    %8141 = vmatmul.mubr.bf16.gmra.mxu0 %v7328
    %v8142 = vpop.f32.mrf.mxu0
    %v8143 = vadd.f32 %v7726, %v8142
    %v8144 = vpop.f32.mrf.mxu0
    %v8145 = vpop.f32.mrf.mxu0
    %v8146 = vadd.f32 %v7729, %v8145
    %v8147 = vpop.f32.mrf.mxu0
    %8148 = vmatprep.mubr.bf16.mxu0 0
    %8149 = vmatmul.mubr.bf16.gmra.mxu0 %v7331
    %v8150 = vpop.f32.mrf.mxu0
    %v8151 = vadd.f32 %v7734, %v8150
    %v8152 = vpop.f32.mrf.mxu0
    %v8153 = vpop.f32.mrf.mxu0
    %v8154 = vadd.f32 %v7737, %v8153
    %v8155 = vpop.f32.mrf.mxu0
    %8156 = vmatprep.mubr.bf16.mxu0 0
    %8157 = vmatmul.mubr.bf16.gmra.mxu0 %v7334
    %v8158 = vpop.f32.mrf.mxu0
    %v8159 = vadd.f32 %v7742, %v8158
    %v8160 = vpop.f32.mrf.mxu0
    %v8161 = vpop.f32.mrf.mxu0
    %v8162 = vadd.f32 %v7745, %v8161
    %v8163 = vpop.f32.mrf.mxu0
    %8164 = vmatprep.mubr.bf16.mxu0 0
    %8165 = vmatmul.mubr.bf16.gmra.mxu0 %v7337
    %v8166 = vpop.f32.mrf.mxu0
    %v8167 = vadd.f32 %v7750, %v8166
    %v8168 = vpop.f32.mrf.mxu0
    %v8169 = vpop.f32.mrf.mxu0
    %v8170 = vadd.f32 %v7753, %v8169
    %v8171 = vpop.f32.mrf.mxu0
    %8172 = vdwg.mxu0
    %s8173 = sld [smem:[#allocation3 + $0x4]]
    %v8174 = vstv %s8173
    %v8175 = vmul.f32 %v8174, %v5913
    %v8176 = vmul.f32 %v8174, %v5919
    %v8177 = vmul.f32 %v8174, %v5925
    %v8178 = vmul.f32 %v8174, %v5931
    %v8179 = vmul.f32 %v8174, %v5937
    %v8180 = vmul.f32 %v8174, %v5943
    %v8181 = vmul.f32 %v8174, %v5949
    %v8182 = vmul.f32 %v8174, %v5955
    %8191 = vrot.lane.b32.xlu0 %v7791, 96
    %v8192 = vpop.permute.xlu0 %8191
    %8193 = vrot.lane.b32.xlu0 %v7794, 96
    %v8194 = vpop.permute.xlu0 %8193
    %8195 = vrot.lane.b32.xlu0 %v7799, 96
    %v8196 = vpop.permute.xlu0 %8195
    %8197 = vrot.lane.b32.xlu0 %v7802, 96
    %v8198 = vpop.permute.xlu0 %8197
    %8199 = vrot.lane.b32.xlu0 %v7807, 96
    %v8200 = vpop.permute.xlu0 %8199
    %8201 = vrot.lane.b32.xlu0 %v7810, 96
    %v8202 = vpop.permute.xlu0 %8201
    %8203 = vrot.lane.b32.xlu0 %v7815, 96
    %v8204 = vpop.permute.xlu0 %8203
    %8205 = vrot.lane.b32.xlu0 %v7818, 96
    %v8206 = vpop.permute.xlu0 %8205
    %v8215 = vadd.f32 %v6734, %v8192
    %v8216 = vadd.f32 %v6740, %v8194
    %v8217 = vadd.f32 %v6746, %v8196
    %v8218 = vadd.f32 %v6752, %v8198
    %v8219 = vadd.f32 %v6758, %v8200
    %v8220 = vadd.f32 %v6764, %v8202
    %v8221 = vadd.f32 %v6770, %v8204
    %v8222 = vadd.f32 %v6776, %v8206
    %vm8223 = vcmp.gt.f32.partialorder %v8215, 0.0
    %vm8224 = vcmp.gt.f32.partialorder %v8216, 0.0
    %vm8225 = vcmp.gt.f32.partialorder %v8217, 0.0
    %vm8226 = vcmp.gt.f32.partialorder %v8218, 0.0
    %vm8227 = vcmp.gt.f32.partialorder %v8219, 0.0
    %vm8228 = vcmp.gt.f32.partialorder %v8220, 0.0
    %vm8229 = vcmp.gt.f32.partialorder %v8221, 0.0
    %vm8230 = vcmp.gt.f32.partialorder %v8222, 0.0
    %v8231 = vmul.f32 %v8215, 0.2
    %v8232 = vmul.f32 %v8216, 0.2
    %v8233 = vmul.f32 %v8217, 0.2
    %v8234 = vmul.f32 %v8218, 0.2
    %v8235 = vmul.f32 %v8219, 0.2
    %v8236 = vmul.f32 %v8220, 0.2
    %v8237 = vmul.f32 %v8221, 0.2
    %v8238 = vmul.f32 %v8222, 0.2
    %v8239 = vsel %vm8223, %v8215, %v8231
    %v8240 = vsel %vm8224, %v8216, %v8232
    %v8241 = vsel %vm8225, %v8217, %v8233
    %v8242 = vsel %vm8226, %v8218, %v8234
    %v8243 = vsel %vm8227, %v8219, %v8235
    %v8244 = vsel %vm8228, %v8220, %v8236
    %v8245 = vsel %vm8229, %v8221, %v8237
    %v8246 = vsel %vm8230, %v8222, %v8238
    %8255 = vrot.lane.b32.xlu0 %v7823, 96
    %v8256 = vpop.permute.xlu0 %8255
    %8257 = vrot.lane.b32.xlu0 %v7826, 96
    %v8258 = vpop.permute.xlu0 %8257
    %8259 = vrot.lane.b32.xlu0 %v7831, 96
    %v8260 = vpop.permute.xlu0 %8259
    %8261 = vrot.lane.b32.xlu0 %v7834, 96
    %v8262 = vpop.permute.xlu0 %8261
    %8263 = vrot.lane.b32.xlu0 %v7839, 96
    %v8264 = vpop.permute.xlu0 %8263
    %8265 = vrot.lane.b32.xlu0 %v7842, 96
    %v8266 = vpop.permute.xlu0 %8265
    %8267 = vrot.lane.b32.xlu0 %v7847, 96
    %v8268 = vpop.permute.xlu0 %8267
    %8269 = vrot.lane.b32.xlu0 %v7850, 96
    %v8270 = vpop.permute.xlu0 %8269
    %v8279 = vadd.f32 %v6734, %v8256
    %v8280 = vadd.f32 %v6740, %v8258
    %v8281 = vadd.f32 %v6746, %v8260
    %v8282 = vadd.f32 %v6752, %v8262
    %v8283 = vadd.f32 %v6758, %v8264
    %v8284 = vadd.f32 %v6764, %v8266
    %v8285 = vadd.f32 %v6770, %v8268
    %v8286 = vadd.f32 %v6776, %v8270
    %vm8287 = vcmp.gt.f32.partialorder %v8279, 0.0
    %vm8288 = vcmp.gt.f32.partialorder %v8280, 0.0
    %vm8289 = vcmp.gt.f32.partialorder %v8281, 0.0
    %vm8290 = vcmp.gt.f32.partialorder %v8282, 0.0
    %vm8291 = vcmp.gt.f32.partialorder %v8283, 0.0
    %vm8292 = vcmp.gt.f32.partialorder %v8284, 0.0
    %vm8293 = vcmp.gt.f32.partialorder %v8285, 0.0
    %vm8294 = vcmp.gt.f32.partialorder %v8286, 0.0
    %v8295 = vmul.f32 %v8279, 0.2
    %v8296 = vmul.f32 %v8280, 0.2
    %v8297 = vmul.f32 %v8281, 0.2
    %v8298 = vmul.f32 %v8282, 0.2
    %v8299 = vmul.f32 %v8283, 0.2
    %v8300 = vmul.f32 %v8284, 0.2
    %v8301 = vmul.f32 %v8285, 0.2
    %v8302 = vmul.f32 %v8286, 0.2
    %v8303 = vsel %vm8287, %v8279, %v8295
    %v8304 = vsel %vm8288, %v8280, %v8296
    %v8305 = vsel %vm8289, %v8281, %v8297
    %v8306 = vsel %vm8290, %v8282, %v8298
    %v8307 = vsel %vm8291, %v8283, %v8299
    %v8308 = vsel %vm8292, %v8284, %v8300
    %v8309 = vsel %vm8293, %v8285, %v8301
    %v8310 = vsel %vm8294, %v8286, %v8302
    %8319 = vrot.lane.b32.xlu0 %v7855, 96
    %v8320 = vpop.permute.xlu0 %8319
    %8321 = vrot.lane.b32.xlu0 %v7858, 96
    %v8322 = vpop.permute.xlu0 %8321
    %8323 = vrot.lane.b32.xlu0 %v7863, 96
    %v8324 = vpop.permute.xlu0 %8323
    %8325 = vrot.lane.b32.xlu0 %v7866, 96
    %v8326 = vpop.permute.xlu0 %8325
    %8327 = vrot.lane.b32.xlu0 %v7871, 96
    %v8328 = vpop.permute.xlu0 %8327
    %8329 = vrot.lane.b32.xlu0 %v7874, 96
    %v8330 = vpop.permute.xlu0 %8329
    %8331 = vrot.lane.b32.xlu0 %v7879, 96
    %v8332 = vpop.permute.xlu0 %8331
    %8333 = vrot.lane.b32.xlu0 %v7882, 96
    %v8334 = vpop.permute.xlu0 %8333
    %v8343 = vadd.f32 %v6734, %v8320
    %v8344 = vadd.f32 %v6740, %v8322
    %v8345 = vadd.f32 %v6746, %v8324
    %v8346 = vadd.f32 %v6752, %v8326
    %v8347 = vadd.f32 %v6758, %v8328
    %v8348 = vadd.f32 %v6764, %v8330
    %v8349 = vadd.f32 %v6770, %v8332
    %v8350 = vadd.f32 %v6776, %v8334
    %vm8351 = vcmp.gt.f32.partialorder %v8343, 0.0
    %vm8352 = vcmp.gt.f32.partialorder %v8344, 0.0
    %vm8353 = vcmp.gt.f32.partialorder %v8345, 0.0
    %vm8354 = vcmp.gt.f32.partialorder %v8346, 0.0
    %vm8355 = vcmp.gt.f32.partialorder %v8347, 0.0
    %vm8356 = vcmp.gt.f32.partialorder %v8348, 0.0
    %vm8357 = vcmp.gt.f32.partialorder %v8349, 0.0
    %vm8358 = vcmp.gt.f32.partialorder %v8350, 0.0
    %v8359 = vmul.f32 %v8343, 0.2
    %v8360 = vmul.f32 %v8344, 0.2
    %v8361 = vmul.f32 %v8345, 0.2
    %v8362 = vmul.f32 %v8346, 0.2
    %v8363 = vmul.f32 %v8347, 0.2
    %v8364 = vmul.f32 %v8348, 0.2
    %v8365 = vmul.f32 %v8349, 0.2
    %v8366 = vmul.f32 %v8350, 0.2
    %v8367 = vsel %vm8351, %v8343, %v8359
    %v8368 = vsel %vm8352, %v8344, %v8360
    %v8369 = vsel %vm8353, %v8345, %v8361
    %v8370 = vsel %vm8354, %v8346, %v8362
    %v8371 = vsel %vm8355, %v8347, %v8363
    %v8372 = vsel %vm8356, %v8348, %v8364
    %v8373 = vsel %vm8357, %v8349, %v8365
    %v8374 = vsel %vm8358, %v8350, %v8366
    %8383 = vrot.lane.b32.xlu0 %v7887, 96
    %v8384 = vpop.permute.xlu0 %8383
    %8385 = vrot.lane.b32.xlu0 %v7890, 96
    %v8386 = vpop.permute.xlu0 %8385
    %8387 = vrot.lane.b32.xlu0 %v7895, 96
    %v8388 = vpop.permute.xlu0 %8387
    %8389 = vrot.lane.b32.xlu0 %v7898, 96
    %v8390 = vpop.permute.xlu0 %8389
    %8391 = vrot.lane.b32.xlu0 %v7903, 96
    %v8392 = vpop.permute.xlu0 %8391
    %8393 = vrot.lane.b32.xlu0 %v7906, 96
    %v8394 = vpop.permute.xlu0 %8393
    %8395 = vrot.lane.b32.xlu0 %v7911, 96
    %v8396 = vpop.permute.xlu0 %8395
    %8397 = vrot.lane.b32.xlu0 %v7914, 96
    %v8398 = vpop.permute.xlu0 %8397
    %v8407 = vadd.f32 %v6734, %v8384
    %v8408 = vadd.f32 %v6740, %v8386
    %v8409 = vadd.f32 %v6746, %v8388
    %v8410 = vadd.f32 %v6752, %v8390
    %v8411 = vadd.f32 %v6758, %v8392
    %v8412 = vadd.f32 %v6764, %v8394
    %v8413 = vadd.f32 %v6770, %v8396
    %v8414 = vadd.f32 %v6776, %v8398
    %vm8415 = vcmp.gt.f32.partialorder %v8407, 0.0
    %vm8416 = vcmp.gt.f32.partialorder %v8408, 0.0
    %vm8417 = vcmp.gt.f32.partialorder %v8409, 0.0
    %vm8418 = vcmp.gt.f32.partialorder %v8410, 0.0
    %vm8419 = vcmp.gt.f32.partialorder %v8411, 0.0
    %vm8420 = vcmp.gt.f32.partialorder %v8412, 0.0
    %vm8421 = vcmp.gt.f32.partialorder %v8413, 0.0
    %vm8422 = vcmp.gt.f32.partialorder %v8414, 0.0
    %v8423 = vmul.f32 %v8407, 0.2
    %v8424 = vmul.f32 %v8408, 0.2
    %v8425 = vmul.f32 %v8409, 0.2
    %v8426 = vmul.f32 %v8410, 0.2
    %v8427 = vmul.f32 %v8411, 0.2
    %v8428 = vmul.f32 %v8412, 0.2
    %v8429 = vmul.f32 %v8413, 0.2
    %v8430 = vmul.f32 %v8414, 0.2
    %v8431 = vsel %vm8415, %v8407, %v8423
    %v8432 = vsel %vm8416, %v8408, %v8424
    %v8433 = vsel %vm8417, %v8409, %v8425
    %v8434 = vsel %vm8418, %v8410, %v8426
    %v8435 = vsel %vm8419, %v8411, %v8427
    %v8436 = vsel %vm8420, %v8412, %v8428
    %v8437 = vsel %vm8421, %v8413, %v8429
    %v8438 = vsel %vm8422, %v8414, %v8430
    %v8439 = vmax.f32 %v8239, %v8303
    %v8440 = vmax.f32 %v8240, %v8304
    %v8441 = vmax.f32 %v8241, %v8305
    %v8442 = vmax.f32 %v8242, %v8306
    %v8443 = vmax.f32 %v8243, %v8307
    %v8444 = vmax.f32 %v8244, %v8308
    %v8445 = vmax.f32 %v8245, %v8309
    %v8446 = vmax.f32 %v8246, %v8310
    %v8447 = vmax.f32 %v8439, %v8367
    %v8448 = vmax.f32 %v8440, %v8368
    %v8449 = vmax.f32 %v8441, %v8369
    %v8450 = vmax.f32 %v8442, %v8370
    %v8451 = vmax.f32 %v8443, %v8371
    %v8452 = vmax.f32 %v8444, %v8372
    %v8453 = vmax.f32 %v8445, %v8373
    %v8454 = vmax.f32 %v8446, %v8374
    %v8455 = vmax.f32 %v8447, %v8431
    %v8456 = vmax.f32 %v8448, %v8432
    %v8457 = vmax.f32 %v8449, %v8433
    %v8458 = vmax.f32 %v8450, %v8434
    %v8459 = vmax.f32 %v8451, %v8435
    %v8460 = vmax.f32 %v8452, %v8436
    %v8461 = vmax.f32 %v8453, %v8437
    %v8462 = vmax.f32 %v8454, %v8438
    %v8463 = vsub.f32 %v8239, %v8455
    %v8464 = vsub.f32 %v8240, %v8456
    %v8465 = vsub.f32 %v8241, %v8457
    %v8466 = vsub.f32 %v8242, %v8458
    %v8467 = vsub.f32 %v8243, %v8459
    %v8468 = vsub.f32 %v8244, %v8460
    %v8469 = vsub.f32 %v8245, %v8461
    %v8470 = vsub.f32 %v8246, %v8462
    %v8471 = vmul.f32 %v8463, 1.442695
    %v8472 = vpow.pop %v8471
    %v8473 = vmul.f32 %v8464, 1.442695
    %v8474 = vpow.pop %v8473
    %v8475 = vmul.f32 %v8465, 1.442695
    %v8476 = vpow.pop %v8475
    %v8477 = vmul.f32 %v8466, 1.442695
    %v8478 = vpow.pop %v8477
    %v8479 = vmul.f32 %v8467, 1.442695
    %v8480 = vpow.pop %v8479
    %v8481 = vmul.f32 %v8468, 1.442695
    %v8482 = vpow.pop %v8481
    %v8483 = vmul.f32 %v8469, 1.442695
    %v8484 = vpow.pop %v8483
    %v8485 = vmul.f32 %v8470, 1.442695
    %v8486 = vpow.pop %v8485
    %v8487 = vsub.f32 %v8303, %v8455
    %v8488 = vsub.f32 %v8304, %v8456
    %v8489 = vsub.f32 %v8305, %v8457
    %v8490 = vsub.f32 %v8306, %v8458
    %v8491 = vsub.f32 %v8307, %v8459
    %v8492 = vsub.f32 %v8308, %v8460
    %v8493 = vsub.f32 %v8309, %v8461
    %v8494 = vsub.f32 %v8310, %v8462
    %v8495 = vmul.f32 %v8487, 1.442695
    %v8496 = vpow.pop %v8495
    %v8497 = vmul.f32 %v8488, 1.442695
    %v8498 = vpow.pop %v8497
    %v8499 = vmul.f32 %v8489, 1.442695
    %v8500 = vpow.pop %v8499
    %v8501 = vmul.f32 %v8490, 1.442695
    %v8502 = vpow.pop %v8501
    %v8503 = vmul.f32 %v8491, 1.442695
    %v8504 = vpow.pop %v8503
    %v8505 = vmul.f32 %v8492, 1.442695
    %v8506 = vpow.pop %v8505
    %v8507 = vmul.f32 %v8493, 1.442695
    %v8508 = vpow.pop %v8507
    %v8509 = vmul.f32 %v8494, 1.442695
    %v8510 = vpow.pop %v8509
    %v8511 = vsub.f32 %v8367, %v8455
    %v8512 = vsub.f32 %v8368, %v8456
    %v8513 = vsub.f32 %v8369, %v8457
    %v8514 = vsub.f32 %v8370, %v8458
    %v8515 = vsub.f32 %v8371, %v8459
    %v8516 = vsub.f32 %v8372, %v8460
    %v8517 = vsub.f32 %v8373, %v8461
    %v8518 = vsub.f32 %v8374, %v8462
    %v8519 = vmul.f32 %v8511, 1.442695
    %v8520 = vpow.pop %v8519
    %v8521 = vmul.f32 %v8512, 1.442695
    %v8522 = vpow.pop %v8521
    %v8523 = vmul.f32 %v8513, 1.442695
    %v8524 = vpow.pop %v8523
    %v8525 = vmul.f32 %v8514, 1.442695
    %v8526 = vpow.pop %v8525
    %v8527 = vmul.f32 %v8515, 1.442695
    %v8528 = vpow.pop %v8527
    %v8529 = vmul.f32 %v8516, 1.442695
    %v8530 = vpow.pop %v8529
    %v8531 = vmul.f32 %v8517, 1.442695
    %v8532 = vpow.pop %v8531
    %v8533 = vmul.f32 %v8518, 1.442695
    %v8534 = vpow.pop %v8533
    %v8535 = vsub.f32 %v8431, %v8455
    %v8536 = vsub.f32 %v8432, %v8456
    %v8537 = vsub.f32 %v8433, %v8457
    %v8538 = vsub.f32 %v8434, %v8458
    %v8539 = vsub.f32 %v8435, %v8459
    %v8540 = vsub.f32 %v8436, %v8460
    %v8541 = vsub.f32 %v8437, %v8461
    %v8542 = vsub.f32 %v8438, %v8462
    %v8543 = vmul.f32 %v8535, 1.442695
    %v8544 = vpow.pop %v8543
    %v8545 = vmul.f32 %v8536, 1.442695
    %v8546 = vpow.pop %v8545
    %v8547 = vmul.f32 %v8537, 1.442695
    %v8548 = vpow.pop %v8547
    %v8549 = vmul.f32 %v8538, 1.442695
    %v8550 = vpow.pop %v8549
    %v8551 = vmul.f32 %v8539, 1.442695
    %v8552 = vpow.pop %v8551
    %v8553 = vmul.f32 %v8540, 1.442695
    %v8554 = vpow.pop %v8553
    %v8555 = vmul.f32 %v8541, 1.442695
    %v8556 = vpow.pop %v8555
    %v8557 = vmul.f32 %v8542, 1.442695
    %v8558 = vpow.pop %v8557
    %v8559 = vadd.f32 %v8472, %v8496
    %v8560 = vadd.f32 %v8474, %v8498
    %v8561 = vadd.f32 %v8476, %v8500
    %v8562 = vadd.f32 %v8478, %v8502
    %v8563 = vadd.f32 %v8480, %v8504
    %v8564 = vadd.f32 %v8482, %v8506
    %v8565 = vadd.f32 %v8484, %v8508
    %v8566 = vadd.f32 %v8486, %v8510
    %v8567 = vadd.f32 %v8559, %v8520
    %v8568 = vadd.f32 %v8560, %v8522
    %v8569 = vadd.f32 %v8561, %v8524
    %v8570 = vadd.f32 %v8562, %v8526
    %v8571 = vadd.f32 %v8563, %v8528
    %v8572 = vadd.f32 %v8564, %v8530
    %v8573 = vadd.f32 %v8565, %v8532
    %v8574 = vadd.f32 %v8566, %v8534
    %v8575 = vadd.f32 %v8567, %v8544
    %v8576 = vadd.f32 %v8568, %v8546
    %v8577 = vadd.f32 %v8569, %v8548
    %v8578 = vadd.f32 %v8570, %v8550
    %v8579 = vadd.f32 %v8571, %v8552
    %v8580 = vadd.f32 %v8572, %v8554
    %v8581 = vadd.f32 %v8573, %v8556
    %v8582 = vadd.f32 %v8574, %v8558
    %v8583 = vrcp.pop %v8575
    %v8584 = vmul.f32 1.0, %v8583
    %v8585 = vrcp.pop %v8576
    %v8586 = vmul.f32 1.0, %v8585
    %v8587 = vrcp.pop %v8577
    %v8588 = vmul.f32 1.0, %v8587
    %v8589 = vrcp.pop %v8578
    %v8590 = vmul.f32 1.0, %v8589
    %v8591 = vrcp.pop %v8579
    %v8592 = vmul.f32 1.0, %v8591
    %v8593 = vrcp.pop %v8580
    %v8594 = vmul.f32 1.0, %v8593
    %v8595 = vrcp.pop %v8581
    %v8596 = vmul.f32 1.0, %v8595
    %v8597 = vrcp.pop %v8582
    %v8598 = vmul.f32 1.0, %v8597
    %v8599 = vmul.f32 %v8472, %v8584
    %v8600 = vmul.f32 %v8474, %v8586
    %v8601 = vmul.f32 %v8476, %v8588
    %v8602 = vmul.f32 %v8478, %v8590
    %v8603 = vmul.f32 %v8480, %v8592
    %v8604 = vmul.f32 %v8482, %v8594
    %v8605 = vmul.f32 %v8484, %v8596
    %v8606 = vmul.f32 %v8486, %v8598
    %8608 = vset.pattern.permute.xlu0 0
    %8609 = vperm.xlu0 %8608, %v8599
    %v8610 = vpop.permute.xlu0 %8609
    %8613 = vset.pattern.permute.xlu0 0
    %8614 = vperm.xlu0 %8613, %v8600
    %v8615 = vpop.permute.xlu0 %8614
    %8618 = vset.pattern.permute.xlu0 0
    %8619 = vperm.xlu0 %8618, %v8601
    %v8620 = vpop.permute.xlu0 %8619
    %8623 = vset.pattern.permute.xlu0 0
    %8624 = vperm.xlu0 %8623, %v8602
    %v8625 = vpop.permute.xlu0 %8624
    %8628 = vset.pattern.permute.xlu0 0
    %8629 = vperm.xlu0 %8628, %v8603
    %v8630 = vpop.permute.xlu0 %8629
    %8633 = vset.pattern.permute.xlu0 0
    %8634 = vperm.xlu0 %8633, %v8604
    %v8635 = vpop.permute.xlu0 %8634
    %8638 = vset.pattern.permute.xlu0 0
    %8639 = vperm.xlu0 %8638, %v8605
    %v8640 = vpop.permute.xlu0 %8639
    %8643 = vset.pattern.permute.xlu0 0
    %8644 = vperm.xlu0 %8643, %v8606
    %v8645 = vpop.permute.xlu0 %8644
    %v8647 = vmul.f32 %v8610, %v7791
    %v8648 = vmul.f32 %v8615, %v7794
    %v8649 = vmul.f32 %v8620, %v7799
    %v8650 = vmul.f32 %v8625, %v7802
    %v8651 = vmul.f32 %v8630, %v7807
    %v8652 = vmul.f32 %v8635, %v7810
    %v8653 = vmul.f32 %v8640, %v7815
    %v8654 = vmul.f32 %v8645, %v7818
    %v8655 = vmul.f32 %v8496, %v8584
    %v8656 = vmul.f32 %v8498, %v8586
    %v8657 = vmul.f32 %v8500, %v8588
    %v8658 = vmul.f32 %v8502, %v8590
    %v8659 = vmul.f32 %v8504, %v8592
    %v8660 = vmul.f32 %v8506, %v8594
    %v8661 = vmul.f32 %v8508, %v8596
    %v8662 = vmul.f32 %v8510, %v8598
    %8664 = vset.pattern.permute.xlu0 0
    %8665 = vperm.xlu0 %8664, %v8655
    %v8666 = vpop.permute.xlu0 %8665
    %8669 = vset.pattern.permute.xlu0 0
    %8670 = vperm.xlu0 %8669, %v8656
    %v8671 = vpop.permute.xlu0 %8670
    %8674 = vset.pattern.permute.xlu0 0
    %8675 = vperm.xlu0 %8674, %v8657
    %v8676 = vpop.permute.xlu0 %8675
    %8679 = vset.pattern.permute.xlu0 0
    %8680 = vperm.xlu0 %8679, %v8658
    %v8681 = vpop.permute.xlu0 %8680
    %8684 = vset.pattern.permute.xlu0 0
    %8685 = vperm.xlu0 %8684, %v8659
    %v8686 = vpop.permute.xlu0 %8685
    %8689 = vset.pattern.permute.xlu0 0
    %8690 = vperm.xlu0 %8689, %v8660
    %v8691 = vpop.permute.xlu0 %8690
    %8694 = vset.pattern.permute.xlu0 0
    %8695 = vperm.xlu0 %8694, %v8661
    %v8696 = vpop.permute.xlu0 %8695
    %8699 = vset.pattern.permute.xlu0 0
    %8700 = vperm.xlu0 %8699, %v8662
    %v8701 = vpop.permute.xlu0 %8700
    %v8703 = vmul.f32 %v8666, %v7823
    %v8704 = vmul.f32 %v8671, %v7826
    %v8705 = vmul.f32 %v8676, %v7831
    %v8706 = vmul.f32 %v8681, %v7834
    %v8707 = vmul.f32 %v8686, %v7839
    %v8708 = vmul.f32 %v8691, %v7842
    %v8709 = vmul.f32 %v8696, %v7847
    %v8710 = vmul.f32 %v8701, %v7850
    %v8711 = vadd.f32 %v8647, %v8703
    %v8712 = vadd.f32 %v8648, %v8704
    %v8713 = vadd.f32 %v8649, %v8705
    %v8714 = vadd.f32 %v8650, %v8706
    %v8715 = vadd.f32 %v8651, %v8707
    %v8716 = vadd.f32 %v8652, %v8708
    %v8717 = vadd.f32 %v8653, %v8709
    %v8718 = vadd.f32 %v8654, %v8710
    %v8719 = vmul.f32 %v8520, %v8584
    %v8720 = vmul.f32 %v8522, %v8586
    %v8721 = vmul.f32 %v8524, %v8588
    %v8722 = vmul.f32 %v8526, %v8590
    %v8723 = vmul.f32 %v8528, %v8592
    %v8724 = vmul.f32 %v8530, %v8594
    %v8725 = vmul.f32 %v8532, %v8596
    %v8726 = vmul.f32 %v8534, %v8598
    %8728 = vset.pattern.permute.xlu0 0
    %8729 = vperm.xlu0 %8728, %v8719
    %v8730 = vpop.permute.xlu0 %8729
    %8733 = vset.pattern.permute.xlu0 0
    %8734 = vperm.xlu0 %8733, %v8720
    %v8735 = vpop.permute.xlu0 %8734
    %8738 = vset.pattern.permute.xlu0 0
    %8739 = vperm.xlu0 %8738, %v8721
    %v8740 = vpop.permute.xlu0 %8739
    %8743 = vset.pattern.permute.xlu0 0
    %8744 = vperm.xlu0 %8743, %v8722
    %v8745 = vpop.permute.xlu0 %8744
    %8748 = vset.pattern.permute.xlu0 0
    %8749 = vperm.xlu0 %8748, %v8723
    %v8750 = vpop.permute.xlu0 %8749
    %8753 = vset.pattern.permute.xlu0 0
    %8754 = vperm.xlu0 %8753, %v8724
    %v8755 = vpop.permute.xlu0 %8754
    %8758 = vset.pattern.permute.xlu0 0
    %8759 = vperm.xlu0 %8758, %v8725
    %v8760 = vpop.permute.xlu0 %8759
    %8763 = vset.pattern.permute.xlu0 0
    %8764 = vperm.xlu0 %8763, %v8726
    %v8765 = vpop.permute.xlu0 %8764
    %v8767 = vmul.f32 %v8730, %v7855
    %v8768 = vmul.f32 %v8735, %v7858
    %v8769 = vmul.f32 %v8740, %v7863
    %v8770 = vmul.f32 %v8745, %v7866
    %v8771 = vmul.f32 %v8750, %v7871
    %v8772 = vmul.f32 %v8755, %v7874
    %v8773 = vmul.f32 %v8760, %v7879
    %v8774 = vmul.f32 %v8765, %v7882
    %v8775 = vadd.f32 %v8711, %v8767
    %v8776 = vadd.f32 %v8712, %v8768
    %v8777 = vadd.f32 %v8713, %v8769
    %v8778 = vadd.f32 %v8714, %v8770
    %v8779 = vadd.f32 %v8715, %v8771
    %v8780 = vadd.f32 %v8716, %v8772
    %v8781 = vadd.f32 %v8717, %v8773
    %v8782 = vadd.f32 %v8718, %v8774
    %v8783 = vmul.f32 %v8544, %v8584
    %v8784 = vmul.f32 %v8546, %v8586
    %v8785 = vmul.f32 %v8548, %v8588
    %v8786 = vmul.f32 %v8550, %v8590
    %v8787 = vmul.f32 %v8552, %v8592
    %v8788 = vmul.f32 %v8554, %v8594
    %v8789 = vmul.f32 %v8556, %v8596
    %v8790 = vmul.f32 %v8558, %v8598
    %8792 = vset.pattern.permute.xlu0 0
    %8793 = vperm.xlu0 %8792, %v8783
    %v8794 = vpop.permute.xlu0 %8793
    %8797 = vset.pattern.permute.xlu0 0
    %8798 = vperm.xlu0 %8797, %v8784
    %v8799 = vpop.permute.xlu0 %8798
    %8802 = vset.pattern.permute.xlu0 0
    %8803 = vperm.xlu0 %8802, %v8785
    %v8804 = vpop.permute.xlu0 %8803
    %8807 = vset.pattern.permute.xlu0 0
    %8808 = vperm.xlu0 %8807, %v8786
    %v8809 = vpop.permute.xlu0 %8808
    %8812 = vset.pattern.permute.xlu0 0
    %8813 = vperm.xlu0 %8812, %v8787
    %v8814 = vpop.permute.xlu0 %8813
    %8817 = vset.pattern.permute.xlu0 0
    %8818 = vperm.xlu0 %8817, %v8788
    %v8819 = vpop.permute.xlu0 %8818
    %8822 = vset.pattern.permute.xlu0 0
    %8823 = vperm.xlu0 %8822, %v8789
    %v8824 = vpop.permute.xlu0 %8823
    %8827 = vset.pattern.permute.xlu0 0
    %8828 = vperm.xlu0 %8827, %v8790
    %v8829 = vpop.permute.xlu0 %8828
    %v8831 = vmul.f32 %v8794, %v7887
    %v8832 = vmul.f32 %v8799, %v7890
    %v8833 = vmul.f32 %v8804, %v7895
    %v8834 = vmul.f32 %v8809, %v7898
    %v8835 = vmul.f32 %v8814, %v7903
    %v8836 = vmul.f32 %v8819, %v7906
    %v8837 = vmul.f32 %v8824, %v7911
    %v8838 = vmul.f32 %v8829, %v7914
    %v8839 = vadd.f32 %v8775, %v8831
    %v8840 = vadd.f32 %v8776, %v8832
    %v8841 = vadd.f32 %v8777, %v8833
    %v8842 = vadd.f32 %v8778, %v8834
    %v8843 = vadd.f32 %v8779, %v8835
    %v8844 = vadd.f32 %v8780, %v8836
    %v8845 = vadd.f32 %v8781, %v8837
    %v8846 = vadd.f32 %v8782, %v8838
    %s8847 = sld [smem:[#allocation3 + $0x5]]
    %s8848 = smul.f32 %s8847, 0.25
    %v8849 = vstv %s8848
    %v8850 = vmul.f32 %v8849, %v8839
    %v8851 = vmul.f32 %v8849, %v8840
    %v8852 = vmul.f32 %v8849, %v8841
    %v8853 = vmul.f32 %v8849, %v8842
    %v8854 = vmul.f32 %v8849, %v8843
    %v8855 = vmul.f32 %v8849, %v8844
    %v8856 = vmul.f32 %v8849, %v8845
    %v8857 = vmul.f32 %v8849, %v8846
    %v8858 = vadd.f32 %v8175, %v8850
    %v8859 = vadd.f32 %v8176, %v8851
    %v8860 = vadd.f32 %v8177, %v8852
    %v8861 = vadd.f32 %v8178, %v8853
    %v8862 = vadd.f32 %v8179, %v8854
    %v8863 = vadd.f32 %v8180, %v8855
    %v8864 = vadd.f32 %v8181, %v8856
    %v8865 = vadd.f32 %v8182, %v8857
    %8874 = vrot.lane.b32.xlu0 %v7919, 96
    %v8875 = vpop.permute.xlu0 %8874
    %8876 = vrot.lane.b32.xlu0 %v7922, 96
    %v8877 = vpop.permute.xlu0 %8876
    %8878 = vrot.lane.b32.xlu0 %v7927, 96
    %v8879 = vpop.permute.xlu0 %8878
    %8880 = vrot.lane.b32.xlu0 %v7930, 96
    %v8881 = vpop.permute.xlu0 %8880
    %8882 = vrot.lane.b32.xlu0 %v7935, 96
    %v8883 = vpop.permute.xlu0 %8882
    %8884 = vrot.lane.b32.xlu0 %v7938, 96
    %v8885 = vpop.permute.xlu0 %8884
    %8886 = vrot.lane.b32.xlu0 %v7943, 96
    %v8887 = vpop.permute.xlu0 %8886
    %8888 = vrot.lane.b32.xlu0 %v7946, 96
    %v8889 = vpop.permute.xlu0 %8888
    %v8898 = vadd.f32 %v6734, %v8875
    %v8899 = vadd.f32 %v6740, %v8877
    %v8900 = vadd.f32 %v6746, %v8879
    %v8901 = vadd.f32 %v6752, %v8881
    %v8902 = vadd.f32 %v6758, %v8883
    %v8903 = vadd.f32 %v6764, %v8885
    %v8904 = vadd.f32 %v6770, %v8887
    %v8905 = vadd.f32 %v6776, %v8889
    %vm8906 = vcmp.gt.f32.partialorder %v8898, 0.0
    %vm8907 = vcmp.gt.f32.partialorder %v8899, 0.0
    %vm8908 = vcmp.gt.f32.partialorder %v8900, 0.0
    %vm8909 = vcmp.gt.f32.partialorder %v8901, 0.0
    %vm8910 = vcmp.gt.f32.partialorder %v8902, 0.0
    %vm8911 = vcmp.gt.f32.partialorder %v8903, 0.0
    %vm8912 = vcmp.gt.f32.partialorder %v8904, 0.0
    %vm8913 = vcmp.gt.f32.partialorder %v8905, 0.0
    %v8914 = vmul.f32 %v8898, 0.2
    %v8915 = vmul.f32 %v8899, 0.2
    %v8916 = vmul.f32 %v8900, 0.2
    %v8917 = vmul.f32 %v8901, 0.2
    %v8918 = vmul.f32 %v8902, 0.2
    %v8919 = vmul.f32 %v8903, 0.2
    %v8920 = vmul.f32 %v8904, 0.2
    %v8921 = vmul.f32 %v8905, 0.2
    %v8922 = vsel %vm8906, %v8898, %v8914
    %v8923 = vsel %vm8907, %v8899, %v8915
    %v8924 = vsel %vm8908, %v8900, %v8916
    %v8925 = vsel %vm8909, %v8901, %v8917
    %v8926 = vsel %vm8910, %v8902, %v8918
    %v8927 = vsel %vm8911, %v8903, %v8919
    %v8928 = vsel %vm8912, %v8904, %v8920
    %v8929 = vsel %vm8913, %v8905, %v8921
    %8938 = vrot.lane.b32.xlu0 %v7951, 96
    %v8939 = vpop.permute.xlu0 %8938
    %8940 = vrot.lane.b32.xlu0 %v7954, 96
    %v8941 = vpop.permute.xlu0 %8940
    %8942 = vrot.lane.b32.xlu0 %v7959, 96
    %v8943 = vpop.permute.xlu0 %8942
    %8944 = vrot.lane.b32.xlu0 %v7962, 96
    %v8945 = vpop.permute.xlu0 %8944
    %8946 = vrot.lane.b32.xlu0 %v7967, 96
    %v8947 = vpop.permute.xlu0 %8946
    %8948 = vrot.lane.b32.xlu0 %v7970, 96
    %v8949 = vpop.permute.xlu0 %8948
    %8950 = vrot.lane.b32.xlu0 %v7975, 96
    %v8951 = vpop.permute.xlu0 %8950
    %8952 = vrot.lane.b32.xlu0 %v7978, 96
    %v8953 = vpop.permute.xlu0 %8952
    %v8962 = vadd.f32 %v6734, %v8939
    %v8963 = vadd.f32 %v6740, %v8941
    %v8964 = vadd.f32 %v6746, %v8943
    %v8965 = vadd.f32 %v6752, %v8945
    %v8966 = vadd.f32 %v6758, %v8947
    %v8967 = vadd.f32 %v6764, %v8949
    %v8968 = vadd.f32 %v6770, %v8951
    %v8969 = vadd.f32 %v6776, %v8953
    %vm8970 = vcmp.gt.f32.partialorder %v8962, 0.0
    %vm8971 = vcmp.gt.f32.partialorder %v8963, 0.0
    %vm8972 = vcmp.gt.f32.partialorder %v8964, 0.0
    %vm8973 = vcmp.gt.f32.partialorder %v8965, 0.0
    %vm8974 = vcmp.gt.f32.partialorder %v8966, 0.0
    %vm8975 = vcmp.gt.f32.partialorder %v8967, 0.0
    %vm8976 = vcmp.gt.f32.partialorder %v8968, 0.0
    %vm8977 = vcmp.gt.f32.partialorder %v8969, 0.0
    %v8978 = vmul.f32 %v8962, 0.2
    %v8979 = vmul.f32 %v8963, 0.2
    %v8980 = vmul.f32 %v8964, 0.2
    %v8981 = vmul.f32 %v8965, 0.2
    %v8982 = vmul.f32 %v8966, 0.2
    %v8983 = vmul.f32 %v8967, 0.2
    %v8984 = vmul.f32 %v8968, 0.2
    %v8985 = vmul.f32 %v8969, 0.2
    %v8986 = vsel %vm8970, %v8962, %v8978
    %v8987 = vsel %vm8971, %v8963, %v8979
    %v8988 = vsel %vm8972, %v8964, %v8980
    %v8989 = vsel %vm8973, %v8965, %v8981
    %v8990 = vsel %vm8974, %v8966, %v8982
    %v8991 = vsel %vm8975, %v8967, %v8983
    %v8992 = vsel %vm8976, %v8968, %v8984
    %v8993 = vsel %vm8977, %v8969, %v8985
    %9002 = vrot.lane.b32.xlu0 %v7983, 96
    %v9003 = vpop.permute.xlu0 %9002
    %9004 = vrot.lane.b32.xlu0 %v7986, 96
    %v9005 = vpop.permute.xlu0 %9004
    %9006 = vrot.lane.b32.xlu0 %v7991, 96
    %v9007 = vpop.permute.xlu0 %9006
    %9008 = vrot.lane.b32.xlu0 %v7994, 96
    %v9009 = vpop.permute.xlu0 %9008
    %9010 = vrot.lane.b32.xlu0 %v7999, 96
    %v9011 = vpop.permute.xlu0 %9010
    %9012 = vrot.lane.b32.xlu0 %v8002, 96
    %v9013 = vpop.permute.xlu0 %9012
    %9014 = vrot.lane.b32.xlu0 %v8007, 96
    %v9015 = vpop.permute.xlu0 %9014
    %9016 = vrot.lane.b32.xlu0 %v8010, 96
    %v9017 = vpop.permute.xlu0 %9016
    %v9026 = vadd.f32 %v6734, %v9003
    %v9027 = vadd.f32 %v6740, %v9005
    %v9028 = vadd.f32 %v6746, %v9007
    %v9029 = vadd.f32 %v6752, %v9009
    %v9030 = vadd.f32 %v6758, %v9011
    %v9031 = vadd.f32 %v6764, %v9013
    %v9032 = vadd.f32 %v6770, %v9015
    %v9033 = vadd.f32 %v6776, %v9017
    %vm9034 = vcmp.gt.f32.partialorder %v9026, 0.0
    %vm9035 = vcmp.gt.f32.partialorder %v9027, 0.0
    %vm9036 = vcmp.gt.f32.partialorder %v9028, 0.0
    %vm9037 = vcmp.gt.f32.partialorder %v9029, 0.0
    %vm9038 = vcmp.gt.f32.partialorder %v9030, 0.0
    %vm9039 = vcmp.gt.f32.partialorder %v9031, 0.0
    %vm9040 = vcmp.gt.f32.partialorder %v9032, 0.0
    %vm9041 = vcmp.gt.f32.partialorder %v9033, 0.0
    %v9042 = vmul.f32 %v9026, 0.2
    %v9043 = vmul.f32 %v9027, 0.2
    %v9044 = vmul.f32 %v9028, 0.2
    %v9045 = vmul.f32 %v9029, 0.2
    %v9046 = vmul.f32 %v9030, 0.2
    %v9047 = vmul.f32 %v9031, 0.2
    %v9048 = vmul.f32 %v9032, 0.2
    %v9049 = vmul.f32 %v9033, 0.2
    %v9050 = vsel %vm9034, %v9026, %v9042
    %v9051 = vsel %vm9035, %v9027, %v9043
    %v9052 = vsel %vm9036, %v9028, %v9044
    %v9053 = vsel %vm9037, %v9029, %v9045
    %v9054 = vsel %vm9038, %v9030, %v9046
    %v9055 = vsel %vm9039, %v9031, %v9047
    %v9056 = vsel %vm9040, %v9032, %v9048
    %v9057 = vsel %vm9041, %v9033, %v9049
    %9066 = vrot.lane.b32.xlu0 %v8015, 96
    %v9067 = vpop.permute.xlu0 %9066
    %9068 = vrot.lane.b32.xlu0 %v8018, 96
    %v9069 = vpop.permute.xlu0 %9068
    %9070 = vrot.lane.b32.xlu0 %v8023, 96
    %v9071 = vpop.permute.xlu0 %9070
    %9072 = vrot.lane.b32.xlu0 %v8026, 96
    %v9073 = vpop.permute.xlu0 %9072
    %9074 = vrot.lane.b32.xlu0 %v8031, 96
    %v9075 = vpop.permute.xlu0 %9074
    %9076 = vrot.lane.b32.xlu0 %v8034, 96
    %v9077 = vpop.permute.xlu0 %9076
    %9078 = vrot.lane.b32.xlu0 %v8039, 96
    %v9079 = vpop.permute.xlu0 %9078
    %9080 = vrot.lane.b32.xlu0 %v8042, 96
    %v9081 = vpop.permute.xlu0 %9080
    %v9090 = vadd.f32 %v6734, %v9067
    %v9091 = vadd.f32 %v6740, %v9069
    %v9092 = vadd.f32 %v6746, %v9071
    %v9093 = vadd.f32 %v6752, %v9073
    %v9094 = vadd.f32 %v6758, %v9075
    %v9095 = vadd.f32 %v6764, %v9077
    %v9096 = vadd.f32 %v6770, %v9079
    %v9097 = vadd.f32 %v6776, %v9081
    %vm9098 = vcmp.gt.f32.partialorder %v9090, 0.0
    %vm9099 = vcmp.gt.f32.partialorder %v9091, 0.0
    %vm9100 = vcmp.gt.f32.partialorder %v9092, 0.0
    %vm9101 = vcmp.gt.f32.partialorder %v9093, 0.0
    %vm9102 = vcmp.gt.f32.partialorder %v9094, 0.0
    %vm9103 = vcmp.gt.f32.partialorder %v9095, 0.0
    %vm9104 = vcmp.gt.f32.partialorder %v9096, 0.0
    %vm9105 = vcmp.gt.f32.partialorder %v9097, 0.0
    %v9106 = vmul.f32 %v9090, 0.2
    %v9107 = vmul.f32 %v9091, 0.2
    %v9108 = vmul.f32 %v9092, 0.2
    %v9109 = vmul.f32 %v9093, 0.2
    %v9110 = vmul.f32 %v9094, 0.2
    %v9111 = vmul.f32 %v9095, 0.2
    %v9112 = vmul.f32 %v9096, 0.2
    %v9113 = vmul.f32 %v9097, 0.2
    %v9114 = vsel %vm9098, %v9090, %v9106
    %v9115 = vsel %vm9099, %v9091, %v9107
    %v9116 = vsel %vm9100, %v9092, %v9108
    %v9117 = vsel %vm9101, %v9093, %v9109
    %v9118 = vsel %vm9102, %v9094, %v9110
    %v9119 = vsel %vm9103, %v9095, %v9111
    %v9120 = vsel %vm9104, %v9096, %v9112
    %v9121 = vsel %vm9105, %v9097, %v9113
    %v9122 = vmax.f32 %v8922, %v8986
    %v9123 = vmax.f32 %v8923, %v8987
    %v9124 = vmax.f32 %v8924, %v8988
    %v9125 = vmax.f32 %v8925, %v8989
    %v9126 = vmax.f32 %v8926, %v8990
    %v9127 = vmax.f32 %v8927, %v8991
    %v9128 = vmax.f32 %v8928, %v8992
    %v9129 = vmax.f32 %v8929, %v8993
    %v9130 = vmax.f32 %v9122, %v9050
    %v9131 = vmax.f32 %v9123, %v9051
    %v9132 = vmax.f32 %v9124, %v9052
    %v9133 = vmax.f32 %v9125, %v9053
    %v9134 = vmax.f32 %v9126, %v9054
    %v9135 = vmax.f32 %v9127, %v9055
    %v9136 = vmax.f32 %v9128, %v9056
    %v9137 = vmax.f32 %v9129, %v9057
    %v9138 = vmax.f32 %v9130, %v9114
    %v9139 = vmax.f32 %v9131, %v9115
    %v9140 = vmax.f32 %v9132, %v9116
    %v9141 = vmax.f32 %v9133, %v9117
    %v9142 = vmax.f32 %v9134, %v9118
    %v9143 = vmax.f32 %v9135, %v9119
    %v9144 = vmax.f32 %v9136, %v9120
    %v9145 = vmax.f32 %v9137, %v9121
    %v9146 = vsub.f32 %v8922, %v9138
    %v9147 = vsub.f32 %v8923, %v9139
    %v9148 = vsub.f32 %v8924, %v9140
    %v9149 = vsub.f32 %v8925, %v9141
    %v9150 = vsub.f32 %v8926, %v9142
    %v9151 = vsub.f32 %v8927, %v9143
    %v9152 = vsub.f32 %v8928, %v9144
    %v9153 = vsub.f32 %v8929, %v9145
    %v9154 = vmul.f32 %v9146, 1.442695
    %v9155 = vpow.pop %v9154
    %v9156 = vmul.f32 %v9147, 1.442695
    %v9157 = vpow.pop %v9156
    %v9158 = vmul.f32 %v9148, 1.442695
    %v9159 = vpow.pop %v9158
    %v9160 = vmul.f32 %v9149, 1.442695
    %v9161 = vpow.pop %v9160
    %v9162 = vmul.f32 %v9150, 1.442695
    %v9163 = vpow.pop %v9162
    %v9164 = vmul.f32 %v9151, 1.442695
    %v9165 = vpow.pop %v9164
    %v9166 = vmul.f32 %v9152, 1.442695
    %v9167 = vpow.pop %v9166
    %v9168 = vmul.f32 %v9153, 1.442695
    %v9169 = vpow.pop %v9168
    %v9170 = vsub.f32 %v8986, %v9138
    %v9171 = vsub.f32 %v8987, %v9139
    %v9172 = vsub.f32 %v8988, %v9140
    %v9173 = vsub.f32 %v8989, %v9141
    %v9174 = vsub.f32 %v8990, %v9142
    %v9175 = vsub.f32 %v8991, %v9143
    %v9176 = vsub.f32 %v8992, %v9144
    %v9177 = vsub.f32 %v8993, %v9145
    %v9178 = vmul.f32 %v9170, 1.442695
    %v9179 = vpow.pop %v9178
    %v9180 = vmul.f32 %v9171, 1.442695
    %v9181 = vpow.pop %v9180
    %v9182 = vmul.f32 %v9172, 1.442695
    %v9183 = vpow.pop %v9182
    %v9184 = vmul.f32 %v9173, 1.442695
    %v9185 = vpow.pop %v9184
    %v9186 = vmul.f32 %v9174, 1.442695
    %v9187 = vpow.pop %v9186
    %v9188 = vmul.f32 %v9175, 1.442695
    %v9189 = vpow.pop %v9188
    %v9190 = vmul.f32 %v9176, 1.442695
    %v9191 = vpow.pop %v9190
    %v9192 = vmul.f32 %v9177, 1.442695
    %v9193 = vpow.pop %v9192
    %v9194 = vsub.f32 %v9050, %v9138
    %v9195 = vsub.f32 %v9051, %v9139
    %v9196 = vsub.f32 %v9052, %v9140
    %v9197 = vsub.f32 %v9053, %v9141
    %v9198 = vsub.f32 %v9054, %v9142
    %v9199 = vsub.f32 %v9055, %v9143
    %v9200 = vsub.f32 %v9056, %v9144
    %v9201 = vsub.f32 %v9057, %v9145
    %v9202 = vmul.f32 %v9194, 1.442695
    %v9203 = vpow.pop %v9202
    %v9204 = vmul.f32 %v9195, 1.442695
    %v9205 = vpow.pop %v9204
    %v9206 = vmul.f32 %v9196, 1.442695
    %v9207 = vpow.pop %v9206
    %v9208 = vmul.f32 %v9197, 1.442695
    %v9209 = vpow.pop %v9208
    %v9210 = vmul.f32 %v9198, 1.442695
    %v9211 = vpow.pop %v9210
    %v9212 = vmul.f32 %v9199, 1.442695
    %v9213 = vpow.pop %v9212
    %v9214 = vmul.f32 %v9200, 1.442695
    %v9215 = vpow.pop %v9214
    %v9216 = vmul.f32 %v9201, 1.442695
    %v9217 = vpow.pop %v9216
    %v9218 = vsub.f32 %v9114, %v9138
    %v9219 = vsub.f32 %v9115, %v9139
    %v9220 = vsub.f32 %v9116, %v9140
    %v9221 = vsub.f32 %v9117, %v9141
    %v9222 = vsub.f32 %v9118, %v9142
    %v9223 = vsub.f32 %v9119, %v9143
    %v9224 = vsub.f32 %v9120, %v9144
    %v9225 = vsub.f32 %v9121, %v9145
    %v9226 = vmul.f32 %v9218, 1.442695
    %v9227 = vpow.pop %v9226
    %v9228 = vmul.f32 %v9219, 1.442695
    %v9229 = vpow.pop %v9228
    %v9230 = vmul.f32 %v9220, 1.442695
    %v9231 = vpow.pop %v9230
    %v9232 = vmul.f32 %v9221, 1.442695
    %v9233 = vpow.pop %v9232
    %v9234 = vmul.f32 %v9222, 1.442695
    %v9235 = vpow.pop %v9234
    %v9236 = vmul.f32 %v9223, 1.442695
    %v9237 = vpow.pop %v9236
    %v9238 = vmul.f32 %v9224, 1.442695
    %v9239 = vpow.pop %v9238
    %v9240 = vmul.f32 %v9225, 1.442695
    %v9241 = vpow.pop %v9240
    %v9242 = vadd.f32 %v9155, %v9179
    %v9243 = vadd.f32 %v9157, %v9181
    %v9244 = vadd.f32 %v9159, %v9183
    %v9245 = vadd.f32 %v9161, %v9185
    %v9246 = vadd.f32 %v9163, %v9187
    %v9247 = vadd.f32 %v9165, %v9189
    %v9248 = vadd.f32 %v9167, %v9191
    %v9249 = vadd.f32 %v9169, %v9193
    %v9250 = vadd.f32 %v9242, %v9203
    %v9251 = vadd.f32 %v9243, %v9205
    %v9252 = vadd.f32 %v9244, %v9207
    %v9253 = vadd.f32 %v9245, %v9209
    %v9254 = vadd.f32 %v9246, %v9211
    %v9255 = vadd.f32 %v9247, %v9213
    %v9256 = vadd.f32 %v9248, %v9215
    %v9257 = vadd.f32 %v9249, %v9217
    %v9258 = vadd.f32 %v9250, %v9227
    %v9259 = vadd.f32 %v9251, %v9229
    %v9260 = vadd.f32 %v9252, %v9231
    %v9261 = vadd.f32 %v9253, %v9233
    %v9262 = vadd.f32 %v9254, %v9235
    %v9263 = vadd.f32 %v9255, %v9237
    %v9264 = vadd.f32 %v9256, %v9239
    %v9265 = vadd.f32 %v9257, %v9241
    %v9266 = vrcp.pop %v9258
    %v9267 = vmul.f32 1.0, %v9266
    %v9268 = vrcp.pop %v9259
    %v9269 = vmul.f32 1.0, %v9268
    %v9270 = vrcp.pop %v9260
    %v9271 = vmul.f32 1.0, %v9270
    %v9272 = vrcp.pop %v9261
    %v9273 = vmul.f32 1.0, %v9272
    %v9274 = vrcp.pop %v9262
    %v9275 = vmul.f32 1.0, %v9274
    %v9276 = vrcp.pop %v9263
    %v9277 = vmul.f32 1.0, %v9276
    %v9278 = vrcp.pop %v9264
    %v9279 = vmul.f32 1.0, %v9278
    %v9280 = vrcp.pop %v9265
    %v9281 = vmul.f32 1.0, %v9280
    %v9282 = vmul.f32 %v9155, %v9267
    %v9283 = vmul.f32 %v9157, %v9269
    %v9284 = vmul.f32 %v9159, %v9271
    %v9285 = vmul.f32 %v9161, %v9273
    %v9286 = vmul.f32 %v9163, %v9275
    %v9287 = vmul.f32 %v9165, %v9277
    %v9288 = vmul.f32 %v9167, %v9279
    %v9289 = vmul.f32 %v9169, %v9281
    %9291 = vset.pattern.permute.xlu0 0
    %9292 = vperm.xlu0 %9291, %v9282
    %v9293 = vpop.permute.xlu0 %9292
    %9296 = vset.pattern.permute.xlu0 0
    %9297 = vperm.xlu0 %9296, %v9283
    %v9298 = vpop.permute.xlu0 %9297
    %9301 = vset.pattern.permute.xlu0 0
    %9302 = vperm.xlu0 %9301, %v9284
    %v9303 = vpop.permute.xlu0 %9302
    %9306 = vset.pattern.permute.xlu0 0
    %9307 = vperm.xlu0 %9306, %v9285
    %v9308 = vpop.permute.xlu0 %9307
    %9311 = vset.pattern.permute.xlu0 0
    %9312 = vperm.xlu0 %9311, %v9286
    %v9313 = vpop.permute.xlu0 %9312
    %9316 = vset.pattern.permute.xlu0 0
    %9317 = vperm.xlu0 %9316, %v9287
    %v9318 = vpop.permute.xlu0 %9317
    %9321 = vset.pattern.permute.xlu0 0
    %9322 = vperm.xlu0 %9321, %v9288
    %v9323 = vpop.permute.xlu0 %9322
    %9326 = vset.pattern.permute.xlu0 0
    %9327 = vperm.xlu0 %9326, %v9289
    %v9328 = vpop.permute.xlu0 %9327
    %v9330 = vmul.f32 %v9293, %v7919
    %v9331 = vmul.f32 %v9298, %v7922
    %v9332 = vmul.f32 %v9303, %v7927
    %v9333 = vmul.f32 %v9308, %v7930
    %v9334 = vmul.f32 %v9313, %v7935
    %v9335 = vmul.f32 %v9318, %v7938
    %v9336 = vmul.f32 %v9323, %v7943
    %v9337 = vmul.f32 %v9328, %v7946
    %v9338 = vmul.f32 %v9179, %v9267
    %v9339 = vmul.f32 %v9181, %v9269
    %v9340 = vmul.f32 %v9183, %v9271
    %v9341 = vmul.f32 %v9185, %v9273
    %v9342 = vmul.f32 %v9187, %v9275
    %v9343 = vmul.f32 %v9189, %v9277
    %v9344 = vmul.f32 %v9191, %v9279
    %v9345 = vmul.f32 %v9193, %v9281
    %9347 = vset.pattern.permute.xlu0 0
    %9348 = vperm.xlu0 %9347, %v9338
    %v9349 = vpop.permute.xlu0 %9348
    %9352 = vset.pattern.permute.xlu0 0
    %9353 = vperm.xlu0 %9352, %v9339
    %v9354 = vpop.permute.xlu0 %9353
    %9357 = vset.pattern.permute.xlu0 0
    %9358 = vperm.xlu0 %9357, %v9340
    %v9359 = vpop.permute.xlu0 %9358
    %9362 = vset.pattern.permute.xlu0 0
    %9363 = vperm.xlu0 %9362, %v9341
    %v9364 = vpop.permute.xlu0 %9363
    %9367 = vset.pattern.permute.xlu0 0
    %9368 = vperm.xlu0 %9367, %v9342
    %v9369 = vpop.permute.xlu0 %9368
    %9372 = vset.pattern.permute.xlu0 0
    %9373 = vperm.xlu0 %9372, %v9343
    %v9374 = vpop.permute.xlu0 %9373
    %9377 = vset.pattern.permute.xlu0 0
    %9378 = vperm.xlu0 %9377, %v9344
    %v9379 = vpop.permute.xlu0 %9378
    %9382 = vset.pattern.permute.xlu0 0
    %9383 = vperm.xlu0 %9382, %v9345
    %v9384 = vpop.permute.xlu0 %9383
    %v9386 = vmul.f32 %v9349, %v7951
    %v9387 = vmul.f32 %v9354, %v7954
    %v9388 = vmul.f32 %v9359, %v7959
    %v9389 = vmul.f32 %v9364, %v7962
    %v9390 = vmul.f32 %v9369, %v7967
    %v9391 = vmul.f32 %v9374, %v7970
    %v9392 = vmul.f32 %v9379, %v7975
    %v9393 = vmul.f32 %v9384, %v7978
    %v9394 = vadd.f32 %v9330, %v9386
    %v9395 = vadd.f32 %v9331, %v9387
    %v9396 = vadd.f32 %v9332, %v9388
    %v9397 = vadd.f32 %v9333, %v9389
    %v9398 = vadd.f32 %v9334, %v9390
    %v9399 = vadd.f32 %v9335, %v9391
    %v9400 = vadd.f32 %v9336, %v9392
    %v9401 = vadd.f32 %v9337, %v9393
    %v9402 = vmul.f32 %v9203, %v9267
    %v9403 = vmul.f32 %v9205, %v9269
    %v9404 = vmul.f32 %v9207, %v9271
    %v9405 = vmul.f32 %v9209, %v9273
    %v9406 = vmul.f32 %v9211, %v9275
    %v9407 = vmul.f32 %v9213, %v9277
    %v9408 = vmul.f32 %v9215, %v9279
    %v9409 = vmul.f32 %v9217, %v9281
    %9411 = vset.pattern.permute.xlu0 0
    %9412 = vperm.xlu0 %9411, %v9402
    %v9413 = vpop.permute.xlu0 %9412
    %9416 = vset.pattern.permute.xlu0 0
    %9417 = vperm.xlu0 %9416, %v9403
    %v9418 = vpop.permute.xlu0 %9417
    %9421 = vset.pattern.permute.xlu0 0
    %9422 = vperm.xlu0 %9421, %v9404
    %v9423 = vpop.permute.xlu0 %9422
    %9426 = vset.pattern.permute.xlu0 0
    %9427 = vperm.xlu0 %9426, %v9405
    %v9428 = vpop.permute.xlu0 %9427
    %9431 = vset.pattern.permute.xlu0 0
    %9432 = vperm.xlu0 %9431, %v9406
    %v9433 = vpop.permute.xlu0 %9432
    %9436 = vset.pattern.permute.xlu0 0
    %9437 = vperm.xlu0 %9436, %v9407
    %v9438 = vpop.permute.xlu0 %9437
    %9441 = vset.pattern.permute.xlu0 0
    %9442 = vperm.xlu0 %9441, %v9408
    %v9443 = vpop.permute.xlu0 %9442
    %9446 = vset.pattern.permute.xlu0 0
    %9447 = vperm.xlu0 %9446, %v9409
    %v9448 = vpop.permute.xlu0 %9447
    %v9450 = vmul.f32 %v9413, %v7983
    %v9451 = vmul.f32 %v9418, %v7986
    %v9452 = vmul.f32 %v9423, %v7991
    %v9453 = vmul.f32 %v9428, %v7994
    %v9454 = vmul.f32 %v9433, %v7999
    %v9455 = vmul.f32 %v9438, %v8002
    %v9456 = vmul.f32 %v9443, %v8007
    %v9457 = vmul.f32 %v9448, %v8010
    %v9458 = vadd.f32 %v9394, %v9450
    %v9459 = vadd.f32 %v9395, %v9451
    %v9460 = vadd.f32 %v9396, %v9452
    %v9461 = vadd.f32 %v9397, %v9453
    %v9462 = vadd.f32 %v9398, %v9454
    %v9463 = vadd.f32 %v9399, %v9455
    %v9464 = vadd.f32 %v9400, %v9456
    %v9465 = vadd.f32 %v9401, %v9457
    %v9466 = vmul.f32 %v9227, %v9267
    %v9467 = vmul.f32 %v9229, %v9269
    %v9468 = vmul.f32 %v9231, %v9271
    %v9469 = vmul.f32 %v9233, %v9273
    %v9470 = vmul.f32 %v9235, %v9275
    %v9471 = vmul.f32 %v9237, %v9277
    %v9472 = vmul.f32 %v9239, %v9279
    %v9473 = vmul.f32 %v9241, %v9281
    %9475 = vset.pattern.permute.xlu0 0
    %9476 = vperm.xlu0 %9475, %v9466
    %v9477 = vpop.permute.xlu0 %9476
    %9480 = vset.pattern.permute.xlu0 0
    %9481 = vperm.xlu0 %9480, %v9467
    %v9482 = vpop.permute.xlu0 %9481
    %9485 = vset.pattern.permute.xlu0 0
    %9486 = vperm.xlu0 %9485, %v9468
    %v9487 = vpop.permute.xlu0 %9486
    %9490 = vset.pattern.permute.xlu0 0
    %9491 = vperm.xlu0 %9490, %v9469
    %v9492 = vpop.permute.xlu0 %9491
    %9495 = vset.pattern.permute.xlu0 0
    %9496 = vperm.xlu0 %9495, %v9470
    %v9497 = vpop.permute.xlu0 %9496
    %9500 = vset.pattern.permute.xlu0 0
    %9501 = vperm.xlu0 %9500, %v9471
    %v9502 = vpop.permute.xlu0 %9501
    %9505 = vset.pattern.permute.xlu0 0
    %9506 = vperm.xlu0 %9505, %v9472
    %v9507 = vpop.permute.xlu0 %9506
    %9510 = vset.pattern.permute.xlu0 0
    %9511 = vperm.xlu0 %9510, %v9473
    %v9512 = vpop.permute.xlu0 %9511
    %v9514 = vmul.f32 %v9477, %v8015
    %v9515 = vmul.f32 %v9482, %v8018
    %v9516 = vmul.f32 %v9487, %v8023
    %v9517 = vmul.f32 %v9492, %v8026
    %v9518 = vmul.f32 %v9497, %v8031
    %v9519 = vmul.f32 %v9502, %v8034
    %v9520 = vmul.f32 %v9507, %v8039
    %v9521 = vmul.f32 %v9512, %v8042
    %v9522 = vadd.f32 %v9458, %v9514
    %v9523 = vadd.f32 %v9459, %v9515
    %v9524 = vadd.f32 %v9460, %v9516
    %v9525 = vadd.f32 %v9461, %v9517
    %v9526 = vadd.f32 %v9462, %v9518
    %v9527 = vadd.f32 %v9463, %v9519
    %v9528 = vadd.f32 %v9464, %v9520
    %v9529 = vadd.f32 %v9465, %v9521
    %s9530 = sld [smem:[#allocation3 + $0x6]]
    %s9531 = smul.f32 %s9530, 0.25
    %v9532 = vstv %s9531
    %v9533 = vmul.f32 %v9532, %v9522
    %v9534 = vmul.f32 %v9532, %v9523
    %v9535 = vmul.f32 %v9532, %v9524
    %v9536 = vmul.f32 %v9532, %v9525
    %v9537 = vmul.f32 %v9532, %v9526
    %v9538 = vmul.f32 %v9532, %v9527
    %v9539 = vmul.f32 %v9532, %v9528
    %v9540 = vmul.f32 %v9532, %v9529
    %v9541 = vadd.f32 %v8858, %v9533
    %v9542 = vadd.f32 %v8859, %v9534
    %v9543 = vadd.f32 %v8860, %v9535
    %v9544 = vadd.f32 %v8861, %v9536
    %v9545 = vadd.f32 %v8862, %v9537
    %v9546 = vadd.f32 %v8863, %v9538
    %v9547 = vadd.f32 %v8864, %v9539
    %v9548 = vadd.f32 %v8865, %v9540
    %9557 = vrot.lane.b32.xlu0 %v8047, 96
    %v9558 = vpop.permute.xlu0 %9557
    %9559 = vrot.lane.b32.xlu0 %v8050, 96
    %v9560 = vpop.permute.xlu0 %9559
    %9561 = vrot.lane.b32.xlu0 %v8055, 96
    %v9562 = vpop.permute.xlu0 %9561
    %9563 = vrot.lane.b32.xlu0 %v8058, 96
    %v9564 = vpop.permute.xlu0 %9563
    %9565 = vrot.lane.b32.xlu0 %v8063, 96
    %v9566 = vpop.permute.xlu0 %9565
    %9567 = vrot.lane.b32.xlu0 %v8066, 96
    %v9568 = vpop.permute.xlu0 %9567
    %9569 = vrot.lane.b32.xlu0 %v8071, 96
    %v9570 = vpop.permute.xlu0 %9569
    %9571 = vrot.lane.b32.xlu0 %v8074, 96
    %v9572 = vpop.permute.xlu0 %9571
    %v9581 = vadd.f32 %v6734, %v9558
    %v9582 = vadd.f32 %v6740, %v9560
    %v9583 = vadd.f32 %v6746, %v9562
    %v9584 = vadd.f32 %v6752, %v9564
    %v9585 = vadd.f32 %v6758, %v9566
    %v9586 = vadd.f32 %v6764, %v9568
    %v9587 = vadd.f32 %v6770, %v9570
    %v9588 = vadd.f32 %v6776, %v9572
    %vm9589 = vcmp.gt.f32.partialorder %v9581, 0.0
    %vm9590 = vcmp.gt.f32.partialorder %v9582, 0.0
    %vm9591 = vcmp.gt.f32.partialorder %v9583, 0.0
    %vm9592 = vcmp.gt.f32.partialorder %v9584, 0.0
    %vm9593 = vcmp.gt.f32.partialorder %v9585, 0.0
    %vm9594 = vcmp.gt.f32.partialorder %v9586, 0.0
    %vm9595 = vcmp.gt.f32.partialorder %v9587, 0.0
    %vm9596 = vcmp.gt.f32.partialorder %v9588, 0.0
    %v9597 = vmul.f32 %v9581, 0.2
    %v9598 = vmul.f32 %v9582, 0.2
    %v9599 = vmul.f32 %v9583, 0.2
    %v9600 = vmul.f32 %v9584, 0.2
    %v9601 = vmul.f32 %v9585, 0.2
    %v9602 = vmul.f32 %v9586, 0.2
    %v9603 = vmul.f32 %v9587, 0.2
    %v9604 = vmul.f32 %v9588, 0.2
    %v9605 = vsel %vm9589, %v9581, %v9597
    %v9606 = vsel %vm9590, %v9582, %v9598
    %v9607 = vsel %vm9591, %v9583, %v9599
    %v9608 = vsel %vm9592, %v9584, %v9600
    %v9609 = vsel %vm9593, %v9585, %v9601
    %v9610 = vsel %vm9594, %v9586, %v9602
    %v9611 = vsel %vm9595, %v9587, %v9603
    %v9612 = vsel %vm9596, %v9588, %v9604
    %9621 = vrot.lane.b32.xlu0 %v8079, 96
    %v9622 = vpop.permute.xlu0 %9621
    %9623 = vrot.lane.b32.xlu0 %v8082, 96
    %v9624 = vpop.permute.xlu0 %9623
    %9625 = vrot.lane.b32.xlu0 %v8087, 96
    %v9626 = vpop.permute.xlu0 %9625
    %9627 = vrot.lane.b32.xlu0 %v8090, 96
    %v9628 = vpop.permute.xlu0 %9627
    %9629 = vrot.lane.b32.xlu0 %v8095, 96
    %v9630 = vpop.permute.xlu0 %9629
    %9631 = vrot.lane.b32.xlu0 %v8098, 96
    %v9632 = vpop.permute.xlu0 %9631
    %9633 = vrot.lane.b32.xlu0 %v8103, 96
    %v9634 = vpop.permute.xlu0 %9633
    %9635 = vrot.lane.b32.xlu0 %v8106, 96
    %v9636 = vpop.permute.xlu0 %9635
    %v9645 = vadd.f32 %v6734, %v9622
    %v9646 = vadd.f32 %v6740, %v9624
    %v9647 = vadd.f32 %v6746, %v9626
    %v9648 = vadd.f32 %v6752, %v9628
    %v9649 = vadd.f32 %v6758, %v9630
    %v9650 = vadd.f32 %v6764, %v9632
    %v9651 = vadd.f32 %v6770, %v9634
    %v9652 = vadd.f32 %v6776, %v9636
    %vm9653 = vcmp.gt.f32.partialorder %v9645, 0.0
    %vm9654 = vcmp.gt.f32.partialorder %v9646, 0.0
    %vm9655 = vcmp.gt.f32.partialorder %v9647, 0.0
    %vm9656 = vcmp.gt.f32.partialorder %v9648, 0.0
    %vm9657 = vcmp.gt.f32.partialorder %v9649, 0.0
    %vm9658 = vcmp.gt.f32.partialorder %v9650, 0.0
    %vm9659 = vcmp.gt.f32.partialorder %v9651, 0.0
    %vm9660 = vcmp.gt.f32.partialorder %v9652, 0.0
    %v9661 = vmul.f32 %v9645, 0.2
    %v9662 = vmul.f32 %v9646, 0.2
    %v9663 = vmul.f32 %v9647, 0.2
    %v9664 = vmul.f32 %v9648, 0.2
    %v9665 = vmul.f32 %v9649, 0.2
    %v9666 = vmul.f32 %v9650, 0.2
    %v9667 = vmul.f32 %v9651, 0.2
    %v9668 = vmul.f32 %v9652, 0.2
    %v9669 = vsel %vm9653, %v9645, %v9661
    %v9670 = vsel %vm9654, %v9646, %v9662
    %v9671 = vsel %vm9655, %v9647, %v9663
    %v9672 = vsel %vm9656, %v9648, %v9664
    %v9673 = vsel %vm9657, %v9649, %v9665
    %v9674 = vsel %vm9658, %v9650, %v9666
    %v9675 = vsel %vm9659, %v9651, %v9667
    %v9676 = vsel %vm9660, %v9652, %v9668
    %9685 = vrot.lane.b32.xlu0 %v8111, 96
    %v9686 = vpop.permute.xlu0 %9685
    %9687 = vrot.lane.b32.xlu0 %v8114, 96
    %v9688 = vpop.permute.xlu0 %9687
    %9689 = vrot.lane.b32.xlu0 %v8119, 96
    %v9690 = vpop.permute.xlu0 %9689
    %9691 = vrot.lane.b32.xlu0 %v8122, 96
    %v9692 = vpop.permute.xlu0 %9691
    %9693 = vrot.lane.b32.xlu0 %v8127, 96
    %v9694 = vpop.permute.xlu0 %9693
    %9695 = vrot.lane.b32.xlu0 %v8130, 96
    %v9696 = vpop.permute.xlu0 %9695
    %9697 = vrot.lane.b32.xlu0 %v8135, 96
    %v9698 = vpop.permute.xlu0 %9697
    %9699 = vrot.lane.b32.xlu0 %v8138, 96
    %v9700 = vpop.permute.xlu0 %9699
    %v9709 = vadd.f32 %v6734, %v9686
    %v9710 = vadd.f32 %v6740, %v9688
    %v9711 = vadd.f32 %v6746, %v9690
    %v9712 = vadd.f32 %v6752, %v9692
    %v9713 = vadd.f32 %v6758, %v9694
    %v9714 = vadd.f32 %v6764, %v9696
    %v9715 = vadd.f32 %v6770, %v9698
    %v9716 = vadd.f32 %v6776, %v9700
    %vm9717 = vcmp.gt.f32.partialorder %v9709, 0.0
    %vm9718 = vcmp.gt.f32.partialorder %v9710, 0.0
    %vm9719 = vcmp.gt.f32.partialorder %v9711, 0.0
    %vm9720 = vcmp.gt.f32.partialorder %v9712, 0.0
    %vm9721 = vcmp.gt.f32.partialorder %v9713, 0.0
    %vm9722 = vcmp.gt.f32.partialorder %v9714, 0.0
    %vm9723 = vcmp.gt.f32.partialorder %v9715, 0.0
    %vm9724 = vcmp.gt.f32.partialorder %v9716, 0.0
    %v9725 = vmul.f32 %v9709, 0.2
    %v9726 = vmul.f32 %v9710, 0.2
    %v9727 = vmul.f32 %v9711, 0.2
    %v9728 = vmul.f32 %v9712, 0.2
    %v9729 = vmul.f32 %v9713, 0.2
    %v9730 = vmul.f32 %v9714, 0.2
    %v9731 = vmul.f32 %v9715, 0.2
    %v9732 = vmul.f32 %v9716, 0.2
    %v9733 = vsel %vm9717, %v9709, %v9725
    %v9734 = vsel %vm9718, %v9710, %v9726
    %v9735 = vsel %vm9719, %v9711, %v9727
    %v9736 = vsel %vm9720, %v9712, %v9728
    %v9737 = vsel %vm9721, %v9713, %v9729
    %v9738 = vsel %vm9722, %v9714, %v9730
    %v9739 = vsel %vm9723, %v9715, %v9731
    %v9740 = vsel %vm9724, %v9716, %v9732
    %9749 = vrot.lane.b32.xlu0 %v8143, 96
    %v9750 = vpop.permute.xlu0 %9749
    %9751 = vrot.lane.b32.xlu0 %v8146, 96
    %v9752 = vpop.permute.xlu0 %9751
    %9753 = vrot.lane.b32.xlu0 %v8151, 96
    %v9754 = vpop.permute.xlu0 %9753
    %9755 = vrot.lane.b32.xlu0 %v8154, 96
    %v9756 = vpop.permute.xlu0 %9755
    %9757 = vrot.lane.b32.xlu0 %v8159, 96
    %v9758 = vpop.permute.xlu0 %9757
    %9759 = vrot.lane.b32.xlu0 %v8162, 96
    %v9760 = vpop.permute.xlu0 %9759
    %9761 = vrot.lane.b32.xlu0 %v8167, 96
    %v9762 = vpop.permute.xlu0 %9761
    %9763 = vrot.lane.b32.xlu0 %v8170, 96
    %v9764 = vpop.permute.xlu0 %9763
    %v9773 = vadd.f32 %v6734, %v9750
    %v9774 = vadd.f32 %v6740, %v9752
    %v9775 = vadd.f32 %v6746, %v9754
    %v9776 = vadd.f32 %v6752, %v9756
    %v9777 = vadd.f32 %v6758, %v9758
    %v9778 = vadd.f32 %v6764, %v9760
    %v9779 = vadd.f32 %v6770, %v9762
    %v9780 = vadd.f32 %v6776, %v9764
    %vm9781 = vcmp.gt.f32.partialorder %v9773, 0.0
    %vm9782 = vcmp.gt.f32.partialorder %v9774, 0.0
    %vm9783 = vcmp.gt.f32.partialorder %v9775, 0.0
    %vm9784 = vcmp.gt.f32.partialorder %v9776, 0.0
    %vm9785 = vcmp.gt.f32.partialorder %v9777, 0.0
    %vm9786 = vcmp.gt.f32.partialorder %v9778, 0.0
    %vm9787 = vcmp.gt.f32.partialorder %v9779, 0.0
    %vm9788 = vcmp.gt.f32.partialorder %v9780, 0.0
    %v9789 = vmul.f32 %v9773, 0.2
    %v9790 = vmul.f32 %v9774, 0.2
    %v9791 = vmul.f32 %v9775, 0.2
    %v9792 = vmul.f32 %v9776, 0.2
    %v9793 = vmul.f32 %v9777, 0.2
    %v9794 = vmul.f32 %v9778, 0.2
    %v9795 = vmul.f32 %v9779, 0.2
    %v9796 = vmul.f32 %v9780, 0.2
    %v9797 = vsel %vm9781, %v9773, %v9789
    %v9798 = vsel %vm9782, %v9774, %v9790
    %v9799 = vsel %vm9783, %v9775, %v9791
    %v9800 = vsel %vm9784, %v9776, %v9792
    %v9801 = vsel %vm9785, %v9777, %v9793
    %v9802 = vsel %vm9786, %v9778, %v9794
    %v9803 = vsel %vm9787, %v9779, %v9795
    %v9804 = vsel %vm9788, %v9780, %v9796
    %v9805 = vmax.f32 %v9605, %v9669
    %v9806 = vmax.f32 %v9606, %v9670
    %v9807 = vmax.f32 %v9607, %v9671
    %v9808 = vmax.f32 %v9608, %v9672
    %v9809 = vmax.f32 %v9609, %v9673
    %v9810 = vmax.f32 %v9610, %v9674
    %v9811 = vmax.f32 %v9611, %v9675
    %v9812 = vmax.f32 %v9612, %v9676
    %v9813 = vmax.f32 %v9805, %v9733
    %v9814 = vmax.f32 %v9806, %v9734
    %v9815 = vmax.f32 %v9807, %v9735
    %v9816 = vmax.f32 %v9808, %v9736
    %v9817 = vmax.f32 %v9809, %v9737
    %v9818 = vmax.f32 %v9810, %v9738
    %v9819 = vmax.f32 %v9811, %v9739
    %v9820 = vmax.f32 %v9812, %v9740
    %v9821 = vmax.f32 %v9813, %v9797
    %v9822 = vmax.f32 %v9814, %v9798
    %v9823 = vmax.f32 %v9815, %v9799
    %v9824 = vmax.f32 %v9816, %v9800
    %v9825 = vmax.f32 %v9817, %v9801
    %v9826 = vmax.f32 %v9818, %v9802
    %v9827 = vmax.f32 %v9819, %v9803
    %v9828 = vmax.f32 %v9820, %v9804
    %v9829 = vsub.f32 %v9605, %v9821
    %v9830 = vsub.f32 %v9606, %v9822
    %v9831 = vsub.f32 %v9607, %v9823
    %v9832 = vsub.f32 %v9608, %v9824
    %v9833 = vsub.f32 %v9609, %v9825
    %v9834 = vsub.f32 %v9610, %v9826
    %v9835 = vsub.f32 %v9611, %v9827
    %v9836 = vsub.f32 %v9612, %v9828
    %v9837 = vmul.f32 %v9829, 1.442695
    %v9838 = vpow.pop %v9837
    %v9839 = vmul.f32 %v9830, 1.442695
    %v9840 = vpow.pop %v9839
    %v9841 = vmul.f32 %v9831, 1.442695
    %v9842 = vpow.pop %v9841
    %v9843 = vmul.f32 %v9832, 1.442695
    %v9844 = vpow.pop %v9843
    %v9845 = vmul.f32 %v9833, 1.442695
    %v9846 = vpow.pop %v9845
    %v9847 = vmul.f32 %v9834, 1.442695
    %v9848 = vpow.pop %v9847
    %v9849 = vmul.f32 %v9835, 1.442695
    %v9850 = vpow.pop %v9849
    %v9851 = vmul.f32 %v9836, 1.442695
    %v9852 = vpow.pop %v9851
    %v9853 = vsub.f32 %v9669, %v9821
    %v9854 = vsub.f32 %v9670, %v9822
    %v9855 = vsub.f32 %v9671, %v9823
    %v9856 = vsub.f32 %v9672, %v9824
    %v9857 = vsub.f32 %v9673, %v9825
    %v9858 = vsub.f32 %v9674, %v9826
    %v9859 = vsub.f32 %v9675, %v9827
    %v9860 = vsub.f32 %v9676, %v9828
    %v9861 = vmul.f32 %v9853, 1.442695
    %v9862 = vpow.pop %v9861
    %v9863 = vmul.f32 %v9854, 1.442695
    %v9864 = vpow.pop %v9863
    %v9865 = vmul.f32 %v9855, 1.442695
    %v9866 = vpow.pop %v9865
    %v9867 = vmul.f32 %v9856, 1.442695
    %v9868 = vpow.pop %v9867
    %v9869 = vmul.f32 %v9857, 1.442695
    %v9870 = vpow.pop %v9869
    %v9871 = vmul.f32 %v9858, 1.442695
    %v9872 = vpow.pop %v9871
    %v9873 = vmul.f32 %v9859, 1.442695
    %v9874 = vpow.pop %v9873
    %v9875 = vmul.f32 %v9860, 1.442695
    %v9876 = vpow.pop %v9875
    %v9877 = vsub.f32 %v9733, %v9821
    %v9878 = vsub.f32 %v9734, %v9822
    %v9879 = vsub.f32 %v9735, %v9823
    %v9880 = vsub.f32 %v9736, %v9824
    %v9881 = vsub.f32 %v9737, %v9825
    %v9882 = vsub.f32 %v9738, %v9826
    %v9883 = vsub.f32 %v9739, %v9827
    %v9884 = vsub.f32 %v9740, %v9828
    %v9885 = vmul.f32 %v9877, 1.442695
    %v9886 = vpow.pop %v9885
    %v9887 = vmul.f32 %v9878, 1.442695
    %v9888 = vpow.pop %v9887
    %v9889 = vmul.f32 %v9879, 1.442695
    %v9890 = vpow.pop %v9889
    %v9891 = vmul.f32 %v9880, 1.442695
    %v9892 = vpow.pop %v9891
    %v9893 = vmul.f32 %v9881, 1.442695
    %v9894 = vpow.pop %v9893
    %v9895 = vmul.f32 %v9882, 1.442695
    %v9896 = vpow.pop %v9895
    %v9897 = vmul.f32 %v9883, 1.442695
    %v9898 = vpow.pop %v9897
    %v9899 = vmul.f32 %v9884, 1.442695
    %v9900 = vpow.pop %v9899
    %v9901 = vsub.f32 %v9797, %v9821
    %v9902 = vsub.f32 %v9798, %v9822
    %v9903 = vsub.f32 %v9799, %v9823
    %v9904 = vsub.f32 %v9800, %v9824
    %v9905 = vsub.f32 %v9801, %v9825
    %v9906 = vsub.f32 %v9802, %v9826
    %v9907 = vsub.f32 %v9803, %v9827
    %v9908 = vsub.f32 %v9804, %v9828
    %v9909 = vmul.f32 %v9901, 1.442695
    %v9910 = vpow.pop %v9909
    %v9911 = vmul.f32 %v9902, 1.442695
    %v9912 = vpow.pop %v9911
    %v9913 = vmul.f32 %v9903, 1.442695
    %v9914 = vpow.pop %v9913
    %v9915 = vmul.f32 %v9904, 1.442695
    %v9916 = vpow.pop %v9915
    %v9917 = vmul.f32 %v9905, 1.442695
    %v9918 = vpow.pop %v9917
    %v9919 = vmul.f32 %v9906, 1.442695
    %v9920 = vpow.pop %v9919
    %v9921 = vmul.f32 %v9907, 1.442695
    %v9922 = vpow.pop %v9921
    %v9923 = vmul.f32 %v9908, 1.442695
    %v9924 = vpow.pop %v9923
    %v9925 = vadd.f32 %v9838, %v9862
    %v9926 = vadd.f32 %v9840, %v9864
    %v9927 = vadd.f32 %v9842, %v9866
    %v9928 = vadd.f32 %v9844, %v9868
    %v9929 = vadd.f32 %v9846, %v9870
    %v9930 = vadd.f32 %v9848, %v9872
    %v9931 = vadd.f32 %v9850, %v9874
    %v9932 = vadd.f32 %v9852, %v9876
    %v9933 = vadd.f32 %v9925, %v9886
    %v9934 = vadd.f32 %v9926, %v9888
    %v9935 = vadd.f32 %v9927, %v9890
    %v9936 = vadd.f32 %v9928, %v9892
    %v9937 = vadd.f32 %v9929, %v9894
    %v9938 = vadd.f32 %v9930, %v9896
    %v9939 = vadd.f32 %v9931, %v9898
    %v9940 = vadd.f32 %v9932, %v9900
    %v9941 = vadd.f32 %v9933, %v9910
    %v9942 = vadd.f32 %v9934, %v9912
    %v9943 = vadd.f32 %v9935, %v9914
    %v9944 = vadd.f32 %v9936, %v9916
    %v9945 = vadd.f32 %v9937, %v9918
    %v9946 = vadd.f32 %v9938, %v9920
    %v9947 = vadd.f32 %v9939, %v9922
    %v9948 = vadd.f32 %v9940, %v9924
    %v9949 = vrcp.pop %v9941
    %v9950 = vmul.f32 1.0, %v9949
    %v9951 = vrcp.pop %v9942
    %v9952 = vmul.f32 1.0, %v9951
    %v9953 = vrcp.pop %v9943
    %v9954 = vmul.f32 1.0, %v9953
    %v9955 = vrcp.pop %v9944
    %v9956 = vmul.f32 1.0, %v9955
    %v9957 = vrcp.pop %v9945
    %v9958 = vmul.f32 1.0, %v9957
    %v9959 = vrcp.pop %v9946
    %v9960 = vmul.f32 1.0, %v9959
    %v9961 = vrcp.pop %v9947
    %v9962 = vmul.f32 1.0, %v9961
    %v9963 = vrcp.pop %v9948
    %v9964 = vmul.f32 1.0, %v9963
    %v9965 = vmul.f32 %v9838, %v9950
    %v9966 = vmul.f32 %v9840, %v9952
    %v9967 = vmul.f32 %v9842, %v9954
    %v9968 = vmul.f32 %v9844, %v9956
    %v9969 = vmul.f32 %v9846, %v9958
    %v9970 = vmul.f32 %v9848, %v9960
    %v9971 = vmul.f32 %v9850, %v9962
    %v9972 = vmul.f32 %v9852, %v9964
    %9974 = vset.pattern.permute.xlu0 0
    %9975 = vperm.xlu0 %9974, %v9965
    %v9976 = vpop.permute.xlu0 %9975
    %9979 = vset.pattern.permute.xlu0 0
    %9980 = vperm.xlu0 %9979, %v9966
    %v9981 = vpop.permute.xlu0 %9980
    %9984 = vset.pattern.permute.xlu0 0
    %9985 = vperm.xlu0 %9984, %v9967
    %v9986 = vpop.permute.xlu0 %9985
    %9989 = vset.pattern.permute.xlu0 0
    %9990 = vperm.xlu0 %9989, %v9968
    %v9991 = vpop.permute.xlu0 %9990
    %9994 = vset.pattern.permute.xlu0 0
    %9995 = vperm.xlu0 %9994, %v9969
    %v9996 = vpop.permute.xlu0 %9995
    %9999 = vset.pattern.permute.xlu0 0
    %10000 = vperm.xlu0 %9999, %v9970
    %v10001 = vpop.permute.xlu0 %10000
    %10004 = vset.pattern.permute.xlu0 0
    %10005 = vperm.xlu0 %10004, %v9971
    %v10006 = vpop.permute.xlu0 %10005
    %10009 = vset.pattern.permute.xlu0 0
    %10010 = vperm.xlu0 %10009, %v9972
    %v10011 = vpop.permute.xlu0 %10010
    %v10013 = vmul.f32 %v9976, %v8047
    %v10014 = vmul.f32 %v9981, %v8050
    %v10015 = vmul.f32 %v9986, %v8055
    %v10016 = vmul.f32 %v9991, %v8058
    %v10017 = vmul.f32 %v9996, %v8063
    %v10018 = vmul.f32 %v10001, %v8066
    %v10019 = vmul.f32 %v10006, %v8071
    %v10020 = vmul.f32 %v10011, %v8074
    %v10021 = vmul.f32 %v9862, %v9950
    %v10022 = vmul.f32 %v9864, %v9952
    %v10023 = vmul.f32 %v9866, %v9954
    %v10024 = vmul.f32 %v9868, %v9956
    %v10025 = vmul.f32 %v9870, %v9958
    %v10026 = vmul.f32 %v9872, %v9960
    %v10027 = vmul.f32 %v9874, %v9962
    %v10028 = vmul.f32 %v9876, %v9964
    %10030 = vset.pattern.permute.xlu0 0
    %10031 = vperm.xlu0 %10030, %v10021
    %v10032 = vpop.permute.xlu0 %10031
    %10035 = vset.pattern.permute.xlu0 0
    %10036 = vperm.xlu0 %10035, %v10022
    %v10037 = vpop.permute.xlu0 %10036
    %10040 = vset.pattern.permute.xlu0 0
    %10041 = vperm.xlu0 %10040, %v10023
    %v10042 = vpop.permute.xlu0 %10041
    %10045 = vset.pattern.permute.xlu0 0
    %10046 = vperm.xlu0 %10045, %v10024
    %v10047 = vpop.permute.xlu0 %10046
    %10050 = vset.pattern.permute.xlu0 0
    %10051 = vperm.xlu0 %10050, %v10025
    %v10052 = vpop.permute.xlu0 %10051
    %10055 = vset.pattern.permute.xlu0 0
    %10056 = vperm.xlu0 %10055, %v10026
    %v10057 = vpop.permute.xlu0 %10056
    %10060 = vset.pattern.permute.xlu0 0
    %10061 = vperm.xlu0 %10060, %v10027
    %v10062 = vpop.permute.xlu0 %10061
    %10065 = vset.pattern.permute.xlu0 0
    %10066 = vperm.xlu0 %10065, %v10028
    %v10067 = vpop.permute.xlu0 %10066
    %v10069 = vmul.f32 %v10032, %v8079
    %v10070 = vmul.f32 %v10037, %v8082
    %v10071 = vmul.f32 %v10042, %v8087
    %v10072 = vmul.f32 %v10047, %v8090
    %v10073 = vmul.f32 %v10052, %v8095
    %v10074 = vmul.f32 %v10057, %v8098
    %v10075 = vmul.f32 %v10062, %v8103
    %v10076 = vmul.f32 %v10067, %v8106
    %v10077 = vadd.f32 %v10013, %v10069
    %v10078 = vadd.f32 %v10014, %v10070
    %v10079 = vadd.f32 %v10015, %v10071
    %v10080 = vadd.f32 %v10016, %v10072
    %v10081 = vadd.f32 %v10017, %v10073
    %v10082 = vadd.f32 %v10018, %v10074
    %v10083 = vadd.f32 %v10019, %v10075
    %v10084 = vadd.f32 %v10020, %v10076
    %v10085 = vmul.f32 %v9886, %v9950
    %v10086 = vmul.f32 %v9888, %v9952
    %v10087 = vmul.f32 %v9890, %v9954
    %v10088 = vmul.f32 %v9892, %v9956
    %v10089 = vmul.f32 %v9894, %v9958
    %v10090 = vmul.f32 %v9896, %v9960
    %v10091 = vmul.f32 %v9898, %v9962
    %v10092 = vmul.f32 %v9900, %v9964
    %10094 = vset.pattern.permute.xlu0 0
    %10095 = vperm.xlu0 %10094, %v10085
    %v10096 = vpop.permute.xlu0 %10095
    %10099 = vset.pattern.permute.xlu0 0
    %10100 = vperm.xlu0 %10099, %v10086
    %v10101 = vpop.permute.xlu0 %10100
    %10104 = vset.pattern.permute.xlu0 0
    %10105 = vperm.xlu0 %10104, %v10087
    %v10106 = vpop.permute.xlu0 %10105
    %10109 = vset.pattern.permute.xlu0 0
    %10110 = vperm.xlu0 %10109, %v10088
    %v10111 = vpop.permute.xlu0 %10110
    %10114 = vset.pattern.permute.xlu0 0
    %10115 = vperm.xlu0 %10114, %v10089
    %v10116 = vpop.permute.xlu0 %10115
    %10119 = vset.pattern.permute.xlu0 0
    %10120 = vperm.xlu0 %10119, %v10090
    %v10121 = vpop.permute.xlu0 %10120
    %10124 = vset.pattern.permute.xlu0 0
    %10125 = vperm.xlu0 %10124, %v10091
    %v10126 = vpop.permute.xlu0 %10125
    %10129 = vset.pattern.permute.xlu0 0
    %10130 = vperm.xlu0 %10129, %v10092
    %v10131 = vpop.permute.xlu0 %10130
    %v10133 = vmul.f32 %v10096, %v8111
    %v10134 = vmul.f32 %v10101, %v8114
    %v10135 = vmul.f32 %v10106, %v8119
    %v10136 = vmul.f32 %v10111, %v8122
    %v10137 = vmul.f32 %v10116, %v8127
    %v10138 = vmul.f32 %v10121, %v8130
    %v10139 = vmul.f32 %v10126, %v8135
    %v10140 = vmul.f32 %v10131, %v8138
    %v10141 = vadd.f32 %v10077, %v10133
    %v10142 = vadd.f32 %v10078, %v10134
    %v10143 = vadd.f32 %v10079, %v10135
    %v10144 = vadd.f32 %v10080, %v10136
    %v10145 = vadd.f32 %v10081, %v10137
    %v10146 = vadd.f32 %v10082, %v10138
    %v10147 = vadd.f32 %v10083, %v10139
    %v10148 = vadd.f32 %v10084, %v10140
    %v10149 = vmul.f32 %v9910, %v9950
    %v10150 = vmul.f32 %v9912, %v9952
    %v10151 = vmul.f32 %v9914, %v9954
    %v10152 = vmul.f32 %v9916, %v9956
    %v10153 = vmul.f32 %v9918, %v9958
    %v10154 = vmul.f32 %v9920, %v9960
    %v10155 = vmul.f32 %v9922, %v9962
    %v10156 = vmul.f32 %v9924, %v9964
    %10158 = vset.pattern.permute.xlu0 0
    %10159 = vperm.xlu0 %10158, %v10149
    %v10160 = vpop.permute.xlu0 %10159
    %10163 = vset.pattern.permute.xlu0 0
    %10164 = vperm.xlu0 %10163, %v10150
    %v10165 = vpop.permute.xlu0 %10164
    %10168 = vset.pattern.permute.xlu0 0
    %10169 = vperm.xlu0 %10168, %v10151
    %v10170 = vpop.permute.xlu0 %10169
    %10173 = vset.pattern.permute.xlu0 0
    %10174 = vperm.xlu0 %10173, %v10152
    %v10175 = vpop.permute.xlu0 %10174
    %10178 = vset.pattern.permute.xlu0 0
    %10179 = vperm.xlu0 %10178, %v10153
    %v10180 = vpop.permute.xlu0 %10179
    %10183 = vset.pattern.permute.xlu0 0
    %10184 = vperm.xlu0 %10183, %v10154
    %v10185 = vpop.permute.xlu0 %10184
    %10188 = vset.pattern.permute.xlu0 0
    %10189 = vperm.xlu0 %10188, %v10155
    %v10190 = vpop.permute.xlu0 %10189
    %10193 = vset.pattern.permute.xlu0 0
    %10194 = vperm.xlu0 %10193, %v10156
    %v10195 = vpop.permute.xlu0 %10194
    %v10197 = vmul.f32 %v10160, %v8143
    %v10198 = vmul.f32 %v10165, %v8146
    %v10199 = vmul.f32 %v10170, %v8151
    %v10200 = vmul.f32 %v10175, %v8154
    %v10201 = vmul.f32 %v10180, %v8159
    %v10202 = vmul.f32 %v10185, %v8162
    %v10203 = vmul.f32 %v10190, %v8167
    %v10204 = vmul.f32 %v10195, %v8170
    %v10205 = vadd.f32 %v10141, %v10197
    %v10206 = vadd.f32 %v10142, %v10198
    %v10207 = vadd.f32 %v10143, %v10199
    %v10208 = vadd.f32 %v10144, %v10200
    %v10209 = vadd.f32 %v10145, %v10201
    %v10210 = vadd.f32 %v10146, %v10202
    %v10211 = vadd.f32 %v10147, %v10203
    %v10212 = vadd.f32 %v10148, %v10204
    %s10213 = sld [smem:[#allocation3 + $0x7]]
    %s10214 = smul.f32 %s10213, 0.25
    %v10215 = vstv %s10214
    %v10216 = vmul.f32 %v10215, %v10205
    %v10217 = vmul.f32 %v10215, %v10206
    %v10218 = vmul.f32 %v10215, %v10207
    %v10219 = vmul.f32 %v10215, %v10208
    %v10220 = vmul.f32 %v10215, %v10209
    %v10221 = vmul.f32 %v10215, %v10210
    %v10222 = vmul.f32 %v10215, %v10211
    %v10223 = vmul.f32 %v10215, %v10212
    %v10224 = vadd.f32 %v9541, %v10216
    %v10225 = vadd.f32 %v9542, %v10217
    %v10226 = vadd.f32 %v9543, %v10218
    %v10227 = vadd.f32 %v9544, %v10219
    %v10228 = vadd.f32 %v9545, %v10220
    %v10229 = vadd.f32 %v9546, %v10221
    %v10230 = vadd.f32 %v9547, %v10222
    %v10231 = vadd.f32 %v9548, %v10223
    %v10232 = vld [vmem:[%s11] sm:$0xff]
    %v10233 = vld [vmem:[%s11 + $0x8] sm:$0xff]
    %v10234 = vld [vmem:[%s11 + $0x10] sm:$0xff]
    %v10235 = vld [vmem:[%s11 + $0x18] sm:$0xff]
    %v10236 = vld [vmem:[%s12] sm:$0x1]
    %v10238 = vlaneseq
    %v10239 = vshrl.u32 %v10238, 7
    %v10240 = vsub.s32 0, %v10239
    %v10241 = vrot.slane %v10236, %v10240
    %v10244 = vsel %vm871, %v10224, 0
    %v10247 = vsel %vm871, %v10225, 0
    %v10250 = vsel %vm871, %v10226, 0
    %v10253 = vsel %vm871, %v10227, 0
    %v10256 = vsel %vm871, %v10228, 0
    %v10259 = vsel %vm871, %v10229, 0
    %v10262 = vsel %vm871, %v10230, 0
    %v10265 = vsel %vm871, %v10231, 0
    %10267 = vmatprep.subr.mxu0 0.0
    %10268 = vmatpush1.msra.mxu0 0.0
    %10269 = vmatprep.subr.mxu0 0.0
    %10270 = vmatpush1.msra.mxu0 0.0
    %10271 = vmatprep.subr.mxu0 0.0
    %10272 = vmatpush1.msra.mxu0 0.0
    %10273 = vmatprep.subr.mxu0 0.0
    %10274 = vmatpush1.msra.mxu0 0.0
    %10275 = vmatprep.subr.mxu0 0.0
    %10276 = vmatpush1.msra.mxu0 0.0
    %10277 = vmatprep.subr.mxu0 0.0
    %10278 = vmatpush1.msra.mxu0 0.0
    %10279 = vmatprep.subr.mxu0 0.0
    %10280 = vmatpush1.msra.mxu0 0.0
    %10281 = vmatprep.subr.mxu0 0.0
    %10282 = vmatpush1.msra.mxu0 0.0
    %10283 = vmatprep.subr.mxu0 0.0
    %10284 = vmatpush1.msra.mxu0 0.0
    %10285 = vmatprep.subr.mxu0 0.0
    %10286 = vmatpush1.msra.mxu0 0.0
    %10287 = vmatprep.subr.mxu0 0.0
    %10288 = vmatpush1.msra.mxu0 0.0
    %10289 = vmatprep.subr.mxu0 0.0
    %10290 = vmatpush1.msra.mxu0 0.0
    %10291 = vmatprep.subr.mxu0 0.0
    %v10292 = vand.u32 %v10235, 4294901760
    %10293 = vmatpush1.msra.mxu0 %v10292
    %10294 = vmatprep.subr.mxu0 0.0
    %v10295 = vand.u32 %v10234, 4294901760
    %10296 = vmatpush1.msra.mxu0 %v10295
    %10297 = vmatprep.subr.mxu0 0.0
    %v10298 = vand.u32 %v10233, 4294901760
    %10299 = vmatpush1.msra.mxu0 %v10298
    %10300 = vmatprep.subr.mxu0 0.0
    %v10301 = vand.u32 %v10232, 4294901760
    %10302 = vmatpush1.msra.mxu0 %v10301
    %10303 = vmatprep.subr.mxu0 0.0
    %10304 = vmatpush2.msra.mxu0 0.0
    %10305 = vmatprep.subr.mxu0 0.0
    %10306 = vmatpush2.msra.mxu0 0.0
    %10307 = vmatprep.subr.mxu0 0.0
    %10308 = vmatpush2.msra.mxu0 0.0
    %10309 = vmatprep.subr.mxu0 0.0
    %10310 = vmatpush2.msra.mxu0 0.0
    %10311 = vmatprep.subr.mxu0 0.0
    %10312 = vmatpush2.msra.mxu0 0.0
    %10313 = vmatprep.subr.mxu0 0.0
    %10314 = vmatpush2.msra.mxu0 0.0
    %10315 = vmatprep.subr.mxu0 0.0
    %10316 = vmatpush2.msra.mxu0 0.0
    %10317 = vmatprep.subr.mxu0 0.0
    %10318 = vmatpush2.msra.mxu0 0.0
    %10319 = vmatprep.subr.mxu0 0.0
    %10320 = vmatpush2.msra.mxu0 0.0
    %10321 = vmatprep.subr.mxu0 0.0
    %10322 = vmatpush2.msra.mxu0 0.0
    %10323 = vmatprep.subr.mxu0 0.0
    %10324 = vmatpush2.msra.mxu0 0.0
    %10325 = vmatprep.subr.mxu0 0.0
    %10326 = vmatpush2.msra.mxu0 0.0
    %10327 = vmatprep.subr.mxu0 0.0
    %10328 = vmatpush2.msra.mxu0 0.0
    %10329 = vmatprep.subr.mxu0 0.0
    %10330 = vmatpush2.msra.mxu0 0.0
    %10331 = vmatprep.subr.mxu0 0.0
    %10332 = vmatpush2.msra.mxu0 0.0
    %10333 = vmatprep.subr.mxu0 0.0
    %10334 = vmatpush2.msra.mxu0 0.0
    %10335 = vmatprep.mubr.f32.mxu0 0.0
    %v10336 = vand.u32 %v10244, 4294901760
    %v10337 = vsub.f32 %v10244, %v10336
    %v10338 = vand.u32 %v10337, 4294901760
    %v10339 = vsub.f32 %v10337, %v10338
    %v10340 = vand.u32 %v10339, 4294901760
    %10341 = vmatmul.mubr.f32.gmra.mxu0 %v10340
    %v10342 = vpop.f32.mrf.mxu0
    %v10343 = vadd.f32 %v10241, %v10342
    %v10344 = vpop.f32.mrf.mxu0
    %10345 = vmatprep.mubr.f32.mxu0 0.0
    %v10346 = vand.u32 %v10247, 4294901760
    %v10347 = vsub.f32 %v10247, %v10346
    %v10348 = vand.u32 %v10347, 4294901760
    %v10349 = vsub.f32 %v10347, %v10348
    %v10350 = vand.u32 %v10349, 4294901760
    %10351 = vmatmul.mubr.f32.gmra.mxu0 %v10350
    %v10352 = vpop.f32.mrf.mxu0
    %v10353 = vadd.f32 %v10241, %v10352
    %v10354 = vpop.f32.mrf.mxu0
    %10355 = vmatprep.mubr.f32.mxu0 0.0
    %v10356 = vand.u32 %v10250, 4294901760
    %v10357 = vsub.f32 %v10250, %v10356
    %v10358 = vand.u32 %v10357, 4294901760
    %v10359 = vsub.f32 %v10357, %v10358
    %v10360 = vand.u32 %v10359, 4294901760
    %10361 = vmatmul.mubr.f32.gmra.mxu0 %v10360
    %v10362 = vpop.f32.mrf.mxu0
    %v10363 = vadd.f32 %v10241, %v10362
    %v10364 = vpop.f32.mrf.mxu0
    %10365 = vmatprep.mubr.f32.mxu0 0.0
    %v10366 = vand.u32 %v10253, 4294901760
    %v10367 = vsub.f32 %v10253, %v10366
    %v10368 = vand.u32 %v10367, 4294901760
    %v10369 = vsub.f32 %v10367, %v10368
    %v10370 = vand.u32 %v10369, 4294901760
    %10371 = vmatmul.mubr.f32.gmra.mxu0 %v10370
    %v10372 = vpop.f32.mrf.mxu0
    %v10373 = vadd.f32 %v10241, %v10372
    %v10374 = vpop.f32.mrf.mxu0
    %10375 = vmatprep.mubr.f32.mxu0 0.0
    %v10376 = vand.u32 %v10256, 4294901760
    %v10377 = vsub.f32 %v10256, %v10376
    %v10378 = vand.u32 %v10377, 4294901760
    %v10379 = vsub.f32 %v10377, %v10378
    %v10380 = vand.u32 %v10379, 4294901760
    %10381 = vmatmul.mubr.f32.gmra.mxu0 %v10380
    %v10382 = vpop.f32.mrf.mxu0
    %v10383 = vadd.f32 %v10241, %v10382
    %v10384 = vpop.f32.mrf.mxu0
    %10385 = vmatprep.mubr.f32.mxu0 0.0
    %v10386 = vand.u32 %v10259, 4294901760
    %v10387 = vsub.f32 %v10259, %v10386
    %v10388 = vand.u32 %v10387, 4294901760
    %v10389 = vsub.f32 %v10387, %v10388
    %v10390 = vand.u32 %v10389, 4294901760
    %10391 = vmatmul.mubr.f32.gmra.mxu0 %v10390
    %v10392 = vpop.f32.mrf.mxu0
    %v10393 = vadd.f32 %v10241, %v10392
    %v10394 = vpop.f32.mrf.mxu0
    %10395 = vmatprep.mubr.f32.mxu0 0.0
    %v10396 = vand.u32 %v10262, 4294901760
    %v10397 = vsub.f32 %v10262, %v10396
    %v10398 = vand.u32 %v10397, 4294901760
    %v10399 = vsub.f32 %v10397, %v10398
    %v10400 = vand.u32 %v10399, 4294901760
    %10401 = vmatmul.mubr.f32.gmra.mxu0 %v10400
    %v10402 = vpop.f32.mrf.mxu0
    %v10403 = vadd.f32 %v10241, %v10402
    %v10404 = vpop.f32.mrf.mxu0
    %10405 = vmatprep.mubr.f32.mxu0 0.0
    %v10406 = vand.u32 %v10265, 4294901760
    %v10407 = vsub.f32 %v10265, %v10406
    %v10408 = vand.u32 %v10407, 4294901760
    %v10409 = vsub.f32 %v10407, %v10408
    %v10410 = vand.u32 %v10409, 4294901760
    %10411 = vmatmul.mubr.f32.gmra.mxu0 %v10410
    %v10412 = vpop.f32.mrf.mxu0
    %v10413 = vadd.f32 %v10241, %v10412
    %v10414 = vpop.f32.mrf.mxu0
    %10415 = vdwg.mxu0
    %10416 = vmatprep.subr.mxu0 0.0
    %10417 = vmatpush1.msra.mxu0 0.0
    %10418 = vmatprep.subr.mxu0 0.0
    %10419 = vmatpush1.msra.mxu0 0.0
    %10420 = vmatprep.subr.mxu0 0.0
    %10421 = vmatpush1.msra.mxu0 0.0
    %10422 = vmatprep.subr.mxu0 0.0
    %10423 = vmatpush1.msra.mxu0 0.0
    %10424 = vmatprep.subr.mxu0 0.0
    %10425 = vmatpush1.msra.mxu0 0.0
    %10426 = vmatprep.subr.mxu0 0.0
    %10427 = vmatpush1.msra.mxu0 0.0
    %10428 = vmatprep.subr.mxu0 0.0
    %10429 = vmatpush1.msra.mxu0 0.0
    %10430 = vmatprep.subr.mxu0 0.0
    %10431 = vmatpush1.msra.mxu0 0.0
    %10432 = vmatprep.subr.mxu0 0.0
    %10433 = vmatpush1.msra.mxu0 0.0
    %10434 = vmatprep.subr.mxu0 0.0
    %10435 = vmatpush1.msra.mxu0 0.0
    %10436 = vmatprep.subr.mxu0 0.0
    %10437 = vmatpush1.msra.mxu0 0.0
    %10438 = vmatprep.subr.mxu0 0.0
    %10439 = vmatpush1.msra.mxu0 0.0
    %10440 = vmatprep.subr.mxu0 0.0
    %v10441 = vand.u32 %v10235, 4294901760
    %v10442 = vsub.f32 %v10235, %v10441
    %v10443 = vand.u32 %v10442, 4294901760
    %v10444 = vsub.f32 %v10442, %v10443
    %v10445 = vand.u32 %v10444, 4294901760
    %10446 = vmatpush1.msra.mxu0 %v10445
    %10447 = vmatprep.subr.mxu0 0.0
    %v10448 = vand.u32 %v10234, 4294901760
    %v10449 = vsub.f32 %v10234, %v10448
    %v10450 = vand.u32 %v10449, 4294901760
    %v10451 = vsub.f32 %v10449, %v10450
    %v10452 = vand.u32 %v10451, 4294901760
    %10453 = vmatpush1.msra.mxu0 %v10452
    %10454 = vmatprep.subr.mxu0 0.0
    %v10455 = vand.u32 %v10233, 4294901760
    %v10456 = vsub.f32 %v10233, %v10455
    %v10457 = vand.u32 %v10456, 4294901760
    %v10458 = vsub.f32 %v10456, %v10457
    %v10459 = vand.u32 %v10458, 4294901760
    %10460 = vmatpush1.msra.mxu0 %v10459
    %10461 = vmatprep.subr.mxu0 0.0
    %v10462 = vand.u32 %v10232, 4294901760
    %v10463 = vsub.f32 %v10232, %v10462
    %v10464 = vand.u32 %v10463, 4294901760
    %v10465 = vsub.f32 %v10463, %v10464
    %v10466 = vand.u32 %v10465, 4294901760
    %10467 = vmatpush1.msra.mxu0 %v10466
    %10468 = vmatprep.subr.mxu0 0.0
    %10469 = vmatpush2.msra.mxu0 0.0
    %10470 = vmatprep.subr.mxu0 0.0
    %10471 = vmatpush2.msra.mxu0 0.0
    %10472 = vmatprep.subr.mxu0 0.0
    %10473 = vmatpush2.msra.mxu0 0.0
    %10474 = vmatprep.subr.mxu0 0.0
    %10475 = vmatpush2.msra.mxu0 0.0
    %10476 = vmatprep.subr.mxu0 0.0
    %10477 = vmatpush2.msra.mxu0 0.0
    %10478 = vmatprep.subr.mxu0 0.0
    %10479 = vmatpush2.msra.mxu0 0.0
    %10480 = vmatprep.subr.mxu0 0.0
    %10481 = vmatpush2.msra.mxu0 0.0
    %10482 = vmatprep.subr.mxu0 0.0
    %10483 = vmatpush2.msra.mxu0 0.0
    %10484 = vmatprep.subr.mxu0 0.0
    %10485 = vmatpush2.msra.mxu0 0.0
    %10486 = vmatprep.subr.mxu0 0.0
    %10487 = vmatpush2.msra.mxu0 0.0
    %10488 = vmatprep.subr.mxu0 0.0
    %10489 = vmatpush2.msra.mxu0 0.0
    %10490 = vmatprep.subr.mxu0 0.0
    %10491 = vmatpush2.msra.mxu0 0.0
    %10492 = vmatprep.subr.mxu0 0.0
    %10493 = vmatpush2.msra.mxu0 0.0
    %10494 = vmatprep.subr.mxu0 0.0
    %10495 = vmatpush2.msra.mxu0 0.0
    %10496 = vmatprep.subr.mxu0 0.0
    %10497 = vmatpush2.msra.mxu0 0.0
    %10498 = vmatprep.subr.mxu0 0.0
    %10499 = vmatpush2.msra.mxu0 0.0
    %10500 = vmatprep.mubr.f32.mxu0 0.0
    %v10501 = vand.u32 %v10244, 4294901760
    %10502 = vmatmul.mubr.f32.gmra.mxu0 %v10501
    %v10503 = vpop.f32.mrf.mxu0
    %v10504 = vadd.f32 %v10343, %v10503
    %v10505 = vpop.f32.mrf.mxu0
    %10506 = vmatprep.mubr.f32.mxu0 0.0
    %v10507 = vand.u32 %v10247, 4294901760
    %10508 = vmatmul.mubr.f32.gmra.mxu0 %v10507
    %v10509 = vpop.f32.mrf.mxu0
    %v10510 = vadd.f32 %v10353, %v10509
    %v10511 = vpop.f32.mrf.mxu0
    %10512 = vmatprep.mubr.f32.mxu0 0.0
    %v10513 = vand.u32 %v10250, 4294901760
    %10514 = vmatmul.mubr.f32.gmra.mxu0 %v10513
    %v10515 = vpop.f32.mrf.mxu0
    %v10516 = vadd.f32 %v10363, %v10515
    %v10517 = vpop.f32.mrf.mxu0
    %10518 = vmatprep.mubr.f32.mxu0 0.0
    %v10519 = vand.u32 %v10253, 4294901760
    %10520 = vmatmul.mubr.f32.gmra.mxu0 %v10519
    %v10521 = vpop.f32.mrf.mxu0
    %v10522 = vadd.f32 %v10373, %v10521
    %v10523 = vpop.f32.mrf.mxu0
    %10524 = vmatprep.mubr.f32.mxu0 0.0
    %v10525 = vand.u32 %v10256, 4294901760
    %10526 = vmatmul.mubr.f32.gmra.mxu0 %v10525
    %v10527 = vpop.f32.mrf.mxu0
    %v10528 = vadd.f32 %v10383, %v10527
    %v10529 = vpop.f32.mrf.mxu0
    %10530 = vmatprep.mubr.f32.mxu0 0.0
    %v10531 = vand.u32 %v10259, 4294901760
    %10532 = vmatmul.mubr.f32.gmra.mxu0 %v10531
    %v10533 = vpop.f32.mrf.mxu0
    %v10534 = vadd.f32 %v10393, %v10533
    %v10535 = vpop.f32.mrf.mxu0
    %10536 = vmatprep.mubr.f32.mxu0 0.0
    %v10537 = vand.u32 %v10262, 4294901760
    %10538 = vmatmul.mubr.f32.gmra.mxu0 %v10537
    %v10539 = vpop.f32.mrf.mxu0
    %v10540 = vadd.f32 %v10403, %v10539
    %v10541 = vpop.f32.mrf.mxu0
    %10542 = vmatprep.mubr.f32.mxu0 0.0
    %v10543 = vand.u32 %v10265, 4294901760
    %10544 = vmatmul.mubr.f32.gmra.mxu0 %v10543
    %v10545 = vpop.f32.mrf.mxu0
    %v10546 = vadd.f32 %v10413, %v10545
    %v10547 = vpop.f32.mrf.mxu0
    %10548 = vdwg.mxu0
    %10549 = vmatprep.subr.mxu0 0.0
    %10550 = vmatpush1.msra.mxu0 0.0
    %10551 = vmatprep.subr.mxu0 0.0
    %10552 = vmatpush1.msra.mxu0 0.0
    %10553 = vmatprep.subr.mxu0 0.0
    %10554 = vmatpush1.msra.mxu0 0.0
    %10555 = vmatprep.subr.mxu0 0.0
    %10556 = vmatpush1.msra.mxu0 0.0
    %10557 = vmatprep.subr.mxu0 0.0
    %10558 = vmatpush1.msra.mxu0 0.0
    %10559 = vmatprep.subr.mxu0 0.0
    %10560 = vmatpush1.msra.mxu0 0.0
    %10561 = vmatprep.subr.mxu0 0.0
    %10562 = vmatpush1.msra.mxu0 0.0
    %10563 = vmatprep.subr.mxu0 0.0
    %10564 = vmatpush1.msra.mxu0 0.0
    %10565 = vmatprep.subr.mxu0 0.0
    %10566 = vmatpush1.msra.mxu0 0.0
    %10567 = vmatprep.subr.mxu0 0.0
    %10568 = vmatpush1.msra.mxu0 0.0
    %10569 = vmatprep.subr.mxu0 0.0
    %10570 = vmatpush1.msra.mxu0 0.0
    %10571 = vmatprep.subr.mxu0 0.0
    %10572 = vmatpush1.msra.mxu0 0.0
    %10573 = vmatprep.subr.mxu0 0.0
    %v10574 = vand.u32 %v10235, 4294901760
    %v10575 = vsub.f32 %v10235, %v10574
    %10576 = vmatpush1.msra.mxu0 %v10575
    %10577 = vmatprep.subr.mxu0 0.0
    %v10578 = vand.u32 %v10234, 4294901760
    %v10579 = vsub.f32 %v10234, %v10578
    %10580 = vmatpush1.msra.mxu0 %v10579
    %10581 = vmatprep.subr.mxu0 0.0
    %v10582 = vand.u32 %v10233, 4294901760
    %v10583 = vsub.f32 %v10233, %v10582
    %10584 = vmatpush1.msra.mxu0 %v10583
    %10585 = vmatprep.subr.mxu0 0.0
    %v10586 = vand.u32 %v10232, 4294901760
    %v10587 = vsub.f32 %v10232, %v10586
    %10588 = vmatpush1.msra.mxu0 %v10587
    %10589 = vmatprep.subr.mxu0 0.0
    %10590 = vmatpush2.msra.mxu0 0.0
    %10591 = vmatprep.subr.mxu0 0.0
    %10592 = vmatpush2.msra.mxu0 0.0
    %10593 = vmatprep.subr.mxu0 0.0
    %10594 = vmatpush2.msra.mxu0 0.0
    %10595 = vmatprep.subr.mxu0 0.0
    %10596 = vmatpush2.msra.mxu0 0.0
    %10597 = vmatprep.subr.mxu0 0.0
    %10598 = vmatpush2.msra.mxu0 0.0
    %10599 = vmatprep.subr.mxu0 0.0
    %10600 = vmatpush2.msra.mxu0 0.0
    %10601 = vmatprep.subr.mxu0 0.0
    %10602 = vmatpush2.msra.mxu0 0.0
    %10603 = vmatprep.subr.mxu0 0.0
    %10604 = vmatpush2.msra.mxu0 0.0
    %10605 = vmatprep.subr.mxu0 0.0
    %10606 = vmatpush2.msra.mxu0 0.0
    %10607 = vmatprep.subr.mxu0 0.0
    %10608 = vmatpush2.msra.mxu0 0.0
    %10609 = vmatprep.subr.mxu0 0.0
    %10610 = vmatpush2.msra.mxu0 0.0
    %10611 = vmatprep.subr.mxu0 0.0
    %10612 = vmatpush2.msra.mxu0 0.0
    %10613 = vmatprep.subr.mxu0 0.0
    %10614 = vmatpush2.msra.mxu0 0.0
    %10615 = vmatprep.subr.mxu0 0.0
    %10616 = vmatpush2.msra.mxu0 0.0
    %10617 = vmatprep.subr.mxu0 0.0
    %10618 = vmatpush2.msra.mxu0 0.0
    %10619 = vmatprep.subr.mxu0 0.0
    %10620 = vmatpush2.msra.mxu0 0.0
    %10621 = vmatprep.mubr.f32.mxu0 0.0
    %v10622 = vand.u32 %v10244, 4294901760
    %v10623 = vsub.f32 %v10244, %v10622
    %10624 = vmatmul.mubr.f32.gmra.mxu0 %v10623
    %v10625 = vpop.f32.mrf.mxu0
    %v10626 = vadd.f32 %v10504, %v10625
    %v10627 = vpop.f32.mrf.mxu0
    %10628 = vmatprep.mubr.f32.mxu0 0.0
    %v10629 = vand.u32 %v10247, 4294901760
    %v10630 = vsub.f32 %v10247, %v10629
    %10631 = vmatmul.mubr.f32.gmra.mxu0 %v10630
    %v10632 = vpop.f32.mrf.mxu0
    %v10633 = vadd.f32 %v10510, %v10632
    %v10634 = vpop.f32.mrf.mxu0
    %10635 = vmatprep.mubr.f32.mxu0 0.0
    %v10636 = vand.u32 %v10250, 4294901760
    %v10637 = vsub.f32 %v10250, %v10636
    %10638 = vmatmul.mubr.f32.gmra.mxu0 %v10637
    %v10639 = vpop.f32.mrf.mxu0
    %v10640 = vadd.f32 %v10516, %v10639
    %v10641 = vpop.f32.mrf.mxu0
    %10642 = vmatprep.mubr.f32.mxu0 0.0
    %v10643 = vand.u32 %v10253, 4294901760
    %v10644 = vsub.f32 %v10253, %v10643
    %10645 = vmatmul.mubr.f32.gmra.mxu0 %v10644
    %v10646 = vpop.f32.mrf.mxu0
    %v10647 = vadd.f32 %v10522, %v10646
    %v10648 = vpop.f32.mrf.mxu0
    %10649 = vmatprep.mubr.f32.mxu0 0.0
    %v10650 = vand.u32 %v10256, 4294901760
    %v10651 = vsub.f32 %v10256, %v10650
    %10652 = vmatmul.mubr.f32.gmra.mxu0 %v10651
    %v10653 = vpop.f32.mrf.mxu0
    %v10654 = vadd.f32 %v10528, %v10653
    %v10655 = vpop.f32.mrf.mxu0
    %10656 = vmatprep.mubr.f32.mxu0 0.0
    %v10657 = vand.u32 %v10259, 4294901760
    %v10658 = vsub.f32 %v10259, %v10657
    %10659 = vmatmul.mubr.f32.gmra.mxu0 %v10658
    %v10660 = vpop.f32.mrf.mxu0
    %v10661 = vadd.f32 %v10534, %v10660
    %v10662 = vpop.f32.mrf.mxu0
    %10663 = vmatprep.mubr.f32.mxu0 0.0
    %v10664 = vand.u32 %v10262, 4294901760
    %v10665 = vsub.f32 %v10262, %v10664
    %10666 = vmatmul.mubr.f32.gmra.mxu0 %v10665
    %v10667 = vpop.f32.mrf.mxu0
    %v10668 = vadd.f32 %v10540, %v10667
    %v10669 = vpop.f32.mrf.mxu0
    %10670 = vmatprep.mubr.f32.mxu0 0.0
    %v10671 = vand.u32 %v10265, 4294901760
    %v10672 = vsub.f32 %v10265, %v10671
    %10673 = vmatmul.mubr.f32.gmra.mxu0 %v10672
    %v10674 = vpop.f32.mrf.mxu0
    %v10675 = vadd.f32 %v10546, %v10674
    %v10676 = vpop.f32.mrf.mxu0
    %10677 = vdwg.mxu0
    %10678 = vmatprep.subr.mxu0 0.0
    %10679 = vmatpush1.msra.mxu0 0.0
    %10680 = vmatprep.subr.mxu0 0.0
    %10681 = vmatpush1.msra.mxu0 0.0
    %10682 = vmatprep.subr.mxu0 0.0
    %10683 = vmatpush1.msra.mxu0 0.0
    %10684 = vmatprep.subr.mxu0 0.0
    %10685 = vmatpush1.msra.mxu0 0.0
    %10686 = vmatprep.subr.mxu0 0.0
    %10687 = vmatpush1.msra.mxu0 0.0
    %10688 = vmatprep.subr.mxu0 0.0
    %10689 = vmatpush1.msra.mxu0 0.0
    %10690 = vmatprep.subr.mxu0 0.0
    %10691 = vmatpush1.msra.mxu0 0.0
    %10692 = vmatprep.subr.mxu0 0.0
    %10693 = vmatpush1.msra.mxu0 0.0
    %10694 = vmatprep.subr.mxu0 0.0
    %10695 = vmatpush1.msra.mxu0 0.0
    %10696 = vmatprep.subr.mxu0 0.0
    %10697 = vmatpush1.msra.mxu0 0.0
    %10698 = vmatprep.subr.mxu0 0.0
    %10699 = vmatpush1.msra.mxu0 0.0
    %10700 = vmatprep.subr.mxu0 0.0
    %10701 = vmatpush1.msra.mxu0 0.0
    %10702 = vmatprep.subr.mxu0 0.0
    %v10703 = vand.u32 %v10235, 4294901760
    %10704 = vmatpush1.msra.mxu0 %v10703
    %10705 = vmatprep.subr.mxu0 0.0
    %v10706 = vand.u32 %v10234, 4294901760
    %10707 = vmatpush1.msra.mxu0 %v10706
    %10708 = vmatprep.subr.mxu0 0.0
    %v10709 = vand.u32 %v10233, 4294901760
    %10710 = vmatpush1.msra.mxu0 %v10709
    %10711 = vmatprep.subr.mxu0 0.0
    %v10712 = vand.u32 %v10232, 4294901760
    %10713 = vmatpush1.msra.mxu0 %v10712
    %10714 = vmatprep.subr.mxu0 0.0
    %10715 = vmatpush2.msra.mxu0 0.0
    %10716 = vmatprep.subr.mxu0 0.0
    %10717 = vmatpush2.msra.mxu0 0.0
    %10718 = vmatprep.subr.mxu0 0.0
    %10719 = vmatpush2.msra.mxu0 0.0
    %10720 = vmatprep.subr.mxu0 0.0
    %10721 = vmatpush2.msra.mxu0 0.0
    %10722 = vmatprep.subr.mxu0 0.0
    %10723 = vmatpush2.msra.mxu0 0.0
    %10724 = vmatprep.subr.mxu0 0.0
    %10725 = vmatpush2.msra.mxu0 0.0
    %10726 = vmatprep.subr.mxu0 0.0
    %10727 = vmatpush2.msra.mxu0 0.0
    %10728 = vmatprep.subr.mxu0 0.0
    %10729 = vmatpush2.msra.mxu0 0.0
    %10730 = vmatprep.subr.mxu0 0.0
    %10731 = vmatpush2.msra.mxu0 0.0
    %10732 = vmatprep.subr.mxu0 0.0
    %10733 = vmatpush2.msra.mxu0 0.0
    %10734 = vmatprep.subr.mxu0 0.0
    %10735 = vmatpush2.msra.mxu0 0.0
    %10736 = vmatprep.subr.mxu0 0.0
    %10737 = vmatpush2.msra.mxu0 0.0
    %10738 = vmatprep.subr.mxu0 0.0
    %10739 = vmatpush2.msra.mxu0 0.0
    %10740 = vmatprep.subr.mxu0 0.0
    %10741 = vmatpush2.msra.mxu0 0.0
    %10742 = vmatprep.subr.mxu0 0.0
    %10743 = vmatpush2.msra.mxu0 0.0
    %10744 = vmatprep.subr.mxu0 0.0
    %10745 = vmatpush2.msra.mxu0 0.0
    %10746 = vmatprep.mubr.f32.mxu0 0.0
    %v10747 = vand.u32 %v10244, 4294901760
    %v10748 = vsub.f32 %v10244, %v10747
    %v10749 = vand.u32 %v10748, 4294901760
    %10750 = vmatmul.mubr.f32.gmra.mxu0 %v10749
    %v10751 = vpop.f32.mrf.mxu0
    %v10752 = vadd.f32 %v10626, %v10751
    %v10753 = vpop.f32.mrf.mxu0
    %10754 = vmatprep.mubr.f32.mxu0 0.0
    %v10755 = vand.u32 %v10247, 4294901760
    %v10756 = vsub.f32 %v10247, %v10755
    %v10757 = vand.u32 %v10756, 4294901760
    %10758 = vmatmul.mubr.f32.gmra.mxu0 %v10757
    %v10759 = vpop.f32.mrf.mxu0
    %v10760 = vadd.f32 %v10633, %v10759
    %v10761 = vpop.f32.mrf.mxu0
    %10762 = vmatprep.mubr.f32.mxu0 0.0
    %v10763 = vand.u32 %v10250, 4294901760
    %v10764 = vsub.f32 %v10250, %v10763
    %v10765 = vand.u32 %v10764, 4294901760
    %10766 = vmatmul.mubr.f32.gmra.mxu0 %v10765
    %v10767 = vpop.f32.mrf.mxu0
    %v10768 = vadd.f32 %v10640, %v10767
    %v10769 = vpop.f32.mrf.mxu0
    %10770 = vmatprep.mubr.f32.mxu0 0.0
    %v10771 = vand.u32 %v10253, 4294901760
    %v10772 = vsub.f32 %v10253, %v10771
    %v10773 = vand.u32 %v10772, 4294901760
    %10774 = vmatmul.mubr.f32.gmra.mxu0 %v10773
    %v10775 = vpop.f32.mrf.mxu0
    %v10776 = vadd.f32 %v10647, %v10775
    %v10777 = vpop.f32.mrf.mxu0
    %10778 = vmatprep.mubr.f32.mxu0 0.0
    %v10779 = vand.u32 %v10256, 4294901760
    %v10780 = vsub.f32 %v10256, %v10779
    %v10781 = vand.u32 %v10780, 4294901760
    %10782 = vmatmul.mubr.f32.gmra.mxu0 %v10781
    %v10783 = vpop.f32.mrf.mxu0
    %v10784 = vadd.f32 %v10654, %v10783
    %v10785 = vpop.f32.mrf.mxu0
    %10786 = vmatprep.mubr.f32.mxu0 0.0
    %v10787 = vand.u32 %v10259, 4294901760
    %v10788 = vsub.f32 %v10259, %v10787
    %v10789 = vand.u32 %v10788, 4294901760
    %10790 = vmatmul.mubr.f32.gmra.mxu0 %v10789
    %v10791 = vpop.f32.mrf.mxu0
    %v10792 = vadd.f32 %v10661, %v10791
    %v10793 = vpop.f32.mrf.mxu0
    %10794 = vmatprep.mubr.f32.mxu0 0.0
    %v10795 = vand.u32 %v10262, 4294901760
    %v10796 = vsub.f32 %v10262, %v10795
    %v10797 = vand.u32 %v10796, 4294901760
    %10798 = vmatmul.mubr.f32.gmra.mxu0 %v10797
    %v10799 = vpop.f32.mrf.mxu0
    %v10800 = vadd.f32 %v10668, %v10799
    %v10801 = vpop.f32.mrf.mxu0
    %10802 = vmatprep.mubr.f32.mxu0 0.0
    %v10803 = vand.u32 %v10265, 4294901760
    %v10804 = vsub.f32 %v10265, %v10803
    %v10805 = vand.u32 %v10804, 4294901760
    %10806 = vmatmul.mubr.f32.gmra.mxu0 %v10805
    %v10807 = vpop.f32.mrf.mxu0
    %v10808 = vadd.f32 %v10675, %v10807
    %v10809 = vpop.f32.mrf.mxu0
    %10810 = vdwg.mxu0
    %10811 = vmatprep.subr.mxu0 0.0
    %10812 = vmatpush1.msra.mxu0 0.0
    %10813 = vmatprep.subr.mxu0 0.0
    %10814 = vmatpush1.msra.mxu0 0.0
    %10815 = vmatprep.subr.mxu0 0.0
    %10816 = vmatpush1.msra.mxu0 0.0
    %10817 = vmatprep.subr.mxu0 0.0
    %10818 = vmatpush1.msra.mxu0 0.0
    %10819 = vmatprep.subr.mxu0 0.0
    %10820 = vmatpush1.msra.mxu0 0.0
    %10821 = vmatprep.subr.mxu0 0.0
    %10822 = vmatpush1.msra.mxu0 0.0
    %10823 = vmatprep.subr.mxu0 0.0
    %10824 = vmatpush1.msra.mxu0 0.0
    %10825 = vmatprep.subr.mxu0 0.0
    %10826 = vmatpush1.msra.mxu0 0.0
    %10827 = vmatprep.subr.mxu0 0.0
    %10828 = vmatpush1.msra.mxu0 0.0
    %10829 = vmatprep.subr.mxu0 0.0
    %10830 = vmatpush1.msra.mxu0 0.0
    %10831 = vmatprep.subr.mxu0 0.0
    %10832 = vmatpush1.msra.mxu0 0.0
    %10833 = vmatprep.subr.mxu0 0.0
    %10834 = vmatpush1.msra.mxu0 0.0
    %10835 = vmatprep.subr.mxu0 0.0
    %v10836 = vand.u32 %v10235, 4294901760
    %v10837 = vsub.f32 %v10235, %v10836
    %v10838 = vand.u32 %v10837, 4294901760
    %10839 = vmatpush1.msra.mxu0 %v10838
    %10840 = vmatprep.subr.mxu0 0.0
    %v10841 = vand.u32 %v10234, 4294901760
    %v10842 = vsub.f32 %v10234, %v10841
    %v10843 = vand.u32 %v10842, 4294901760
    %10844 = vmatpush1.msra.mxu0 %v10843
    %10845 = vmatprep.subr.mxu0 0.0
    %v10846 = vand.u32 %v10233, 4294901760
    %v10847 = vsub.f32 %v10233, %v10846
    %v10848 = vand.u32 %v10847, 4294901760
    %10849 = vmatpush1.msra.mxu0 %v10848
    %10850 = vmatprep.subr.mxu0 0.0
    %v10851 = vand.u32 %v10232, 4294901760
    %v10852 = vsub.f32 %v10232, %v10851
    %v10853 = vand.u32 %v10852, 4294901760
    %10854 = vmatpush1.msra.mxu0 %v10853
    %10855 = vmatprep.subr.mxu0 0.0
    %10856 = vmatpush2.msra.mxu0 0.0
    %10857 = vmatprep.subr.mxu0 0.0
    %10858 = vmatpush2.msra.mxu0 0.0
    %10859 = vmatprep.subr.mxu0 0.0
    %10860 = vmatpush2.msra.mxu0 0.0
    %10861 = vmatprep.subr.mxu0 0.0
    %10862 = vmatpush2.msra.mxu0 0.0
    %10863 = vmatprep.subr.mxu0 0.0
    %10864 = vmatpush2.msra.mxu0 0.0
    %10865 = vmatprep.subr.mxu0 0.0
    %10866 = vmatpush2.msra.mxu0 0.0
    %10867 = vmatprep.subr.mxu0 0.0
    %10868 = vmatpush2.msra.mxu0 0.0
    %10869 = vmatprep.subr.mxu0 0.0
    %10870 = vmatpush2.msra.mxu0 0.0
    %10871 = vmatprep.subr.mxu0 0.0
    %10872 = vmatpush2.msra.mxu0 0.0
    %10873 = vmatprep.subr.mxu0 0.0
    %10874 = vmatpush2.msra.mxu0 0.0
    %10875 = vmatprep.subr.mxu0 0.0
    %10876 = vmatpush2.msra.mxu0 0.0
    %10877 = vmatprep.subr.mxu0 0.0
    %10878 = vmatpush2.msra.mxu0 0.0
    %10879 = vmatprep.subr.mxu0 0.0
    %10880 = vmatpush2.msra.mxu0 0.0
    %10881 = vmatprep.subr.mxu0 0.0
    %10882 = vmatpush2.msra.mxu0 0.0
    %10883 = vmatprep.subr.mxu0 0.0
    %10884 = vmatpush2.msra.mxu0 0.0
    %10885 = vmatprep.subr.mxu0 0.0
    %10886 = vmatpush2.msra.mxu0 0.0
    %10887 = vmatprep.mubr.f32.mxu0 0.0
    %v10888 = vand.u32 %v10244, 4294901760
    %10889 = vmatmul.mubr.f32.gmra.mxu0 %v10888
    %v10890 = vpop.f32.mrf.mxu0
    %v10891 = vadd.f32 %v10752, %v10890
    %v10892 = vpop.f32.mrf.mxu0
    %10893 = vmatprep.mubr.f32.mxu0 0.0
    %v10894 = vand.u32 %v10247, 4294901760
    %10895 = vmatmul.mubr.f32.gmra.mxu0 %v10894
    %v10896 = vpop.f32.mrf.mxu0
    %v10897 = vadd.f32 %v10760, %v10896
    %v10898 = vpop.f32.mrf.mxu0
    %10899 = vmatprep.mubr.f32.mxu0 0.0
    %v10900 = vand.u32 %v10250, 4294901760
    %10901 = vmatmul.mubr.f32.gmra.mxu0 %v10900
    %v10902 = vpop.f32.mrf.mxu0
    %v10903 = vadd.f32 %v10768, %v10902
    %v10904 = vpop.f32.mrf.mxu0
    %10905 = vmatprep.mubr.f32.mxu0 0.0
    %v10906 = vand.u32 %v10253, 4294901760
    %10907 = vmatmul.mubr.f32.gmra.mxu0 %v10906
    %v10908 = vpop.f32.mrf.mxu0
    %v10909 = vadd.f32 %v10776, %v10908
    %v10910 = vpop.f32.mrf.mxu0
    %10911 = vmatprep.mubr.f32.mxu0 0.0
    %v10912 = vand.u32 %v10256, 4294901760
    %10913 = vmatmul.mubr.f32.gmra.mxu0 %v10912
    %v10914 = vpop.f32.mrf.mxu0
    %v10915 = vadd.f32 %v10784, %v10914
    %v10916 = vpop.f32.mrf.mxu0
    %10917 = vmatprep.mubr.f32.mxu0 0.0
    %v10918 = vand.u32 %v10259, 4294901760
    %10919 = vmatmul.mubr.f32.gmra.mxu0 %v10918
    %v10920 = vpop.f32.mrf.mxu0
    %v10921 = vadd.f32 %v10792, %v10920
    %v10922 = vpop.f32.mrf.mxu0
    %10923 = vmatprep.mubr.f32.mxu0 0.0
    %v10924 = vand.u32 %v10262, 4294901760
    %10925 = vmatmul.mubr.f32.gmra.mxu0 %v10924
    %v10926 = vpop.f32.mrf.mxu0
    %v10927 = vadd.f32 %v10800, %v10926
    %v10928 = vpop.f32.mrf.mxu0
    %10929 = vmatprep.mubr.f32.mxu0 0.0
    %v10930 = vand.u32 %v10265, 4294901760
    %10931 = vmatmul.mubr.f32.gmra.mxu0 %v10930
    %v10932 = vpop.f32.mrf.mxu0
    %v10933 = vadd.f32 %v10808, %v10932
    %v10934 = vpop.f32.mrf.mxu0
    %10935 = vdwg.mxu0
    %10936 = vmatprep.subr.mxu0 0.0
    %10937 = vmatpush1.msra.mxu0 0.0
    %10938 = vmatprep.subr.mxu0 0.0
    %10939 = vmatpush1.msra.mxu0 0.0
    %10940 = vmatprep.subr.mxu0 0.0
    %10941 = vmatpush1.msra.mxu0 0.0
    %10942 = vmatprep.subr.mxu0 0.0
    %10943 = vmatpush1.msra.mxu0 0.0
    %10944 = vmatprep.subr.mxu0 0.0
    %10945 = vmatpush1.msra.mxu0 0.0
    %10946 = vmatprep.subr.mxu0 0.0
    %10947 = vmatpush1.msra.mxu0 0.0
    %10948 = vmatprep.subr.mxu0 0.0
    %10949 = vmatpush1.msra.mxu0 0.0
    %10950 = vmatprep.subr.mxu0 0.0
    %10951 = vmatpush1.msra.mxu0 0.0
    %10952 = vmatprep.subr.mxu0 0.0
    %10953 = vmatpush1.msra.mxu0 0.0
    %10954 = vmatprep.subr.mxu0 0.0
    %10955 = vmatpush1.msra.mxu0 0.0
    %10956 = vmatprep.subr.mxu0 0.0
    %10957 = vmatpush1.msra.mxu0 0.0
    %10958 = vmatprep.subr.mxu0 0.0
    %10959 = vmatpush1.msra.mxu0 0.0
    %10960 = vmatprep.subr.mxu0 0.0
    %v10961 = vand.u32 %v10235, 4294901760
    %10962 = vmatpush1.msra.mxu0 %v10961
    %10963 = vmatprep.subr.mxu0 0.0
    %v10964 = vand.u32 %v10234, 4294901760
    %10965 = vmatpush1.msra.mxu0 %v10964
    %10966 = vmatprep.subr.mxu0 0.0
    %v10967 = vand.u32 %v10233, 4294901760
    %10968 = vmatpush1.msra.mxu0 %v10967
    %10969 = vmatprep.subr.mxu0 0.0
    %v10970 = vand.u32 %v10232, 4294901760
    %10971 = vmatpush1.msra.mxu0 %v10970
    %10972 = vmatprep.subr.mxu0 0.0
    %10973 = vmatpush2.msra.mxu0 0.0
    %10974 = vmatprep.subr.mxu0 0.0
    %10975 = vmatpush2.msra.mxu0 0.0
    %10976 = vmatprep.subr.mxu0 0.0
    %10977 = vmatpush2.msra.mxu0 0.0
    %10978 = vmatprep.subr.mxu0 0.0
    %10979 = vmatpush2.msra.mxu0 0.0
    %10980 = vmatprep.subr.mxu0 0.0
    %10981 = vmatpush2.msra.mxu0 0.0
    %10982 = vmatprep.subr.mxu0 0.0
    %10983 = vmatpush2.msra.mxu0 0.0
    %10984 = vmatprep.subr.mxu0 0.0
    %10985 = vmatpush2.msra.mxu0 0.0
    %10986 = vmatprep.subr.mxu0 0.0
    %10987 = vmatpush2.msra.mxu0 0.0
    %10988 = vmatprep.subr.mxu0 0.0
    %10989 = vmatpush2.msra.mxu0 0.0
    %10990 = vmatprep.subr.mxu0 0.0
    %10991 = vmatpush2.msra.mxu0 0.0
    %10992 = vmatprep.subr.mxu0 0.0
    %10993 = vmatpush2.msra.mxu0 0.0
    %10994 = vmatprep.subr.mxu0 0.0
    %10995 = vmatpush2.msra.mxu0 0.0
    %10996 = vmatprep.subr.mxu0 0.0
    %10997 = vmatpush2.msra.mxu0 0.0
    %10998 = vmatprep.subr.mxu0 0.0
    %10999 = vmatpush2.msra.mxu0 0.0
    %11000 = vmatprep.subr.mxu0 0.0
    %11001 = vmatpush2.msra.mxu0 0.0
    %11002 = vmatprep.subr.mxu0 0.0
    %11003 = vmatpush2.msra.mxu0 0.0
    %11004 = vmatprep.mubr.f32.mxu0 0.0
    %v11005 = vand.u32 %v10244, 4294901760
    %11006 = vmatmul.mubr.f32.gmra.mxu0 %v11005
    %v11007 = vpop.f32.mrf.mxu0
    %v11008 = vadd.f32 %v10891, %v11007
    %v11009 = vpop.f32.mrf.mxu0
    %11010 = vmatprep.mubr.f32.mxu0 0.0
    %v11011 = vand.u32 %v10247, 4294901760
    %11012 = vmatmul.mubr.f32.gmra.mxu0 %v11011
    %v11013 = vpop.f32.mrf.mxu0
    %v11014 = vadd.f32 %v10897, %v11013
    %v11015 = vpop.f32.mrf.mxu0
    %11016 = vmatprep.mubr.f32.mxu0 0.0
    %v11017 = vand.u32 %v10250, 4294901760
    %11018 = vmatmul.mubr.f32.gmra.mxu0 %v11017
    %v11019 = vpop.f32.mrf.mxu0
    %v11020 = vadd.f32 %v10903, %v11019
    %v11021 = vpop.f32.mrf.mxu0
    %11022 = vmatprep.mubr.f32.mxu0 0.0
    %v11023 = vand.u32 %v10253, 4294901760
    %11024 = vmatmul.mubr.f32.gmra.mxu0 %v11023
    %v11025 = vpop.f32.mrf.mxu0
    %v11026 = vadd.f32 %v10909, %v11025
    %v11027 = vpop.f32.mrf.mxu0
    %11028 = vmatprep.mubr.f32.mxu0 0.0
    %v11029 = vand.u32 %v10256, 4294901760
    %11030 = vmatmul.mubr.f32.gmra.mxu0 %v11029
    %v11031 = vpop.f32.mrf.mxu0
    %v11032 = vadd.f32 %v10915, %v11031
    %v11033 = vpop.f32.mrf.mxu0
    %11034 = vmatprep.mubr.f32.mxu0 0.0
    %v11035 = vand.u32 %v10259, 4294901760
    %11036 = vmatmul.mubr.f32.gmra.mxu0 %v11035
    %v11037 = vpop.f32.mrf.mxu0
    %v11038 = vadd.f32 %v10921, %v11037
    %v11039 = vpop.f32.mrf.mxu0
    %11040 = vmatprep.mubr.f32.mxu0 0.0
    %v11041 = vand.u32 %v10262, 4294901760
    %11042 = vmatmul.mubr.f32.gmra.mxu0 %v11041
    %v11043 = vpop.f32.mrf.mxu0
    %v11044 = vadd.f32 %v10927, %v11043
    %v11045 = vpop.f32.mrf.mxu0
    %11046 = vmatprep.mubr.f32.mxu0 0.0
    %v11047 = vand.u32 %v10265, 4294901760
    %11048 = vmatmul.mubr.f32.gmra.mxu0 %v11047
    %v11049 = vpop.f32.mrf.mxu0
    %v11050 = vadd.f32 %v10933, %v11049
    %v11051 = vpop.f32.mrf.mxu0
    %11052 = vdwg.mxu0
    %vm11053 = vcmask 31744
    %v11054 = vsel %vm11053, %v11008, -inf
    %11055 = vmax.xlane.f32.xlu0 %v11054
    %v11056 = vpop.xlane.xlu0 %11055
    %v11057 = vsel %vm11053, %v11014, -inf
    %11058 = vmax.xlane.f32.xlu0 %v11057
    %v11059 = vpop.xlane.xlu0 %11058
    %v11060 = vsel %vm11053, %v11020, -inf
    %11061 = vmax.xlane.f32.xlu0 %v11060
    %v11062 = vpop.xlane.xlu0 %11061
    %v11063 = vsel %vm11053, %v11026, -inf
    %11064 = vmax.xlane.f32.xlu0 %v11063
    %v11065 = vpop.xlane.xlu0 %11064
    %v11066 = vsel %vm11053, %v11032, -inf
    %11067 = vmax.xlane.f32.xlu0 %v11066
    %v11068 = vpop.xlane.xlu0 %11067
    %v11069 = vsel %vm11053, %v11038, -inf
    %11070 = vmax.xlane.f32.xlu0 %v11069
    %v11071 = vpop.xlane.xlu0 %11070
    %v11072 = vsel %vm11053, %v11044, -inf
    %11073 = vmax.xlane.f32.xlu0 %v11072
    %v11074 = vpop.xlane.xlu0 %11073
    %v11075 = vsel %vm11053, %v11050, -inf
    %11076 = vmax.xlane.f32.xlu0 %v11075
    %v11077 = vpop.xlane.xlu0 %11076
    %v11078 = vsub.f32 %v11008, %v11056
    %v11079 = vsub.f32 %v11014, %v11059
    %v11080 = vsub.f32 %v11020, %v11062
    %v11081 = vsub.f32 %v11026, %v11065
    %v11082 = vsub.f32 %v11032, %v11068
    %v11083 = vsub.f32 %v11038, %v11071
    %v11084 = vsub.f32 %v11044, %v11074
    %v11085 = vsub.f32 %v11050, %v11077
    %v11086 = vmul.f32 %v11078, 1.442695
    %v11087 = vpow.pop %v11086
    %v11088 = vmul.f32 %v11079, 1.442695
    %v11089 = vpow.pop %v11088
    %v11090 = vmul.f32 %v11080, 1.442695
    %v11091 = vpow.pop %v11090
    %v11092 = vmul.f32 %v11081, 1.442695
    %v11093 = vpow.pop %v11092
    %v11094 = vmul.f32 %v11082, 1.442695
    %v11095 = vpow.pop %v11094
    %v11096 = vmul.f32 %v11083, 1.442695
    %v11097 = vpow.pop %v11096
    %v11098 = vmul.f32 %v11084, 1.442695
    %v11099 = vpow.pop %v11098
    %v11100 = vmul.f32 %v11085, 1.442695
    %v11101 = vpow.pop %v11100
    %v11102 = vsel %vm11053, %v11087, 0.0
    %11103 = vadd.xlane.f32.xlu0 %v11102
    %v11104 = vpop.xlane.xlu0 %11103
    %v11105 = vsel %vm11053, %v11089, 0.0
    %11106 = vadd.xlane.f32.xlu0 %v11105
    %v11107 = vpop.xlane.xlu0 %11106
    %v11108 = vsel %vm11053, %v11091, 0.0
    %11109 = vadd.xlane.f32.xlu0 %v11108
    %v11110 = vpop.xlane.xlu0 %11109
    %v11111 = vsel %vm11053, %v11093, 0.0
    %11112 = vadd.xlane.f32.xlu0 %v11111
    %v11113 = vpop.xlane.xlu0 %11112
    %v11114 = vsel %vm11053, %v11095, 0.0
    %11115 = vadd.xlane.f32.xlu0 %v11114
    %v11116 = vpop.xlane.xlu0 %11115
    %v11117 = vsel %vm11053, %v11097, 0.0
    %11118 = vadd.xlane.f32.xlu0 %v11117
    %v11119 = vpop.xlane.xlu0 %11118
    %v11120 = vsel %vm11053, %v11099, 0.0
    %11121 = vadd.xlane.f32.xlu0 %v11120
    %v11122 = vpop.xlane.xlu0 %11121
    %v11123 = vsel %vm11053, %v11101, 0.0
    %11124 = vadd.xlane.f32.xlu0 %v11123
    %v11125 = vpop.xlane.xlu0 %11124
    %v11126 = vlog2.pop %v11104
    %v11127 = vmul.f32 %v11126, 0.6931472
    %v11128 = vlog2.pop %v11107
    %v11129 = vmul.f32 %v11128, 0.6931472
    %v11130 = vlog2.pop %v11110
    %v11131 = vmul.f32 %v11130, 0.6931472
    %v11132 = vlog2.pop %v11113
    %v11133 = vmul.f32 %v11132, 0.6931472
    %v11134 = vlog2.pop %v11116
    %v11135 = vmul.f32 %v11134, 0.6931472
    %v11136 = vlog2.pop %v11119
    %v11137 = vmul.f32 %v11136, 0.6931472
    %v11138 = vlog2.pop %v11122
    %v11139 = vmul.f32 %v11138, 0.6931472
    %v11140 = vlog2.pop %v11125
    %v11141 = vmul.f32 %v11140, 0.6931472
    %v11142 = vsub.f32 %v11078, %v11127
    %v11143 = vsub.f32 %v11079, %v11129
    %v11144 = vsub.f32 %v11080, %v11131
    %v11145 = vsub.f32 %v11081, %v11133
    %v11146 = vsub.f32 %v11082, %v11135
    %v11147 = vsub.f32 %v11083, %v11137
    %v11148 = vsub.f32 %v11084, %v11139
    %v11149 = vsub.f32 %v11085, %v11141
    %11150 = vst.msk [vmem:[%s13] sm:$0xff] %vm11053, %v11142
    %11151 = vst.msk [vmem:[%s13 + $0x8] sm:$0xff] %vm11053, %v11143
    %11152 = vst.msk [vmem:[%s13 + $0x10] sm:$0xff] %vm11053, %v11144
    %11153 = vst.msk [vmem:[%s13 + $0x18] sm:$0xff] %vm11053, %v11145
    %11154 = vst.msk [vmem:[%s13 + $0x20] sm:$0xff] %vm11053, %v11146
    %11155 = vst.msk [vmem:[%s13 + $0x28] sm:$0xff] %vm11053, %v11147
    %11156 = vst.msk [vmem:[%s13 + $0x30] sm:$0xff] %vm11053, %v11148
    %11157 = vst.msk [vmem:[%s13 + $0x38] sm:$0xff] %vm11053, %v11149
    // Predicated region
    $region58: #{tpu_custom_call.1} parent=1 // pred_check
      _
    $region59: #{tpu_custom_call.1} parent=1 // pred_check_branch
      %11159 = sbr.rel (0) target = $region61
    $region60: #{tpu_custom_call.1} parent=1 // pred_region
      _
    $region61: #{tpu_custom_call.1} parent=1 // pred_fallthru
      _
    // Predicated region
    $region62: #{tpu_custom_call.1} parent=1 // pred_check
      _
    $region63: #{tpu_custom_call.1} parent=1 // pred_check_branch
      %11161 = sbr.rel (0) target = $region65
    $region64: #{tpu_custom_call.1} parent=1 // pred_region
      _
    $region65: #{tpu_custom_call.1} parent=1 // pred_fallthru
      _
    %11162 = vsyncpa [#allocation4], 1

</llo_original>
